<compile_context>
chip_gen: v5e
topology: v5e:2x2
jax: 0.10.0
libtpu: 0.0.40
codegen_flags: <defaults>
</compile_context>

<pallas_src>
import functools

import jax
import jax.numpy as jnp
from jax.experimental import pallas as pl
from jax.experimental.pallas import tpu as pltpu


# ---------------------------------------------------------------------------
# In-kernel helpers.
# ---------------------------------------------------------------------------
def _zero_halo(xs_ref, Hb, TB, CB):
    """Zero the 1-block halo ring of a (Hb, Hb, TB, CB) block-s2d scratch."""
    zr = jnp.zeros((1, Hb, TB, CB), jnp.float32)
    zc = jnp.zeros((Hb, 1, TB, CB), jnp.float32)
    xs_ref[0:1, :, :, :] = zr
    xs_ref[Hb - 1:Hb, :, :, :] = zr
    xs_ref[:, 0:1, :, :] = zc
    xs_ref[:, Hb - 1:Hb, :, :] = zc


def _scatter_bs2d(a, xs_ref, *, H, C, TB):
    """Write a conv output `a` ((H*H*TB, C) f32, rows ordered (h, w, b)) into a
    block-space-to-depth padded scratch xs_ref of shape (H//2+1, H//2+1, TB, 4C):

        xs[bh, bw, b, (rh*2+rw)*C + c] = a[2*bh + rh - 1, 2*bw + rw - 1, b, c]

    Only valid (non-halo) positions are written; the halo ring stays zero."""
    Hh = H // 2
    ar = a.reshape(Hh, 2, Hh, 2, TB, C)        # (hh, hp, wh, wp, b, c); h = 2*hh + hp
    for rh in range(2):
        hsl = slice(1, Hh + 1) if rh == 0 else slice(0, Hh)
        for rw in range(2):
            wsl = slice(1, Hh + 1) if rw == 0 else slice(0, Hh)
            cb = rh * 2 + rw
            xs_ref[hsl, wsl, :, cb * C:(cb + 1) * C] = ar[:, 1 - rh, :, 1 - rw]


def _gather_patch(xs_ref, patch_ref, *, Ho, TB, CB):
    """Assemble the im2col patch (Ho*Ho*TB, 4*CB) bf16 of a 4x4/stride-2 conv from
    the block-s2d scratch (Ho+1, Ho+1, TB, CB): 4 lane-aligned column blocks, one
    per 2x2 block-window offset (dh, dw)."""
    for dh in range(2):
        for dw in range(2):
            slab = xs_ref[dh:dh + Ho, dw:dw + Ho, :, :]          # (Ho, Ho, TB, CB) f32
            patch_ref[:, (dh * 2 + dw) * CB:(dh * 2 + dw + 1) * CB] = (
                slab.reshape(Ho * Ho * TB, CB).astype(jnp.bfloat16))


# ---------------------------------------------------------------------------
# The fused kernel body (one batch tile of TB rows per grid step).
# ---------------------------------------------------------------------------
def _mlp_fused_kernel(p0_ref, w0_ref, b0_ref, w1_ref, b1_ref, w2_ref, b2_ref,
                      w3_ref, b3_ref, w4_ref, b4_ref,
                      out_ref, xs1_ref, xs2_ref, p1_ref, p2_ref, f0_ref, *, TB):
    # Halo rings.  Zeroed every step (cheap: edge strips only) so the kernel is
    # correct even if the "parallel" batch grid is split across TensorCores,
    # each with its own scratch.  Still ~2.5x fewer zero-stores than the old
    # full-buffer memset, and the interior is no longer written twice.
    _zero_halo(xs1_ref, 9, TB, 128)
    _zero_halo(xs2_ref, 5, TB, 256)

    # ---- conv0: host-built im2col patches, one K=16 matmul ------------------
    lhs0 = p0_ref[...].reshape(256 * TB, 16).astype(jnp.bfloat16)
    a1 = jnp.dot(lhs0, w0_ref[...], preferred_element_type=jnp.float32)
    a1 = jnp.maximum(a1 + b0_ref[...], 0.0)                       # (256*TB, 32) f32
    _scatter_bs2d(a1, xs1_ref, H=16, C=32, TB=TB)

    # ---- conv1: 32 -> 64, spatial 16 -> 8, single K=512 matmul --------------
    _gather_patch(xs1_ref, p1_ref, Ho=8, TB=TB, CB=128)
    a2 = jnp.dot(p1_ref[...], w1_ref[...], preferred_element_type=jnp.float32)
    a2 = jnp.maximum(a2 + b1_ref[...], 0.0)                       # (64*TB, 64) f32
    _scatter_bs2d(a2, xs2_ref, H=8, C=64, TB=TB)

    # ---- conv2: 64 -> 64, spatial 8 -> 4, single K=1024 matmul --------------
    _gather_patch(xs2_ref, p2_ref, Ho=4, TB=TB, CB=256)
    z2 = jnp.dot(p2_ref[...], w2_ref[...], preferred_element_type=jnp.float32)
    z2 = jnp.maximum(z2 + b2_ref[...], 0.0)                       # (16*TB, 64) f32

    # ---- fc0: rearrange (s, b) rows -> (b, s*64+c) cols, one K=1024 matmul --
    for s in range(16):
        f0_ref[:, s * 64:(s + 1) * 64] = z2[s * TB:(s + 1) * TB, :]
    h = jnp.dot(f0_ref[...].astype(jnp.bfloat16), w3_ref[...],
                preferred_element_type=jnp.float32)
    h = jnp.maximum(h + b3_ref[...], 0.0)                         # (TB, 256) f32

    # ---- fc1: 256 -> 10 (zero-padded to 128 lanes -> lane-dense store) ------
    out_ref[...] = jnp.dot(h.astype(jnp.bfloat16), w4_ref[...],
                           preferred_element_type=jnp.float32) + b4_ref[...]


# ---------------------------------------------------------------------------
# JAX-side forward wrapper: cheap one-time im2col of the raw input (XLA), then
# one fused, batch-tiled Pallas kernel, then slice the padded logits.
# ---------------------------------------------------------------------------
def mlp_forward(prepared, x_nchw):
    B, C, H, W = x_nchw.shape
    assert (C, H, W) == (1, 32, 32), "module implies (B, 1, 32, 32) inputs"
    TB = min(16, ((B + 7) // 8) * 8)        # per-step batch tile (multiple of 8)
    B8 = ((B + TB - 1) // TB) * TB          # padded batch (multiple of TB)

    # conv0 im2col on the raw input: p0[(ho*16+wo), b, kh*4+kw], zero-padded batch.
    # TODO(synk): for large B, emit p0 in this layout straight from the data
    # pipeline instead of transposing in XLA here (extra HBM round trip).
    xs = jnp.pad(x_nchw[:, 0].astype(jnp.float32), ((0, B8 - B), (1, 1), (1, 1)))
    cols = [xs[:, i:i + 32:2, j:j + 32:2] for i in range(4) for j in range(4)]
    p0 = jnp.stack(cols, axis=-1)                                  # (B8, 16, 16, 16)
    p0 = p0.transpose(1, 2, 0, 3).reshape(256, B8, 16)             # rows (ho, wo)

    args = (p0, prepared["w0"], prepared["b0"], prepared["w1"], prepared["b1"],
            prepared["w2"], prepared["b2"], prepared["w3"], prepared["b3"],
            prepared["w4"], prepared["b4"])

    def const_spec(a):
        zeros = (0,) * a.ndim
        return pl.BlockSpec(a.shape, lambda i: zeros)

    in_specs = [pl.BlockSpec((256, TB, 16), lambda i: (0, i, 0))]   # batch-blocked p0
    in_specs += [const_spec(a) for a in args[1:]]                   # resident weights

    flops = 2 * B8 * (256 * 16 * 32 + 64 * 512 * 64 + 16 * 1024 * 64
                      + 1024 * 256 + 256 * 128)
    bytes_accessed = sum(int(a.size) * a.dtype.itemsize for a in args) + B8 * 128 * 4

    out = pl.pallas_call(
        functools.partial(_mlp_fused_kernel, TB=TB),
        out_shape=jax.ShapeDtypeStruct((B8, 128), jnp.float32),
        grid=(B8 // TB,),
        in_specs=in_specs,
        out_specs=pl.BlockSpec((TB, 128), lambda i: (i, 0)),
        scratch_shapes=[
            pltpu.VMEM((9, 9, TB, 128), jnp.float32),    # conv1 input, block-s2d + halo
            pltpu.VMEM((5, 5, TB, 256), jnp.float32),    # conv2 input, block-s2d + halo
            pltpu.VMEM((64 * TB, 512), jnp.bfloat16),    # conv1 im2col patch (K=512)
            pltpu.VMEM((16 * TB, 1024), jnp.bfloat16),   # conv2 im2col patch (K=1024)
            pltpu.VMEM((TB, 1024), jnp.float32),         # fc0 input (K=1024)
        ],
        compiler_params=pltpu.CompilerParams(
            dimension_semantics=("parallel",)),
        cost_estimate=pl.CostEstimate(flops=int(flops), transcendentals=0,
                                      bytes_accessed=int(bytes_accessed)),
    )(*args)
    return out[:B, :10]


# ---------------------------------------------------------------------------
# Parameters: PyTorch-layout init + one-time conversion to kernel layout.
# ---------------------------------------------------------------------------
def init_params(key):
    ks = jax.random.split(key, 10)
    p = {}
    conv_shapes = [(32, 1, 4, 4), (64, 32, 4, 4), (64, 64, 4, 4)]
    for i, (co, ci, kh, kw) in enumerate(conv_shapes):
        bound = 1.0 / (ci * kh * kw) ** 0.5
        p[f"conv{i}_w"] = jax.random.uniform(ks[2 * i], (co, ci, kh, kw),
                                             jnp.float32, -bound, bound)
        p[f"conv{i}_b"] = jax.random.uniform(ks[2 * i + 1], (co,),
                                             jnp.float32, -bound, bound)
    fc_shapes = [(256, 1024), (10, 256)]       # torch Linear weight is (out, in)
    for i, (fo, fi) in enumerate(fc_shapes):
        bound = 1.0 / fi ** 0.5
        p[f"fc{i}_w"] = jax.random.uniform(ks[6 + 2 * i], (fo, fi),
                                           jnp.float32, -bound, bound)
        p[f"fc{i}_b"] = jax.random.uniform(ks[7 + 2 * i], (fo,),
                                           jnp.float32, -bound, bound)
    return p


def _conv_w_to_mat(w):
    """(Cout, Cin, 4, 4) torch conv weight -> (16*Cin, Cout) matmul weight whose
    row order matches the kernel's im2col patch columns:
        col = (dh*2 + dw)*4*Cin + (rh*2 + rw)*Cin + c,  kh = 2*dh + rh, kw = 2*dw + rw."""
    co, ci = w.shape[0], w.shape[1]
    wr = w.reshape(co, ci, 2, 2, 2, 2)          # [cout, c, dh, rh, dw, rw]
    wr = wr.transpose(2, 4, 3, 5, 1, 0)         # [dh, dw, rh, rw, c, cout]
    return wr.reshape(16 * ci, co)


def prepare_params(p):
    """One-time conversion of torch-layout params into the fused-kernel layout."""
    prep = {}
    # conv0 as a plain (16, 32) matmul weight (row order = (kh, kw)).
    prep["w0"] = p["conv0_w"].reshape(32, 16).T.astype(jnp.bfloat16)        # (16, 32)
    prep["b0"] = p["conv0_b"].reshape(1, 32).astype(jnp.float32)
    # conv1 / conv2 as single-matmul im2col weights with K = 16*Cin.
    prep["w1"] = _conv_w_to_mat(p["conv1_w"]).astype(jnp.bfloat16)          # (512, 64)
    prep["b1"] = p["conv1_b"].reshape(1, 64).astype(jnp.float32)
    prep["w2"] = _conv_w_to_mat(p["conv2_w"]).astype(jnp.bfloat16)          # (1024, 64)
    prep["b2"] = p["conv2_b"].reshape(1, 64).astype(jnp.float32)
    # fc0: torch (256, 1024) over inputs flattened in (c, h, w) order; kernel
    # consumes columns ordered (h*4+w)*64 + c, so permute once here.
    w3 = p["fc0_w"].reshape(256, 64, 4, 4).transpose(2, 3, 1, 0)            # (4,4,64,256)
    prep["w3"] = w3.reshape(1024, 256).astype(jnp.bfloat16)
    prep["b3"] = p["fc0_b"].reshape(1, 256).astype(jnp.float32)
    # fc1: (256, 10) zero-padded to 128 output lanes (lane-dense final store).
    w4 = jnp.zeros((256, 128), jnp.float32).at[:, :10].set(p["fc1_w"].T)
    prep["w4"] = w4.astype(jnp.bfloat16)
    prep["b4"] = jnp.zeros((1, 128), jnp.float32).at[0, :10].set(p["fc1_b"])
    return prep


# ---------------------------------------------------------------------------
# Pure-JAX reference (same bf16 matmul casts) for a self-check.
# ---------------------------------------------------------------------------
def reference_forward(p, x_nchw):
    def conv(x, w, b):
        B, C, H, W = x.shape
        Ho, Wo = H // 2, W // 2
        xp = jnp.pad(x, ((0, 0), (0, 0), (1, 1), (1, 1)))
        cols = [xp[:, :, i:i + 2 * Ho:2, j:j + 2 * Wo:2]
                for i in range(4) for j in range(4)]
        pat = jnp.stack(cols, axis=2).reshape(B, C, 4, 4, Ho, Wo)
        pat = pat.transpose(0, 4, 5, 1, 2, 3).reshape(B * Ho * Wo, C * 16)
        wm = w.reshape(w.shape[0], -1).T
        y = jnp.dot(pat.astype(jnp.bfloat16), wm.astype(jnp.bfloat16),
                    preferred_element_type=jnp.float32) + b
        y = jnp.maximum(y, 0.0)
        return y.reshape(B, Ho, Wo, -1).transpose(0, 3, 1, 2)

    h = conv(x_nchw, p["conv0_w"], p["conv0_b"])
    h = conv(h, p["conv1_w"], p["conv1_b"])
    h = conv(h, p["conv2_w"], p["conv2_b"])
    f = h.reshape(x_nchw.shape[0], -1)
    h = jnp.maximum(jnp.dot(f.astype(jnp.bfloat16),
                            p["fc0_w"].T.astype(jnp.bfloat16),
                            preferred_element_type=jnp.float32) + p["fc0_b"], 0.0)
    return jnp.dot(h.astype(jnp.bfloat16), p["fc1_w"].T.astype(jnp.bfloat16),
                   preferred_element_type=jnp.float32) + p["fc1_b"]


if __name__ == "__main__":
    key = jax.random.PRNGKey(0)
    k_param, k_x = jax.random.split(key)
    params = init_params(k_param)           # torch-layout params
    prepared = prepare_params(params)       # one-time layout conversion
    x = jax.random.normal(k_x, (2, 1, 32, 32), jnp.float32)

    logits = jax.jit(mlp_forward)(prepared, x)
    jax.block_until_ready(logits)
    assert logits.shape == (2, 10), logits.shape

    ref = reference_forward(params, x)
    err = float(jnp.max(jnp.abs(logits - ref)))
    assert err < 1e-2, f"max abs error vs reference: {err}"
    print("KERNEL_OK")
</pallas_src>

<mosaic_0001>
module attributes {stable_mosaic.version = 11 : i64} {
  func.func @_mlp_fused_kernel(%arg0: i32, %arg1: memref<256x8x16xf32, #tpu.memory_space<vmem>>, %arg2: memref<16x32xbf16, #tpu.memory_space<vmem>>, %arg3: memref<1x32xf32, #tpu.memory_space<vmem>>, %arg4: memref<512x64xbf16, #tpu.memory_space<vmem>>, %arg5: memref<1x64xf32, #tpu.memory_space<vmem>>, %arg6: memref<1024x64xbf16, #tpu.memory_space<vmem>>, %arg7: memref<1x64xf32, #tpu.memory_space<vmem>>, %arg8: memref<1024x256xbf16, #tpu.memory_space<vmem>>, %arg9: memref<1x256xf32, #tpu.memory_space<vmem>>, %arg10: memref<256x128xbf16, #tpu.memory_space<vmem>>, %arg11: memref<1x128xf32, #tpu.memory_space<vmem>>, %arg12: memref<8x128xf32, #tpu.memory_space<vmem>>, %arg13: memref<9x9x8x128xf32, #tpu.memory_space<vmem>>, %arg14: memref<5x5x8x256xf32, #tpu.memory_space<vmem>>, %arg15: memref<512x512xbf16, #tpu.memory_space<vmem>>, %arg16: memref<128x1024xbf16, #tpu.memory_space<vmem>>, %arg17: memref<8x1024xf32, #tpu.memory_space<vmem>>) attributes {dimension_semantics = [#tpu.dimension_semantics<parallel>], iteration_bounds = array<i64: 1>, scalar_prefetch = 0 : i64, scratch_operands = 5 : i64, tpu.core_type = #tpu.core_type<tc>, window_params = [{transform_indices = @transform_0, window_bounds = array<i64: 256, 8, 16>}, {pipeline_mode = #tpu.pipeline_mode<synchronous>, transform_indices = @transform_1, window_bounds = array<i64: 16, 32>}, {pipeline_mode = #tpu.pipeline_mode<synchronous>, transform_indices = @transform_2, window_bounds = array<i64: 1, 32>}, {pipeline_mode = #tpu.pipeline_mode<synchronous>, transform_indices = @transform_3, window_bounds = array<i64: 512, 64>}, {pipeline_mode = #tpu.pipeline_mode<synchronous>, transform_indices = @transform_4, window_bounds = array<i64: 1, 64>}, {pipeline_mode = #tpu.pipeline_mode<synchronous>, transform_indices = @transform_5, window_bounds = array<i64: 1024, 64>}, {pipeline_mode = #tpu.pipeline_mode<synchronous>, transform_indices = @transform_6, window_bounds = array<i64: 1, 64>}, {pipeline_mode = #tpu.pipeline_mode<synchronous>, transform_indices = @transform_7, window_bounds = array<i64: 1024, 256>}, {pipeline_mode = #tpu.pipeline_mode<synchronous>, transform_indices = @transform_8, window_bounds = array<i64: 1, 256>}, {pipeline_mode = #tpu.pipeline_mode<synchronous>, transform_indices = @transform_9, window_bounds = array<i64: 256, 128>}, {pipeline_mode = #tpu.pipeline_mode<synchronous>, transform_indices = @transform_10, window_bounds = array<i64: 1, 128>}, {transform_indices = @transform_11, window_bounds = array<i64: 8, 128>}]} {
    %cst = arith.constant 0.000000e+00 : f32
    %0 = vector.broadcast %cst : f32 to vector<1x9x8x128xf32>
    %cst_0 = arith.constant 0.000000e+00 : f32
    %1 = vector.broadcast %cst_0 : f32 to vector<9x1x8x128xf32>
    %c0 = arith.constant 0 : index
    %c0_1 = arith.constant 0 : index
    %c0_2 = arith.constant 0 : index
    %c0_3 = arith.constant 0 : index
    %2 = vector.load %arg13[%c0, %c0_1, %c0_2, %c0_3] : memref<9x9x8x128xf32, #tpu.memory_space<vmem>>, vector<1x9x8x128xf32>
    tpu.vector_store %arg13[%c0, %c0_1, %c0_2, %c0_3], %0 {strides = array<i32>} : memref<9x9x8x128xf32, #tpu.memory_space<vmem>>, vector<1x9x8x128xf32>,
    %c8 = arith.constant 8 : index
    %c0_4 = arith.constant 0 : index
    %c0_5 = arith.constant 0 : index
    %c0_6 = arith.constant 0 : index
    %3 = vector.load %arg13[%c8, %c0_4, %c0_5, %c0_6] : memref<9x9x8x128xf32, #tpu.memory_space<vmem>>, vector<1x9x8x128xf32>
    tpu.vector_store %arg13[%c8, %c0_4, %c0_5, %c0_6], %0 {strides = array<i32>} : memref<9x9x8x128xf32, #tpu.memory_space<vmem>>, vector<1x9x8x128xf32>,
    %c0_7 = arith.constant 0 : index
    %c0_8 = arith.constant 0 : index
    %c0_9 = arith.constant 0 : index
    %c0_10 = arith.constant 0 : index
    %4 = vector.load %arg13[%c0_7, %c0_8, %c0_9, %c0_10] : memref<9x9x8x128xf32, #tpu.memory_space<vmem>>, vector<9x1x8x128xf32>
    tpu.vector_store %arg13[%c0_7, %c0_8, %c0_9, %c0_10], %1 {strides = array<i32>} : memref<9x9x8x128xf32, #tpu.memory_space<vmem>>, vector<9x1x8x128xf32>,
    %c0_11 = arith.constant 0 : index
    %c8_12 = arith.constant 8 : index
    %c0_13 = arith.constant 0 : index
    %c0_14 = arith.constant 0 : index
    %5 = vector.load %arg13[%c0_11, %c8_12, %c0_13, %c0_14] : memref<9x9x8x128xf32, #tpu.memory_space<vmem>>, vector<9x1x8x128xf32>
    tpu.vector_store %arg13[%c0_11, %c8_12, %c0_13, %c0_14], %1 {strides = array<i32>} : memref<9x9x8x128xf32, #tpu.memory_space<vmem>>, vector<9x1x8x128xf32>,
    %cst_15 = arith.constant 0.000000e+00 : f32
    %6 = vector.broadcast %cst_15 : f32 to vector<1x5x8x256xf32>
    %cst_16 = arith.constant 0.000000e+00 : f32
    %7 = vector.broadcast %cst_16 : f32 to vector<5x1x8x256xf32>
    %c0_17 = arith.constant 0 : index
    %c0_18 = arith.constant 0 : index
    %c0_19 = arith.constant 0 : index
    %c0_20 = arith.constant 0 : index
    %8 = vector.load %arg14[%c0_17, %c0_18, %c0_19, %c0_20] : memref<5x5x8x256xf32, #tpu.memory_space<vmem>>, vector<1x5x8x256xf32>
    tpu.vector_store %arg14[%c0_17, %c0_18, %c0_19, %c0_20], %6 {strides = array<i32>} : memref<5x5x8x256xf32, #tpu.memory_space<vmem>>, vector<1x5x8x256xf32>,
    %c4 = arith.constant 4 : index
    %c0_21 = arith.constant 0 : index
    %c0_22 = arith.constant 0 : index
    %c0_23 = arith.constant 0 : index
    %9 = vector.load %arg14[%c4, %c0_21, %c0_22, %c0_23] : memref<5x5x8x256xf32, #tpu.memory_space<vmem>>, vector<1x5x8x256xf32>
    tpu.vector_store %arg14[%c4, %c0_21, %c0_22, %c0_23], %6 {strides = array<i32>} : memref<5x5x8x256xf32, #tpu.memory_space<vmem>>, vector<1x5x8x256xf32>,
    %c0_24 = arith.constant 0 : index
    %c0_25 = arith.constant 0 : index
    %c0_26 = arith.constant 0 : index
    %c0_27 = arith.constant 0 : index
    %10 = vector.load %arg14[%c0_24, %c0_25, %c0_26, %c0_27] : memref<5x5x8x256xf32, #tpu.memory_space<vmem>>, vector<5x1x8x256xf32>
    tpu.vector_store %arg14[%c0_24, %c0_25, %c0_26, %c0_27], %7 {strides = array<i32>} : memref<5x5x8x256xf32, #tpu.memory_space<vmem>>, vector<5x1x8x256xf32>,
    %c0_28 = arith.constant 0 : index
    %c4_29 = arith.constant 4 : index
    %c0_30 = arith.constant 0 : index
    %c0_31 = arith.constant 0 : index
    %11 = vector.load %arg14[%c0_28, %c4_29, %c0_30, %c0_31] : memref<5x5x8x256xf32, #tpu.memory_space<vmem>>, vector<5x1x8x256xf32>
    tpu.vector_store %arg14[%c0_28, %c4_29, %c0_30, %c0_31], %7 {strides = array<i32>} : memref<5x5x8x256xf32, #tpu.memory_space<vmem>>, vector<5x1x8x256xf32>,
    %c0_32 = arith.constant 0 : index
    %c0_33 = arith.constant 0 : index
    %c0_34 = arith.constant 0 : index
    %12 = vector.load %arg1[%c0_32, %c0_33, %c0_34] : memref<256x8x16xf32, #tpu.memory_space<vmem>>, vector<256x8x16xf32>
    %13 = vector.shape_cast %12 : vector<256x8x16xf32> to vector<2048x16xf32>
    %14 = arith.truncf %13 : vector<2048x16xf32> to vector<2048x16xbf16>
    %c0_35 = arith.constant 0 : index
    %c0_36 = arith.constant 0 : index
    %15 = vector.load %arg2[%c0_35, %c0_36] : memref<16x32xbf16, #tpu.memory_space<vmem>>, vector<16x32xbf16>
    %cst_37 = arith.constant dense<0.000000e+00> : vector<2048x32xf32>
    %16 = tpu.matmul %14, %15, %cst_37 {dimension_numbers = #tpu.dot_dimension_numbers<[1], [0], [0], [1], [0, 0, 1, 1], [], []>} : vector<2048x16xbf16>, vector<16x32xbf16>, vector<2048x32xf32> -> vector<2048x32xf32>
    %c0_38 = arith.constant 0 : index
    %c0_39 = arith.constant 0 : index
    %17 = vector.load %arg3[%c0_38, %c0_39] : memref<1x32xf32, #tpu.memory_space<vmem>>, vector<1x32xf32>
    %18 = vector.broadcast %17 : vector<1x32xf32> to vector<2048x32xf32>
    %19 = arith.addf %16, %18 : vector<2048x32xf32>
    %cst_40 = arith.constant 0.000000e+00 : f32
    %20 = vector.broadcast %cst_40 : f32 to vector<2048x32xf32>
    %21 = arith.maximumf %19, %20 : vector<2048x32xf32>
    %22 = vector.shape_cast %21 : vector<2048x32xf32> to vector<8x2x8x2x8x32xf32>
    %23 = vector.extract_strided_slice %22 {offsets = [0, 1, 0, 1, 0, 0], sizes = [8, 1, 8, 1, 8, 32], strides = [1, 1, 1, 1, 1, 1]} : vector<8x2x8x2x8x32xf32> to vector<8x1x8x1x8x32xf32>
    %24 = vector.shape_cast %23 : vector<8x1x8x1x8x32xf32> to vector<8x8x8x32xf32>
    %c1 = arith.constant 1 : index
    %c1_41 = arith.constant 1 : index
    %c0_42 = arith.constant 0 : index
    %c0_43 = arith.constant 0 : index
    %25 = vector.load %arg13[%c1, %c1_41, %c0_42, %c0_43] : memref<9x9x8x128xf32, #tpu.memory_space<vmem>>, vector<8x8x8x32xf32>
    tpu.vector_store %arg13[%c1, %c1_41, %c0_42, %c0_43], %24 {strides = array<i32>} : memref<9x9x8x128xf32, #tpu.memory_space<vmem>>, vector<8x8x8x32xf32>,
    %26 = vector.extract_strided_slice %22 {offsets = [0, 1, 0, 0, 0, 0], sizes = [8, 1, 8, 1, 8, 32], strides = [1, 1, 1, 1, 1, 1]} : vector<8x2x8x2x8x32xf32> to vector<8x1x8x1x8x32xf32>
    %27 = vector.shape_cast %26 : vector<8x1x8x1x8x32xf32> to vector<8x8x8x32xf32>
    %c1_44 = arith.constant 1 : index
    %c0_45 = arith.constant 0 : index
    %c0_46 = arith.constant 0 : index
    %c32 = arith.constant 32 : index
    %28 = vector.load %arg13[%c1_44, %c0_45, %c0_46, %c32] : memref<9x9x8x128xf32, #tpu.memory_space<vmem>>, vector<8x8x8x32xf32>
    tpu.vector_store %arg13[%c1_44, %c0_45, %c0_46, %c32], %27 {strides = array<i32>} : memref<9x9x8x128xf32, #tpu.memory_space<vmem>>, vector<8x8x8x32xf32>,
    %29 = vector.extract_strided_slice %22 {offsets = [0, 0, 0, 1, 0, 0], sizes = [8, 1, 8, 1, 8, 32], strides = [1, 1, 1, 1, 1, 1]} : vector<8x2x8x2x8x32xf32> to vector<8x1x8x1x8x32xf32>
    %30 = vector.shape_cast %29 : vector<8x1x8x1x8x32xf32> to vector<8x8x8x32xf32>
    %c0_47 = arith.constant 0 : index
    %c1_48 = arith.constant 1 : index
    %c0_49 = arith.constant 0 : index
    %c64 = arith.constant 64 : index
    %31 = vector.load %arg13[%c0_47, %c1_48, %c0_49, %c64] : memref<9x9x8x128xf32, #tpu.memory_space<vmem>>, vector<8x8x8x32xf32>
    tpu.vector_store %arg13[%c0_47, %c1_48, %c0_49, %c64], %30 {strides = array<i32>} : memref<9x9x8x128xf32, #tpu.memory_space<vmem>>, vector<8x8x8x32xf32>,
    %32 = vector.extract_strided_slice %22 {offsets = [0, 0, 0, 0, 0, 0], sizes = [8, 1, 8, 1, 8, 32], strides = [1, 1, 1, 1, 1, 1]} : vector<8x2x8x2x8x32xf32> to vector<8x1x8x1x8x32xf32>
    %33 = vector.shape_cast %32 : vector<8x1x8x1x8x32xf32> to vector<8x8x8x32xf32>
    %c0_50 = arith.constant 0 : index
    %c0_51 = arith.constant 0 : index
    %c0_52 = arith.constant 0 : index
    %c96 = arith.constant 96 : index
    %34 = vector.load %arg13[%c0_50, %c0_51, %c0_52, %c96] : memref<9x9x8x128xf32, #tpu.memory_space<vmem>>, vector<8x8x8x32xf32>
    tpu.vector_store %arg13[%c0_50, %c0_51, %c0_52, %c96], %33 {strides = array<i32>} : memref<9x9x8x128xf32, #tpu.memory_space<vmem>>, vector<8x8x8x32xf32>,
    %c0_53 = arith.constant 0 : index
    %c0_54 = arith.constant 0 : index
    %c0_55 = arith.constant 0 : index
    %c0_56 = arith.constant 0 : index
    %35 = vector.load %arg13[%c0_53, %c0_54, %c0_55, %c0_56] : memref<9x9x8x128xf32, #tpu.memory_space<vmem>>, vector<8x8x8x128xf32>
    %36 = vector.shape_cast %35 : vector<8x8x8x128xf32> to vector<512x128xf32>
    %37 = arith.truncf %36 : vector<512x128xf32> to vector<512x128xbf16>
    %c0_57 = arith.constant 0 : index
    %c0_58 = arith.constant 0 : index
    %38 = vector.load %arg15[%c0_57, %c0_58] : memref<512x512xbf16, #tpu.memory_space<vmem>>, vector<512x128xbf16>
    tpu.vector_store %arg15[%c0_57, %c0_58], %37 {strides = array<i32>} : memref<512x512xbf16, #tpu.memory_space<vmem>>, vector<512x128xbf16>,
    %c0_59 = arith.constant 0 : index
    %c1_60 = arith.constant 1 : index
    %c0_61 = arith.constant 0 : index
    %c0_62 = arith.constant 0 : index
    %39 = vector.load %arg13[%c0_59, %c1_60, %c0_61, %c0_62] : memref<9x9x8x128xf32, #tpu.memory_space<vmem>>, vector<8x8x8x128xf32>
    %40 = vector.shape_cast %39 : vector<8x8x8x128xf32> to vector<512x128xf32>
    %41 = arith.truncf %40 : vector<512x128xf32> to vector<512x128xbf16>
    %c0_63 = arith.constant 0 : index
    %c128 = arith.constant 128 : index
    %42 = vector.load %arg15[%c0_63, %c128] : memref<512x512xbf16, #tpu.memory_space<vmem>>, vector<512x128xbf16>
    tpu.vector_store %arg15[%c0_63, %c128], %41 {strides = array<i32>} : memref<512x512xbf16, #tpu.memory_space<vmem>>, vector<512x128xbf16>,
    %c1_64 = arith.constant 1 : index
    %c0_65 = arith.constant 0 : index
    %c0_66 = arith.constant 0 : index
    %c0_67 = arith.constant 0 : index
    %43 = vector.load %arg13[%c1_64, %c0_65, %c0_66, %c0_67] : memref<9x9x8x128xf32, #tpu.memory_space<vmem>>, vector<8x8x8x128xf32>
    %44 = vector.shape_cast %43 : vector<8x8x8x128xf32> to vector<512x128xf32>
    %45 = arith.truncf %44 : vector<512x128xf32> to vector<512x128xbf16>
    %c0_68 = arith.constant 0 : index
    %c256 = arith.constant 256 : index
    %46 = vector.load %arg15[%c0_68, %c256] : memref<512x512xbf16, #tpu.memory_space<vmem>>, vector<512x128xbf16>
    tpu.vector_store %arg15[%c0_68, %c256], %45 {strides = array<i32>} : memref<512x512xbf16, #tpu.memory_space<vmem>>, vector<512x128xbf16>,
    %c1_69 = arith.constant 1 : index
    %c1_70 = arith.constant 1 : index
    %c0_71 = arith.constant 0 : index
    %c0_72 = arith.constant 0 : index
    %47 = vector.load %arg13[%c1_69, %c1_70, %c0_71, %c0_72] : memref<9x9x8x128xf32, #tpu.memory_space<vmem>>, vector<8x8x8x128xf32>
    %48 = vector.shape_cast %47 : vector<8x8x8x128xf32> to vector<512x128xf32>
    %49 = arith.truncf %48 : vector<512x128xf32> to vector<512x128xbf16>
    %c0_73 = arith.constant 0 : index
    %c384 = arith.constant 384 : index
    %50 = vector.load %arg15[%c0_73, %c384] : memref<512x512xbf16, #tpu.memory_space<vmem>>, vector<512x128xbf16>
    tpu.vector_store %arg15[%c0_73, %c384], %49 {strides = array<i32>} : memref<512x512xbf16, #tpu.memory_space<vmem>>, vector<512x128xbf16>,
    %c0_74 = arith.constant 0 : index
    %c0_75 = arith.constant 0 : index
    %51 = vector.load %arg15[%c0_74, %c0_75] : memref<512x512xbf16, #tpu.memory_space<vmem>>, vector<512x512xbf16>
    %c0_76 = arith.constant 0 : index
    %c0_77 = arith.constant 0 : index
    %52 = vector.load %arg4[%c0_76, %c0_77] : memref<512x64xbf16, #tpu.memory_space<vmem>>, vector<512x64xbf16>
    %cst_78 = arith.constant dense<0.000000e+00> : vector<512x64xf32>
    %53 = tpu.matmul %51, %52, %cst_78 {dimension_numbers = #tpu.dot_dimension_numbers<[1], [0], [0], [1], [0, 0, 1, 1], [], []>} : vector<512x512xbf16>, vector<512x64xbf16>, vector<512x64xf32> -> vector<512x64xf32>
    %c0_79 = arith.constant 0 : index
    %c0_80 = arith.constant 0 : index
    %54 = vector.load %arg5[%c0_79, %c0_80] : memref<1x64xf32, #tpu.memory_space<vmem>>, vector<1x64xf32>
    %55 = vector.broadcast %54 : vector<1x64xf32> to vector<512x64xf32>
    %56 = arith.addf %53, %55 : vector<512x64xf32>
    %cst_81 = arith.constant 0.000000e+00 : f32
    %57 = vector.broadcast %cst_81 : f32 to vector<512x64xf32>
    %58 = arith.maximumf %56, %57 : vector<512x64xf32>
    %59 = vector.shape_cast %58 : vector<512x64xf32> to vector<4x2x4x2x8x64xf32>
    %60 = vector.extract_strided_slice %59 {offsets = [0, 1, 0, 1, 0, 0], sizes = [4, 1, 4, 1, 8, 64], strides = [1, 1, 1, 1, 1, 1]} : vector<4x2x4x2x8x64xf32> to vector<4x1x4x1x8x64xf32>
    %61 = vector.shape_cast %60 : vector<4x1x4x1x8x64xf32> to vector<4x4x8x64xf32>
    %c1_82 = arith.constant 1 : index
    %c1_83 = arith.constant 1 : index
    %c0_84 = arith.constant 0 : index
    %c0_85 = arith.constant 0 : index
    %62 = vector.load %arg14[%c1_82, %c1_83, %c0_84, %c0_85] : memref<5x5x8x256xf32, #tpu.memory_space<vmem>>, vector<4x4x8x64xf32>
    tpu.vector_store %arg14[%c1_82, %c1_83, %c0_84, %c0_85], %61 {strides = array<i32>} : memref<5x5x8x256xf32, #tpu.memory_space<vmem>>, vector<4x4x8x64xf32>,
    %63 = vector.extract_strided_slice %59 {offsets = [0, 1, 0, 0, 0, 0], sizes = [4, 1, 4, 1, 8, 64], strides = [1, 1, 1, 1, 1, 1]} : vector<4x2x4x2x8x64xf32> to vector<4x1x4x1x8x64xf32>
    %64 = vector.shape_cast %63 : vector<4x1x4x1x8x64xf32> to vector<4x4x8x64xf32>
    %c1_86 = arith.constant 1 : index
    %c0_87 = arith.constant 0 : index
    %c0_88 = arith.constant 0 : index
    %c64_89 = arith.constant 64 : index
    %65 = vector.load %arg14[%c1_86, %c0_87, %c0_88, %c64_89] : memref<5x5x8x256xf32, #tpu.memory_space<vmem>>, vector<4x4x8x64xf32>
    tpu.vector_store %arg14[%c1_86, %c0_87, %c0_88, %c64_89], %64 {strides = array<i32>} : memref<5x5x8x256xf32, #tpu.memory_space<vmem>>, vector<4x4x8x64xf32>,
    %66 = vector.extract_strided_slice %59 {offsets = [0, 0, 0, 1, 0, 0], sizes = [4, 1, 4, 1, 8, 64], strides = [1, 1, 1, 1, 1, 1]} : vector<4x2x4x2x8x64xf32> to vector<4x1x4x1x8x64xf32>
    %67 = vector.shape_cast %66 : vector<4x1x4x1x8x64xf32> to vector<4x4x8x64xf32>
    %c0_90 = arith.constant 0 : index
    %c1_91 = arith.constant 1 : index
    %c0_92 = arith.constant 0 : index
    %c128_93 = arith.constant 128 : index
    %68 = vector.load %arg14[%c0_90, %c1_91, %c0_92, %c128_93] : memref<5x5x8x256xf32, #tpu.memory_space<vmem>>, vector<4x4x8x64xf32>
    tpu.vector_store %arg14[%c0_90, %c1_91, %c0_92, %c128_93], %67 {strides = array<i32>} : memref<5x5x8x256xf32, #tpu.memory_space<vmem>>, vector<4x4x8x64xf32>,
    %69 = vector.extract_strided_slice %59 {offsets = [0, 0, 0, 0, 0, 0], sizes = [4, 1, 4, 1, 8, 64], strides = [1, 1, 1, 1, 1, 1]} : vector<4x2x4x2x8x64xf32> to vector<4x1x4x1x8x64xf32>
    %70 = vector.shape_cast %69 : vector<4x1x4x1x8x64xf32> to vector<4x4x8x64xf32>
    %c0_94 = arith.constant 0 : index
    %c0_95 = arith.constant 0 : index
    %c0_96 = arith.constant 0 : index
    %c192 = arith.constant 192 : index
    %71 = vector.load %arg14[%c0_94, %c0_95, %c0_96, %c192] : memref<5x5x8x256xf32, #tpu.memory_space<vmem>>, vector<4x4x8x64xf32>
    tpu.vector_store %arg14[%c0_94, %c0_95, %c0_96, %c192], %70 {strides = array<i32>} : memref<5x5x8x256xf32, #tpu.memory_space<vmem>>, vector<4x4x8x64xf32>,
    %c0_97 = arith.constant 0 : index
    %c0_98 = arith.constant 0 : index
    %c0_99 = arith.constant 0 : index
    %c0_100 = arith.constant 0 : index
    %72 = vector.load %arg14[%c0_97, %c0_98, %c0_99, %c0_100] : memref<5x5x8x256xf32, #tpu.memory_space<vmem>>, vector<4x4x8x256xf32>
    %73 = vector.shape_cast %72 : vector<4x4x8x256xf32> to vector<128x256xf32>
    %74 = arith.truncf %73 : vector<128x256xf32> to vector<128x256xbf16>
    %c0_101 = arith.constant 0 : index
    %c0_102 = arith.constant 0 : index
    %75 = vector.load %arg16[%c0_101, %c0_102] : memref<128x1024xbf16, #tpu.memory_space<vmem>>, vector<128x256xbf16>
    tpu.vector_store %arg16[%c0_101, %c0_102], %74 {strides = array<i32>} : memref<128x1024xbf16, #tpu.memory_space<vmem>>, vector<128x256xbf16>,
    %c0_103 = arith.constant 0 : index
    %c1_104 = arith.constant 1 : index
    %c0_105 = arith.constant 0 : index
    %c0_106 = arith.constant 0 : index
    %76 = vector.load %arg14[%c0_103, %c1_104, %c0_105, %c0_106] : memref<5x5x8x256xf32, #tpu.memory_space<vmem>>, vector<4x4x8x256xf32>
    %77 = vector.shape_cast %76 : vector<4x4x8x256xf32> to vector<128x256xf32>
    %78 = arith.truncf %77 : vector<128x256xf32> to vector<128x256xbf16>
    %c0_107 = arith.constant 0 : index
    %c256_108 = arith.constant 256 : index
    %79 = vector.load %arg16[%c0_107, %c256_108] : memref<128x1024xbf16, #tpu.memory_space<vmem>>, vector<128x256xbf16>
    tpu.vector_store %arg16[%c0_107, %c256_108], %78 {strides = array<i32>} : memref<128x1024xbf16, #tpu.memory_space<vmem>>, vector<128x256xbf16>,
    %c1_109 = arith.constant 1 : index
    %c0_110 = arith.constant 0 : index
    %c0_111 = arith.constant 0 : index
    %c0_112 = arith.constant 0 : index
    %80 = vector.load %arg14[%c1_109, %c0_110, %c0_111, %c0_112] : memref<5x5x8x256xf32, #tpu.memory_space<vmem>>, vector<4x4x8x256xf32>
    %81 = vector.shape_cast %80 : vector<4x4x8x256xf32> to vector<128x256xf32>
    %82 = arith.truncf %81 : vector<128x256xf32> to vector<128x256xbf16>
    %c0_113 = arith.constant 0 : index
    %c512 = arith.constant 512 : index
    %83 = vector.load %arg16[%c0_113, %c512] : memref<128x1024xbf16, #tpu.memory_space<vmem>>, vector<128x256xbf16>
    tpu.vector_store %arg16[%c0_113, %c512], %82 {strides = array<i32>} : memref<128x1024xbf16, #tpu.memory_space<vmem>>, vector<128x256xbf16>,
    %c1_114 = arith.constant 1 : index
    %c1_115 = arith.constant 1 : index
    %c0_116 = arith.constant 0 : index
    %c0_117 = arith.constant 0 : index
    %84 = vector.load %arg14[%c1_114, %c1_115, %c0_116, %c0_117] : memref<5x5x8x256xf32, #tpu.memory_space<vmem>>, vector<4x4x8x256xf32>
    %85 = vector.shape_cast %84 : vector<4x4x8x256xf32> to vector<128x256xf32>
    %86 = arith.truncf %85 : vector<128x256xf32> to vector<128x256xbf16>
    %c0_118 = arith.constant 0 : index
    %c768 = arith.constant 768 : index
    %87 = vector.load %arg16[%c0_118, %c768] : memref<128x1024xbf16, #tpu.memory_space<vmem>>, vector<128x256xbf16>
    tpu.vector_store %arg16[%c0_118, %c768], %86 {strides = array<i32>} : memref<128x1024xbf16, #tpu.memory_space<vmem>>, vector<128x256xbf16>,
    %c0_119 = arith.constant 0 : index
    %c0_120 = arith.constant 0 : index
    %88 = vector.load %arg16[%c0_119, %c0_120] : memref<128x1024xbf16, #tpu.memory_space<vmem>>, vector<128x1024xbf16>
    %c0_121 = arith.constant 0 : index
    %c0_122 = arith.constant 0 : index
    %89 = vector.load %arg6[%c0_121, %c0_122] : memref<1024x64xbf16, #tpu.memory_space<vmem>>, vector<1024x64xbf16>
    %cst_123 = arith.constant dense<0.000000e+00> : vector<128x64xf32>
    %90 = tpu.matmul %88, %89, %cst_123 {dimension_numbers = #tpu.dot_dimension_numbers<[1], [0], [0], [1], [0, 0, 1, 1], [], []>} : vector<128x1024xbf16>, vector<1024x64xbf16>, vector<128x64xf32> -> vector<128x64xf32>
    %c0_124 = arith.constant 0 : index
    %c0_125 = arith.constant 0 : index
    %91 = vector.load %arg7[%c0_124, %c0_125] : memref<1x64xf32, #tpu.memory_space<vmem>>, vector<1x64xf32>
    %92 = vector.broadcast %91 : vector<1x64xf32> to vector<128x64xf32>
    %93 = arith.addf %90, %92 : vector<128x64xf32>
    %cst_126 = arith.constant 0.000000e+00 : f32
    %94 = vector.broadcast %cst_126 : f32 to vector<128x64xf32>
    %95 = arith.maximumf %93, %94 : vector<128x64xf32>
    %96 = vector.extract_strided_slice %95 {offsets = [0, 0], sizes = [8, 64], strides = [1, 1]} : vector<128x64xf32> to vector<8x64xf32>
    %c0_127 = arith.constant 0 : index
    %c0_128 = arith.constant 0 : index
    %97 = vector.load %arg17[%c0_127, %c0_128] : memref<8x1024xf32, #tpu.memory_space<vmem>>, vector<8x64xf32>
    tpu.vector_store %arg17[%c0_127, %c0_128], %96 {strides = array<i32>} : memref<8x1024xf32, #tpu.memory_space<vmem>>, vector<8x64xf32>,
    %98 = vector.extract_strided_slice %95 {offsets = [8, 0], sizes = [8, 64], strides = [1, 1]} : vector<128x64xf32> to vector<8x64xf32>
    %c0_129 = arith.constant 0 : index
    %c64_130 = arith.constant 64 : index
    %99 = vector.load %arg17[%c0_129, %c64_130] : memref<8x1024xf32, #tpu.memory_space<vmem>>, vector<8x64xf32>
    tpu.vector_store %arg17[%c0_129, %c64_130], %98 {strides = array<i32>} : memref<8x1024xf32, #tpu.memory_space<vmem>>, vector<8x64xf32>,
    %100 = vector.extract_strided_slice %95 {offsets = [16, 0], sizes = [8, 64], strides = [1, 1]} : vector<128x64xf32> to vector<8x64xf32>
    %c0_131 = arith.constant 0 : index
    %c128_132 = arith.constant 128 : index
    %101 = vector.load %arg17[%c0_131, %c128_132] : memref<8x1024xf32, #tpu.memory_space<vmem>>, vector<8x64xf32>
    tpu.vector_store %arg17[%c0_131, %c128_132], %100 {strides = array<i32>} : memref<8x1024xf32, #tpu.memory_space<vmem>>, vector<8x64xf32>,
    %102 = vector.extract_strided_slice %95 {offsets = [24, 0], sizes = [8, 64], strides = [1, 1]} : vector<128x64xf32> to vector<8x64xf32>
    %c0_133 = arith.constant 0 : index
    %c192_134 = arith.constant 192 : index
    %103 = vector.load %arg17[%c0_133, %c192_134] : memref<8x1024xf32, #tpu.memory_space<vmem>>, vector<8x64xf32>
    tpu.vector_store %arg17[%c0_133, %c192_134], %102 {strides = array<i32>} : memref<8x1024xf32, #tpu.memory_space<vmem>>, vector<8x64xf32>,
    %104 = vector.extract_strided_slice %95 {offsets = [32, 0], sizes = [8, 64], strides = [1, 1]} : vector<128x64xf32> to vector<8x64xf32>
    %c0_135 = arith.constant 0 : index
    %c256_136 = arith.constant 256 : index
    %105 = vector.load %arg17[%c0_135, %c256_136] : memref<8x1024xf32, #tpu.memory_space<vmem>>, vector<8x64xf32>
    tpu.vector_store %arg17[%c0_135, %c256_136], %104 {strides = array<i32>} : memref<8x1024xf32, #tpu.memory_space<vmem>>, vector<8x64xf32>,
    %106 = vector.extract_strided_slice %95 {offsets = [40, 0], sizes = [8, 64], strides = [1, 1]} : vector<128x64xf32> to vector<8x64xf32>
    %c0_137 = arith.constant 0 : index
    %c320 = arith.constant 320 : index
    %107 = vector.load %arg17[%c0_137, %c320] : memref<8x1024xf32, #tpu.memory_space<vmem>>, vector<8x64xf32>
    tpu.vector_store %arg17[%c0_137, %c320], %106 {strides = array<i32>} : memref<8x1024xf32, #tpu.memory_space<vmem>>, vector<8x64xf32>,
    %108 = vector.extract_strided_slice %95 {offsets = [48, 0], sizes = [8, 64], strides = [1, 1]} : vector<128x64xf32> to vector<8x64xf32>
    %c0_138 = arith.constant 0 : index
    %c384_139 = arith.constant 384 : index
    %109 = vector.load %arg17[%c0_138, %c384_139] : memref<8x1024xf32, #tpu.memory_space<vmem>>, vector<8x64xf32>
    tpu.vector_store %arg17[%c0_138, %c384_139], %108 {strides = array<i32>} : memref<8x1024xf32, #tpu.memory_space<vmem>>, vector<8x64xf32>,
    %110 = vector.extract_strided_slice %95 {offsets = [56, 0], sizes = [8, 64], strides = [1, 1]} : vector<128x64xf32> to vector<8x64xf32>
    %c0_140 = arith.constant 0 : index
    %c448 = arith.constant 448 : index
    %111 = vector.load %arg17[%c0_140, %c448] : memref<8x1024xf32, #tpu.memory_space<vmem>>, vector<8x64xf32>
    tpu.vector_store %arg17[%c0_140, %c448], %110 {strides = array<i32>} : memref<8x1024xf32, #tpu.memory_space<vmem>>, vector<8x64xf32>,
    %112 = vector.extract_strided_slice %95 {offsets = [64, 0], sizes = [8, 64], strides = [1, 1]} : vector<128x64xf32> to vector<8x64xf32>
    %c0_141 = arith.constant 0 : index
    %c512_142 = arith.constant 512 : index
    %113 = vector.load %arg17[%c0_141, %c512_142] : memref<8x1024xf32, #tpu.memory_space<vmem>>, vector<8x64xf32>
    tpu.vector_store %arg17[%c0_141, %c512_142], %112 {strides = array<i32>} : memref<8x1024xf32, #tpu.memory_space<vmem>>, vector<8x64xf32>,
    %114 = vector.extract_strided_slice %95 {offsets = [72, 0], sizes = [8, 64], strides = [1, 1]} : vector<128x64xf32> to vector<8x64xf32>
    %c0_143 = arith.constant 0 : index
    %c576 = arith.constant 576 : index
    %115 = vector.load %arg17[%c0_143, %c576] : memref<8x1024xf32, #tpu.memory_space<vmem>>, vector<8x64xf32>
    tpu.vector_store %arg17[%c0_143, %c576], %114 {strides = array<i32>} : memref<8x1024xf32, #tpu.memory_space<vmem>>, vector<8x64xf32>,
    %116 = vector.extract_strided_slice %95 {offsets = [80, 0], sizes = [8, 64], strides = [1, 1]} : vector<128x64xf32> to vector<8x64xf32>
    %c0_144 = arith.constant 0 : index
    %c640 = arith.constant 640 : index
    %117 = vector.load %arg17[%c0_144, %c640] : memref<8x1024xf32, #tpu.memory_space<vmem>>, vector<8x64xf32>
    tpu.vector_store %arg17[%c0_144, %c640], %116 {strides = array<i32>} : memref<8x1024xf32, #tpu.memory_space<vmem>>, vector<8x64xf32>,
    %118 = vector.extract_strided_slice %95 {offsets = [88, 0], sizes = [8, 64], strides = [1, 1]} : vector<128x64xf32> to vector<8x64xf32>
    %c0_145 = arith.constant 0 : index
    %c704 = arith.constant 704 : index
    %119 = vector.load %arg17[%c0_145, %c704] : memref<8x1024xf32, #tpu.memory_space<vmem>>, vector<8x64xf32>
    tpu.vector_store %arg17[%c0_145, %c704], %118 {strides = array<i32>} : memref<8x1024xf32, #tpu.memory_space<vmem>>, vector<8x64xf32>,
    %120 = vector.extract_strided_slice %95 {offsets = [96, 0], sizes = [8, 64], strides = [1, 1]} : vector<128x64xf32> to vector<8x64xf32>
    %c0_146 = arith.constant 0 : index
    %c768_147 = arith.constant 768 : index
    %121 = vector.load %arg17[%c0_146, %c768_147] : memref<8x1024xf32, #tpu.memory_space<vmem>>, vector<8x64xf32>
    tpu.vector_store %arg17[%c0_146, %c768_147], %120 {strides = array<i32>} : memref<8x1024xf32, #tpu.memory_space<vmem>>, vector<8x64xf32>,
    %122 = vector.extract_strided_slice %95 {offsets = [104, 0], sizes = [8, 64], strides = [1, 1]} : vector<128x64xf32> to vector<8x64xf32>
    %c0_148 = arith.constant 0 : index
    %c832 = arith.constant 832 : index
    %123 = vector.load %arg17[%c0_148, %c832] : memref<8x1024xf32, #tpu.memory_space<vmem>>, vector<8x64xf32>
    tpu.vector_store %arg17[%c0_148, %c832], %122 {strides = array<i32>} : memref<8x1024xf32, #tpu.memory_space<vmem>>, vector<8x64xf32>,
    %124 = vector.extract_strided_slice %95 {offsets = [112, 0], sizes = [8, 64], strides = [1, 1]} : vector<128x64xf32> to vector<8x64xf32>
    %c0_149 = arith.constant 0 : index
    %c896 = arith.constant 896 : index
    %125 = vector.load %arg17[%c0_149, %c896] : memref<8x1024xf32, #tpu.memory_space<vmem>>, vector<8x64xf32>
    tpu.vector_store %arg17[%c0_149, %c896], %124 {strides = array<i32>} : memref<8x1024xf32, #tpu.memory_space<vmem>>, vector<8x64xf32>,
    %126 = vector.extract_strided_slice %95 {offsets = [120, 0], sizes = [8, 64], strides = [1, 1]} : vector<128x64xf32> to vector<8x64xf32>
    %c0_150 = arith.constant 0 : index
    %c960 = arith.constant 960 : index
    %127 = vector.load %arg17[%c0_150, %c960] : memref<8x1024xf32, #tpu.memory_space<vmem>>, vector<8x64xf32>
    tpu.vector_store %arg17[%c0_150, %c960], %126 {strides = array<i32>} : memref<8x1024xf32, #tpu.memory_space<vmem>>, vector<8x64xf32>,
    %c0_151 = arith.constant 0 : index
    %c0_152 = arith.constant 0 : index
    %128 = vector.load %arg17[%c0_151, %c0_152] : memref<8x1024xf32, #tpu.memory_space<vmem>>, vector<8x1024xf32>
    %129 = arith.truncf %128 : vector<8x1024xf32> to vector<8x1024xbf16>
    %c0_153 = arith.constant 0 : index
    %c0_154 = arith.constant 0 : index
    %130 = vector.load %arg8[%c0_153, %c0_154] : memref<1024x256xbf16, #tpu.memory_space<vmem>>, vector<1024x256xbf16>
    %cst_155 = arith.constant dense<0.000000e+00> : vector<8x256xf32>
    %131 = tpu.matmul %129, %130, %cst_155 {dimension_numbers = #tpu.dot_dimension_numbers<[1], [0], [0], [1], [0, 0, 1, 1], [], []>} : vector<8x1024xbf16>, vector<1024x256xbf16>, vector<8x256xf32> -> vector<8x256xf32>
    %c0_156 = arith.constant 0 : index
    %c0_157 = arith.constant 0 : index
    %132 = vector.load %arg9[%c0_156, %c0_157] : memref<1x256xf32, #tpu.memory_space<vmem>>, vector<1x256xf32>
    %133 = vector.broadcast %132 : vector<1x256xf32> to vector<8x256xf32>
    %134 = arith.addf %131, %133 : vector<8x256xf32>
    %cst_158 = arith.constant 0.000000e+00 : f32
    %135 = vector.broadcast %cst_158 : f32 to vector<8x256xf32>
    %136 = arith.maximumf %134, %135 : vector<8x256xf32>
    %137 = arith.truncf %136 : vector<8x256xf32> to vector<8x256xbf16>
    %c0_159 = arith.constant 0 : index
    %c0_160 = arith.constant 0 : index
    %138 = vector.load %arg10[%c0_159, %c0_160] : memref<256x128xbf16, #tpu.memory_space<vmem>>, vector<256x128xbf16>
    %cst_161 = arith.constant dense<0.000000e+00> : vector<8x128xf32>
    %139 = tpu.matmul %137, %138, %cst_161 {dimension_numbers = #tpu.dot_dimension_numbers<[1], [0], [0], [1], [0, 0, 1, 1], [], []>} : vector<8x256xbf16>, vector<256x128xbf16>, vector<8x128xf32> -> vector<8x128xf32>
    %c0_162 = arith.constant 0 : index
    %c0_163 = arith.constant 0 : index
    %140 = vector.load %arg11[%c0_162, %c0_163] : memref<1x128xf32, #tpu.memory_space<vmem>>, vector<1x128xf32>
    %141 = vector.broadcast %140 : vector<1x128xf32> to vector<8x128xf32>
    %142 = arith.addf %139, %141 : vector<8x128xf32>
    %c0_164 = arith.constant 0 : index
    %c0_165 = arith.constant 0 : index
    %143 = vector.load %arg12[%c0_164, %c0_165] : memref<8x128xf32, #tpu.memory_space<vmem>>, vector<8x128xf32>
    tpu.vector_store %arg12[%c0_164, %c0_165], %142 {strides = array<i32>} : memref<8x128xf32, #tpu.memory_space<vmem>>, vector<8x128xf32>,
    return
  }
  func.func @transform_0(%arg0: i32) -> (i32, i32, i32) {
    %c0_i32 = arith.constant 0 : i32
    %c0_i32_0 = arith.constant 0 : i32
    %c0_i32_1 = arith.constant 0 : i32
    return %c0_i32, %arg0, %c0_i32_0 : i32, i32, i32
  }
  func.func @transform_1(%arg0: i32) -> (i32, i32) {
    %c0_i32 = arith.constant 0 : i32
    %c0_i32_0 = arith.constant 0 : i32
    %c0_i32_1 = arith.constant 0 : i32
    return %c0_i32, %c0_i32_0 : i32, i32
  }
  func.func @transform_2(%arg0: i32) -> (i32, i32) {
    %c0_i32 = arith.constant 0 : i32
    %c0_i32_0 = arith.constant 0 : i32
    %c0_i32_1 = arith.constant 0 : i32
    return %c0_i32, %c0_i32_0 : i32, i32
  }
  func.func @transform_3(%arg0: i32) -> (i32, i32) {
    %c0_i32 = arith.constant 0 : i32
    %c0_i32_0 = arith.constant 0 : i32
    %c0_i32_1 = arith.constant 0 : i32
    return %c0_i32, %c0_i32_0 : i32, i32
  }
  func.func @transform_4(%arg0: i32) -> (i32, i32) {
    %c0_i32 = arith.constant 0 : i32
    %c0_i32_0 = arith.constant 0 : i32
    %c0_i32_1 = arith.constant 0 : i32
    return %c0_i32, %c0_i32_0 : i32, i32
  }
  func.func @transform_5(%arg0: i32) -> (i32, i32) {
    %c0_i32 = arith.constant 0 : i32
    %c0_i32_0 = arith.constant 0 : i32
    %c0_i32_1 = arith.constant 0 : i32
    return %c0_i32, %c0_i32_0 : i32, i32
  }
  func.func @transform_6(%arg0: i32) -> (i32, i32) {
    %c0_i32 = arith.constant 0 : i32
    %c0_i32_0 = arith.constant 0 : i32
    %c0_i32_1 = arith.constant 0 : i32
    return %c0_i32, %c0_i32_0 : i32, i32
  }
  func.func @transform_7(%arg0: i32) -> (i32, i32) {
    %c0_i32 = arith.constant 0 : i32
    %c0_i32_0 = arith.constant 0 : i32
    %c0_i32_1 = arith.constant 0 : i32
    return %c0_i32, %c0_i32_0 : i32, i32
  }
  func.func @transform_8(%arg0: i32) -> (i32, i32) {
    %c0_i32 = arith.constant 0 : i32
    %c0_i32_0 = arith.constant 0 : i32
    %c0_i32_1 = arith.constant 0 : i32
    return %c0_i32, %c0_i32_0 : i32, i32
  }
  func.func @transform_9(%arg0: i32) -> (i32, i32) {
    %c0_i32 = arith.constant 0 : i32
    %c0_i32_0 = arith.constant 0 : i32
    %c0_i32_1 = arith.constant 0 : i32
    return %c0_i32, %c0_i32_0 : i32, i32
  }
  func.func @transform_10(%arg0: i32) -> (i32, i32) {
    %c0_i32 = arith.constant 0 : i32
    %c0_i32_0 = arith.constant 0 : i32
    %c0_i32_1 = arith.constant 0 : i32
    return %c0_i32, %c0_i32_0 : i32, i32
  }
  func.func @transform_11(%arg0: i32) -> (i32, i32) {
    %c0_i32 = arith.constant 0 : i32
    %c0_i32_0 = arith.constant 0 : i32
    return %arg0, %c0_i32 : i32, i32
  }
}

</mosaic_0001>

<llo_original>
// kernel: mlp_forward.1
$region0: #{mlp_forward.1}
  #allocation0 [shape = 'u32[]', space=smem, size = 0x4, offset = 0x4, fixed_abs, tag = 'smem constant byte address 0x4 - core index']
  #allocation1 [shape = 'u32[72,128]{1,0:T(1,128)}', space=vmem, size = 0x9000, scoped, tag = 'internal scratch']
  #allocation2 [shape = 'f32[9,9,8,128]{3,2,1,0:T(8,128)}', space=vmem, size = 0x51000, scoped, tag = 'scratch operand']
  #allocation3 [shape = 'f32[5,5,8,256]{3,2,1,0:T(8,128)}', space=vmem, size = 0x32000, scoped, tag = 'scratch operand']
  #allocation4 [shape = 'bf16[512,512]{1,0:T(8,128)(2,1)}', space=vmem, size = 0x80000, scoped, tag = 'scratch operand']
  #allocation5 [shape = 'bf16[128,1024]{1,0:T(8,128)(2,1)}', space=vmem, size = 0x40000, scoped, tag = 'scratch operand']
  #allocation6 [shape = 'f32[8,1024]{1,0:T(8,128)}', space=vmem, size = 0x8000, scoped, tag = 'scratch operand']
  %s0 = inlined_call_operand.vmem [shape: f32[256,8,16], index: 0, kind: input, shape index: {}]
  %s1 = inlined_call_operand.vmem [shape: bf16[16,32], index: 1, kind: input, shape index: {}]
  %s2 = inlined_call_operand.vmem [shape: f32[1,32], index: 2, kind: input, shape index: {}]
  %s3 = inlined_call_operand.vmem [shape: bf16[512,64], index: 3, kind: input, shape index: {}]
  %s4 = inlined_call_operand.vmem [shape: f32[1,64], index: 4, kind: input, shape index: {}]
  %s5 = inlined_call_operand.vmem [shape: bf16[1024,64], index: 5, kind: input, shape index: {}]
  %s6 = inlined_call_operand.vmem [shape: f32[1,64], index: 6, kind: input, shape index: {}]
  %s7 = inlined_call_operand.vmem [shape: bf16[1024,256], index: 7, kind: input, shape index: {}]
  %s8 = inlined_call_operand.vmem [shape: f32[1,256], index: 8, kind: input, shape index: {}]
  %s9 = inlined_call_operand.vmem [shape: bf16[256,128], index: 9, kind: input, shape index: {}]
  %s10 = inlined_call_operand.vmem [shape: f32[1,128], index: 10, kind: input, shape index: {}]
  %s11 = inlined_call_operand.vmem [shape: f32[8,128], index: 11, kind: output, shape index: {}]
  %s12 = sld [smem:[#allocation0]]
  $region54: #{mlp_forward.1} parent=0
    _
  %s14 = ssub.s32 1, %s12
  %s15 = scalar_select 0, %s14, %s12
  // Predicated region
  $region2: #{mlp_forward.1} parent=0 // pred_check
    _
  $region3: #{mlp_forward.1} parent=0 // pred_check_branch
    %17 = sbr.rel (0) target = $region5
  $region4: #{mlp_forward.1} parent=0 // pred_region
    _
  $region5: #{mlp_forward.1} parent=0 // pred_fallthru
    _
  // Predicated region
  $region6: #{mlp_forward.1} parent=0 // pred_check
    _
  $region7: #{mlp_forward.1} parent=0 // pred_check_branch
    %19 = sbr.rel (0) target = $region9
  $region8: #{mlp_forward.1} parent=0 // pred_region
    _
  $region9: #{mlp_forward.1} parent=0 // pred_fallthru
    _
  // Predicated region
  $region10: #{mlp_forward.1} parent=0 // pred_check
    _
  $region11: #{mlp_forward.1} parent=0 // pred_check_branch
    %21 = sbr.rel (0) target = $region13
  $region12: #{mlp_forward.1} parent=0 // pred_region
    _
  $region13: #{mlp_forward.1} parent=0 // pred_fallthru
    _
  // Predicated region
  $region14: #{mlp_forward.1} parent=0 // pred_check
    _
  $region15: #{mlp_forward.1} parent=0 // pred_check_branch
    %23 = sbr.rel (0) target = $region17
  $region16: #{mlp_forward.1} parent=0 // pred_region
    _
  $region17: #{mlp_forward.1} parent=0 // pred_fallthru
    _
  // Predicated region
  $region18: #{mlp_forward.1} parent=0 // pred_check
    _
  $region19: #{mlp_forward.1} parent=0 // pred_check_branch
    %25 = sbr.rel (0) target = $region21
  $region20: #{mlp_forward.1} parent=0 // pred_region
    _
  $region21: #{mlp_forward.1} parent=0 // pred_fallthru
    _
  // Predicated region
  $region22: #{mlp_forward.1} parent=0 // pred_check
    _
  $region23: #{mlp_forward.1} parent=0 // pred_check_branch
    %27 = sbr.rel (0) target = $region25
  $region24: #{mlp_forward.1} parent=0 // pred_region
    _
  $region25: #{mlp_forward.1} parent=0 // pred_fallthru
    _
  // Predicated region
  $region26: #{mlp_forward.1} parent=0 // pred_check
    _
  $region27: #{mlp_forward.1} parent=0 // pred_check_branch
    %29 = sbr.rel (0) target = $region29
  $region28: #{mlp_forward.1} parent=0 // pred_region
    _
  $region29: #{mlp_forward.1} parent=0 // pred_fallthru
    _
  // Predicated region
  $region30: #{mlp_forward.1} parent=0 // pred_check
    _
  $region31: #{mlp_forward.1} parent=0 // pred_check_branch
    %31 = sbr.rel (0) target = $region33
  $region32: #{mlp_forward.1} parent=0 // pred_region
    _
  $region33: #{mlp_forward.1} parent=0 // pred_fallthru
    _
  // Predicated region
  $region34: #{mlp_forward.1} parent=0 // pred_check
    _
  $region35: #{mlp_forward.1} parent=0 // pred_check_branch
    %33 = sbr.rel (0) target = $region37
  $region36: #{mlp_forward.1} parent=0 // pred_region
    _
  $region37: #{mlp_forward.1} parent=0 // pred_fallthru
    _
  // Predicated region
  $region38: #{mlp_forward.1} parent=0 // pred_check
    _
  $region39: #{mlp_forward.1} parent=0 // pred_check_branch
    %35 = sbr.rel (0) target = $region41
  $region40: #{mlp_forward.1} parent=0 // pred_region
    _
  $region41: #{mlp_forward.1} parent=0 // pred_fallthru
    _
  // Predicated region
  $region42: #{mlp_forward.1} parent=0 // pred_check
    _
  $region43: #{mlp_forward.1} parent=0 // pred_check_branch
    %37 = sbr.rel (0) target = $region45
  $region44: #{mlp_forward.1} parent=0 // pred_region
    _
  $region45: #{mlp_forward.1} parent=0 // pred_fallthru
    _
  %39 = vst [vmem:[#allocation2] sm:$0xff] 0.0
  %40 = vst [vmem:[#allocation2 + $0x8] sm:$0xff] 0.0
  %41 = vst [vmem:[#allocation2 + $0x10] sm:$0xff] 0.0
  %42 = vst [vmem:[#allocation2 + $0x18] sm:$0xff] 0.0
  %43 = vst [vmem:[#allocation2 + $0x20] sm:$0xff] 0.0
  %44 = vst [vmem:[#allocation2 + $0x28] sm:$0xff] 0.0
  %45 = vst [vmem:[#allocation2 + $0x30] sm:$0xff] 0.0
  %46 = vst [vmem:[#allocation2 + $0x38] sm:$0xff] 0.0
  %47 = vst [vmem:[#allocation2 + $0x40] sm:$0xff] 0.0
  %s48 = scalar_lea.vmem [#allocation2], 576
  %49 = vst [vmem:[%s48] sm:$0xff] 0.0
  %50 = vst [vmem:[%s48 + $0x8] sm:$0xff] 0.0
  %51 = vst [vmem:[%s48 + $0x10] sm:$0xff] 0.0
  %52 = vst [vmem:[%s48 + $0x18] sm:$0xff] 0.0
  %53 = vst [vmem:[%s48 + $0x20] sm:$0xff] 0.0
  %54 = vst [vmem:[%s48 + $0x28] sm:$0xff] 0.0
  %55 = vst [vmem:[%s48 + $0x30] sm:$0xff] 0.0
  %56 = vst [vmem:[%s48 + $0x38] sm:$0xff] 0.0
  %57 = vst [vmem:[%s48 + $0x40] sm:$0xff] 0.0
  %58 = vst [vmem:[#allocation2] sm:$0xff] 0.0
  %59 = vst [vmem:[#allocation2 + $0x48] sm:$0xff] 0.0
  %60 = vst [vmem:[#allocation2 + $0x90] sm:$0xff] 0.0
  %61 = vst [vmem:[#allocation2 + $0xd8] sm:$0xff] 0.0
  %62 = vst [vmem:[#allocation2 + $0x120] sm:$0xff] 0.0
  %63 = vst [vmem:[#allocation2 + $0x168] sm:$0xff] 0.0
  %64 = vst [vmem:[#allocation2 + $0x1b0] sm:$0xff] 0.0
  %65 = vst [vmem:[#allocation2 + $0x1f8] sm:$0xff] 0.0
  %66 = vst [vmem:[#allocation2 + $0x240] sm:$0xff] 0.0
  %s67 = scalar_lea.vmem [#allocation2], 64
  %68 = vst [vmem:[%s67] sm:$0xff] 0.0
  %69 = vst [vmem:[%s67 + $0x48] sm:$0xff] 0.0
  %70 = vst [vmem:[%s67 + $0x90] sm:$0xff] 0.0
  %71 = vst [vmem:[%s67 + $0xd8] sm:$0xff] 0.0
  %72 = vst [vmem:[%s67 + $0x120] sm:$0xff] 0.0
  %73 = vst [vmem:[%s67 + $0x168] sm:$0xff] 0.0
  %74 = vst [vmem:[%s67 + $0x1b0] sm:$0xff] 0.0
  %75 = vst [vmem:[%s67 + $0x1f8] sm:$0xff] 0.0
  %76 = vst [vmem:[%s67 + $0x240] sm:$0xff] 0.0
  %77 = vst [vmem:[#allocation3] sm:$0xff] 0.0
  %78 = vst [vmem:[#allocation3 + $0x8] sm:$0xff] 0.0
  %79 = vst [vmem:[#allocation3 + $0x10] sm:$0xff] 0.0
  %80 = vst [vmem:[#allocation3 + $0x18] sm:$0xff] 0.0
  %81 = vst [vmem:[#allocation3 + $0x20] sm:$0xff] 0.0
  %82 = vst [vmem:[#allocation3 + $0x28] sm:$0xff] 0.0
  %83 = vst [vmem:[#allocation3 + $0x30] sm:$0xff] 0.0
  %84 = vst [vmem:[#allocation3 + $0x38] sm:$0xff] 0.0
  %85 = vst [vmem:[#allocation3 + $0x40] sm:$0xff] 0.0
  %86 = vst [vmem:[#allocation3 + $0x48] sm:$0xff] 0.0
  %s87 = scalar_lea.vmem [#allocation3], 320
  %88 = vst [vmem:[%s87] sm:$0xff] 0.0
  %89 = vst [vmem:[%s87 + $0x8] sm:$0xff] 0.0
  %90 = vst [vmem:[%s87 + $0x10] sm:$0xff] 0.0
  %91 = vst [vmem:[%s87 + $0x18] sm:$0xff] 0.0
  %92 = vst [vmem:[%s87 + $0x20] sm:$0xff] 0.0
  %93 = vst [vmem:[%s87 + $0x28] sm:$0xff] 0.0
  %94 = vst [vmem:[%s87 + $0x30] sm:$0xff] 0.0
  %95 = vst [vmem:[%s87 + $0x38] sm:$0xff] 0.0
  %96 = vst [vmem:[%s87 + $0x40] sm:$0xff] 0.0
  %97 = vst [vmem:[%s87 + $0x48] sm:$0xff] 0.0
  %98 = vst [vmem:[#allocation3] sm:$0xff] 0.0
  %99 = vst [vmem:[#allocation3 + $0x8] sm:$0xff] 0.0
  %100 = vst [vmem:[#allocation3 + $0x50] sm:$0xff] 0.0
  %101 = vst [vmem:[#allocation3 + $0x58] sm:$0xff] 0.0
  %102 = vst [vmem:[#allocation3 + $0xa0] sm:$0xff] 0.0
  %103 = vst [vmem:[#allocation3 + $0xa8] sm:$0xff] 0.0
  %104 = vst [vmem:[#allocation3 + $0xf0] sm:$0xff] 0.0
  %105 = vst [vmem:[#allocation3 + $0xf8] sm:$0xff] 0.0
  %106 = vst [vmem:[#allocation3 + $0x140] sm:$0xff] 0.0
  %107 = vst [vmem:[#allocation3 + $0x148] sm:$0xff] 0.0
  %s108 = scalar_lea.vmem [#allocation3], 64
  %109 = vst [vmem:[%s108] sm:$0xff] 0.0
  %110 = vst [vmem:[%s108 + $0x8] sm:$0xff] 0.0
  %111 = vst [vmem:[%s108 + $0x50] sm:$0xff] 0.0
  %112 = vst [vmem:[%s108 + $0x58] sm:$0xff] 0.0
  %113 = vst [vmem:[%s108 + $0xa0] sm:$0xff] 0.0
  %114 = vst [vmem:[%s108 + $0xa8] sm:$0xff] 0.0
  %115 = vst [vmem:[%s108 + $0xf0] sm:$0xff] 0.0
  %116 = vst [vmem:[%s108 + $0xf8] sm:$0xff] 0.0
  %117 = vst [vmem:[%s108 + $0x140] sm:$0xff] 0.0
  %118 = vst [vmem:[%s108 + $0x148] sm:$0xff] 0.0
  %v119 = vld [vmem:[%s0] sm:$0xff]
  %v120 = vld [vmem:[%s0 + $0x8] sm:$0xff]
  %v121 = vld [vmem:[%s0 + $0x10] sm:$0xff]
  %v122 = vld [vmem:[%s0 + $0x18] sm:$0xff]
  %v123 = vld [vmem:[%s0 + $0x20] sm:$0xff]
  %v124 = vld [vmem:[%s0 + $0x28] sm:$0xff]
  %v125 = vld [vmem:[%s0 + $0x30] sm:$0xff]
  %v126 = vld [vmem:[%s0 + $0x38] sm:$0xff]
  %v127 = vld [vmem:[%s0 + $0x40] sm:$0xff]
  %v128 = vld [vmem:[%s0 + $0x48] sm:$0xff]
  %v129 = vld [vmem:[%s0 + $0x50] sm:$0xff]
  %v130 = vld [vmem:[%s0 + $0x58] sm:$0xff]
  %v131 = vld [vmem:[%s0 + $0x60] sm:$0xff]
  %v132 = vld [vmem:[%s0 + $0x68] sm:$0xff]
  %v133 = vld [vmem:[%s0 + $0x70] sm:$0xff]
  %v134 = vld [vmem:[%s0 + $0x78] sm:$0xff]
  %v135 = vld [vmem:[%s0 + $0x80] sm:$0xff]
  %v136 = vld [vmem:[%s0 + $0x88] sm:$0xff]
  %v137 = vld [vmem:[%s0 + $0x90] sm:$0xff]
  %v138 = vld [vmem:[%s0 + $0x98] sm:$0xff]
  %v139 = vld [vmem:[%s0 + $0xa0] sm:$0xff]
  %v140 = vld [vmem:[%s0 + $0xa8] sm:$0xff]
  %v141 = vld [vmem:[%s0 + $0xb0] sm:$0xff]
  %v142 = vld [vmem:[%s0 + $0xb8] sm:$0xff]
  %v143 = vld [vmem:[%s0 + $0xc0] sm:$0xff]
  %v144 = vld [vmem:[%s0 + $0xc8] sm:$0xff]
  %v145 = vld [vmem:[%s0 + $0xd0] sm:$0xff]
  %v146 = vld [vmem:[%s0 + $0xd8] sm:$0xff]
  %v147 = vld [vmem:[%s0 + $0xe0] sm:$0xff]
  %v148 = vld [vmem:[%s0 + $0xe8] sm:$0xff]
  %v149 = vld [vmem:[%s0 + $0xf0] sm:$0xff]
  %v150 = vld [vmem:[%s0 + $0xf8] sm:$0xff]
  %v151 = vld [vmem:[%s0 + $0x100] sm:$0xff]
  %v152 = vld [vmem:[%s0 + $0x108] sm:$0xff]
  %v153 = vld [vmem:[%s0 + $0x110] sm:$0xff]
  %v154 = vld [vmem:[%s0 + $0x118] sm:$0xff]
  %v155 = vld [vmem:[%s0 + $0x120] sm:$0xff]
  %v156 = vld [vmem:[%s0 + $0x128] sm:$0xff]
  %v157 = vld [vmem:[%s0 + $0x130] sm:$0xff]
  %v158 = vld [vmem:[%s0 + $0x138] sm:$0xff]
  %v159 = vld [vmem:[%s0 + $0x140] sm:$0xff]
  %v160 = vld [vmem:[%s0 + $0x148] sm:$0xff]
  %v161 = vld [vmem:[%s0 + $0x150] sm:$0xff]
  %v162 = vld [vmem:[%s0 + $0x158] sm:$0xff]
  %v163 = vld [vmem:[%s0 + $0x160] sm:$0xff]
  %v164 = vld [vmem:[%s0 + $0x168] sm:$0xff]
  %v165 = vld [vmem:[%s0 + $0x170] sm:$0xff]
  %v166 = vld [vmem:[%s0 + $0x178] sm:$0xff]
  %v167 = vld [vmem:[%s0 + $0x180] sm:$0xff]
  %v168 = vld [vmem:[%s0 + $0x188] sm:$0xff]
  %v169 = vld [vmem:[%s0 + $0x190] sm:$0xff]
  %v170 = vld [vmem:[%s0 + $0x198] sm:$0xff]
  %v171 = vld [vmem:[%s0 + $0x1a0] sm:$0xff]
  %v172 = vld [vmem:[%s0 + $0x1a8] sm:$0xff]
  %v173 = vld [vmem:[%s0 + $0x1b0] sm:$0xff]
  %v174 = vld [vmem:[%s0 + $0x1b8] sm:$0xff]
  %v175 = vld [vmem:[%s0 + $0x1c0] sm:$0xff]
  %v176 = vld [vmem:[%s0 + $0x1c8] sm:$0xff]
  %v177 = vld [vmem:[%s0 + $0x1d0] sm:$0xff]
  %v178 = vld [vmem:[%s0 + $0x1d8] sm:$0xff]
  %v179 = vld [vmem:[%s0 + $0x1e0] sm:$0xff]
  %v180 = vld [vmem:[%s0 + $0x1e8] sm:$0xff]
  %v181 = vld [vmem:[%s0 + $0x1f0] sm:$0xff]
  %v182 = vld [vmem:[%s0 + $0x1f8] sm:$0xff]
  %v183 = vld [vmem:[%s0 + $0x200] sm:$0xff]
  %v184 = vld [vmem:[%s0 + $0x208] sm:$0xff]
  %v185 = vld [vmem:[%s0 + $0x210] sm:$0xff]
  %v186 = vld [vmem:[%s0 + $0x218] sm:$0xff]
  %v187 = vld [vmem:[%s0 + $0x220] sm:$0xff]
  %v188 = vld [vmem:[%s0 + $0x228] sm:$0xff]
  %v189 = vld [vmem:[%s0 + $0x230] sm:$0xff]
  %v190 = vld [vmem:[%s0 + $0x238] sm:$0xff]
  %v191 = vld [vmem:[%s0 + $0x240] sm:$0xff]
  %v192 = vld [vmem:[%s0 + $0x248] sm:$0xff]
  %v193 = vld [vmem:[%s0 + $0x250] sm:$0xff]
  %v194 = vld [vmem:[%s0 + $0x258] sm:$0xff]
  %v195 = vld [vmem:[%s0 + $0x260] sm:$0xff]
  %v196 = vld [vmem:[%s0 + $0x268] sm:$0xff]
  %v197 = vld [vmem:[%s0 + $0x270] sm:$0xff]
  %v198 = vld [vmem:[%s0 + $0x278] sm:$0xff]
  %v199 = vld [vmem:[%s0 + $0x280] sm:$0xff]
  %v200 = vld [vmem:[%s0 + $0x288] sm:$0xff]
  %v201 = vld [vmem:[%s0 + $0x290] sm:$0xff]
  %v202 = vld [vmem:[%s0 + $0x298] sm:$0xff]
  %v203 = vld [vmem:[%s0 + $0x2a0] sm:$0xff]
  %v204 = vld [vmem:[%s0 + $0x2a8] sm:$0xff]
  %v205 = vld [vmem:[%s0 + $0x2b0] sm:$0xff]
  %v206 = vld [vmem:[%s0 + $0x2b8] sm:$0xff]
  %v207 = vld [vmem:[%s0 + $0x2c0] sm:$0xff]
  %v208 = vld [vmem:[%s0 + $0x2c8] sm:$0xff]
  %v209 = vld [vmem:[%s0 + $0x2d0] sm:$0xff]
  %v210 = vld [vmem:[%s0 + $0x2d8] sm:$0xff]
  %v211 = vld [vmem:[%s0 + $0x2e0] sm:$0xff]
  %v212 = vld [vmem:[%s0 + $0x2e8] sm:$0xff]
  %v213 = vld [vmem:[%s0 + $0x2f0] sm:$0xff]
  %v214 = vld [vmem:[%s0 + $0x2f8] sm:$0xff]
  %v215 = vld [vmem:[%s0 + $0x300] sm:$0xff]
  %v216 = vld [vmem:[%s0 + $0x308] sm:$0xff]
  %v217 = vld [vmem:[%s0 + $0x310] sm:$0xff]
  %v218 = vld [vmem:[%s0 + $0x318] sm:$0xff]
  %v219 = vld [vmem:[%s0 + $0x320] sm:$0xff]
  %v220 = vld [vmem:[%s0 + $0x328] sm:$0xff]
  %v221 = vld [vmem:[%s0 + $0x330] sm:$0xff]
  %v222 = vld [vmem:[%s0 + $0x338] sm:$0xff]
  %v223 = vld [vmem:[%s0 + $0x340] sm:$0xff]
  %v224 = vld [vmem:[%s0 + $0x348] sm:$0xff]
  %v225 = vld [vmem:[%s0 + $0x350] sm:$0xff]
  %v226 = vld [vmem:[%s0 + $0x358] sm:$0xff]
  %v227 = vld [vmem:[%s0 + $0x360] sm:$0xff]
  %v228 = vld [vmem:[%s0 + $0x368] sm:$0xff]
  %v229 = vld [vmem:[%s0 + $0x370] sm:$0xff]
  %v230 = vld [vmem:[%s0 + $0x378] sm:$0xff]
  %v231 = vld [vmem:[%s0 + $0x380] sm:$0xff]
  %v232 = vld [vmem:[%s0 + $0x388] sm:$0xff]
  %v233 = vld [vmem:[%s0 + $0x390] sm:$0xff]
  %v234 = vld [vmem:[%s0 + $0x398] sm:$0xff]
  %v235 = vld [vmem:[%s0 + $0x3a0] sm:$0xff]
  %v236 = vld [vmem:[%s0 + $0x3a8] sm:$0xff]
  %v237 = vld [vmem:[%s0 + $0x3b0] sm:$0xff]
  %v238 = vld [vmem:[%s0 + $0x3b8] sm:$0xff]
  %v239 = vld [vmem:[%s0 + $0x3c0] sm:$0xff]
  %v240 = vld [vmem:[%s0 + $0x3c8] sm:$0xff]
  %v241 = vld [vmem:[%s0 + $0x3d0] sm:$0xff]
  %v242 = vld [vmem:[%s0 + $0x3d8] sm:$0xff]
  %v243 = vld [vmem:[%s0 + $0x3e0] sm:$0xff]
  %v244 = vld [vmem:[%s0 + $0x3e8] sm:$0xff]
  %v245 = vld [vmem:[%s0 + $0x3f0] sm:$0xff]
  %v246 = vld [vmem:[%s0 + $0x3f8] sm:$0xff]
  %v247 = vld [vmem:[%s0 + $0x400] sm:$0xff]
  %v248 = vld [vmem:[%s0 + $0x408] sm:$0xff]
  %v249 = vld [vmem:[%s0 + $0x410] sm:$0xff]
  %v250 = vld [vmem:[%s0 + $0x418] sm:$0xff]
  %v251 = vld [vmem:[%s0 + $0x420] sm:$0xff]
  %v252 = vld [vmem:[%s0 + $0x428] sm:$0xff]
  %v253 = vld [vmem:[%s0 + $0x430] sm:$0xff]
  %v254 = vld [vmem:[%s0 + $0x438] sm:$0xff]
  %v255 = vld [vmem:[%s0 + $0x440] sm:$0xff]
  %v256 = vld [vmem:[%s0 + $0x448] sm:$0xff]
  %v257 = vld [vmem:[%s0 + $0x450] sm:$0xff]
  %v258 = vld [vmem:[%s0 + $0x458] sm:$0xff]
  %v259 = vld [vmem:[%s0 + $0x460] sm:$0xff]
  %v260 = vld [vmem:[%s0 + $0x468] sm:$0xff]
  %v261 = vld [vmem:[%s0 + $0x470] sm:$0xff]
  %v262 = vld [vmem:[%s0 + $0x478] sm:$0xff]
  %v263 = vld [vmem:[%s0 + $0x480] sm:$0xff]
  %v264 = vld [vmem:[%s0 + $0x488] sm:$0xff]
  %v265 = vld [vmem:[%s0 + $0x490] sm:$0xff]
  %v266 = vld [vmem:[%s0 + $0x498] sm:$0xff]
  %v267 = vld [vmem:[%s0 + $0x4a0] sm:$0xff]
  %v268 = vld [vmem:[%s0 + $0x4a8] sm:$0xff]
  %v269 = vld [vmem:[%s0 + $0x4b0] sm:$0xff]
  %v270 = vld [vmem:[%s0 + $0x4b8] sm:$0xff]
  %v271 = vld [vmem:[%s0 + $0x4c0] sm:$0xff]
  %v272 = vld [vmem:[%s0 + $0x4c8] sm:$0xff]
  %v273 = vld [vmem:[%s0 + $0x4d0] sm:$0xff]
  %v274 = vld [vmem:[%s0 + $0x4d8] sm:$0xff]
  %v275 = vld [vmem:[%s0 + $0x4e0] sm:$0xff]
  %v276 = vld [vmem:[%s0 + $0x4e8] sm:$0xff]
  %v277 = vld [vmem:[%s0 + $0x4f0] sm:$0xff]
  %v278 = vld [vmem:[%s0 + $0x4f8] sm:$0xff]
  %v279 = vld [vmem:[%s0 + $0x500] sm:$0xff]
  %v280 = vld [vmem:[%s0 + $0x508] sm:$0xff]
  %v281 = vld [vmem:[%s0 + $0x510] sm:$0xff]
  %v282 = vld [vmem:[%s0 + $0x518] sm:$0xff]
  %v283 = vld [vmem:[%s0 + $0x520] sm:$0xff]
  %v284 = vld [vmem:[%s0 + $0x528] sm:$0xff]
  %v285 = vld [vmem:[%s0 + $0x530] sm:$0xff]
  %v286 = vld [vmem:[%s0 + $0x538] sm:$0xff]
  %v287 = vld [vmem:[%s0 + $0x540] sm:$0xff]
  %v288 = vld [vmem:[%s0 + $0x548] sm:$0xff]
  %v289 = vld [vmem:[%s0 + $0x550] sm:$0xff]
  %v290 = vld [vmem:[%s0 + $0x558] sm:$0xff]
  %v291 = vld [vmem:[%s0 + $0x560] sm:$0xff]
  %v292 = vld [vmem:[%s0 + $0x568] sm:$0xff]
  %v293 = vld [vmem:[%s0 + $0x570] sm:$0xff]
  %v294 = vld [vmem:[%s0 + $0x578] sm:$0xff]
  %v295 = vld [vmem:[%s0 + $0x580] sm:$0xff]
  %v296 = vld [vmem:[%s0 + $0x588] sm:$0xff]
  %v297 = vld [vmem:[%s0 + $0x590] sm:$0xff]
  %v298 = vld [vmem:[%s0 + $0x598] sm:$0xff]
  %v299 = vld [vmem:[%s0 + $0x5a0] sm:$0xff]
  %v300 = vld [vmem:[%s0 + $0x5a8] sm:$0xff]
  %v301 = vld [vmem:[%s0 + $0x5b0] sm:$0xff]
  %v302 = vld [vmem:[%s0 + $0x5b8] sm:$0xff]
  %v303 = vld [vmem:[%s0 + $0x5c0] sm:$0xff]
  %v304 = vld [vmem:[%s0 + $0x5c8] sm:$0xff]
  %v305 = vld [vmem:[%s0 + $0x5d0] sm:$0xff]
  %v306 = vld [vmem:[%s0 + $0x5d8] sm:$0xff]
  %v307 = vld [vmem:[%s0 + $0x5e0] sm:$0xff]
  %v308 = vld [vmem:[%s0 + $0x5e8] sm:$0xff]
  %v309 = vld [vmem:[%s0 + $0x5f0] sm:$0xff]
  %v310 = vld [vmem:[%s0 + $0x5f8] sm:$0xff]
  %v311 = vld [vmem:[%s0 + $0x600] sm:$0xff]
  %v312 = vld [vmem:[%s0 + $0x608] sm:$0xff]
  %v313 = vld [vmem:[%s0 + $0x610] sm:$0xff]
  %v314 = vld [vmem:[%s0 + $0x618] sm:$0xff]
  %v315 = vld [vmem:[%s0 + $0x620] sm:$0xff]
  %v316 = vld [vmem:[%s0 + $0x628] sm:$0xff]
  %v317 = vld [vmem:[%s0 + $0x630] sm:$0xff]
  %v318 = vld [vmem:[%s0 + $0x638] sm:$0xff]
  %v319 = vld [vmem:[%s0 + $0x640] sm:$0xff]
  %v320 = vld [vmem:[%s0 + $0x648] sm:$0xff]
  %v321 = vld [vmem:[%s0 + $0x650] sm:$0xff]
  %v322 = vld [vmem:[%s0 + $0x658] sm:$0xff]
  %v323 = vld [vmem:[%s0 + $0x660] sm:$0xff]
  %v324 = vld [vmem:[%s0 + $0x668] sm:$0xff]
  %v325 = vld [vmem:[%s0 + $0x670] sm:$0xff]
  %v326 = vld [vmem:[%s0 + $0x678] sm:$0xff]
  %v327 = vld [vmem:[%s0 + $0x680] sm:$0xff]
  %v328 = vld [vmem:[%s0 + $0x688] sm:$0xff]
  %v329 = vld [vmem:[%s0 + $0x690] sm:$0xff]
  %v330 = vld [vmem:[%s0 + $0x698] sm:$0xff]
  %v331 = vld [vmem:[%s0 + $0x6a0] sm:$0xff]
  %v332 = vld [vmem:[%s0 + $0x6a8] sm:$0xff]
  %v333 = vld [vmem:[%s0 + $0x6b0] sm:$0xff]
  %v334 = vld [vmem:[%s0 + $0x6b8] sm:$0xff]
  %v335 = vld [vmem:[%s0 + $0x6c0] sm:$0xff]
  %v336 = vld [vmem:[%s0 + $0x6c8] sm:$0xff]
  %v337 = vld [vmem:[%s0 + $0x6d0] sm:$0xff]
  %v338 = vld [vmem:[%s0 + $0x6d8] sm:$0xff]
  %v339 = vld [vmem:[%s0 + $0x6e0] sm:$0xff]
  %v340 = vld [vmem:[%s0 + $0x6e8] sm:$0xff]
  %v341 = vld [vmem:[%s0 + $0x6f0] sm:$0xff]
  %v342 = vld [vmem:[%s0 + $0x6f8] sm:$0xff]
  %v343 = vld [vmem:[%s0 + $0x700] sm:$0xff]
  %v344 = vld [vmem:[%s0 + $0x708] sm:$0xff]
  %v345 = vld [vmem:[%s0 + $0x710] sm:$0xff]
  %v346 = vld [vmem:[%s0 + $0x718] sm:$0xff]
  %v347 = vld [vmem:[%s0 + $0x720] sm:$0xff]
  %v348 = vld [vmem:[%s0 + $0x728] sm:$0xff]
  %v349 = vld [vmem:[%s0 + $0x730] sm:$0xff]
  %v350 = vld [vmem:[%s0 + $0x738] sm:$0xff]
  %v351 = vld [vmem:[%s0 + $0x740] sm:$0xff]
  %v352 = vld [vmem:[%s0 + $0x748] sm:$0xff]
  %v353 = vld [vmem:[%s0 + $0x750] sm:$0xff]
  %v354 = vld [vmem:[%s0 + $0x758] sm:$0xff]
  %v355 = vld [vmem:[%s0 + $0x760] sm:$0xff]
  %v356 = vld [vmem:[%s0 + $0x768] sm:$0xff]
  %v357 = vld [vmem:[%s0 + $0x770] sm:$0xff]
  %v358 = vld [vmem:[%s0 + $0x778] sm:$0xff]
  %v359 = vld [vmem:[%s0 + $0x780] sm:$0xff]
  %v360 = vld [vmem:[%s0 + $0x788] sm:$0xff]
  %v361 = vld [vmem:[%s0 + $0x790] sm:$0xff]
  %v362 = vld [vmem:[%s0 + $0x798] sm:$0xff]
  %v363 = vld [vmem:[%s0 + $0x7a0] sm:$0xff]
  %v364 = vld [vmem:[%s0 + $0x7a8] sm:$0xff]
  %v365 = vld [vmem:[%s0 + $0x7b0] sm:$0xff]
  %v366 = vld [vmem:[%s0 + $0x7b8] sm:$0xff]
  %v367 = vld [vmem:[%s0 + $0x7c0] sm:$0xff]
  %v368 = vld [vmem:[%s0 + $0x7c8] sm:$0xff]
  %v369 = vld [vmem:[%s0 + $0x7d0] sm:$0xff]
  %v370 = vld [vmem:[%s0 + $0x7d8] sm:$0xff]
  %v371 = vld [vmem:[%s0 + $0x7e0] sm:$0xff]
  %v372 = vld [vmem:[%s0 + $0x7e8] sm:$0xff]
  %v373 = vld [vmem:[%s0 + $0x7f0] sm:$0xff]
  %v374 = vld [vmem:[%s0 + $0x7f8] sm:$0xff]
  %v375 = vpack.c.bf16 %v120, %v119
  %v376 = vpack.c.bf16 %v122, %v121
  %v377 = vpack.c.bf16 %v124, %v123
  %v378 = vpack.c.bf16 %v126, %v125
  %v379 = vpack.c.bf16 %v128, %v127
  %v380 = vpack.c.bf16 %v130, %v129
  %v381 = vpack.c.bf16 %v132, %v131
  %v382 = vpack.c.bf16 %v134, %v133
  %v383 = vpack.c.bf16 %v136, %v135
  %v384 = vpack.c.bf16 %v138, %v137
  %v385 = vpack.c.bf16 %v140, %v139
  %v386 = vpack.c.bf16 %v142, %v141
  %v387 = vpack.c.bf16 %v144, %v143
  %v388 = vpack.c.bf16 %v146, %v145
  %v389 = vpack.c.bf16 %v148, %v147
  %v390 = vpack.c.bf16 %v150, %v149
  %v391 = vpack.c.bf16 %v152, %v151
  %v392 = vpack.c.bf16 %v154, %v153
  %v393 = vpack.c.bf16 %v156, %v155
  %v394 = vpack.c.bf16 %v158, %v157
  %v395 = vpack.c.bf16 %v160, %v159
  %v396 = vpack.c.bf16 %v162, %v161
  %v397 = vpack.c.bf16 %v164, %v163
  %v398 = vpack.c.bf16 %v166, %v165
  %v399 = vpack.c.bf16 %v168, %v167
  %v400 = vpack.c.bf16 %v170, %v169
  %v401 = vpack.c.bf16 %v172, %v171
  %v402 = vpack.c.bf16 %v174, %v173
  %v403 = vpack.c.bf16 %v176, %v175
  %v404 = vpack.c.bf16 %v178, %v177
  %v405 = vpack.c.bf16 %v180, %v179
  %v406 = vpack.c.bf16 %v182, %v181
  %v407 = vpack.c.bf16 %v184, %v183
  %v408 = vpack.c.bf16 %v186, %v185
  %v409 = vpack.c.bf16 %v188, %v187
  %v410 = vpack.c.bf16 %v190, %v189
  %v411 = vpack.c.bf16 %v192, %v191
  %v412 = vpack.c.bf16 %v194, %v193
  %v413 = vpack.c.bf16 %v196, %v195
  %v414 = vpack.c.bf16 %v198, %v197
  %v415 = vpack.c.bf16 %v200, %v199
  %v416 = vpack.c.bf16 %v202, %v201
  %v417 = vpack.c.bf16 %v204, %v203
  %v418 = vpack.c.bf16 %v206, %v205
  %v419 = vpack.c.bf16 %v208, %v207
  %v420 = vpack.c.bf16 %v210, %v209
  %v421 = vpack.c.bf16 %v212, %v211
  %v422 = vpack.c.bf16 %v214, %v213
  %v423 = vpack.c.bf16 %v216, %v215
  %v424 = vpack.c.bf16 %v218, %v217
  %v425 = vpack.c.bf16 %v220, %v219
  %v426 = vpack.c.bf16 %v222, %v221
  %v427 = vpack.c.bf16 %v224, %v223
  %v428 = vpack.c.bf16 %v226, %v225
  %v429 = vpack.c.bf16 %v228, %v227
  %v430 = vpack.c.bf16 %v230, %v229
  %v431 = vpack.c.bf16 %v232, %v231
  %v432 = vpack.c.bf16 %v234, %v233
  %v433 = vpack.c.bf16 %v236, %v235
  %v434 = vpack.c.bf16 %v238, %v237
  %v435 = vpack.c.bf16 %v240, %v239
  %v436 = vpack.c.bf16 %v242, %v241
  %v437 = vpack.c.bf16 %v244, %v243
  %v438 = vpack.c.bf16 %v246, %v245
  %v439 = vpack.c.bf16 %v248, %v247
  %v440 = vpack.c.bf16 %v250, %v249
  %v441 = vpack.c.bf16 %v252, %v251
  %v442 = vpack.c.bf16 %v254, %v253
  %v443 = vpack.c.bf16 %v256, %v255
  %v444 = vpack.c.bf16 %v258, %v257
  %v445 = vpack.c.bf16 %v260, %v259
  %v446 = vpack.c.bf16 %v262, %v261
  %v447 = vpack.c.bf16 %v264, %v263
  %v448 = vpack.c.bf16 %v266, %v265
  %v449 = vpack.c.bf16 %v268, %v267
  %v450 = vpack.c.bf16 %v270, %v269
  %v451 = vpack.c.bf16 %v272, %v271
  %v452 = vpack.c.bf16 %v274, %v273
  %v453 = vpack.c.bf16 %v276, %v275
  %v454 = vpack.c.bf16 %v278, %v277
  %v455 = vpack.c.bf16 %v280, %v279
  %v456 = vpack.c.bf16 %v282, %v281
  %v457 = vpack.c.bf16 %v284, %v283
  %v458 = vpack.c.bf16 %v286, %v285
  %v459 = vpack.c.bf16 %v288, %v287
  %v460 = vpack.c.bf16 %v290, %v289
  %v461 = vpack.c.bf16 %v292, %v291
  %v462 = vpack.c.bf16 %v294, %v293
  %v463 = vpack.c.bf16 %v296, %v295
  %v464 = vpack.c.bf16 %v298, %v297
  %v465 = vpack.c.bf16 %v300, %v299
  %v466 = vpack.c.bf16 %v302, %v301
  %v467 = vpack.c.bf16 %v304, %v303
  %v468 = vpack.c.bf16 %v306, %v305
  %v469 = vpack.c.bf16 %v308, %v307
  %v470 = vpack.c.bf16 %v310, %v309
  %v471 = vpack.c.bf16 %v312, %v311
  %v472 = vpack.c.bf16 %v314, %v313
  %v473 = vpack.c.bf16 %v316, %v315
  %v474 = vpack.c.bf16 %v318, %v317
  %v475 = vpack.c.bf16 %v320, %v319
  %v476 = vpack.c.bf16 %v322, %v321
  %v477 = vpack.c.bf16 %v324, %v323
  %v478 = vpack.c.bf16 %v326, %v325
  %v479 = vpack.c.bf16 %v328, %v327
  %v480 = vpack.c.bf16 %v330, %v329
  %v481 = vpack.c.bf16 %v332, %v331
  %v482 = vpack.c.bf16 %v334, %v333
  %v483 = vpack.c.bf16 %v336, %v335
  %v484 = vpack.c.bf16 %v338, %v337
  %v485 = vpack.c.bf16 %v340, %v339
  %v486 = vpack.c.bf16 %v342, %v341
  %v487 = vpack.c.bf16 %v344, %v343
  %v488 = vpack.c.bf16 %v346, %v345
  %v489 = vpack.c.bf16 %v348, %v347
  %v490 = vpack.c.bf16 %v350, %v349
  %v491 = vpack.c.bf16 %v352, %v351
  %v492 = vpack.c.bf16 %v354, %v353
  %v493 = vpack.c.bf16 %v356, %v355
  %v494 = vpack.c.bf16 %v358, %v357
  %v495 = vpack.c.bf16 %v360, %v359
  %v496 = vpack.c.bf16 %v362, %v361
  %v497 = vpack.c.bf16 %v364, %v363
  %v498 = vpack.c.bf16 %v366, %v365
  %v499 = vpack.c.bf16 %v368, %v367
  %v500 = vpack.c.bf16 %v370, %v369
  %v501 = vpack.c.bf16 %v372, %v371
  %v502 = vpack.c.bf16 %v374, %v373
  %v503 = vld [vmem:[%s1] sm:$0xf]
  %v504 = vld [vmem:[%s1 + $0x4] sm:$0xf]
  %v505 = vld [vmem:[%s2] sm:$0x1]
  %v507 = vperm.slane %v505, 0
  %v511 = vunpack.c.l.b16 %v503
  %v512 = vunpack.c.l.b16 %v504
  %v513 = vpack.c.b16 %v512, %v511
  %vm515 = vcmask 130048
  %v517 = vsel %vm515, %v375, 0
  %v520 = vsel %vm515, %v376, 0
  %v523 = vsel %vm515, %v377, 0
  %v526 = vsel %vm515, %v378, 0
  %v529 = vsel %vm515, %v379, 0
  %v532 = vsel %vm515, %v380, 0
  %v535 = vsel %vm515, %v381, 0
  %v538 = vsel %vm515, %v382, 0
  %v541 = vsel %vm515, %v383, 0
  %v544 = vsel %vm515, %v384, 0
  %v547 = vsel %vm515, %v385, 0
  %v550 = vsel %vm515, %v386, 0
  %v553 = vsel %vm515, %v387, 0
  %v556 = vsel %vm515, %v388, 0
  %v559 = vsel %vm515, %v389, 0
  %v562 = vsel %vm515, %v390, 0
  %v565 = vsel %vm515, %v391, 0
  %v568 = vsel %vm515, %v392, 0
  %v571 = vsel %vm515, %v393, 0
  %v574 = vsel %vm515, %v394, 0
  %v577 = vsel %vm515, %v395, 0
  %v580 = vsel %vm515, %v396, 0
  %v583 = vsel %vm515, %v397, 0
  %v586 = vsel %vm515, %v398, 0
  %v589 = vsel %vm515, %v399, 0
  %v592 = vsel %vm515, %v400, 0
  %v595 = vsel %vm515, %v401, 0
  %v598 = vsel %vm515, %v402, 0
  %v601 = vsel %vm515, %v403, 0
  %v604 = vsel %vm515, %v404, 0
  %v607 = vsel %vm515, %v405, 0
  %v610 = vsel %vm515, %v406, 0
  %v613 = vsel %vm515, %v407, 0
  %v616 = vsel %vm515, %v408, 0
  %v619 = vsel %vm515, %v409, 0
  %v622 = vsel %vm515, %v410, 0
  %v625 = vsel %vm515, %v411, 0
  %v628 = vsel %vm515, %v412, 0
  %v631 = vsel %vm515, %v413, 0
  %v634 = vsel %vm515, %v414, 0
  %v637 = vsel %vm515, %v415, 0
  %v640 = vsel %vm515, %v416, 0
  %v643 = vsel %vm515, %v417, 0
  %v646 = vsel %vm515, %v418, 0
  %v649 = vsel %vm515, %v419, 0
  %v652 = vsel %vm515, %v420, 0
  %v655 = vsel %vm515, %v421, 0
  %v658 = vsel %vm515, %v422, 0
  %v661 = vsel %vm515, %v423, 0
  %v664 = vsel %vm515, %v424, 0
  %v667 = vsel %vm515, %v425, 0
  %v670 = vsel %vm515, %v426, 0
  %v673 = vsel %vm515, %v427, 0
  %v676 = vsel %vm515, %v428, 0
  %v679 = vsel %vm515, %v429, 0
  %v682 = vsel %vm515, %v430, 0
  %v685 = vsel %vm515, %v431, 0
  %v688 = vsel %vm515, %v432, 0
  %v691 = vsel %vm515, %v433, 0
  %v694 = vsel %vm515, %v434, 0
  %v697 = vsel %vm515, %v435, 0
  %v700 = vsel %vm515, %v436, 0
  %v703 = vsel %vm515, %v437, 0
  %v706 = vsel %vm515, %v438, 0
  %v709 = vsel %vm515, %v439, 0
  %v712 = vsel %vm515, %v440, 0
  %v715 = vsel %vm515, %v441, 0
  %v718 = vsel %vm515, %v442, 0
  %v721 = vsel %vm515, %v443, 0
  %v724 = vsel %vm515, %v444, 0
  %v727 = vsel %vm515, %v445, 0
  %v730 = vsel %vm515, %v446, 0
  %v733 = vsel %vm515, %v447, 0
  %v736 = vsel %vm515, %v448, 0
  %v739 = vsel %vm515, %v449, 0
  %v742 = vsel %vm515, %v450, 0
  %v745 = vsel %vm515, %v451, 0
  %v748 = vsel %vm515, %v452, 0
  %v751 = vsel %vm515, %v453, 0
  %v754 = vsel %vm515, %v454, 0
  %v757 = vsel %vm515, %v455, 0
  %v760 = vsel %vm515, %v456, 0
  %v763 = vsel %vm515, %v457, 0
  %v766 = vsel %vm515, %v458, 0
  %v769 = vsel %vm515, %v459, 0
  %v772 = vsel %vm515, %v460, 0
  %v775 = vsel %vm515, %v461, 0
  %v778 = vsel %vm515, %v462, 0
  %v781 = vsel %vm515, %v463, 0
  %v784 = vsel %vm515, %v464, 0
  %v787 = vsel %vm515, %v465, 0
  %v790 = vsel %vm515, %v466, 0
  %v793 = vsel %vm515, %v467, 0
  %v796 = vsel %vm515, %v468, 0
  %v799 = vsel %vm515, %v469, 0
  %v802 = vsel %vm515, %v470, 0
  %v805 = vsel %vm515, %v471, 0
  %v808 = vsel %vm515, %v472, 0
  %v811 = vsel %vm515, %v473, 0
  %v814 = vsel %vm515, %v474, 0
  %v817 = vsel %vm515, %v475, 0
  %v820 = vsel %vm515, %v476, 0
  %v823 = vsel %vm515, %v477, 0
  %v826 = vsel %vm515, %v478, 0
  %v829 = vsel %vm515, %v479, 0
  %v832 = vsel %vm515, %v480, 0
  %v835 = vsel %vm515, %v481, 0
  %v838 = vsel %vm515, %v482, 0
  %v841 = vsel %vm515, %v483, 0
  %v844 = vsel %vm515, %v484, 0
  %v847 = vsel %vm515, %v485, 0
  %v850 = vsel %vm515, %v486, 0
  %v853 = vsel %vm515, %v487, 0
  %v856 = vsel %vm515, %v488, 0
  %v859 = vsel %vm515, %v489, 0
  %v862 = vsel %vm515, %v490, 0
  %v865 = vsel %vm515, %v491, 0
  %v868 = vsel %vm515, %v492, 0
  %v871 = vsel %vm515, %v493, 0
  %v874 = vsel %vm515, %v494, 0
  %v877 = vsel %vm515, %v495, 0
  %v880 = vsel %vm515, %v496, 0
  %v883 = vsel %vm515, %v497, 0
  %v886 = vsel %vm515, %v498, 0
  %v889 = vsel %vm515, %v499, 0
  %v892 = vsel %vm515, %v500, 0
  %v895 = vsel %vm515, %v501, 0
  %v898 = vsel %vm515, %v502, 0
  %900 = vmatpush.bf16.msra.mxu0 0
  %901 = vmatpush.bf16.msra.mxu0 0
  %902 = vmatpush.bf16.msra.mxu0 0
  %903 = vmatpush.bf16.msra.mxu0 0
  %904 = vmatpush.bf16.msra.mxu0 0
  %905 = vmatpush.bf16.msra.mxu0 0
  %906 = vmatpush.bf16.msra.mxu0 0
  %907 = vmatpush.bf16.msra.mxu0 %v513
  %908 = vmatmul.bf16.gmra.mxu0 %v517
  %v909 = vpop.f32.mrf.mxu0
  %v910 = vadd.f32 %v507, %v909
  %v911 = vpop.f32.mrf.mxu0
  %v912 = vadd.f32 %v507, %v911
  %913 = vmatmul.bf16.gmra.mxu0 %v520
  %v914 = vpop.f32.mrf.mxu0
  %v915 = vadd.f32 %v507, %v914
  %v916 = vpop.f32.mrf.mxu0
  %v917 = vadd.f32 %v507, %v916
  %918 = vmatmul.bf16.gmra.mxu0 %v523
  %v919 = vpop.f32.mrf.mxu0
  %v920 = vadd.f32 %v507, %v919
  %v921 = vpop.f32.mrf.mxu0
  %v922 = vadd.f32 %v507, %v921
  %923 = vmatmul.bf16.gmra.mxu0 %v526
  %v924 = vpop.f32.mrf.mxu0
  %v925 = vadd.f32 %v507, %v924
  %v926 = vpop.f32.mrf.mxu0
  %v927 = vadd.f32 %v507, %v926
  %928 = vmatmul.bf16.gmra.mxu0 %v529
  %v929 = vpop.f32.mrf.mxu0
  %v930 = vadd.f32 %v507, %v929
  %v931 = vpop.f32.mrf.mxu0
  %v932 = vadd.f32 %v507, %v931
  %933 = vmatmul.bf16.gmra.mxu0 %v532
  %v934 = vpop.f32.mrf.mxu0
  %v935 = vadd.f32 %v507, %v934
  %v936 = vpop.f32.mrf.mxu0
  %v937 = vadd.f32 %v507, %v936
  %938 = vmatmul.bf16.gmra.mxu0 %v535
  %v939 = vpop.f32.mrf.mxu0
  %v940 = vadd.f32 %v507, %v939
  %v941 = vpop.f32.mrf.mxu0
  %v942 = vadd.f32 %v507, %v941
  %943 = vmatmul.bf16.gmra.mxu0 %v538
  %v944 = vpop.f32.mrf.mxu0
  %v945 = vadd.f32 %v507, %v944
  %v946 = vpop.f32.mrf.mxu0
  %v947 = vadd.f32 %v507, %v946
  %948 = vmatmul.bf16.gmra.mxu0 %v541
  %v949 = vpop.f32.mrf.mxu0
  %v950 = vadd.f32 %v507, %v949
  %v951 = vpop.f32.mrf.mxu0
  %v952 = vadd.f32 %v507, %v951
  %953 = vmatmul.bf16.gmra.mxu0 %v544
  %v954 = vpop.f32.mrf.mxu0
  %v955 = vadd.f32 %v507, %v954
  %v956 = vpop.f32.mrf.mxu0
  %v957 = vadd.f32 %v507, %v956
  %958 = vmatmul.bf16.gmra.mxu0 %v547
  %v959 = vpop.f32.mrf.mxu0
  %v960 = vadd.f32 %v507, %v959
  %v961 = vpop.f32.mrf.mxu0
  %v962 = vadd.f32 %v507, %v961
  %963 = vmatmul.bf16.gmra.mxu0 %v550
  %v964 = vpop.f32.mrf.mxu0
  %v965 = vadd.f32 %v507, %v964
  %v966 = vpop.f32.mrf.mxu0
  %v967 = vadd.f32 %v507, %v966
  %968 = vmatmul.bf16.gmra.mxu0 %v553
  %v969 = vpop.f32.mrf.mxu0
  %v970 = vadd.f32 %v507, %v969
  %v971 = vpop.f32.mrf.mxu0
  %v972 = vadd.f32 %v507, %v971
  %973 = vmatmul.bf16.gmra.mxu0 %v556
  %v974 = vpop.f32.mrf.mxu0
  %v975 = vadd.f32 %v507, %v974
  %v976 = vpop.f32.mrf.mxu0
  %v977 = vadd.f32 %v507, %v976
  %978 = vmatmul.bf16.gmra.mxu0 %v559
  %v979 = vpop.f32.mrf.mxu0
  %v980 = vadd.f32 %v507, %v979
  %v981 = vpop.f32.mrf.mxu0
  %v982 = vadd.f32 %v507, %v981
  %983 = vmatmul.bf16.gmra.mxu0 %v562
  %v984 = vpop.f32.mrf.mxu0
  %v985 = vadd.f32 %v507, %v984
  %v986 = vpop.f32.mrf.mxu0
  %v987 = vadd.f32 %v507, %v986
  %988 = vmatmul.bf16.gmra.mxu0 %v565
  %v989 = vpop.f32.mrf.mxu0
  %v990 = vadd.f32 %v507, %v989
  %v991 = vpop.f32.mrf.mxu0
  %v992 = vadd.f32 %v507, %v991
  %993 = vmatmul.bf16.gmra.mxu0 %v568
  %v994 = vpop.f32.mrf.mxu0
  %v995 = vadd.f32 %v507, %v994
  %v996 = vpop.f32.mrf.mxu0
  %v997 = vadd.f32 %v507, %v996
  %998 = vmatmul.bf16.gmra.mxu0 %v571
  %v999 = vpop.f32.mrf.mxu0
  %v1000 = vadd.f32 %v507, %v999
  %v1001 = vpop.f32.mrf.mxu0
  %v1002 = vadd.f32 %v507, %v1001
  %1003 = vmatmul.bf16.gmra.mxu0 %v574
  %v1004 = vpop.f32.mrf.mxu0
  %v1005 = vadd.f32 %v507, %v1004
  %v1006 = vpop.f32.mrf.mxu0
  %v1007 = vadd.f32 %v507, %v1006
  %1008 = vmatmul.bf16.gmra.mxu0 %v577
  %v1009 = vpop.f32.mrf.mxu0
  %v1010 = vadd.f32 %v507, %v1009
  %v1011 = vpop.f32.mrf.mxu0
  %v1012 = vadd.f32 %v507, %v1011
  %1013 = vmatmul.bf16.gmra.mxu0 %v580
  %v1014 = vpop.f32.mrf.mxu0
  %v1015 = vadd.f32 %v507, %v1014
  %v1016 = vpop.f32.mrf.mxu0
  %v1017 = vadd.f32 %v507, %v1016
  %1018 = vmatmul.bf16.gmra.mxu0 %v583
  %v1019 = vpop.f32.mrf.mxu0
  %v1020 = vadd.f32 %v507, %v1019
  %v1021 = vpop.f32.mrf.mxu0
  %v1022 = vadd.f32 %v507, %v1021
  %1023 = vmatmul.bf16.gmra.mxu0 %v586
  %v1024 = vpop.f32.mrf.mxu0
  %v1025 = vadd.f32 %v507, %v1024
  %v1026 = vpop.f32.mrf.mxu0
  %v1027 = vadd.f32 %v507, %v1026
  %1028 = vmatmul.bf16.gmra.mxu0 %v589
  %v1029 = vpop.f32.mrf.mxu0
  %v1030 = vadd.f32 %v507, %v1029
  %v1031 = vpop.f32.mrf.mxu0
  %v1032 = vadd.f32 %v507, %v1031
  %1033 = vmatmul.bf16.gmra.mxu0 %v592
  %v1034 = vpop.f32.mrf.mxu0
  %v1035 = vadd.f32 %v507, %v1034
  %v1036 = vpop.f32.mrf.mxu0
  %v1037 = vadd.f32 %v507, %v1036
  %1038 = vmatmul.bf16.gmra.mxu0 %v595
  %v1039 = vpop.f32.mrf.mxu0
  %v1040 = vadd.f32 %v507, %v1039
  %v1041 = vpop.f32.mrf.mxu0
  %v1042 = vadd.f32 %v507, %v1041
  %1043 = vmatmul.bf16.gmra.mxu0 %v598
  %v1044 = vpop.f32.mrf.mxu0
  %v1045 = vadd.f32 %v507, %v1044
  %v1046 = vpop.f32.mrf.mxu0
  %v1047 = vadd.f32 %v507, %v1046
  %1048 = vmatmul.bf16.gmra.mxu0 %v601
  %v1049 = vpop.f32.mrf.mxu0
  %v1050 = vadd.f32 %v507, %v1049
  %v1051 = vpop.f32.mrf.mxu0
  %v1052 = vadd.f32 %v507, %v1051
  %1053 = vmatmul.bf16.gmra.mxu0 %v604
  %v1054 = vpop.f32.mrf.mxu0
  %v1055 = vadd.f32 %v507, %v1054
  %v1056 = vpop.f32.mrf.mxu0
  %v1057 = vadd.f32 %v507, %v1056
  %1058 = vmatmul.bf16.gmra.mxu0 %v607
  %v1059 = vpop.f32.mrf.mxu0
  %v1060 = vadd.f32 %v507, %v1059
  %v1061 = vpop.f32.mrf.mxu0
  %v1062 = vadd.f32 %v507, %v1061
  %1063 = vmatmul.bf16.gmra.mxu0 %v610
  %v1064 = vpop.f32.mrf.mxu0
  %v1065 = vadd.f32 %v507, %v1064
  %v1066 = vpop.f32.mrf.mxu0
  %v1067 = vadd.f32 %v507, %v1066
  %1068 = vmatmul.bf16.gmra.mxu0 %v613
  %v1069 = vpop.f32.mrf.mxu0
  %v1070 = vadd.f32 %v507, %v1069
  %v1071 = vpop.f32.mrf.mxu0
  %v1072 = vadd.f32 %v507, %v1071
  %1073 = vmatmul.bf16.gmra.mxu0 %v616
  %v1074 = vpop.f32.mrf.mxu0
  %v1075 = vadd.f32 %v507, %v1074
  %v1076 = vpop.f32.mrf.mxu0
  %v1077 = vadd.f32 %v507, %v1076
  %1078 = vmatmul.bf16.gmra.mxu0 %v619
  %v1079 = vpop.f32.mrf.mxu0
  %v1080 = vadd.f32 %v507, %v1079
  %v1081 = vpop.f32.mrf.mxu0
  %v1082 = vadd.f32 %v507, %v1081
  %1083 = vmatmul.bf16.gmra.mxu0 %v622
  %v1084 = vpop.f32.mrf.mxu0
  %v1085 = vadd.f32 %v507, %v1084
  %v1086 = vpop.f32.mrf.mxu0
  %v1087 = vadd.f32 %v507, %v1086
  %1088 = vmatmul.bf16.gmra.mxu0 %v625
  %v1089 = vpop.f32.mrf.mxu0
  %v1090 = vadd.f32 %v507, %v1089
  %v1091 = vpop.f32.mrf.mxu0
  %v1092 = vadd.f32 %v507, %v1091
  %1093 = vmatmul.bf16.gmra.mxu0 %v628
  %v1094 = vpop.f32.mrf.mxu0
  %v1095 = vadd.f32 %v507, %v1094
  %v1096 = vpop.f32.mrf.mxu0
  %v1097 = vadd.f32 %v507, %v1096
  %1098 = vmatmul.bf16.gmra.mxu0 %v631
  %v1099 = vpop.f32.mrf.mxu0
  %v1100 = vadd.f32 %v507, %v1099
  %v1101 = vpop.f32.mrf.mxu0
  %v1102 = vadd.f32 %v507, %v1101
  %1103 = vmatmul.bf16.gmra.mxu0 %v634
  %v1104 = vpop.f32.mrf.mxu0
  %v1105 = vadd.f32 %v507, %v1104
  %v1106 = vpop.f32.mrf.mxu0
  %v1107 = vadd.f32 %v507, %v1106
  %1108 = vmatmul.bf16.gmra.mxu0 %v637
  %v1109 = vpop.f32.mrf.mxu0
  %v1110 = vadd.f32 %v507, %v1109
  %v1111 = vpop.f32.mrf.mxu0
  %v1112 = vadd.f32 %v507, %v1111
  %1113 = vmatmul.bf16.gmra.mxu0 %v640
  %v1114 = vpop.f32.mrf.mxu0
  %v1115 = vadd.f32 %v507, %v1114
  %v1116 = vpop.f32.mrf.mxu0
  %v1117 = vadd.f32 %v507, %v1116
  %1118 = vmatmul.bf16.gmra.mxu0 %v643
  %v1119 = vpop.f32.mrf.mxu0
  %v1120 = vadd.f32 %v507, %v1119
  %v1121 = vpop.f32.mrf.mxu0
  %v1122 = vadd.f32 %v507, %v1121
  %1123 = vmatmul.bf16.gmra.mxu0 %v646
  %v1124 = vpop.f32.mrf.mxu0
  %v1125 = vadd.f32 %v507, %v1124
  %v1126 = vpop.f32.mrf.mxu0
  %v1127 = vadd.f32 %v507, %v1126
  %1128 = vmatmul.bf16.gmra.mxu0 %v649
  %v1129 = vpop.f32.mrf.mxu0
  %v1130 = vadd.f32 %v507, %v1129
  %v1131 = vpop.f32.mrf.mxu0
  %v1132 = vadd.f32 %v507, %v1131
  %1133 = vmatmul.bf16.gmra.mxu0 %v652
  %v1134 = vpop.f32.mrf.mxu0
  %v1135 = vadd.f32 %v507, %v1134
  %v1136 = vpop.f32.mrf.mxu0
  %v1137 = vadd.f32 %v507, %v1136
  %1138 = vmatmul.bf16.gmra.mxu0 %v655
  %v1139 = vpop.f32.mrf.mxu0
  %v1140 = vadd.f32 %v507, %v1139
  %v1141 = vpop.f32.mrf.mxu0
  %v1142 = vadd.f32 %v507, %v1141
  %1143 = vmatmul.bf16.gmra.mxu0 %v658
  %v1144 = vpop.f32.mrf.mxu0
  %v1145 = vadd.f32 %v507, %v1144
  %v1146 = vpop.f32.mrf.mxu0
  %v1147 = vadd.f32 %v507, %v1146
  %1148 = vmatmul.bf16.gmra.mxu0 %v661
  %v1149 = vpop.f32.mrf.mxu0
  %v1150 = vadd.f32 %v507, %v1149
  %v1151 = vpop.f32.mrf.mxu0
  %v1152 = vadd.f32 %v507, %v1151
  %1153 = vmatmul.bf16.gmra.mxu0 %v664
  %v1154 = vpop.f32.mrf.mxu0
  %v1155 = vadd.f32 %v507, %v1154
  %v1156 = vpop.f32.mrf.mxu0
  %v1157 = vadd.f32 %v507, %v1156
  %1158 = vmatmul.bf16.gmra.mxu0 %v667
  %v1159 = vpop.f32.mrf.mxu0
  %v1160 = vadd.f32 %v507, %v1159
  %v1161 = vpop.f32.mrf.mxu0
  %v1162 = vadd.f32 %v507, %v1161
  %1163 = vmatmul.bf16.gmra.mxu0 %v670
  %v1164 = vpop.f32.mrf.mxu0
  %v1165 = vadd.f32 %v507, %v1164
  %v1166 = vpop.f32.mrf.mxu0
  %v1167 = vadd.f32 %v507, %v1166
  %1168 = vmatmul.bf16.gmra.mxu0 %v673
  %v1169 = vpop.f32.mrf.mxu0
  %v1170 = vadd.f32 %v507, %v1169
  %v1171 = vpop.f32.mrf.mxu0
  %v1172 = vadd.f32 %v507, %v1171
  %1173 = vmatmul.bf16.gmra.mxu0 %v676
  %v1174 = vpop.f32.mrf.mxu0
  %v1175 = vadd.f32 %v507, %v1174
  %v1176 = vpop.f32.mrf.mxu0
  %v1177 = vadd.f32 %v507, %v1176
  %1178 = vmatmul.bf16.gmra.mxu0 %v679
  %v1179 = vpop.f32.mrf.mxu0
  %v1180 = vadd.f32 %v507, %v1179
  %v1181 = vpop.f32.mrf.mxu0
  %v1182 = vadd.f32 %v507, %v1181
  %1183 = vmatmul.bf16.gmra.mxu0 %v682
  %v1184 = vpop.f32.mrf.mxu0
  %v1185 = vadd.f32 %v507, %v1184
  %v1186 = vpop.f32.mrf.mxu0
  %v1187 = vadd.f32 %v507, %v1186
  %1188 = vmatmul.bf16.gmra.mxu0 %v685
  %v1189 = vpop.f32.mrf.mxu0
  %v1190 = vadd.f32 %v507, %v1189
  %v1191 = vpop.f32.mrf.mxu0
  %v1192 = vadd.f32 %v507, %v1191
  %1193 = vmatmul.bf16.gmra.mxu0 %v688
  %v1194 = vpop.f32.mrf.mxu0
  %v1195 = vadd.f32 %v507, %v1194
  %v1196 = vpop.f32.mrf.mxu0
  %v1197 = vadd.f32 %v507, %v1196
  %1198 = vmatmul.bf16.gmra.mxu0 %v691
  %v1199 = vpop.f32.mrf.mxu0
  %v1200 = vadd.f32 %v507, %v1199
  %v1201 = vpop.f32.mrf.mxu0
  %v1202 = vadd.f32 %v507, %v1201
  %1203 = vmatmul.bf16.gmra.mxu0 %v694
  %v1204 = vpop.f32.mrf.mxu0
  %v1205 = vadd.f32 %v507, %v1204
  %v1206 = vpop.f32.mrf.mxu0
  %v1207 = vadd.f32 %v507, %v1206
  %1208 = vmatmul.bf16.gmra.mxu0 %v697
  %v1209 = vpop.f32.mrf.mxu0
  %v1210 = vadd.f32 %v507, %v1209
  %v1211 = vpop.f32.mrf.mxu0
  %v1212 = vadd.f32 %v507, %v1211
  %1213 = vmatmul.bf16.gmra.mxu0 %v700
  %v1214 = vpop.f32.mrf.mxu0
  %v1215 = vadd.f32 %v507, %v1214
  %v1216 = vpop.f32.mrf.mxu0
  %v1217 = vadd.f32 %v507, %v1216
  %1218 = vmatmul.bf16.gmra.mxu0 %v703
  %v1219 = vpop.f32.mrf.mxu0
  %v1220 = vadd.f32 %v507, %v1219
  %v1221 = vpop.f32.mrf.mxu0
  %v1222 = vadd.f32 %v507, %v1221
  %1223 = vmatmul.bf16.gmra.mxu0 %v706
  %v1224 = vpop.f32.mrf.mxu0
  %v1225 = vadd.f32 %v507, %v1224
  %v1226 = vpop.f32.mrf.mxu0
  %v1227 = vadd.f32 %v507, %v1226
  %1228 = vmatmul.bf16.gmra.mxu0 %v709
  %v1229 = vpop.f32.mrf.mxu0
  %v1230 = vadd.f32 %v507, %v1229
  %v1231 = vpop.f32.mrf.mxu0
  %v1232 = vadd.f32 %v507, %v1231
  %1233 = vmatmul.bf16.gmra.mxu0 %v712
  %v1234 = vpop.f32.mrf.mxu0
  %v1235 = vadd.f32 %v507, %v1234
  %v1236 = vpop.f32.mrf.mxu0
  %v1237 = vadd.f32 %v507, %v1236
  %1238 = vmatmul.bf16.gmra.mxu0 %v715
  %v1239 = vpop.f32.mrf.mxu0
  %v1240 = vadd.f32 %v507, %v1239
  %v1241 = vpop.f32.mrf.mxu0
  %v1242 = vadd.f32 %v507, %v1241
  %1243 = vmatmul.bf16.gmra.mxu0 %v718
  %v1244 = vpop.f32.mrf.mxu0
  %v1245 = vadd.f32 %v507, %v1244
  %v1246 = vpop.f32.mrf.mxu0
  %v1247 = vadd.f32 %v507, %v1246
  %1248 = vmatmul.bf16.gmra.mxu0 %v721
  %v1249 = vpop.f32.mrf.mxu0
  %v1250 = vadd.f32 %v507, %v1249
  %v1251 = vpop.f32.mrf.mxu0
  %v1252 = vadd.f32 %v507, %v1251
  %1253 = vmatmul.bf16.gmra.mxu0 %v724
  %v1254 = vpop.f32.mrf.mxu0
  %v1255 = vadd.f32 %v507, %v1254
  %v1256 = vpop.f32.mrf.mxu0
  %v1257 = vadd.f32 %v507, %v1256
  %1258 = vmatmul.bf16.gmra.mxu0 %v727
  %v1259 = vpop.f32.mrf.mxu0
  %v1260 = vadd.f32 %v507, %v1259
  %v1261 = vpop.f32.mrf.mxu0
  %v1262 = vadd.f32 %v507, %v1261
  %1263 = vmatmul.bf16.gmra.mxu0 %v730
  %v1264 = vpop.f32.mrf.mxu0
  %v1265 = vadd.f32 %v507, %v1264
  %v1266 = vpop.f32.mrf.mxu0
  %v1267 = vadd.f32 %v507, %v1266
  %1268 = vmatmul.bf16.gmra.mxu0 %v733
  %v1269 = vpop.f32.mrf.mxu0
  %v1270 = vadd.f32 %v507, %v1269
  %v1271 = vpop.f32.mrf.mxu0
  %v1272 = vadd.f32 %v507, %v1271
  %1273 = vmatmul.bf16.gmra.mxu0 %v736
  %v1274 = vpop.f32.mrf.mxu0
  %v1275 = vadd.f32 %v507, %v1274
  %v1276 = vpop.f32.mrf.mxu0
  %v1277 = vadd.f32 %v507, %v1276
  %1278 = vmatmul.bf16.gmra.mxu0 %v739
  %v1279 = vpop.f32.mrf.mxu0
  %v1280 = vadd.f32 %v507, %v1279
  %v1281 = vpop.f32.mrf.mxu0
  %v1282 = vadd.f32 %v507, %v1281
  %1283 = vmatmul.bf16.gmra.mxu0 %v742
  %v1284 = vpop.f32.mrf.mxu0
  %v1285 = vadd.f32 %v507, %v1284
  %v1286 = vpop.f32.mrf.mxu0
  %v1287 = vadd.f32 %v507, %v1286
  %1288 = vmatmul.bf16.gmra.mxu0 %v745
  %v1289 = vpop.f32.mrf.mxu0
  %v1290 = vadd.f32 %v507, %v1289
  %v1291 = vpop.f32.mrf.mxu0
  %v1292 = vadd.f32 %v507, %v1291
  %1293 = vmatmul.bf16.gmra.mxu0 %v748
  %v1294 = vpop.f32.mrf.mxu0
  %v1295 = vadd.f32 %v507, %v1294
  %v1296 = vpop.f32.mrf.mxu0
  %v1297 = vadd.f32 %v507, %v1296
  %1298 = vmatmul.bf16.gmra.mxu0 %v751
  %v1299 = vpop.f32.mrf.mxu0
  %v1300 = vadd.f32 %v507, %v1299
  %v1301 = vpop.f32.mrf.mxu0
  %v1302 = vadd.f32 %v507, %v1301
  %1303 = vmatmul.bf16.gmra.mxu0 %v754
  %v1304 = vpop.f32.mrf.mxu0
  %v1305 = vadd.f32 %v507, %v1304
  %v1306 = vpop.f32.mrf.mxu0
  %v1307 = vadd.f32 %v507, %v1306
  %1308 = vmatmul.bf16.gmra.mxu0 %v757
  %v1309 = vpop.f32.mrf.mxu0
  %v1310 = vadd.f32 %v507, %v1309
  %v1311 = vpop.f32.mrf.mxu0
  %v1312 = vadd.f32 %v507, %v1311
  %1313 = vmatmul.bf16.gmra.mxu0 %v760
  %v1314 = vpop.f32.mrf.mxu0
  %v1315 = vadd.f32 %v507, %v1314
  %v1316 = vpop.f32.mrf.mxu0
  %v1317 = vadd.f32 %v507, %v1316
  %1318 = vmatmul.bf16.gmra.mxu0 %v763
  %v1319 = vpop.f32.mrf.mxu0
  %v1320 = vadd.f32 %v507, %v1319
  %v1321 = vpop.f32.mrf.mxu0
  %v1322 = vadd.f32 %v507, %v1321
  %1323 = vmatmul.bf16.gmra.mxu0 %v766
  %v1324 = vpop.f32.mrf.mxu0
  %v1325 = vadd.f32 %v507, %v1324
  %v1326 = vpop.f32.mrf.mxu0
  %v1327 = vadd.f32 %v507, %v1326
  %1328 = vmatmul.bf16.gmra.mxu0 %v769
  %v1329 = vpop.f32.mrf.mxu0
  %v1330 = vadd.f32 %v507, %v1329
  %v1331 = vpop.f32.mrf.mxu0
  %v1332 = vadd.f32 %v507, %v1331
  %1333 = vmatmul.bf16.gmra.mxu0 %v772
  %v1334 = vpop.f32.mrf.mxu0
  %v1335 = vadd.f32 %v507, %v1334
  %v1336 = vpop.f32.mrf.mxu0
  %v1337 = vadd.f32 %v507, %v1336
  %1338 = vmatmul.bf16.gmra.mxu0 %v775
  %v1339 = vpop.f32.mrf.mxu0
  %v1340 = vadd.f32 %v507, %v1339
  %v1341 = vpop.f32.mrf.mxu0
  %v1342 = vadd.f32 %v507, %v1341
  %1343 = vmatmul.bf16.gmra.mxu0 %v778
  %v1344 = vpop.f32.mrf.mxu0
  %v1345 = vadd.f32 %v507, %v1344
  %v1346 = vpop.f32.mrf.mxu0
  %v1347 = vadd.f32 %v507, %v1346
  %1348 = vmatmul.bf16.gmra.mxu0 %v781
  %v1349 = vpop.f32.mrf.mxu0
  %v1350 = vadd.f32 %v507, %v1349
  %v1351 = vpop.f32.mrf.mxu0
  %v1352 = vadd.f32 %v507, %v1351
  %1353 = vmatmul.bf16.gmra.mxu0 %v784
  %v1354 = vpop.f32.mrf.mxu0
  %v1355 = vadd.f32 %v507, %v1354
  %v1356 = vpop.f32.mrf.mxu0
  %v1357 = vadd.f32 %v507, %v1356
  %1358 = vmatmul.bf16.gmra.mxu0 %v787
  %v1359 = vpop.f32.mrf.mxu0
  %v1360 = vadd.f32 %v507, %v1359
  %v1361 = vpop.f32.mrf.mxu0
  %v1362 = vadd.f32 %v507, %v1361
  %1363 = vmatmul.bf16.gmra.mxu0 %v790
  %v1364 = vpop.f32.mrf.mxu0
  %v1365 = vadd.f32 %v507, %v1364
  %v1366 = vpop.f32.mrf.mxu0
  %v1367 = vadd.f32 %v507, %v1366
  %1368 = vmatmul.bf16.gmra.mxu0 %v793
  %v1369 = vpop.f32.mrf.mxu0
  %v1370 = vadd.f32 %v507, %v1369
  %v1371 = vpop.f32.mrf.mxu0
  %v1372 = vadd.f32 %v507, %v1371
  %1373 = vmatmul.bf16.gmra.mxu0 %v796
  %v1374 = vpop.f32.mrf.mxu0
  %v1375 = vadd.f32 %v507, %v1374
  %v1376 = vpop.f32.mrf.mxu0
  %v1377 = vadd.f32 %v507, %v1376
  %1378 = vmatmul.bf16.gmra.mxu0 %v799
  %v1379 = vpop.f32.mrf.mxu0
  %v1380 = vadd.f32 %v507, %v1379
  %v1381 = vpop.f32.mrf.mxu0
  %v1382 = vadd.f32 %v507, %v1381
  %1383 = vmatmul.bf16.gmra.mxu0 %v802
  %v1384 = vpop.f32.mrf.mxu0
  %v1385 = vadd.f32 %v507, %v1384
  %v1386 = vpop.f32.mrf.mxu0
  %v1387 = vadd.f32 %v507, %v1386
  %1388 = vmatmul.bf16.gmra.mxu0 %v805
  %v1389 = vpop.f32.mrf.mxu0
  %v1390 = vadd.f32 %v507, %v1389
  %v1391 = vpop.f32.mrf.mxu0
  %v1392 = vadd.f32 %v507, %v1391
  %1393 = vmatmul.bf16.gmra.mxu0 %v808
  %v1394 = vpop.f32.mrf.mxu0
  %v1395 = vadd.f32 %v507, %v1394
  %v1396 = vpop.f32.mrf.mxu0
  %v1397 = vadd.f32 %v507, %v1396
  %1398 = vmatmul.bf16.gmra.mxu0 %v811
  %v1399 = vpop.f32.mrf.mxu0
  %v1400 = vadd.f32 %v507, %v1399
  %v1401 = vpop.f32.mrf.mxu0
  %v1402 = vadd.f32 %v507, %v1401
  %1403 = vmatmul.bf16.gmra.mxu0 %v814
  %v1404 = vpop.f32.mrf.mxu0
  %v1405 = vadd.f32 %v507, %v1404
  %v1406 = vpop.f32.mrf.mxu0
  %v1407 = vadd.f32 %v507, %v1406
  %1408 = vmatmul.bf16.gmra.mxu0 %v817
  %v1409 = vpop.f32.mrf.mxu0
  %v1410 = vadd.f32 %v507, %v1409
  %v1411 = vpop.f32.mrf.mxu0
  %v1412 = vadd.f32 %v507, %v1411
  %1413 = vmatmul.bf16.gmra.mxu0 %v820
  %v1414 = vpop.f32.mrf.mxu0
  %v1415 = vadd.f32 %v507, %v1414
  %v1416 = vpop.f32.mrf.mxu0
  %v1417 = vadd.f32 %v507, %v1416
  %1418 = vmatmul.bf16.gmra.mxu0 %v823
  %v1419 = vpop.f32.mrf.mxu0
  %v1420 = vadd.f32 %v507, %v1419
  %v1421 = vpop.f32.mrf.mxu0
  %v1422 = vadd.f32 %v507, %v1421
  %1423 = vmatmul.bf16.gmra.mxu0 %v826
  %v1424 = vpop.f32.mrf.mxu0
  %v1425 = vadd.f32 %v507, %v1424
  %v1426 = vpop.f32.mrf.mxu0
  %v1427 = vadd.f32 %v507, %v1426
  %1428 = vmatmul.bf16.gmra.mxu0 %v829
  %v1429 = vpop.f32.mrf.mxu0
  %v1430 = vadd.f32 %v507, %v1429
  %v1431 = vpop.f32.mrf.mxu0
  %v1432 = vadd.f32 %v507, %v1431
  %1433 = vmatmul.bf16.gmra.mxu0 %v832
  %v1434 = vpop.f32.mrf.mxu0
  %v1435 = vadd.f32 %v507, %v1434
  %v1436 = vpop.f32.mrf.mxu0
  %v1437 = vadd.f32 %v507, %v1436
  %1438 = vmatmul.bf16.gmra.mxu0 %v835
  %v1439 = vpop.f32.mrf.mxu0
  %v1440 = vadd.f32 %v507, %v1439
  %v1441 = vpop.f32.mrf.mxu0
  %v1442 = vadd.f32 %v507, %v1441
  %1443 = vmatmul.bf16.gmra.mxu0 %v838
  %v1444 = vpop.f32.mrf.mxu0
  %v1445 = vadd.f32 %v507, %v1444
  %v1446 = vpop.f32.mrf.mxu0
  %v1447 = vadd.f32 %v507, %v1446
  %1448 = vmatmul.bf16.gmra.mxu0 %v841
  %v1449 = vpop.f32.mrf.mxu0
  %v1450 = vadd.f32 %v507, %v1449
  %v1451 = vpop.f32.mrf.mxu0
  %v1452 = vadd.f32 %v507, %v1451
  %1453 = vmatmul.bf16.gmra.mxu0 %v844
  %v1454 = vpop.f32.mrf.mxu0
  %v1455 = vadd.f32 %v507, %v1454
  %v1456 = vpop.f32.mrf.mxu0
  %v1457 = vadd.f32 %v507, %v1456
  %1458 = vmatmul.bf16.gmra.mxu0 %v847
  %v1459 = vpop.f32.mrf.mxu0
  %v1460 = vadd.f32 %v507, %v1459
  %v1461 = vpop.f32.mrf.mxu0
  %v1462 = vadd.f32 %v507, %v1461
  %1463 = vmatmul.bf16.gmra.mxu0 %v850
  %v1464 = vpop.f32.mrf.mxu0
  %v1465 = vadd.f32 %v507, %v1464
  %v1466 = vpop.f32.mrf.mxu0
  %v1467 = vadd.f32 %v507, %v1466
  %1468 = vmatmul.bf16.gmra.mxu0 %v853
  %v1469 = vpop.f32.mrf.mxu0
  %v1470 = vadd.f32 %v507, %v1469
  %v1471 = vpop.f32.mrf.mxu0
  %v1472 = vadd.f32 %v507, %v1471
  %1473 = vmatmul.bf16.gmra.mxu0 %v856
  %v1474 = vpop.f32.mrf.mxu0
  %v1475 = vadd.f32 %v507, %v1474
  %v1476 = vpop.f32.mrf.mxu0
  %v1477 = vadd.f32 %v507, %v1476
  %1478 = vmatmul.bf16.gmra.mxu0 %v859
  %v1479 = vpop.f32.mrf.mxu0
  %v1480 = vadd.f32 %v507, %v1479
  %v1481 = vpop.f32.mrf.mxu0
  %v1482 = vadd.f32 %v507, %v1481
  %1483 = vmatmul.bf16.gmra.mxu0 %v862
  %v1484 = vpop.f32.mrf.mxu0
  %v1485 = vadd.f32 %v507, %v1484
  %v1486 = vpop.f32.mrf.mxu0
  %v1487 = vadd.f32 %v507, %v1486
  %1488 = vmatmul.bf16.gmra.mxu0 %v865
  %v1489 = vpop.f32.mrf.mxu0
  %v1490 = vadd.f32 %v507, %v1489
  %v1491 = vpop.f32.mrf.mxu0
  %v1492 = vadd.f32 %v507, %v1491
  %1493 = vmatmul.bf16.gmra.mxu0 %v868
  %v1494 = vpop.f32.mrf.mxu0
  %v1495 = vadd.f32 %v507, %v1494
  %v1496 = vpop.f32.mrf.mxu0
  %v1497 = vadd.f32 %v507, %v1496
  %1498 = vmatmul.bf16.gmra.mxu0 %v871
  %v1499 = vpop.f32.mrf.mxu0
  %v1500 = vadd.f32 %v507, %v1499
  %v1501 = vpop.f32.mrf.mxu0
  %v1502 = vadd.f32 %v507, %v1501
  %1503 = vmatmul.bf16.gmra.mxu0 %v874
  %v1504 = vpop.f32.mrf.mxu0
  %v1505 = vadd.f32 %v507, %v1504
  %v1506 = vpop.f32.mrf.mxu0
  %v1507 = vadd.f32 %v507, %v1506
  %1508 = vmatmul.bf16.gmra.mxu0 %v877
  %v1509 = vpop.f32.mrf.mxu0
  %v1510 = vadd.f32 %v507, %v1509
  %v1511 = vpop.f32.mrf.mxu0
  %v1512 = vadd.f32 %v507, %v1511
  %1513 = vmatmul.bf16.gmra.mxu0 %v880
  %v1514 = vpop.f32.mrf.mxu0
  %v1515 = vadd.f32 %v507, %v1514
  %v1516 = vpop.f32.mrf.mxu0
  %v1517 = vadd.f32 %v507, %v1516
  %1518 = vmatmul.bf16.gmra.mxu0 %v883
  %v1519 = vpop.f32.mrf.mxu0
  %v1520 = vadd.f32 %v507, %v1519
  %v1521 = vpop.f32.mrf.mxu0
  %v1522 = vadd.f32 %v507, %v1521
  %1523 = vmatmul.bf16.gmra.mxu0 %v886
  %v1524 = vpop.f32.mrf.mxu0
  %v1525 = vadd.f32 %v507, %v1524
  %v1526 = vpop.f32.mrf.mxu0
  %v1527 = vadd.f32 %v507, %v1526
  %1528 = vmatmul.bf16.gmra.mxu0 %v889
  %v1529 = vpop.f32.mrf.mxu0
  %v1530 = vadd.f32 %v507, %v1529
  %v1531 = vpop.f32.mrf.mxu0
  %v1532 = vadd.f32 %v507, %v1531
  %1533 = vmatmul.bf16.gmra.mxu0 %v892
  %v1534 = vpop.f32.mrf.mxu0
  %v1535 = vadd.f32 %v507, %v1534
  %v1536 = vpop.f32.mrf.mxu0
  %v1537 = vadd.f32 %v507, %v1536
  %1538 = vmatmul.bf16.gmra.mxu0 %v895
  %v1539 = vpop.f32.mrf.mxu0
  %v1540 = vadd.f32 %v507, %v1539
  %v1541 = vpop.f32.mrf.mxu0
  %v1542 = vadd.f32 %v507, %v1541
  %1543 = vmatmul.bf16.gmra.mxu0 %v898
  %v1544 = vpop.f32.mrf.mxu0
  %v1545 = vadd.f32 %v507, %v1544
  %v1546 = vpop.f32.mrf.mxu0
  %v1547 = vadd.f32 %v507, %v1546
  %1548 = vdwg.mxu0
  %v1549 = vmax.f32 %v910, 0.0
  %v1550 = vmax.f32 %v912, 0.0
  %v1551 = vmax.f32 %v915, 0.0
  %v1552 = vmax.f32 %v917, 0.0
  %v1553 = vmax.f32 %v920, 0.0
  %v1554 = vmax.f32 %v922, 0.0
  %v1555 = vmax.f32 %v925, 0.0
  %v1556 = vmax.f32 %v927, 0.0
  %v1557 = vmax.f32 %v930, 0.0
  %v1558 = vmax.f32 %v932, 0.0
  %v1559 = vmax.f32 %v935, 0.0
  %v1560 = vmax.f32 %v937, 0.0
  %v1561 = vmax.f32 %v940, 0.0
  %v1562 = vmax.f32 %v942, 0.0
  %v1563 = vmax.f32 %v945, 0.0
  %v1564 = vmax.f32 %v947, 0.0
  %v1565 = vmax.f32 %v950, 0.0
  %v1566 = vmax.f32 %v952, 0.0
  %v1567 = vmax.f32 %v955, 0.0
  %v1568 = vmax.f32 %v957, 0.0
  %v1569 = vmax.f32 %v960, 0.0
  %v1570 = vmax.f32 %v962, 0.0
  %v1571 = vmax.f32 %v965, 0.0
  %v1572 = vmax.f32 %v967, 0.0
  %v1573 = vmax.f32 %v970, 0.0
  %v1574 = vmax.f32 %v972, 0.0
  %v1575 = vmax.f32 %v975, 0.0
  %v1576 = vmax.f32 %v977, 0.0
  %v1577 = vmax.f32 %v980, 0.0
  %v1578 = vmax.f32 %v982, 0.0
  %v1579 = vmax.f32 %v985, 0.0
  %v1580 = vmax.f32 %v987, 0.0
  %v1581 = vmax.f32 %v990, 0.0
  %v1582 = vmax.f32 %v992, 0.0
  %v1583 = vmax.f32 %v995, 0.0
  %v1584 = vmax.f32 %v997, 0.0
  %v1585 = vmax.f32 %v1000, 0.0
  %v1586 = vmax.f32 %v1002, 0.0
  %v1587 = vmax.f32 %v1005, 0.0
  %v1588 = vmax.f32 %v1007, 0.0
  %v1589 = vmax.f32 %v1010, 0.0
  %v1590 = vmax.f32 %v1012, 0.0
  %v1591 = vmax.f32 %v1015, 0.0
  %v1592 = vmax.f32 %v1017, 0.0
  %v1593 = vmax.f32 %v1020, 0.0
  %v1594 = vmax.f32 %v1022, 0.0
  %v1595 = vmax.f32 %v1025, 0.0
  %v1596 = vmax.f32 %v1027, 0.0
  %v1597 = vmax.f32 %v1030, 0.0
  %v1598 = vmax.f32 %v1032, 0.0
  %v1599 = vmax.f32 %v1035, 0.0
  %v1600 = vmax.f32 %v1037, 0.0
  %v1601 = vmax.f32 %v1040, 0.0
  %v1602 = vmax.f32 %v1042, 0.0
  %v1603 = vmax.f32 %v1045, 0.0
  %v1604 = vmax.f32 %v1047, 0.0
  %v1605 = vmax.f32 %v1050, 0.0
  %v1606 = vmax.f32 %v1052, 0.0
  %v1607 = vmax.f32 %v1055, 0.0
  %v1608 = vmax.f32 %v1057, 0.0
  %v1609 = vmax.f32 %v1060, 0.0
  %v1610 = vmax.f32 %v1062, 0.0
  %v1611 = vmax.f32 %v1065, 0.0
  %v1612 = vmax.f32 %v1067, 0.0
  %v1613 = vmax.f32 %v1070, 0.0
  %v1614 = vmax.f32 %v1072, 0.0
  %v1615 = vmax.f32 %v1075, 0.0
  %v1616 = vmax.f32 %v1077, 0.0
  %v1617 = vmax.f32 %v1080, 0.0
  %v1618 = vmax.f32 %v1082, 0.0
  %v1619 = vmax.f32 %v1085, 0.0
  %v1620 = vmax.f32 %v1087, 0.0
  %v1621 = vmax.f32 %v1090, 0.0
  %v1622 = vmax.f32 %v1092, 0.0
  %v1623 = vmax.f32 %v1095, 0.0
  %v1624 = vmax.f32 %v1097, 0.0
  %v1625 = vmax.f32 %v1100, 0.0
  %v1626 = vmax.f32 %v1102, 0.0
  %v1627 = vmax.f32 %v1105, 0.0
  %v1628 = vmax.f32 %v1107, 0.0
  %v1629 = vmax.f32 %v1110, 0.0
  %v1630 = vmax.f32 %v1112, 0.0
  %v1631 = vmax.f32 %v1115, 0.0
  %v1632 = vmax.f32 %v1117, 0.0
  %v1633 = vmax.f32 %v1120, 0.0
  %v1634 = vmax.f32 %v1122, 0.0
  %v1635 = vmax.f32 %v1125, 0.0
  %v1636 = vmax.f32 %v1127, 0.0
  %v1637 = vmax.f32 %v1130, 0.0
  %v1638 = vmax.f32 %v1132, 0.0
  %v1639 = vmax.f32 %v1135, 0.0
  %v1640 = vmax.f32 %v1137, 0.0
  %v1641 = vmax.f32 %v1140, 0.0
  %v1642 = vmax.f32 %v1142, 0.0
  %v1643 = vmax.f32 %v1145, 0.0
  %v1644 = vmax.f32 %v1147, 0.0
  %v1645 = vmax.f32 %v1150, 0.0
  %v1646 = vmax.f32 %v1152, 0.0
  %v1647 = vmax.f32 %v1155, 0.0
  %v1648 = vmax.f32 %v1157, 0.0
  %v1649 = vmax.f32 %v1160, 0.0
  %v1650 = vmax.f32 %v1162, 0.0
  %v1651 = vmax.f32 %v1165, 0.0
  %v1652 = vmax.f32 %v1167, 0.0
  %v1653 = vmax.f32 %v1170, 0.0
  %v1654 = vmax.f32 %v1172, 0.0
  %v1655 = vmax.f32 %v1175, 0.0
  %v1656 = vmax.f32 %v1177, 0.0
  %v1657 = vmax.f32 %v1180, 0.0
  %v1658 = vmax.f32 %v1182, 0.0
  %v1659 = vmax.f32 %v1185, 0.0
  %v1660 = vmax.f32 %v1187, 0.0
  %v1661 = vmax.f32 %v1190, 0.0
  %v1662 = vmax.f32 %v1192, 0.0
  %v1663 = vmax.f32 %v1195, 0.0
  %v1664 = vmax.f32 %v1197, 0.0
  %v1665 = vmax.f32 %v1200, 0.0
  %v1666 = vmax.f32 %v1202, 0.0
  %v1667 = vmax.f32 %v1205, 0.0
  %v1668 = vmax.f32 %v1207, 0.0
  %v1669 = vmax.f32 %v1210, 0.0
  %v1670 = vmax.f32 %v1212, 0.0
  %v1671 = vmax.f32 %v1215, 0.0
  %v1672 = vmax.f32 %v1217, 0.0
  %v1673 = vmax.f32 %v1220, 0.0
  %v1674 = vmax.f32 %v1222, 0.0
  %v1675 = vmax.f32 %v1225, 0.0
  %v1676 = vmax.f32 %v1227, 0.0
  %v1677 = vmax.f32 %v1230, 0.0
  %v1678 = vmax.f32 %v1232, 0.0
  %v1679 = vmax.f32 %v1235, 0.0
  %v1680 = vmax.f32 %v1237, 0.0
  %v1681 = vmax.f32 %v1240, 0.0
  %v1682 = vmax.f32 %v1242, 0.0
  %v1683 = vmax.f32 %v1245, 0.0
  %v1684 = vmax.f32 %v1247, 0.0
  %v1685 = vmax.f32 %v1250, 0.0
  %v1686 = vmax.f32 %v1252, 0.0
  %v1687 = vmax.f32 %v1255, 0.0
  %v1688 = vmax.f32 %v1257, 0.0
  %v1689 = vmax.f32 %v1260, 0.0
  %v1690 = vmax.f32 %v1262, 0.0
  %v1691 = vmax.f32 %v1265, 0.0
  %v1692 = vmax.f32 %v1267, 0.0
  %v1693 = vmax.f32 %v1270, 0.0
  %v1694 = vmax.f32 %v1272, 0.0
  %v1695 = vmax.f32 %v1275, 0.0
  %v1696 = vmax.f32 %v1277, 0.0
  %v1697 = vmax.f32 %v1280, 0.0
  %v1698 = vmax.f32 %v1282, 0.0
  %v1699 = vmax.f32 %v1285, 0.0
  %v1700 = vmax.f32 %v1287, 0.0
  %v1701 = vmax.f32 %v1290, 0.0
  %v1702 = vmax.f32 %v1292, 0.0
  %v1703 = vmax.f32 %v1295, 0.0
  %v1704 = vmax.f32 %v1297, 0.0
  %v1705 = vmax.f32 %v1300, 0.0
  %v1706 = vmax.f32 %v1302, 0.0
  %v1707 = vmax.f32 %v1305, 0.0
  %v1708 = vmax.f32 %v1307, 0.0
  %v1709 = vmax.f32 %v1310, 0.0
  %v1710 = vmax.f32 %v1312, 0.0
  %v1711 = vmax.f32 %v1315, 0.0
  %v1712 = vmax.f32 %v1317, 0.0
  %v1713 = vmax.f32 %v1320, 0.0
  %v1714 = vmax.f32 %v1322, 0.0
  %v1715 = vmax.f32 %v1325, 0.0
  %v1716 = vmax.f32 %v1327, 0.0
  %v1717 = vmax.f32 %v1330, 0.0
  %v1718 = vmax.f32 %v1332, 0.0
  %v1719 = vmax.f32 %v1335, 0.0
  %v1720 = vmax.f32 %v1337, 0.0
  %v1721 = vmax.f32 %v1340, 0.0
  %v1722 = vmax.f32 %v1342, 0.0
  %v1723 = vmax.f32 %v1345, 0.0
  %v1724 = vmax.f32 %v1347, 0.0
  %v1725 = vmax.f32 %v1350, 0.0
  %v1726 = vmax.f32 %v1352, 0.0
  %v1727 = vmax.f32 %v1355, 0.0
  %v1728 = vmax.f32 %v1357, 0.0
  %v1729 = vmax.f32 %v1360, 0.0
  %v1730 = vmax.f32 %v1362, 0.0
  %v1731 = vmax.f32 %v1365, 0.0
  %v1732 = vmax.f32 %v1367, 0.0
  %v1733 = vmax.f32 %v1370, 0.0
  %v1734 = vmax.f32 %v1372, 0.0
  %v1735 = vmax.f32 %v1375, 0.0
  %v1736 = vmax.f32 %v1377, 0.0
  %v1737 = vmax.f32 %v1380, 0.0
  %v1738 = vmax.f32 %v1382, 0.0
  %v1739 = vmax.f32 %v1385, 0.0
  %v1740 = vmax.f32 %v1387, 0.0
  %v1741 = vmax.f32 %v1390, 0.0
  %v1742 = vmax.f32 %v1392, 0.0
  %v1743 = vmax.f32 %v1395, 0.0
  %v1744 = vmax.f32 %v1397, 0.0
  %v1745 = vmax.f32 %v1400, 0.0
  %v1746 = vmax.f32 %v1402, 0.0
  %v1747 = vmax.f32 %v1405, 0.0
  %v1748 = vmax.f32 %v1407, 0.0
  %v1749 = vmax.f32 %v1410, 0.0
  %v1750 = vmax.f32 %v1412, 0.0
  %v1751 = vmax.f32 %v1415, 0.0
  %v1752 = vmax.f32 %v1417, 0.0
  %v1753 = vmax.f32 %v1420, 0.0
  %v1754 = vmax.f32 %v1422, 0.0
  %v1755 = vmax.f32 %v1425, 0.0
  %v1756 = vmax.f32 %v1427, 0.0
  %v1757 = vmax.f32 %v1430, 0.0
  %v1758 = vmax.f32 %v1432, 0.0
  %v1759 = vmax.f32 %v1435, 0.0
  %v1760 = vmax.f32 %v1437, 0.0
  %v1761 = vmax.f32 %v1440, 0.0
  %v1762 = vmax.f32 %v1442, 0.0
  %v1763 = vmax.f32 %v1445, 0.0
  %v1764 = vmax.f32 %v1447, 0.0
  %v1765 = vmax.f32 %v1450, 0.0
  %v1766 = vmax.f32 %v1452, 0.0
  %v1767 = vmax.f32 %v1455, 0.0
  %v1768 = vmax.f32 %v1457, 0.0
  %v1769 = vmax.f32 %v1460, 0.0
  %v1770 = vmax.f32 %v1462, 0.0
  %v1771 = vmax.f32 %v1465, 0.0
  %v1772 = vmax.f32 %v1467, 0.0
  %v1773 = vmax.f32 %v1470, 0.0
  %v1774 = vmax.f32 %v1472, 0.0
  %v1775 = vmax.f32 %v1475, 0.0
  %v1776 = vmax.f32 %v1477, 0.0
  %v1777 = vmax.f32 %v1480, 0.0
  %v1778 = vmax.f32 %v1482, 0.0
  %v1779 = vmax.f32 %v1485, 0.0
  %v1780 = vmax.f32 %v1487, 0.0
  %v1781 = vmax.f32 %v1490, 0.0
  %v1782 = vmax.f32 %v1492, 0.0
  %v1783 = vmax.f32 %v1495, 0.0
  %v1784 = vmax.f32 %v1497, 0.0
  %v1785 = vmax.f32 %v1500, 0.0
  %v1786 = vmax.f32 %v1502, 0.0
  %v1787 = vmax.f32 %v1505, 0.0
  %v1788 = vmax.f32 %v1507, 0.0
  %v1789 = vmax.f32 %v1510, 0.0
  %v1790 = vmax.f32 %v1512, 0.0
  %v1791 = vmax.f32 %v1515, 0.0
  %v1792 = vmax.f32 %v1517, 0.0
  %v1793 = vmax.f32 %v1520, 0.0
  %v1794 = vmax.f32 %v1522, 0.0
  %v1795 = vmax.f32 %v1525, 0.0
  %v1796 = vmax.f32 %v1527, 0.0
  %v1797 = vmax.f32 %v1530, 0.0
  %v1798 = vmax.f32 %v1532, 0.0
  %v1799 = vmax.f32 %v1535, 0.0
  %v1800 = vmax.f32 %v1537, 0.0
  %v1801 = vmax.f32 %v1540, 0.0
  %v1802 = vmax.f32 %v1542, 0.0
  %v1803 = vmax.f32 %v1545, 0.0
  %v1804 = vmax.f32 %v1547, 0.0
  %s1805 = scalar_lea.vmem [#allocation2], 80
  %vm1806 = vcmask 261120
  %1807 = vst.msk [vmem:[%s1805] sm:$0xff] %vm1806, %v1566
  %1808 = vst.msk [vmem:[%s1805 + $0x8] sm:$0xff] %vm1806, %v1568
  %1809 = vst.msk [vmem:[%s1805 + $0x10] sm:$0xff] %vm1806, %v1570
  %1810 = vst.msk [vmem:[%s1805 + $0x18] sm:$0xff] %vm1806, %v1572
  %1811 = vst.msk [vmem:[%s1805 + $0x20] sm:$0xff] %vm1806, %v1574
  %1812 = vst.msk [vmem:[%s1805 + $0x28] sm:$0xff] %vm1806, %v1576
  %1813 = vst.msk [vmem:[%s1805 + $0x30] sm:$0xff] %vm1806, %v1578
  %1814 = vst.msk [vmem:[%s1805 + $0x38] sm:$0xff] %vm1806, %v1580
  %1815 = vst.msk [vmem:[%s1805 + $0x48] sm:$0xff] %vm1806, %v1598
  %1816 = vst.msk [vmem:[%s1805 + $0x50] sm:$0xff] %vm1806, %v1600
  %1817 = vst.msk [vmem:[%s1805 + $0x58] sm:$0xff] %vm1806, %v1602
  %1818 = vst.msk [vmem:[%s1805 + $0x60] sm:$0xff] %vm1806, %v1604
  %1819 = vst.msk [vmem:[%s1805 + $0x68] sm:$0xff] %vm1806, %v1606
  %1820 = vst.msk [vmem:[%s1805 + $0x70] sm:$0xff] %vm1806, %v1608
  %1821 = vst.msk [vmem:[%s1805 + $0x78] sm:$0xff] %vm1806, %v1610
  %1822 = vst.msk [vmem:[%s1805 + $0x80] sm:$0xff] %vm1806, %v1612
  %1823 = vst.msk [vmem:[%s1805 + $0x90] sm:$0xff] %vm1806, %v1630
  %1824 = vst.msk [vmem:[%s1805 + $0x98] sm:$0xff] %vm1806, %v1632
  %1825 = vst.msk [vmem:[%s1805 + $0xa0] sm:$0xff] %vm1806, %v1634
  %1826 = vst.msk [vmem:[%s1805 + $0xa8] sm:$0xff] %vm1806, %v1636
  %1827 = vst.msk [vmem:[%s1805 + $0xb0] sm:$0xff] %vm1806, %v1638
  %1828 = vst.msk [vmem:[%s1805 + $0xb8] sm:$0xff] %vm1806, %v1640
  %1829 = vst.msk [vmem:[%s1805 + $0xc0] sm:$0xff] %vm1806, %v1642
  %1830 = vst.msk [vmem:[%s1805 + $0xc8] sm:$0xff] %vm1806, %v1644
  %1831 = vst.msk [vmem:[%s1805 + $0xd8] sm:$0xff] %vm1806, %v1662
  %1832 = vst.msk [vmem:[%s1805 + $0xe0] sm:$0xff] %vm1806, %v1664
  %1833 = vst.msk [vmem:[%s1805 + $0xe8] sm:$0xff] %vm1806, %v1666
  %1834 = vst.msk [vmem:[%s1805 + $0xf0] sm:$0xff] %vm1806, %v1668
  %1835 = vst.msk [vmem:[%s1805 + $0xf8] sm:$0xff] %vm1806, %v1670
  %1836 = vst.msk [vmem:[%s1805 + $0x100] sm:$0xff] %vm1806, %v1672
  %1837 = vst.msk [vmem:[%s1805 + $0x108] sm:$0xff] %vm1806, %v1674
  %1838 = vst.msk [vmem:[%s1805 + $0x110] sm:$0xff] %vm1806, %v1676
  %1839 = vst.msk [vmem:[%s1805 + $0x120] sm:$0xff] %vm1806, %v1694
  %1840 = vst.msk [vmem:[%s1805 + $0x128] sm:$0xff] %vm1806, %v1696
  %1841 = vst.msk [vmem:[%s1805 + $0x130] sm:$0xff] %vm1806, %v1698
  %1842 = vst.msk [vmem:[%s1805 + $0x138] sm:$0xff] %vm1806, %v1700
  %1843 = vst.msk [vmem:[%s1805 + $0x140] sm:$0xff] %vm1806, %v1702
  %1844 = vst.msk [vmem:[%s1805 + $0x148] sm:$0xff] %vm1806, %v1704
  %1845 = vst.msk [vmem:[%s1805 + $0x150] sm:$0xff] %vm1806, %v1706
  %1846 = vst.msk [vmem:[%s1805 + $0x158] sm:$0xff] %vm1806, %v1708
  %1847 = vst.msk [vmem:[%s1805 + $0x168] sm:$0xff] %vm1806, %v1726
  %1848 = vst.msk [vmem:[%s1805 + $0x170] sm:$0xff] %vm1806, %v1728
  %1849 = vst.msk [vmem:[%s1805 + $0x178] sm:$0xff] %vm1806, %v1730
  %1850 = vst.msk [vmem:[%s1805 + $0x180] sm:$0xff] %vm1806, %v1732
  %1851 = vst.msk [vmem:[%s1805 + $0x188] sm:$0xff] %vm1806, %v1734
  %1852 = vst.msk [vmem:[%s1805 + $0x190] sm:$0xff] %vm1806, %v1736
  %1853 = vst.msk [vmem:[%s1805 + $0x198] sm:$0xff] %vm1806, %v1738
  %1854 = vst.msk [vmem:[%s1805 + $0x1a0] sm:$0xff] %vm1806, %v1740
  %1855 = vst.msk [vmem:[%s1805 + $0x1b0] sm:$0xff] %vm1806, %v1758
  %1856 = vst.msk [vmem:[%s1805 + $0x1b8] sm:$0xff] %vm1806, %v1760
  %1857 = vst.msk [vmem:[%s1805 + $0x1c0] sm:$0xff] %vm1806, %v1762
  %1858 = vst.msk [vmem:[%s1805 + $0x1c8] sm:$0xff] %vm1806, %v1764
  %1859 = vst.msk [vmem:[%s1805 + $0x1d0] sm:$0xff] %vm1806, %v1766
  %1860 = vst.msk [vmem:[%s1805 + $0x1d8] sm:$0xff] %vm1806, %v1768
  %1861 = vst.msk [vmem:[%s1805 + $0x1e0] sm:$0xff] %vm1806, %v1770
  %1862 = vst.msk [vmem:[%s1805 + $0x1e8] sm:$0xff] %vm1806, %v1772
  %1863 = vst.msk [vmem:[%s1805 + $0x1f8] sm:$0xff] %vm1806, %v1790
  %1864 = vst.msk [vmem:[%s1805 + $0x200] sm:$0xff] %vm1806, %v1792
  %1865 = vst.msk [vmem:[%s1805 + $0x208] sm:$0xff] %vm1806, %v1794
  %1866 = vst.msk [vmem:[%s1805 + $0x210] sm:$0xff] %vm1806, %v1796
  %1867 = vst.msk [vmem:[%s1805 + $0x218] sm:$0xff] %vm1806, %v1798
  %1868 = vst.msk [vmem:[%s1805 + $0x220] sm:$0xff] %vm1806, %v1800
  %1869 = vst.msk [vmem:[%s1805 + $0x228] sm:$0xff] %vm1806, %v1802
  %1870 = vst.msk [vmem:[%s1805 + $0x230] sm:$0xff] %vm1806, %v1804
  %1935 = vrot.lane.b32.xlu0 %v1565, 32
  %v1936 = vpop.permute.xlu0 %1935
  %1937 = vrot.lane.b32.xlu0 %v1567, 32
  %v1938 = vpop.permute.xlu0 %1937
  %1939 = vrot.lane.b32.xlu0 %v1569, 32
  %v1940 = vpop.permute.xlu0 %1939
  %1941 = vrot.lane.b32.xlu0 %v1571, 32
  %v1942 = vpop.permute.xlu0 %1941
  %1943 = vrot.lane.b32.xlu0 %v1573, 32
  %v1944 = vpop.permute.xlu0 %1943
  %1945 = vrot.lane.b32.xlu0 %v1575, 32
  %v1946 = vpop.permute.xlu0 %1945
  %1947 = vrot.lane.b32.xlu0 %v1577, 32
  %v1948 = vpop.permute.xlu0 %1947
  %1949 = vrot.lane.b32.xlu0 %v1579, 32
  %v1950 = vpop.permute.xlu0 %1949
  %1951 = vrot.lane.b32.xlu0 %v1597, 32
  %v1952 = vpop.permute.xlu0 %1951
  %1953 = vrot.lane.b32.xlu0 %v1599, 32
  %v1954 = vpop.permute.xlu0 %1953
  %1955 = vrot.lane.b32.xlu0 %v1601, 32
  %v1956 = vpop.permute.xlu0 %1955
  %1957 = vrot.lane.b32.xlu0 %v1603, 32
  %v1958 = vpop.permute.xlu0 %1957
  %1959 = vrot.lane.b32.xlu0 %v1605, 32
  %v1960 = vpop.permute.xlu0 %1959
  %1961 = vrot.lane.b32.xlu0 %v1607, 32
  %v1962 = vpop.permute.xlu0 %1961
  %1963 = vrot.lane.b32.xlu0 %v1609, 32
  %v1964 = vpop.permute.xlu0 %1963
  %1965 = vrot.lane.b32.xlu0 %v1611, 32
  %v1966 = vpop.permute.xlu0 %1965
  %1967 = vrot.lane.b32.xlu0 %v1629, 32
  %v1968 = vpop.permute.xlu0 %1967
  %1969 = vrot.lane.b32.xlu0 %v1631, 32
  %v1970 = vpop.permute.xlu0 %1969
  %1971 = vrot.lane.b32.xlu0 %v1633, 32
  %v1972 = vpop.permute.xlu0 %1971
  %1973 = vrot.lane.b32.xlu0 %v1635, 32
  %v1974 = vpop.permute.xlu0 %1973
  %1975 = vrot.lane.b32.xlu0 %v1637, 32
  %v1976 = vpop.permute.xlu0 %1975
  %1977 = vrot.lane.b32.xlu0 %v1639, 32
  %v1978 = vpop.permute.xlu0 %1977
  %1979 = vrot.lane.b32.xlu0 %v1641, 32
  %v1980 = vpop.permute.xlu0 %1979
  %1981 = vrot.lane.b32.xlu0 %v1643, 32
  %v1982 = vpop.permute.xlu0 %1981
  %1983 = vrot.lane.b32.xlu0 %v1661, 32
  %v1984 = vpop.permute.xlu0 %1983
  %1985 = vrot.lane.b32.xlu0 %v1663, 32
  %v1986 = vpop.permute.xlu0 %1985
  %1987 = vrot.lane.b32.xlu0 %v1665, 32
  %v1988 = vpop.permute.xlu0 %1987
  %1989 = vrot.lane.b32.xlu0 %v1667, 32
  %v1990 = vpop.permute.xlu0 %1989
  %1991 = vrot.lane.b32.xlu0 %v1669, 32
  %v1992 = vpop.permute.xlu0 %1991
  %1993 = vrot.lane.b32.xlu0 %v1671, 32
  %v1994 = vpop.permute.xlu0 %1993
  %1995 = vrot.lane.b32.xlu0 %v1673, 32
  %v1996 = vpop.permute.xlu0 %1995
  %1997 = vrot.lane.b32.xlu0 %v1675, 32
  %v1998 = vpop.permute.xlu0 %1997
  %1999 = vrot.lane.b32.xlu0 %v1693, 32
  %v2000 = vpop.permute.xlu0 %1999
  %2001 = vrot.lane.b32.xlu0 %v1695, 32
  %v2002 = vpop.permute.xlu0 %2001
  %2003 = vrot.lane.b32.xlu0 %v1697, 32
  %v2004 = vpop.permute.xlu0 %2003
  %2005 = vrot.lane.b32.xlu0 %v1699, 32
  %v2006 = vpop.permute.xlu0 %2005
  %2007 = vrot.lane.b32.xlu0 %v1701, 32
  %v2008 = vpop.permute.xlu0 %2007
  %2009 = vrot.lane.b32.xlu0 %v1703, 32
  %v2010 = vpop.permute.xlu0 %2009
  %2011 = vrot.lane.b32.xlu0 %v1705, 32
  %v2012 = vpop.permute.xlu0 %2011
  %2013 = vrot.lane.b32.xlu0 %v1707, 32
  %v2014 = vpop.permute.xlu0 %2013
  %2015 = vrot.lane.b32.xlu0 %v1725, 32
  %v2016 = vpop.permute.xlu0 %2015
  %2017 = vrot.lane.b32.xlu0 %v1727, 32
  %v2018 = vpop.permute.xlu0 %2017
  %2019 = vrot.lane.b32.xlu0 %v1729, 32
  %v2020 = vpop.permute.xlu0 %2019
  %2021 = vrot.lane.b32.xlu0 %v1731, 32
  %v2022 = vpop.permute.xlu0 %2021
  %2023 = vrot.lane.b32.xlu0 %v1733, 32
  %v2024 = vpop.permute.xlu0 %2023
  %2025 = vrot.lane.b32.xlu0 %v1735, 32
  %v2026 = vpop.permute.xlu0 %2025
  %2027 = vrot.lane.b32.xlu0 %v1737, 32
  %v2028 = vpop.permute.xlu0 %2027
  %2029 = vrot.lane.b32.xlu0 %v1739, 32
  %v2030 = vpop.permute.xlu0 %2029
  %2031 = vrot.lane.b32.xlu0 %v1757, 32
  %v2032 = vpop.permute.xlu0 %2031
  %2033 = vrot.lane.b32.xlu0 %v1759, 32
  %v2034 = vpop.permute.xlu0 %2033
  %2035 = vrot.lane.b32.xlu0 %v1761, 32
  %v2036 = vpop.permute.xlu0 %2035
  %2037 = vrot.lane.b32.xlu0 %v1763, 32
  %v2038 = vpop.permute.xlu0 %2037
  %2039 = vrot.lane.b32.xlu0 %v1765, 32
  %v2040 = vpop.permute.xlu0 %2039
  %2041 = vrot.lane.b32.xlu0 %v1767, 32
  %v2042 = vpop.permute.xlu0 %2041
  %2043 = vrot.lane.b32.xlu0 %v1769, 32
  %v2044 = vpop.permute.xlu0 %2043
  %2045 = vrot.lane.b32.xlu0 %v1771, 32
  %v2046 = vpop.permute.xlu0 %2045
  %2047 = vrot.lane.b32.xlu0 %v1789, 32
  %v2048 = vpop.permute.xlu0 %2047
  %2049 = vrot.lane.b32.xlu0 %v1791, 32
  %v2050 = vpop.permute.xlu0 %2049
  %2051 = vrot.lane.b32.xlu0 %v1793, 32
  %v2052 = vpop.permute.xlu0 %2051
  %2053 = vrot.lane.b32.xlu0 %v1795, 32
  %v2054 = vpop.permute.xlu0 %2053
  %2055 = vrot.lane.b32.xlu0 %v1797, 32
  %v2056 = vpop.permute.xlu0 %2055
  %2057 = vrot.lane.b32.xlu0 %v1799, 32
  %v2058 = vpop.permute.xlu0 %2057
  %2059 = vrot.lane.b32.xlu0 %v1801, 32
  %v2060 = vpop.permute.xlu0 %2059
  %2061 = vrot.lane.b32.xlu0 %v1803, 32
  %v2062 = vpop.permute.xlu0 %2061
  %s2127 = scalar_lea.vmem [#allocation2], 72
  %vm2128 = vcmask 523520
  %2129 = vst.msk [vmem:[%s2127] sm:$0xff] %vm2128, %v1936
  %2130 = vst.msk [vmem:[%s2127 + $0x8] sm:$0xff] %vm2128, %v1938
  %2131 = vst.msk [vmem:[%s2127 + $0x10] sm:$0xff] %vm2128, %v1940
  %2132 = vst.msk [vmem:[%s2127 + $0x18] sm:$0xff] %vm2128, %v1942
  %2133 = vst.msk [vmem:[%s2127 + $0x20] sm:$0xff] %vm2128, %v1944
  %2134 = vst.msk [vmem:[%s2127 + $0x28] sm:$0xff] %vm2128, %v1946
  %2135 = vst.msk [vmem:[%s2127 + $0x30] sm:$0xff] %vm2128, %v1948
  %2136 = vst.msk [vmem:[%s2127 + $0x38] sm:$0xff] %vm2128, %v1950
  %2137 = vst.msk [vmem:[%s2127 + $0x48] sm:$0xff] %vm2128, %v1952
  %2138 = vst.msk [vmem:[%s2127 + $0x50] sm:$0xff] %vm2128, %v1954
  %2139 = vst.msk [vmem:[%s2127 + $0x58] sm:$0xff] %vm2128, %v1956
  %2140 = vst.msk [vmem:[%s2127 + $0x60] sm:$0xff] %vm2128, %v1958
  %2141 = vst.msk [vmem:[%s2127 + $0x68] sm:$0xff] %vm2128, %v1960
  %2142 = vst.msk [vmem:[%s2127 + $0x70] sm:$0xff] %vm2128, %v1962
  %2143 = vst.msk [vmem:[%s2127 + $0x78] sm:$0xff] %vm2128, %v1964
  %2144 = vst.msk [vmem:[%s2127 + $0x80] sm:$0xff] %vm2128, %v1966
  %2145 = vst.msk [vmem:[%s2127 + $0x90] sm:$0xff] %vm2128, %v1968
  %2146 = vst.msk [vmem:[%s2127 + $0x98] sm:$0xff] %vm2128, %v1970
  %2147 = vst.msk [vmem:[%s2127 + $0xa0] sm:$0xff] %vm2128, %v1972
  %2148 = vst.msk [vmem:[%s2127 + $0xa8] sm:$0xff] %vm2128, %v1974
  %2149 = vst.msk [vmem:[%s2127 + $0xb0] sm:$0xff] %vm2128, %v1976
  %2150 = vst.msk [vmem:[%s2127 + $0xb8] sm:$0xff] %vm2128, %v1978
  %2151 = vst.msk [vmem:[%s2127 + $0xc0] sm:$0xff] %vm2128, %v1980
  %2152 = vst.msk [vmem:[%s2127 + $0xc8] sm:$0xff] %vm2128, %v1982
  %2153 = vst.msk [vmem:[%s2127 + $0xd8] sm:$0xff] %vm2128, %v1984
  %2154 = vst.msk [vmem:[%s2127 + $0xe0] sm:$0xff] %vm2128, %v1986
  %2155 = vst.msk [vmem:[%s2127 + $0xe8] sm:$0xff] %vm2128, %v1988
  %2156 = vst.msk [vmem:[%s2127 + $0xf0] sm:$0xff] %vm2128, %v1990
  %2157 = vst.msk [vmem:[%s2127 + $0xf8] sm:$0xff] %vm2128, %v1992
  %2158 = vst.msk [vmem:[%s2127 + $0x100] sm:$0xff] %vm2128, %v1994
  %2159 = vst.msk [vmem:[%s2127 + $0x108] sm:$0xff] %vm2128, %v1996
  %2160 = vst.msk [vmem:[%s2127 + $0x110] sm:$0xff] %vm2128, %v1998
  %2161 = vst.msk [vmem:[%s2127 + $0x120] sm:$0xff] %vm2128, %v2000
  %2162 = vst.msk [vmem:[%s2127 + $0x128] sm:$0xff] %vm2128, %v2002
  %2163 = vst.msk [vmem:[%s2127 + $0x130] sm:$0xff] %vm2128, %v2004
  %2164 = vst.msk [vmem:[%s2127 + $0x138] sm:$0xff] %vm2128, %v2006
  %2165 = vst.msk [vmem:[%s2127 + $0x140] sm:$0xff] %vm2128, %v2008
  %2166 = vst.msk [vmem:[%s2127 + $0x148] sm:$0xff] %vm2128, %v2010
  %2167 = vst.msk [vmem:[%s2127 + $0x150] sm:$0xff] %vm2128, %v2012
  %2168 = vst.msk [vmem:[%s2127 + $0x158] sm:$0xff] %vm2128, %v2014
  %2169 = vst.msk [vmem:[%s2127 + $0x168] sm:$0xff] %vm2128, %v2016
  %2170 = vst.msk [vmem:[%s2127 + $0x170] sm:$0xff] %vm2128, %v2018
  %2171 = vst.msk [vmem:[%s2127 + $0x178] sm:$0xff] %vm2128, %v2020
  %2172 = vst.msk [vmem:[%s2127 + $0x180] sm:$0xff] %vm2128, %v2022
  %2173 = vst.msk [vmem:[%s2127 + $0x188] sm:$0xff] %vm2128, %v2024
  %2174 = vst.msk [vmem:[%s2127 + $0x190] sm:$0xff] %vm2128, %v2026
  %2175 = vst.msk [vmem:[%s2127 + $0x198] sm:$0xff] %vm2128, %v2028
  %2176 = vst.msk [vmem:[%s2127 + $0x1a0] sm:$0xff] %vm2128, %v2030
  %2177 = vst.msk [vmem:[%s2127 + $0x1b0] sm:$0xff] %vm2128, %v2032
  %2178 = vst.msk [vmem:[%s2127 + $0x1b8] sm:$0xff] %vm2128, %v2034
  %2179 = vst.msk [vmem:[%s2127 + $0x1c0] sm:$0xff] %vm2128, %v2036
  %2180 = vst.msk [vmem:[%s2127 + $0x1c8] sm:$0xff] %vm2128, %v2038
  %2181 = vst.msk [vmem:[%s2127 + $0x1d0] sm:$0xff] %vm2128, %v2040
  %2182 = vst.msk [vmem:[%s2127 + $0x1d8] sm:$0xff] %vm2128, %v2042
  %2183 = vst.msk [vmem:[%s2127 + $0x1e0] sm:$0xff] %vm2128, %v2044
  %2184 = vst.msk [vmem:[%s2127 + $0x1e8] sm:$0xff] %vm2128, %v2046
  %2185 = vst.msk [vmem:[%s2127 + $0x1f8] sm:$0xff] %vm2128, %v2048
  %2186 = vst.msk [vmem:[%s2127 + $0x200] sm:$0xff] %vm2128, %v2050
  %2187 = vst.msk [vmem:[%s2127 + $0x208] sm:$0xff] %vm2128, %v2052
  %2188 = vst.msk [vmem:[%s2127 + $0x210] sm:$0xff] %vm2128, %v2054
  %2189 = vst.msk [vmem:[%s2127 + $0x218] sm:$0xff] %vm2128, %v2056
  %2190 = vst.msk [vmem:[%s2127 + $0x220] sm:$0xff] %vm2128, %v2058
  %2191 = vst.msk [vmem:[%s2127 + $0x228] sm:$0xff] %vm2128, %v2060
  %2192 = vst.msk [vmem:[%s2127 + $0x230] sm:$0xff] %vm2128, %v2062
  %2257 = vrot.lane.b32.xlu0 %v1550, 64
  %v2258 = vpop.permute.xlu0 %2257
  %2259 = vrot.lane.b32.xlu0 %v1552, 64
  %v2260 = vpop.permute.xlu0 %2259
  %2261 = vrot.lane.b32.xlu0 %v1554, 64
  %v2262 = vpop.permute.xlu0 %2261
  %2263 = vrot.lane.b32.xlu0 %v1556, 64
  %v2264 = vpop.permute.xlu0 %2263
  %2265 = vrot.lane.b32.xlu0 %v1558, 64
  %v2266 = vpop.permute.xlu0 %2265
  %2267 = vrot.lane.b32.xlu0 %v1560, 64
  %v2268 = vpop.permute.xlu0 %2267
  %2269 = vrot.lane.b32.xlu0 %v1562, 64
  %v2270 = vpop.permute.xlu0 %2269
  %2271 = vrot.lane.b32.xlu0 %v1564, 64
  %v2272 = vpop.permute.xlu0 %2271
  %2273 = vrot.lane.b32.xlu0 %v1582, 64
  %v2274 = vpop.permute.xlu0 %2273
  %2275 = vrot.lane.b32.xlu0 %v1584, 64
  %v2276 = vpop.permute.xlu0 %2275
  %2277 = vrot.lane.b32.xlu0 %v1586, 64
  %v2278 = vpop.permute.xlu0 %2277
  %2279 = vrot.lane.b32.xlu0 %v1588, 64
  %v2280 = vpop.permute.xlu0 %2279
  %2281 = vrot.lane.b32.xlu0 %v1590, 64
  %v2282 = vpop.permute.xlu0 %2281
  %2283 = vrot.lane.b32.xlu0 %v1592, 64
  %v2284 = vpop.permute.xlu0 %2283
  %2285 = vrot.lane.b32.xlu0 %v1594, 64
  %v2286 = vpop.permute.xlu0 %2285
  %2287 = vrot.lane.b32.xlu0 %v1596, 64
  %v2288 = vpop.permute.xlu0 %2287
  %2289 = vrot.lane.b32.xlu0 %v1614, 64
  %v2290 = vpop.permute.xlu0 %2289
  %2291 = vrot.lane.b32.xlu0 %v1616, 64
  %v2292 = vpop.permute.xlu0 %2291
  %2293 = vrot.lane.b32.xlu0 %v1618, 64
  %v2294 = vpop.permute.xlu0 %2293
  %2295 = vrot.lane.b32.xlu0 %v1620, 64
  %v2296 = vpop.permute.xlu0 %2295
  %2297 = vrot.lane.b32.xlu0 %v1622, 64
  %v2298 = vpop.permute.xlu0 %2297
  %2299 = vrot.lane.b32.xlu0 %v1624, 64
  %v2300 = vpop.permute.xlu0 %2299
  %2301 = vrot.lane.b32.xlu0 %v1626, 64
  %v2302 = vpop.permute.xlu0 %2301
  %2303 = vrot.lane.b32.xlu0 %v1628, 64
  %v2304 = vpop.permute.xlu0 %2303
  %2305 = vrot.lane.b32.xlu0 %v1646, 64
  %v2306 = vpop.permute.xlu0 %2305
  %2307 = vrot.lane.b32.xlu0 %v1648, 64
  %v2308 = vpop.permute.xlu0 %2307
  %2309 = vrot.lane.b32.xlu0 %v1650, 64
  %v2310 = vpop.permute.xlu0 %2309
  %2311 = vrot.lane.b32.xlu0 %v1652, 64
  %v2312 = vpop.permute.xlu0 %2311
  %2313 = vrot.lane.b32.xlu0 %v1654, 64
  %v2314 = vpop.permute.xlu0 %2313
  %2315 = vrot.lane.b32.xlu0 %v1656, 64
  %v2316 = vpop.permute.xlu0 %2315
  %2317 = vrot.lane.b32.xlu0 %v1658, 64
  %v2318 = vpop.permute.xlu0 %2317
  %2319 = vrot.lane.b32.xlu0 %v1660, 64
  %v2320 = vpop.permute.xlu0 %2319
  %2321 = vrot.lane.b32.xlu0 %v1678, 64
  %v2322 = vpop.permute.xlu0 %2321
  %2323 = vrot.lane.b32.xlu0 %v1680, 64
  %v2324 = vpop.permute.xlu0 %2323
  %2325 = vrot.lane.b32.xlu0 %v1682, 64
  %v2326 = vpop.permute.xlu0 %2325
  %2327 = vrot.lane.b32.xlu0 %v1684, 64
  %v2328 = vpop.permute.xlu0 %2327
  %2329 = vrot.lane.b32.xlu0 %v1686, 64
  %v2330 = vpop.permute.xlu0 %2329
  %2331 = vrot.lane.b32.xlu0 %v1688, 64
  %v2332 = vpop.permute.xlu0 %2331
  %2333 = vrot.lane.b32.xlu0 %v1690, 64
  %v2334 = vpop.permute.xlu0 %2333
  %2335 = vrot.lane.b32.xlu0 %v1692, 64
  %v2336 = vpop.permute.xlu0 %2335
  %2337 = vrot.lane.b32.xlu0 %v1710, 64
  %v2338 = vpop.permute.xlu0 %2337
  %2339 = vrot.lane.b32.xlu0 %v1712, 64
  %v2340 = vpop.permute.xlu0 %2339
  %2341 = vrot.lane.b32.xlu0 %v1714, 64
  %v2342 = vpop.permute.xlu0 %2341
  %2343 = vrot.lane.b32.xlu0 %v1716, 64
  %v2344 = vpop.permute.xlu0 %2343
  %2345 = vrot.lane.b32.xlu0 %v1718, 64
  %v2346 = vpop.permute.xlu0 %2345
  %2347 = vrot.lane.b32.xlu0 %v1720, 64
  %v2348 = vpop.permute.xlu0 %2347
  %2349 = vrot.lane.b32.xlu0 %v1722, 64
  %v2350 = vpop.permute.xlu0 %2349
  %2351 = vrot.lane.b32.xlu0 %v1724, 64
  %v2352 = vpop.permute.xlu0 %2351
  %2353 = vrot.lane.b32.xlu0 %v1742, 64
  %v2354 = vpop.permute.xlu0 %2353
  %2355 = vrot.lane.b32.xlu0 %v1744, 64
  %v2356 = vpop.permute.xlu0 %2355
  %2357 = vrot.lane.b32.xlu0 %v1746, 64
  %v2358 = vpop.permute.xlu0 %2357
  %2359 = vrot.lane.b32.xlu0 %v1748, 64
  %v2360 = vpop.permute.xlu0 %2359
  %2361 = vrot.lane.b32.xlu0 %v1750, 64
  %v2362 = vpop.permute.xlu0 %2361
  %2363 = vrot.lane.b32.xlu0 %v1752, 64
  %v2364 = vpop.permute.xlu0 %2363
  %2365 = vrot.lane.b32.xlu0 %v1754, 64
  %v2366 = vpop.permute.xlu0 %2365
  %2367 = vrot.lane.b32.xlu0 %v1756, 64
  %v2368 = vpop.permute.xlu0 %2367
  %2369 = vrot.lane.b32.xlu0 %v1774, 64
  %v2370 = vpop.permute.xlu0 %2369
  %2371 = vrot.lane.b32.xlu0 %v1776, 64
  %v2372 = vpop.permute.xlu0 %2371
  %2373 = vrot.lane.b32.xlu0 %v1778, 64
  %v2374 = vpop.permute.xlu0 %2373
  %2375 = vrot.lane.b32.xlu0 %v1780, 64
  %v2376 = vpop.permute.xlu0 %2375
  %2377 = vrot.lane.b32.xlu0 %v1782, 64
  %v2378 = vpop.permute.xlu0 %2377
  %2379 = vrot.lane.b32.xlu0 %v1784, 64
  %v2380 = vpop.permute.xlu0 %2379
  %2381 = vrot.lane.b32.xlu0 %v1786, 64
  %v2382 = vpop.permute.xlu0 %2381
  %2383 = vrot.lane.b32.xlu0 %v1788, 64
  %v2384 = vpop.permute.xlu0 %2383
  %s2449 = scalar_lea.vmem [#allocation2], 8
  %vm2450 = vcmask 785920
  %2451 = vst.msk [vmem:[%s2449] sm:$0xff] %vm2450, %v2258
  %2452 = vst.msk [vmem:[%s2449 + $0x8] sm:$0xff] %vm2450, %v2260
  %2453 = vst.msk [vmem:[%s2449 + $0x10] sm:$0xff] %vm2450, %v2262
  %2454 = vst.msk [vmem:[%s2449 + $0x18] sm:$0xff] %vm2450, %v2264
  %2455 = vst.msk [vmem:[%s2449 + $0x20] sm:$0xff] %vm2450, %v2266
  %2456 = vst.msk [vmem:[%s2449 + $0x28] sm:$0xff] %vm2450, %v2268
  %2457 = vst.msk [vmem:[%s2449 + $0x30] sm:$0xff] %vm2450, %v2270
  %2458 = vst.msk [vmem:[%s2449 + $0x38] sm:$0xff] %vm2450, %v2272
  %2459 = vst.msk [vmem:[%s2449 + $0x48] sm:$0xff] %vm2450, %v2274
  %2460 = vst.msk [vmem:[%s2449 + $0x50] sm:$0xff] %vm2450, %v2276
  %2461 = vst.msk [vmem:[%s2449 + $0x58] sm:$0xff] %vm2450, %v2278
  %2462 = vst.msk [vmem:[%s2449 + $0x60] sm:$0xff] %vm2450, %v2280
  %2463 = vst.msk [vmem:[%s2449 + $0x68] sm:$0xff] %vm2450, %v2282
  %2464 = vst.msk [vmem:[%s2449 + $0x70] sm:$0xff] %vm2450, %v2284
  %2465 = vst.msk [vmem:[%s2449 + $0x78] sm:$0xff] %vm2450, %v2286
  %2466 = vst.msk [vmem:[%s2449 + $0x80] sm:$0xff] %vm2450, %v2288
  %2467 = vst.msk [vmem:[%s2449 + $0x90] sm:$0xff] %vm2450, %v2290
  %2468 = vst.msk [vmem:[%s2449 + $0x98] sm:$0xff] %vm2450, %v2292
  %2469 = vst.msk [vmem:[%s2449 + $0xa0] sm:$0xff] %vm2450, %v2294
  %2470 = vst.msk [vmem:[%s2449 + $0xa8] sm:$0xff] %vm2450, %v2296
  %2471 = vst.msk [vmem:[%s2449 + $0xb0] sm:$0xff] %vm2450, %v2298
  %2472 = vst.msk [vmem:[%s2449 + $0xb8] sm:$0xff] %vm2450, %v2300
  %2473 = vst.msk [vmem:[%s2449 + $0xc0] sm:$0xff] %vm2450, %v2302
  %2474 = vst.msk [vmem:[%s2449 + $0xc8] sm:$0xff] %vm2450, %v2304
  %2475 = vst.msk [vmem:[%s2449 + $0xd8] sm:$0xff] %vm2450, %v2306
  %2476 = vst.msk [vmem:[%s2449 + $0xe0] sm:$0xff] %vm2450, %v2308
  %2477 = vst.msk [vmem:[%s2449 + $0xe8] sm:$0xff] %vm2450, %v2310
  %2478 = vst.msk [vmem:[%s2449 + $0xf0] sm:$0xff] %vm2450, %v2312
  %2479 = vst.msk [vmem:[%s2449 + $0xf8] sm:$0xff] %vm2450, %v2314
  %2480 = vst.msk [vmem:[%s2449 + $0x100] sm:$0xff] %vm2450, %v2316
  %2481 = vst.msk [vmem:[%s2449 + $0x108] sm:$0xff] %vm2450, %v2318
  %2482 = vst.msk [vmem:[%s2449 + $0x110] sm:$0xff] %vm2450, %v2320
  %2483 = vst.msk [vmem:[%s2449 + $0x120] sm:$0xff] %vm2450, %v2322
  %2484 = vst.msk [vmem:[%s2449 + $0x128] sm:$0xff] %vm2450, %v2324
  %2485 = vst.msk [vmem:[%s2449 + $0x130] sm:$0xff] %vm2450, %v2326
  %2486 = vst.msk [vmem:[%s2449 + $0x138] sm:$0xff] %vm2450, %v2328
  %2487 = vst.msk [vmem:[%s2449 + $0x140] sm:$0xff] %vm2450, %v2330
  %2488 = vst.msk [vmem:[%s2449 + $0x148] sm:$0xff] %vm2450, %v2332
  %2489 = vst.msk [vmem:[%s2449 + $0x150] sm:$0xff] %vm2450, %v2334
  %2490 = vst.msk [vmem:[%s2449 + $0x158] sm:$0xff] %vm2450, %v2336
  %2491 = vst.msk [vmem:[%s2449 + $0x168] sm:$0xff] %vm2450, %v2338
  %2492 = vst.msk [vmem:[%s2449 + $0x170] sm:$0xff] %vm2450, %v2340
  %2493 = vst.msk [vmem:[%s2449 + $0x178] sm:$0xff] %vm2450, %v2342
  %2494 = vst.msk [vmem:[%s2449 + $0x180] sm:$0xff] %vm2450, %v2344
  %2495 = vst.msk [vmem:[%s2449 + $0x188] sm:$0xff] %vm2450, %v2346
  %2496 = vst.msk [vmem:[%s2449 + $0x190] sm:$0xff] %vm2450, %v2348
  %2497 = vst.msk [vmem:[%s2449 + $0x198] sm:$0xff] %vm2450, %v2350
  %2498 = vst.msk [vmem:[%s2449 + $0x1a0] sm:$0xff] %vm2450, %v2352
  %2499 = vst.msk [vmem:[%s2449 + $0x1b0] sm:$0xff] %vm2450, %v2354
  %2500 = vst.msk [vmem:[%s2449 + $0x1b8] sm:$0xff] %vm2450, %v2356
  %2501 = vst.msk [vmem:[%s2449 + $0x1c0] sm:$0xff] %vm2450, %v2358
  %2502 = vst.msk [vmem:[%s2449 + $0x1c8] sm:$0xff] %vm2450, %v2360
  %2503 = vst.msk [vmem:[%s2449 + $0x1d0] sm:$0xff] %vm2450, %v2362
  %2504 = vst.msk [vmem:[%s2449 + $0x1d8] sm:$0xff] %vm2450, %v2364
  %2505 = vst.msk [vmem:[%s2449 + $0x1e0] sm:$0xff] %vm2450, %v2366
  %2506 = vst.msk [vmem:[%s2449 + $0x1e8] sm:$0xff] %vm2450, %v2368
  %2507 = vst.msk [vmem:[%s2449 + $0x1f8] sm:$0xff] %vm2450, %v2370
  %2508 = vst.msk [vmem:[%s2449 + $0x200] sm:$0xff] %vm2450, %v2372
  %2509 = vst.msk [vmem:[%s2449 + $0x208] sm:$0xff] %vm2450, %v2374
  %2510 = vst.msk [vmem:[%s2449 + $0x210] sm:$0xff] %vm2450, %v2376
  %2511 = vst.msk [vmem:[%s2449 + $0x218] sm:$0xff] %vm2450, %v2378
  %2512 = vst.msk [vmem:[%s2449 + $0x220] sm:$0xff] %vm2450, %v2380
  %2513 = vst.msk [vmem:[%s2449 + $0x228] sm:$0xff] %vm2450, %v2382
  %2514 = vst.msk [vmem:[%s2449 + $0x230] sm:$0xff] %vm2450, %v2384
  %2579 = vrot.lane.b32.xlu0 %v1549, 96
  %v2580 = vpop.permute.xlu0 %2579
  %2581 = vrot.lane.b32.xlu0 %v1551, 96
  %v2582 = vpop.permute.xlu0 %2581
  %2583 = vrot.lane.b32.xlu0 %v1553, 96
  %v2584 = vpop.permute.xlu0 %2583
  %2585 = vrot.lane.b32.xlu0 %v1555, 96
  %v2586 = vpop.permute.xlu0 %2585
  %2587 = vrot.lane.b32.xlu0 %v1557, 96
  %v2588 = vpop.permute.xlu0 %2587
  %2589 = vrot.lane.b32.xlu0 %v1559, 96
  %v2590 = vpop.permute.xlu0 %2589
  %2591 = vrot.lane.b32.xlu0 %v1561, 96
  %v2592 = vpop.permute.xlu0 %2591
  %2593 = vrot.lane.b32.xlu0 %v1563, 96
  %v2594 = vpop.permute.xlu0 %2593
  %2595 = vrot.lane.b32.xlu0 %v1581, 96
  %v2596 = vpop.permute.xlu0 %2595
  %2597 = vrot.lane.b32.xlu0 %v1583, 96
  %v2598 = vpop.permute.xlu0 %2597
  %2599 = vrot.lane.b32.xlu0 %v1585, 96
  %v2600 = vpop.permute.xlu0 %2599
  %2601 = vrot.lane.b32.xlu0 %v1587, 96
  %v2602 = vpop.permute.xlu0 %2601
  %2603 = vrot.lane.b32.xlu0 %v1589, 96
  %v2604 = vpop.permute.xlu0 %2603
  %2605 = vrot.lane.b32.xlu0 %v1591, 96
  %v2606 = vpop.permute.xlu0 %2605
  %2607 = vrot.lane.b32.xlu0 %v1593, 96
  %v2608 = vpop.permute.xlu0 %2607
  %2609 = vrot.lane.b32.xlu0 %v1595, 96
  %v2610 = vpop.permute.xlu0 %2609
  %2611 = vrot.lane.b32.xlu0 %v1613, 96
  %v2612 = vpop.permute.xlu0 %2611
  %2613 = vrot.lane.b32.xlu0 %v1615, 96
  %v2614 = vpop.permute.xlu0 %2613
  %2615 = vrot.lane.b32.xlu0 %v1617, 96
  %v2616 = vpop.permute.xlu0 %2615
  %2617 = vrot.lane.b32.xlu0 %v1619, 96
  %v2618 = vpop.permute.xlu0 %2617
  %2619 = vrot.lane.b32.xlu0 %v1621, 96
  %v2620 = vpop.permute.xlu0 %2619
  %2621 = vrot.lane.b32.xlu0 %v1623, 96
  %v2622 = vpop.permute.xlu0 %2621
  %2623 = vrot.lane.b32.xlu0 %v1625, 96
  %v2624 = vpop.permute.xlu0 %2623
  %2625 = vrot.lane.b32.xlu0 %v1627, 96
  %v2626 = vpop.permute.xlu0 %2625
  %2627 = vrot.lane.b32.xlu0 %v1645, 96
  %v2628 = vpop.permute.xlu0 %2627
  %2629 = vrot.lane.b32.xlu0 %v1647, 96
  %v2630 = vpop.permute.xlu0 %2629
  %2631 = vrot.lane.b32.xlu0 %v1649, 96
  %v2632 = vpop.permute.xlu0 %2631
  %2633 = vrot.lane.b32.xlu0 %v1651, 96
  %v2634 = vpop.permute.xlu0 %2633
  %2635 = vrot.lane.b32.xlu0 %v1653, 96
  %v2636 = vpop.permute.xlu0 %2635
  %2637 = vrot.lane.b32.xlu0 %v1655, 96
  %v2638 = vpop.permute.xlu0 %2637
  %2639 = vrot.lane.b32.xlu0 %v1657, 96
  %v2640 = vpop.permute.xlu0 %2639
  %2641 = vrot.lane.b32.xlu0 %v1659, 96
  %v2642 = vpop.permute.xlu0 %2641
  %2643 = vrot.lane.b32.xlu0 %v1677, 96
  %v2644 = vpop.permute.xlu0 %2643
  %2645 = vrot.lane.b32.xlu0 %v1679, 96
  %v2646 = vpop.permute.xlu0 %2645
  %2647 = vrot.lane.b32.xlu0 %v1681, 96
  %v2648 = vpop.permute.xlu0 %2647
  %2649 = vrot.lane.b32.xlu0 %v1683, 96
  %v2650 = vpop.permute.xlu0 %2649
  %2651 = vrot.lane.b32.xlu0 %v1685, 96
  %v2652 = vpop.permute.xlu0 %2651
  %2653 = vrot.lane.b32.xlu0 %v1687, 96
  %v2654 = vpop.permute.xlu0 %2653
  %2655 = vrot.lane.b32.xlu0 %v1689, 96
  %v2656 = vpop.permute.xlu0 %2655
  %2657 = vrot.lane.b32.xlu0 %v1691, 96
  %v2658 = vpop.permute.xlu0 %2657
  %2659 = vrot.lane.b32.xlu0 %v1709, 96
  %v2660 = vpop.permute.xlu0 %2659
  %2661 = vrot.lane.b32.xlu0 %v1711, 96
  %v2662 = vpop.permute.xlu0 %2661
  %2663 = vrot.lane.b32.xlu0 %v1713, 96
  %v2664 = vpop.permute.xlu0 %2663
  %2665 = vrot.lane.b32.xlu0 %v1715, 96
  %v2666 = vpop.permute.xlu0 %2665
  %2667 = vrot.lane.b32.xlu0 %v1717, 96
  %v2668 = vpop.permute.xlu0 %2667
  %2669 = vrot.lane.b32.xlu0 %v1719, 96
  %v2670 = vpop.permute.xlu0 %2669
  %2671 = vrot.lane.b32.xlu0 %v1721, 96
  %v2672 = vpop.permute.xlu0 %2671
  %2673 = vrot.lane.b32.xlu0 %v1723, 96
  %v2674 = vpop.permute.xlu0 %2673
  %2675 = vrot.lane.b32.xlu0 %v1741, 96
  %v2676 = vpop.permute.xlu0 %2675
  %2677 = vrot.lane.b32.xlu0 %v1743, 96
  %v2678 = vpop.permute.xlu0 %2677
  %2679 = vrot.lane.b32.xlu0 %v1745, 96
  %v2680 = vpop.permute.xlu0 %2679
  %2681 = vrot.lane.b32.xlu0 %v1747, 96
  %v2682 = vpop.permute.xlu0 %2681
  %2683 = vrot.lane.b32.xlu0 %v1749, 96
  %v2684 = vpop.permute.xlu0 %2683
  %2685 = vrot.lane.b32.xlu0 %v1751, 96
  %v2686 = vpop.permute.xlu0 %2685
  %2687 = vrot.lane.b32.xlu0 %v1753, 96
  %v2688 = vpop.permute.xlu0 %2687
  %2689 = vrot.lane.b32.xlu0 %v1755, 96
  %v2690 = vpop.permute.xlu0 %2689
  %2691 = vrot.lane.b32.xlu0 %v1773, 96
  %v2692 = vpop.permute.xlu0 %2691
  %2693 = vrot.lane.b32.xlu0 %v1775, 96
  %v2694 = vpop.permute.xlu0 %2693
  %2695 = vrot.lane.b32.xlu0 %v1777, 96
  %v2696 = vpop.permute.xlu0 %2695
  %2697 = vrot.lane.b32.xlu0 %v1779, 96
  %v2698 = vpop.permute.xlu0 %2697
  %2699 = vrot.lane.b32.xlu0 %v1781, 96
  %v2700 = vpop.permute.xlu0 %2699
  %2701 = vrot.lane.b32.xlu0 %v1783, 96
  %v2702 = vpop.permute.xlu0 %2701
  %2703 = vrot.lane.b32.xlu0 %v1785, 96
  %v2704 = vpop.permute.xlu0 %2703
  %2705 = vrot.lane.b32.xlu0 %v1787, 96
  %v2706 = vpop.permute.xlu0 %2705
  %vm2771 = vcmask 1048320
  %2772 = vst.msk [vmem:[#allocation2] sm:$0xff] %vm2771, %v2580
  %2773 = vst.msk [vmem:[#allocation2 + $0x8] sm:$0xff] %vm2771, %v2582
  %2774 = vst.msk [vmem:[#allocation2 + $0x10] sm:$0xff] %vm2771, %v2584
  %2775 = vst.msk [vmem:[#allocation2 + $0x18] sm:$0xff] %vm2771, %v2586
  %2776 = vst.msk [vmem:[#allocation2 + $0x20] sm:$0xff] %vm2771, %v2588
  %2777 = vst.msk [vmem:[#allocation2 + $0x28] sm:$0xff] %vm2771, %v2590
  %2778 = vst.msk [vmem:[#allocation2 + $0x30] sm:$0xff] %vm2771, %v2592
  %2779 = vst.msk [vmem:[#allocation2 + $0x38] sm:$0xff] %vm2771, %v2594
  %2780 = vst.msk [vmem:[#allocation2 + $0x48] sm:$0xff] %vm2771, %v2596
  %2781 = vst.msk [vmem:[#allocation2 + $0x50] sm:$0xff] %vm2771, %v2598
  %2782 = vst.msk [vmem:[#allocation2 + $0x58] sm:$0xff] %vm2771, %v2600
  %2783 = vst.msk [vmem:[#allocation2 + $0x60] sm:$0xff] %vm2771, %v2602
  %2784 = vst.msk [vmem:[#allocation2 + $0x68] sm:$0xff] %vm2771, %v2604
  %2785 = vst.msk [vmem:[#allocation2 + $0x70] sm:$0xff] %vm2771, %v2606
  %2786 = vst.msk [vmem:[#allocation2 + $0x78] sm:$0xff] %vm2771, %v2608
  %2787 = vst.msk [vmem:[#allocation2 + $0x80] sm:$0xff] %vm2771, %v2610
  %2788 = vst.msk [vmem:[#allocation2 + $0x90] sm:$0xff] %vm2771, %v2612
  %2789 = vst.msk [vmem:[#allocation2 + $0x98] sm:$0xff] %vm2771, %v2614
  %2790 = vst.msk [vmem:[#allocation2 + $0xa0] sm:$0xff] %vm2771, %v2616
  %2791 = vst.msk [vmem:[#allocation2 + $0xa8] sm:$0xff] %vm2771, %v2618
  %2792 = vst.msk [vmem:[#allocation2 + $0xb0] sm:$0xff] %vm2771, %v2620
  %2793 = vst.msk [vmem:[#allocation2 + $0xb8] sm:$0xff] %vm2771, %v2622
  %2794 = vst.msk [vmem:[#allocation2 + $0xc0] sm:$0xff] %vm2771, %v2624
  %2795 = vst.msk [vmem:[#allocation2 + $0xc8] sm:$0xff] %vm2771, %v2626
  %2796 = vst.msk [vmem:[#allocation2 + $0xd8] sm:$0xff] %vm2771, %v2628
  %2797 = vst.msk [vmem:[#allocation2 + $0xe0] sm:$0xff] %vm2771, %v2630
  %2798 = vst.msk [vmem:[#allocation2 + $0xe8] sm:$0xff] %vm2771, %v2632
  %2799 = vst.msk [vmem:[#allocation2 + $0xf0] sm:$0xff] %vm2771, %v2634
  %2800 = vst.msk [vmem:[#allocation2 + $0xf8] sm:$0xff] %vm2771, %v2636
  %2801 = vst.msk [vmem:[#allocation2 + $0x100] sm:$0xff] %vm2771, %v2638
  %2802 = vst.msk [vmem:[#allocation2 + $0x108] sm:$0xff] %vm2771, %v2640
  %2803 = vst.msk [vmem:[#allocation2 + $0x110] sm:$0xff] %vm2771, %v2642
  %2804 = vst.msk [vmem:[#allocation2 + $0x120] sm:$0xff] %vm2771, %v2644
  %2805 = vst.msk [vmem:[#allocation2 + $0x128] sm:$0xff] %vm2771, %v2646
  %2806 = vst.msk [vmem:[#allocation2 + $0x130] sm:$0xff] %vm2771, %v2648
  %2807 = vst.msk [vmem:[#allocation2 + $0x138] sm:$0xff] %vm2771, %v2650
  %2808 = vst.msk [vmem:[#allocation2 + $0x140] sm:$0xff] %vm2771, %v2652
  %2809 = vst.msk [vmem:[#allocation2 + $0x148] sm:$0xff] %vm2771, %v2654
  %2810 = vst.msk [vmem:[#allocation2 + $0x150] sm:$0xff] %vm2771, %v2656
  %2811 = vst.msk [vmem:[#allocation2 + $0x158] sm:$0xff] %vm2771, %v2658
  %2812 = vst.msk [vmem:[#allocation2 + $0x168] sm:$0xff] %vm2771, %v2660
  %2813 = vst.msk [vmem:[#allocation2 + $0x170] sm:$0xff] %vm2771, %v2662
  %2814 = vst.msk [vmem:[#allocation2 + $0x178] sm:$0xff] %vm2771, %v2664
  %2815 = vst.msk [vmem:[#allocation2 + $0x180] sm:$0xff] %vm2771, %v2666
  %2816 = vst.msk [vmem:[#allocation2 + $0x188] sm:$0xff] %vm2771, %v2668
  %2817 = vst.msk [vmem:[#allocation2 + $0x190] sm:$0xff] %vm2771, %v2670
  %2818 = vst.msk [vmem:[#allocation2 + $0x198] sm:$0xff] %vm2771, %v2672
  %2819 = vst.msk [vmem:[#allocation2 + $0x1a0] sm:$0xff] %vm2771, %v2674
  %2820 = vst.msk [vmem:[#allocation2 + $0x1b0] sm:$0xff] %vm2771, %v2676
  %2821 = vst.msk [vmem:[#allocation2 + $0x1b8] sm:$0xff] %vm2771, %v2678
  %2822 = vst.msk [vmem:[#allocation2 + $0x1c0] sm:$0xff] %vm2771, %v2680
  %2823 = vst.msk [vmem:[#allocation2 + $0x1c8] sm:$0xff] %vm2771, %v2682
  %2824 = vst.msk [vmem:[#allocation2 + $0x1d0] sm:$0xff] %vm2771, %v2684
  %2825 = vst.msk [vmem:[#allocation2 + $0x1d8] sm:$0xff] %vm2771, %v2686
  %2826 = vst.msk [vmem:[#allocation2 + $0x1e0] sm:$0xff] %vm2771, %v2688
  %2827 = vst.msk [vmem:[#allocation2 + $0x1e8] sm:$0xff] %vm2771, %v2690
  %2828 = vst.msk [vmem:[#allocation2 + $0x1f8] sm:$0xff] %vm2771, %v2692
  %2829 = vst.msk [vmem:[#allocation2 + $0x200] sm:$0xff] %vm2771, %v2694
  %2830 = vst.msk [vmem:[#allocation2 + $0x208] sm:$0xff] %vm2771, %v2696
  %2831 = vst.msk [vmem:[#allocation2 + $0x210] sm:$0xff] %vm2771, %v2698
  %2832 = vst.msk [vmem:[#allocation2 + $0x218] sm:$0xff] %vm2771, %v2700
  %2833 = vst.msk [vmem:[#allocation2 + $0x220] sm:$0xff] %vm2771, %v2702
  %2834 = vst.msk [vmem:[#allocation2 + $0x228] sm:$0xff] %vm2771, %v2704
  %2835 = vst.msk [vmem:[#allocation2 + $0x230] sm:$0xff] %vm2771, %v2706
  %v2836 = vld [vmem:[#allocation2] sm:$0xff]
  %v2837 = vld [vmem:[#allocation2 + $0x8] sm:$0xff]
  %v2838 = vld [vmem:[#allocation2 + $0x10] sm:$0xff]
  %v2839 = vld [vmem:[#allocation2 + $0x18] sm:$0xff]
  %v2840 = vld [vmem:[#allocation2 + $0x20] sm:$0xff]
  %v2841 = vld [vmem:[#allocation2 + $0x28] sm:$0xff]
  %v2842 = vld [vmem:[#allocation2 + $0x30] sm:$0xff]
  %v2843 = vld [vmem:[#allocation2 + $0x38] sm:$0xff]
  %v2844 = vld [vmem:[#allocation2 + $0x48] sm:$0xff]
  %v2845 = vld [vmem:[#allocation2 + $0x50] sm:$0xff]
  %v2846 = vld [vmem:[#allocation2 + $0x58] sm:$0xff]
  %v2847 = vld [vmem:[#allocation2 + $0x60] sm:$0xff]
  %v2848 = vld [vmem:[#allocation2 + $0x68] sm:$0xff]
  %v2849 = vld [vmem:[#allocation2 + $0x70] sm:$0xff]
  %v2850 = vld [vmem:[#allocation2 + $0x78] sm:$0xff]
  %v2851 = vld [vmem:[#allocation2 + $0x80] sm:$0xff]
  %v2852 = vld [vmem:[#allocation2 + $0x90] sm:$0xff]
  %v2853 = vld [vmem:[#allocation2 + $0x98] sm:$0xff]
  %v2854 = vld [vmem:[#allocation2 + $0xa0] sm:$0xff]
  %v2855 = vld [vmem:[#allocation2 + $0xa8] sm:$0xff]
  %v2856 = vld [vmem:[#allocation2 + $0xb0] sm:$0xff]
  %v2857 = vld [vmem:[#allocation2 + $0xb8] sm:$0xff]
  %v2858 = vld [vmem:[#allocation2 + $0xc0] sm:$0xff]
  %v2859 = vld [vmem:[#allocation2 + $0xc8] sm:$0xff]
  %v2860 = vld [vmem:[#allocation2 + $0xd8] sm:$0xff]
  %v2861 = vld [vmem:[#allocation2 + $0xe0] sm:$0xff]
  %v2862 = vld [vmem:[#allocation2 + $0xe8] sm:$0xff]
  %v2863 = vld [vmem:[#allocation2 + $0xf0] sm:$0xff]
  %v2864 = vld [vmem:[#allocation2 + $0xf8] sm:$0xff]
  %v2865 = vld [vmem:[#allocation2 + $0x100] sm:$0xff]
  %v2866 = vld [vmem:[#allocation2 + $0x108] sm:$0xff]
  %v2867 = vld [vmem:[#allocation2 + $0x110] sm:$0xff]
  %v2868 = vld [vmem:[#allocation2 + $0x120] sm:$0xff]
  %v2869 = vld [vmem:[#allocation2 + $0x128] sm:$0xff]
  %v2870 = vld [vmem:[#allocation2 + $0x130] sm:$0xff]
  %v2871 = vld [vmem:[#allocation2 + $0x138] sm:$0xff]
  %v2872 = vld [vmem:[#allocation2 + $0x140] sm:$0xff]
  %v2873 = vld [vmem:[#allocation2 + $0x148] sm:$0xff]
  %v2874 = vld [vmem:[#allocation2 + $0x150] sm:$0xff]
  %v2875 = vld [vmem:[#allocation2 + $0x158] sm:$0xff]
  %v2876 = vld [vmem:[#allocation2 + $0x168] sm:$0xff]
  %v2877 = vld [vmem:[#allocation2 + $0x170] sm:$0xff]
  %v2878 = vld [vmem:[#allocation2 + $0x178] sm:$0xff]
  %v2879 = vld [vmem:[#allocation2 + $0x180] sm:$0xff]
  %v2880 = vld [vmem:[#allocation2 + $0x188] sm:$0xff]
  %v2881 = vld [vmem:[#allocation2 + $0x190] sm:$0xff]
  %v2882 = vld [vmem:[#allocation2 + $0x198] sm:$0xff]
  %v2883 = vld [vmem:[#allocation2 + $0x1a0] sm:$0xff]
  %v2884 = vld [vmem:[#allocation2 + $0x1b0] sm:$0xff]
  %v2885 = vld [vmem:[#allocation2 + $0x1b8] sm:$0xff]
  %v2886 = vld [vmem:[#allocation2 + $0x1c0] sm:$0xff]
  %v2887 = vld [vmem:[#allocation2 + $0x1c8] sm:$0xff]
  %v2888 = vld [vmem:[#allocation2 + $0x1d0] sm:$0xff]
  %v2889 = vld [vmem:[#allocation2 + $0x1d8] sm:$0xff]
  %v2890 = vld [vmem:[#allocation2 + $0x1e0] sm:$0xff]
  %v2891 = vld [vmem:[#allocation2 + $0x1e8] sm:$0xff]
  %v2892 = vld [vmem:[#allocation2 + $0x1f8] sm:$0xff]
  %v2893 = vld [vmem:[#allocation2 + $0x200] sm:$0xff]
  %v2894 = vld [vmem:[#allocation2 + $0x208] sm:$0xff]
  %v2895 = vld [vmem:[#allocation2 + $0x210] sm:$0xff]
  %v2896 = vld [vmem:[#allocation2 + $0x218] sm:$0xff]
  %v2897 = vld [vmem:[#allocation2 + $0x220] sm:$0xff]
  %v2898 = vld [vmem:[#allocation2 + $0x228] sm:$0xff]
  %v2899 = vld [vmem:[#allocation2 + $0x230] sm:$0xff]
  %v2900 = vpack.c.bf16 %v2836, %v2836
  %v2901 = vpack.c.bf16 %v2837, %v2837
  %v2902 = vpack.c.bf16 %v2838, %v2838
  %v2903 = vpack.c.bf16 %v2839, %v2839
  %v2904 = vpack.c.bf16 %v2840, %v2840
  %v2905 = vpack.c.bf16 %v2841, %v2841
  %v2906 = vpack.c.bf16 %v2842, %v2842
  %v2907 = vpack.c.bf16 %v2843, %v2843
  %v2908 = vpack.c.bf16 %v2844, %v2844
  %v2909 = vpack.c.bf16 %v2845, %v2845
  %v2910 = vpack.c.bf16 %v2846, %v2846
  %v2911 = vpack.c.bf16 %v2847, %v2847
  %v2912 = vpack.c.bf16 %v2848, %v2848
  %v2913 = vpack.c.bf16 %v2849, %v2849
  %v2914 = vpack.c.bf16 %v2850, %v2850
  %v2915 = vpack.c.bf16 %v2851, %v2851
  %v2916 = vpack.c.bf16 %v2852, %v2852
  %v2917 = vpack.c.bf16 %v2853, %v2853
  %v2918 = vpack.c.bf16 %v2854, %v2854
  %v2919 = vpack.c.bf16 %v2855, %v2855
  %v2920 = vpack.c.bf16 %v2856, %v2856
  %v2921 = vpack.c.bf16 %v2857, %v2857
  %v2922 = vpack.c.bf16 %v2858, %v2858
  %v2923 = vpack.c.bf16 %v2859, %v2859
  %v2924 = vpack.c.bf16 %v2860, %v2860
  %v2925 = vpack.c.bf16 %v2861, %v2861
  %v2926 = vpack.c.bf16 %v2862, %v2862
  %v2927 = vpack.c.bf16 %v2863, %v2863
  %v2928 = vpack.c.bf16 %v2864, %v2864
  %v2929 = vpack.c.bf16 %v2865, %v2865
  %v2930 = vpack.c.bf16 %v2866, %v2866
  %v2931 = vpack.c.bf16 %v2867, %v2867
  %v2932 = vpack.c.bf16 %v2868, %v2868
  %v2933 = vpack.c.bf16 %v2869, %v2869
  %v2934 = vpack.c.bf16 %v2870, %v2870
  %v2935 = vpack.c.bf16 %v2871, %v2871
  %v2936 = vpack.c.bf16 %v2872, %v2872
  %v2937 = vpack.c.bf16 %v2873, %v2873
  %v2938 = vpack.c.bf16 %v2874, %v2874
  %v2939 = vpack.c.bf16 %v2875, %v2875
  %v2940 = vpack.c.bf16 %v2876, %v2876
  %v2941 = vpack.c.bf16 %v2877, %v2877
  %v2942 = vpack.c.bf16 %v2878, %v2878
  %v2943 = vpack.c.bf16 %v2879, %v2879
  %v2944 = vpack.c.bf16 %v2880, %v2880
  %v2945 = vpack.c.bf16 %v2881, %v2881
  %v2946 = vpack.c.bf16 %v2882, %v2882
  %v2947 = vpack.c.bf16 %v2883, %v2883
  %v2948 = vpack.c.bf16 %v2884, %v2884
  %v2949 = vpack.c.bf16 %v2885, %v2885
  %v2950 = vpack.c.bf16 %v2886, %v2886
  %v2951 = vpack.c.bf16 %v2887, %v2887
  %v2952 = vpack.c.bf16 %v2888, %v2888
  %v2953 = vpack.c.bf16 %v2889, %v2889
  %v2954 = vpack.c.bf16 %v2890, %v2890
  %v2955 = vpack.c.bf16 %v2891, %v2891
  %v2956 = vpack.c.bf16 %v2892, %v2892
  %v2957 = vpack.c.bf16 %v2893, %v2893
  %v2958 = vpack.c.bf16 %v2894, %v2894
  %v2959 = vpack.c.bf16 %v2895, %v2895
  %v2960 = vpack.c.bf16 %v2896, %v2896
  %v2961 = vpack.c.bf16 %v2897, %v2897
  %v2962 = vpack.c.bf16 %v2898, %v2898
  %v2963 = vpack.c.bf16 %v2899, %v2899
  %2964 = vst [vmem:[#allocation4] sm:$0xf] %v2900
  %2965 = vst [vmem:[#allocation4 + $0x10] sm:$0xf] %v2901
  %2966 = vst [vmem:[#allocation4 + $0x20] sm:$0xf] %v2902
  %2967 = vst [vmem:[#allocation4 + $0x30] sm:$0xf] %v2903
  %2968 = vst [vmem:[#allocation4 + $0x40] sm:$0xf] %v2904
  %2969 = vst [vmem:[#allocation4 + $0x50] sm:$0xf] %v2905
  %2970 = vst [vmem:[#allocation4 + $0x60] sm:$0xf] %v2906
  %2971 = vst [vmem:[#allocation4 + $0x70] sm:$0xf] %v2907
  %2972 = vst [vmem:[#allocation4 + $0x80] sm:$0xf] %v2908
  %2973 = vst [vmem:[#allocation4 + $0x90] sm:$0xf] %v2909
  %2974 = vst [vmem:[#allocation4 + $0xa0] sm:$0xf] %v2910
  %2975 = vst [vmem:[#allocation4 + $0xb0] sm:$0xf] %v2911
  %2976 = vst [vmem:[#allocation4 + $0xc0] sm:$0xf] %v2912
  %2977 = vst [vmem:[#allocation4 + $0xd0] sm:$0xf] %v2913
  %2978 = vst [vmem:[#allocation4 + $0xe0] sm:$0xf] %v2914
  %2979 = vst [vmem:[#allocation4 + $0xf0] sm:$0xf] %v2915
  %2980 = vst [vmem:[#allocation4 + $0x100] sm:$0xf] %v2916
  %2981 = vst [vmem:[#allocation4 + $0x110] sm:$0xf] %v2917
  %2982 = vst [vmem:[#allocation4 + $0x120] sm:$0xf] %v2918
  %2983 = vst [vmem:[#allocation4 + $0x130] sm:$0xf] %v2919
  %2984 = vst [vmem:[#allocation4 + $0x140] sm:$0xf] %v2920
  %2985 = vst [vmem:[#allocation4 + $0x150] sm:$0xf] %v2921
  %2986 = vst [vmem:[#allocation4 + $0x160] sm:$0xf] %v2922
  %2987 = vst [vmem:[#allocation4 + $0x170] sm:$0xf] %v2923
  %2988 = vst [vmem:[#allocation4 + $0x180] sm:$0xf] %v2924
  %2989 = vst [vmem:[#allocation4 + $0x190] sm:$0xf] %v2925
  %2990 = vst [vmem:[#allocation4 + $0x1a0] sm:$0xf] %v2926
  %2991 = vst [vmem:[#allocation4 + $0x1b0] sm:$0xf] %v2927
  %2992 = vst [vmem:[#allocation4 + $0x1c0] sm:$0xf] %v2928
  %2993 = vst [vmem:[#allocation4 + $0x1d0] sm:$0xf] %v2929
  %2994 = vst [vmem:[#allocation4 + $0x1e0] sm:$0xf] %v2930
  %2995 = vst [vmem:[#allocation4 + $0x1f0] sm:$0xf] %v2931
  %2996 = vst [vmem:[#allocation4 + $0x200] sm:$0xf] %v2932
  %2997 = vst [vmem:[#allocation4 + $0x210] sm:$0xf] %v2933
  %2998 = vst [vmem:[#allocation4 + $0x220] sm:$0xf] %v2934
  %2999 = vst [vmem:[#allocation4 + $0x230] sm:$0xf] %v2935
  %3000 = vst [vmem:[#allocation4 + $0x240] sm:$0xf] %v2936
  %3001 = vst [vmem:[#allocation4 + $0x250] sm:$0xf] %v2937
  %3002 = vst [vmem:[#allocation4 + $0x260] sm:$0xf] %v2938
  %3003 = vst [vmem:[#allocation4 + $0x270] sm:$0xf] %v2939
  %3004 = vst [vmem:[#allocation4 + $0x280] sm:$0xf] %v2940
  %3005 = vst [vmem:[#allocation4 + $0x290] sm:$0xf] %v2941
  %3006 = vst [vmem:[#allocation4 + $0x2a0] sm:$0xf] %v2942
  %3007 = vst [vmem:[#allocation4 + $0x2b0] sm:$0xf] %v2943
  %3008 = vst [vmem:[#allocation4 + $0x2c0] sm:$0xf] %v2944
  %3009 = vst [vmem:[#allocation4 + $0x2d0] sm:$0xf] %v2945
  %3010 = vst [vmem:[#allocation4 + $0x2e0] sm:$0xf] %v2946
  %3011 = vst [vmem:[#allocation4 + $0x2f0] sm:$0xf] %v2947
  %3012 = vst [vmem:[#allocation4 + $0x300] sm:$0xf] %v2948
  %3013 = vst [vmem:[#allocation4 + $0x310] sm:$0xf] %v2949
  %3014 = vst [vmem:[#allocation4 + $0x320] sm:$0xf] %v2950
  %3015 = vst [vmem:[#allocation4 + $0x330] sm:$0xf] %v2951
  %3016 = vst [vmem:[#allocation4 + $0x340] sm:$0xf] %v2952
  %3017 = vst [vmem:[#allocation4 + $0x350] sm:$0xf] %v2953
  %3018 = vst [vmem:[#allocation4 + $0x360] sm:$0xf] %v2954
  %3019 = vst [vmem:[#allocation4 + $0x370] sm:$0xf] %v2955
  %3020 = vst [vmem:[#allocation4 + $0x380] sm:$0xf] %v2956
  %3021 = vst [vmem:[#allocation4 + $0x390] sm:$0xf] %v2957
  %3022 = vst [vmem:[#allocation4 + $0x3a0] sm:$0xf] %v2958
  %3023 = vst [vmem:[#allocation4 + $0x3b0] sm:$0xf] %v2959
  %3024 = vst [vmem:[#allocation4 + $0x3c0] sm:$0xf] %v2960
  %3025 = vst [vmem:[#allocation4 + $0x3d0] sm:$0xf] %v2961
  %3026 = vst [vmem:[#allocation4 + $0x3e0] sm:$0xf] %v2962
  %3027 = vst [vmem:[#allocation4 + $0x3f0] sm:$0xf] %v2963
  %v3028 = vld [vmem:[%s2449] sm:$0xff]
  %v3029 = vld [vmem:[%s2449 + $0x8] sm:$0xff]
  %v3030 = vld [vmem:[%s2449 + $0x10] sm:$0xff]
  %v3031 = vld [vmem:[%s2449 + $0x18] sm:$0xff]
  %v3032 = vld [vmem:[%s2449 + $0x20] sm:$0xff]
  %v3033 = vld [vmem:[%s2449 + $0x28] sm:$0xff]
  %v3034 = vld [vmem:[%s2449 + $0x30] sm:$0xff]
  %v3035 = vld [vmem:[%s2449 + $0x38] sm:$0xff]
  %v3036 = vld [vmem:[%s2449 + $0x48] sm:$0xff]
  %v3037 = vld [vmem:[%s2449 + $0x50] sm:$0xff]
  %v3038 = vld [vmem:[%s2449 + $0x58] sm:$0xff]
  %v3039 = vld [vmem:[%s2449 + $0x60] sm:$0xff]
  %v3040 = vld [vmem:[%s2449 + $0x68] sm:$0xff]
  %v3041 = vld [vmem:[%s2449 + $0x70] sm:$0xff]
  %v3042 = vld [vmem:[%s2449 + $0x78] sm:$0xff]
  %v3043 = vld [vmem:[%s2449 + $0x80] sm:$0xff]
  %v3044 = vld [vmem:[%s2449 + $0x90] sm:$0xff]
  %v3045 = vld [vmem:[%s2449 + $0x98] sm:$0xff]
  %v3046 = vld [vmem:[%s2449 + $0xa0] sm:$0xff]
  %v3047 = vld [vmem:[%s2449 + $0xa8] sm:$0xff]
  %v3048 = vld [vmem:[%s2449 + $0xb0] sm:$0xff]
  %v3049 = vld [vmem:[%s2449 + $0xb8] sm:$0xff]
  %v3050 = vld [vmem:[%s2449 + $0xc0] sm:$0xff]
  %v3051 = vld [vmem:[%s2449 + $0xc8] sm:$0xff]
  %v3052 = vld [vmem:[%s2449 + $0xd8] sm:$0xff]
  %v3053 = vld [vmem:[%s2449 + $0xe0] sm:$0xff]
  %v3054 = vld [vmem:[%s2449 + $0xe8] sm:$0xff]
  %v3055 = vld [vmem:[%s2449 + $0xf0] sm:$0xff]
  %v3056 = vld [vmem:[%s2449 + $0xf8] sm:$0xff]
  %v3057 = vld [vmem:[%s2449 + $0x100] sm:$0xff]
  %v3058 = vld [vmem:[%s2449 + $0x108] sm:$0xff]
  %v3059 = vld [vmem:[%s2449 + $0x110] sm:$0xff]
  %v3060 = vld [vmem:[%s2449 + $0x120] sm:$0xff]
  %v3061 = vld [vmem:[%s2449 + $0x128] sm:$0xff]
  %v3062 = vld [vmem:[%s2449 + $0x130] sm:$0xff]
  %v3063 = vld [vmem:[%s2449 + $0x138] sm:$0xff]
  %v3064 = vld [vmem:[%s2449 + $0x140] sm:$0xff]
  %v3065 = vld [vmem:[%s2449 + $0x148] sm:$0xff]
  %v3066 = vld [vmem:[%s2449 + $0x150] sm:$0xff]
  %v3067 = vld [vmem:[%s2449 + $0x158] sm:$0xff]
  %v3068 = vld [vmem:[%s2449 + $0x168] sm:$0xff]
  %v3069 = vld [vmem:[%s2449 + $0x170] sm:$0xff]
  %v3070 = vld [vmem:[%s2449 + $0x178] sm:$0xff]
  %v3071 = vld [vmem:[%s2449 + $0x180] sm:$0xff]
  %v3072 = vld [vmem:[%s2449 + $0x188] sm:$0xff]
  %v3073 = vld [vmem:[%s2449 + $0x190] sm:$0xff]
  %v3074 = vld [vmem:[%s2449 + $0x198] sm:$0xff]
  %v3075 = vld [vmem:[%s2449 + $0x1a0] sm:$0xff]
  %v3076 = vld [vmem:[%s2449 + $0x1b0] sm:$0xff]
  %v3077 = vld [vmem:[%s2449 + $0x1b8] sm:$0xff]
  %v3078 = vld [vmem:[%s2449 + $0x1c0] sm:$0xff]
  %v3079 = vld [vmem:[%s2449 + $0x1c8] sm:$0xff]
  %v3080 = vld [vmem:[%s2449 + $0x1d0] sm:$0xff]
  %v3081 = vld [vmem:[%s2449 + $0x1d8] sm:$0xff]
  %v3082 = vld [vmem:[%s2449 + $0x1e0] sm:$0xff]
  %v3083 = vld [vmem:[%s2449 + $0x1e8] sm:$0xff]
  %v3084 = vld [vmem:[%s2449 + $0x1f8] sm:$0xff]
  %v3085 = vld [vmem:[%s2449 + $0x200] sm:$0xff]
  %v3086 = vld [vmem:[%s2449 + $0x208] sm:$0xff]
  %v3087 = vld [vmem:[%s2449 + $0x210] sm:$0xff]
  %v3088 = vld [vmem:[%s2449 + $0x218] sm:$0xff]
  %v3089 = vld [vmem:[%s2449 + $0x220] sm:$0xff]
  %v3090 = vld [vmem:[%s2449 + $0x228] sm:$0xff]
  %v3091 = vld [vmem:[%s2449 + $0x230] sm:$0xff]
  %v3092 = vpack.c.bf16 %v3028, %v3028
  %v3093 = vpack.c.bf16 %v3029, %v3029
  %v3094 = vpack.c.bf16 %v3030, %v3030
  %v3095 = vpack.c.bf16 %v3031, %v3031
  %v3096 = vpack.c.bf16 %v3032, %v3032
  %v3097 = vpack.c.bf16 %v3033, %v3033
  %v3098 = vpack.c.bf16 %v3034, %v3034
  %v3099 = vpack.c.bf16 %v3035, %v3035
  %v3100 = vpack.c.bf16 %v3036, %v3036
  %v3101 = vpack.c.bf16 %v3037, %v3037
  %v3102 = vpack.c.bf16 %v3038, %v3038
  %v3103 = vpack.c.bf16 %v3039, %v3039
  %v3104 = vpack.c.bf16 %v3040, %v3040
  %v3105 = vpack.c.bf16 %v3041, %v3041
  %v3106 = vpack.c.bf16 %v3042, %v3042
  %v3107 = vpack.c.bf16 %v3043, %v3043
  %v3108 = vpack.c.bf16 %v3044, %v3044
  %v3109 = vpack.c.bf16 %v3045, %v3045
  %v3110 = vpack.c.bf16 %v3046, %v3046
  %v3111 = vpack.c.bf16 %v3047, %v3047
  %v3112 = vpack.c.bf16 %v3048, %v3048
  %v3113 = vpack.c.bf16 %v3049, %v3049
  %v3114 = vpack.c.bf16 %v3050, %v3050
  %v3115 = vpack.c.bf16 %v3051, %v3051
  %v3116 = vpack.c.bf16 %v3052, %v3052
  %v3117 = vpack.c.bf16 %v3053, %v3053
  %v3118 = vpack.c.bf16 %v3054, %v3054
  %v3119 = vpack.c.bf16 %v3055, %v3055
  %v3120 = vpack.c.bf16 %v3056, %v3056
  %v3121 = vpack.c.bf16 %v3057, %v3057
  %v3122 = vpack.c.bf16 %v3058, %v3058
  %v3123 = vpack.c.bf16 %v3059, %v3059
  %v3124 = vpack.c.bf16 %v3060, %v3060
  %v3125 = vpack.c.bf16 %v3061, %v3061
  %v3126 = vpack.c.bf16 %v3062, %v3062
  %v3127 = vpack.c.bf16 %v3063, %v3063
  %v3128 = vpack.c.bf16 %v3064, %v3064
  %v3129 = vpack.c.bf16 %v3065, %v3065
  %v3130 = vpack.c.bf16 %v3066, %v3066
  %v3131 = vpack.c.bf16 %v3067, %v3067
  %v3132 = vpack.c.bf16 %v3068, %v3068
  %v3133 = vpack.c.bf16 %v3069, %v3069
  %v3134 = vpack.c.bf16 %v3070, %v3070
  %v3135 = vpack.c.bf16 %v3071, %v3071
  %v3136 = vpack.c.bf16 %v3072, %v3072
  %v3137 = vpack.c.bf16 %v3073, %v3073
  %v3138 = vpack.c.bf16 %v3074, %v3074
  %v3139 = vpack.c.bf16 %v3075, %v3075
  %v3140 = vpack.c.bf16 %v3076, %v3076
  %v3141 = vpack.c.bf16 %v3077, %v3077
  %v3142 = vpack.c.bf16 %v3078, %v3078
  %v3143 = vpack.c.bf16 %v3079, %v3079
  %v3144 = vpack.c.bf16 %v3080, %v3080
  %v3145 = vpack.c.bf16 %v3081, %v3081
  %v3146 = vpack.c.bf16 %v3082, %v3082
  %v3147 = vpack.c.bf16 %v3083, %v3083
  %v3148 = vpack.c.bf16 %v3084, %v3084
  %v3149 = vpack.c.bf16 %v3085, %v3085
  %v3150 = vpack.c.bf16 %v3086, %v3086
  %v3151 = vpack.c.bf16 %v3087, %v3087
  %v3152 = vpack.c.bf16 %v3088, %v3088
  %v3153 = vpack.c.bf16 %v3089, %v3089
  %v3154 = vpack.c.bf16 %v3090, %v3090
  %v3155 = vpack.c.bf16 %v3091, %v3091
  %3156 = vst [vmem:[#allocation4 + $0x4] sm:$0xf] %v3092
  %3157 = vst [vmem:[#allocation4 + $0x14] sm:$0xf] %v3093
  %3158 = vst [vmem:[#allocation4 + $0x24] sm:$0xf] %v3094
  %3159 = vst [vmem:[#allocation4 + $0x34] sm:$0xf] %v3095
  %3160 = vst [vmem:[#allocation4 + $0x44] sm:$0xf] %v3096
  %3161 = vst [vmem:[#allocation4 + $0x54] sm:$0xf] %v3097
  %3162 = vst [vmem:[#allocation4 + $0x64] sm:$0xf] %v3098
  %3163 = vst [vmem:[#allocation4 + $0x74] sm:$0xf] %v3099
  %3164 = vst [vmem:[#allocation4 + $0x84] sm:$0xf] %v3100
  %3165 = vst [vmem:[#allocation4 + $0x94] sm:$0xf] %v3101
  %3166 = vst [vmem:[#allocation4 + $0xa4] sm:$0xf] %v3102
  %3167 = vst [vmem:[#allocation4 + $0xb4] sm:$0xf] %v3103
  %3168 = vst [vmem:[#allocation4 + $0xc4] sm:$0xf] %v3104
  %3169 = vst [vmem:[#allocation4 + $0xd4] sm:$0xf] %v3105
  %3170 = vst [vmem:[#allocation4 + $0xe4] sm:$0xf] %v3106
  %3171 = vst [vmem:[#allocation4 + $0xf4] sm:$0xf] %v3107
  %3172 = vst [vmem:[#allocation4 + $0x104] sm:$0xf] %v3108
  %3173 = vst [vmem:[#allocation4 + $0x114] sm:$0xf] %v3109
  %3174 = vst [vmem:[#allocation4 + $0x124] sm:$0xf] %v3110
  %3175 = vst [vmem:[#allocation4 + $0x134] sm:$0xf] %v3111
  %3176 = vst [vmem:[#allocation4 + $0x144] sm:$0xf] %v3112
  %3177 = vst [vmem:[#allocation4 + $0x154] sm:$0xf] %v3113
  %3178 = vst [vmem:[#allocation4 + $0x164] sm:$0xf] %v3114
  %3179 = vst [vmem:[#allocation4 + $0x174] sm:$0xf] %v3115
  %3180 = vst [vmem:[#allocation4 + $0x184] sm:$0xf] %v3116
  %3181 = vst [vmem:[#allocation4 + $0x194] sm:$0xf] %v3117
  %3182 = vst [vmem:[#allocation4 + $0x1a4] sm:$0xf] %v3118
  %3183 = vst [vmem:[#allocation4 + $0x1b4] sm:$0xf] %v3119
  %3184 = vst [vmem:[#allocation4 + $0x1c4] sm:$0xf] %v3120
  %3185 = vst [vmem:[#allocation4 + $0x1d4] sm:$0xf] %v3121
  %3186 = vst [vmem:[#allocation4 + $0x1e4] sm:$0xf] %v3122
  %3187 = vst [vmem:[#allocation4 + $0x1f4] sm:$0xf] %v3123
  %3188 = vst [vmem:[#allocation4 + $0x204] sm:$0xf] %v3124
  %3189 = vst [vmem:[#allocation4 + $0x214] sm:$0xf] %v3125
  %3190 = vst [vmem:[#allocation4 + $0x224] sm:$0xf] %v3126
  %3191 = vst [vmem:[#allocation4 + $0x234] sm:$0xf] %v3127
  %3192 = vst [vmem:[#allocation4 + $0x244] sm:$0xf] %v3128
  %3193 = vst [vmem:[#allocation4 + $0x254] sm:$0xf] %v3129
  %3194 = vst [vmem:[#allocation4 + $0x264] sm:$0xf] %v3130
  %3195 = vst [vmem:[#allocation4 + $0x274] sm:$0xf] %v3131
  %3196 = vst [vmem:[#allocation4 + $0x284] sm:$0xf] %v3132
  %3197 = vst [vmem:[#allocation4 + $0x294] sm:$0xf] %v3133
  %3198 = vst [vmem:[#allocation4 + $0x2a4] sm:$0xf] %v3134
  %3199 = vst [vmem:[#allocation4 + $0x2b4] sm:$0xf] %v3135
  %3200 = vst [vmem:[#allocation4 + $0x2c4] sm:$0xf] %v3136
  %3201 = vst [vmem:[#allocation4 + $0x2d4] sm:$0xf] %v3137
  %3202 = vst [vmem:[#allocation4 + $0x2e4] sm:$0xf] %v3138
  %3203 = vst [vmem:[#allocation4 + $0x2f4] sm:$0xf] %v3139
  %3204 = vst [vmem:[#allocation4 + $0x304] sm:$0xf] %v3140
  %3205 = vst [vmem:[#allocation4 + $0x314] sm:$0xf] %v3141
  %3206 = vst [vmem:[#allocation4 + $0x324] sm:$0xf] %v3142
  %3207 = vst [vmem:[#allocation4 + $0x334] sm:$0xf] %v3143
  %3208 = vst [vmem:[#allocation4 + $0x344] sm:$0xf] %v3144
  %3209 = vst [vmem:[#allocation4 + $0x354] sm:$0xf] %v3145
  %3210 = vst [vmem:[#allocation4 + $0x364] sm:$0xf] %v3146
  %3211 = vst [vmem:[#allocation4 + $0x374] sm:$0xf] %v3147
  %3212 = vst [vmem:[#allocation4 + $0x384] sm:$0xf] %v3148
  %3213 = vst [vmem:[#allocation4 + $0x394] sm:$0xf] %v3149
  %3214 = vst [vmem:[#allocation4 + $0x3a4] sm:$0xf] %v3150
  %3215 = vst [vmem:[#allocation4 + $0x3b4] sm:$0xf] %v3151
  %3216 = vst [vmem:[#allocation4 + $0x3c4] sm:$0xf] %v3152
  %3217 = vst [vmem:[#allocation4 + $0x3d4] sm:$0xf] %v3153
  %3218 = vst [vmem:[#allocation4 + $0x3e4] sm:$0xf] %v3154
  %3219 = vst [vmem:[#allocation4 + $0x3f4] sm:$0xf] %v3155
  %v3220 = vld [vmem:[%s2127] sm:$0xff]
  %v3221 = vld [vmem:[%s2127 + $0x8] sm:$0xff]
  %v3222 = vld [vmem:[%s2127 + $0x10] sm:$0xff]
  %v3223 = vld [vmem:[%s2127 + $0x18] sm:$0xff]
  %v3224 = vld [vmem:[%s2127 + $0x20] sm:$0xff]
  %v3225 = vld [vmem:[%s2127 + $0x28] sm:$0xff]
  %v3226 = vld [vmem:[%s2127 + $0x30] sm:$0xff]
  %v3227 = vld [vmem:[%s2127 + $0x38] sm:$0xff]
  %v3228 = vld [vmem:[%s2127 + $0x48] sm:$0xff]
  %v3229 = vld [vmem:[%s2127 + $0x50] sm:$0xff]
  %v3230 = vld [vmem:[%s2127 + $0x58] sm:$0xff]
  %v3231 = vld [vmem:[%s2127 + $0x60] sm:$0xff]
  %v3232 = vld [vmem:[%s2127 + $0x68] sm:$0xff]
  %v3233 = vld [vmem:[%s2127 + $0x70] sm:$0xff]
  %v3234 = vld [vmem:[%s2127 + $0x78] sm:$0xff]
  %v3235 = vld [vmem:[%s2127 + $0x80] sm:$0xff]
  %v3236 = vld [vmem:[%s2127 + $0x90] sm:$0xff]
  %v3237 = vld [vmem:[%s2127 + $0x98] sm:$0xff]
  %v3238 = vld [vmem:[%s2127 + $0xa0] sm:$0xff]
  %v3239 = vld [vmem:[%s2127 + $0xa8] sm:$0xff]
  %v3240 = vld [vmem:[%s2127 + $0xb0] sm:$0xff]
  %v3241 = vld [vmem:[%s2127 + $0xb8] sm:$0xff]
  %v3242 = vld [vmem:[%s2127 + $0xc0] sm:$0xff]
  %v3243 = vld [vmem:[%s2127 + $0xc8] sm:$0xff]
  %v3244 = vld [vmem:[%s2127 + $0xd8] sm:$0xff]
  %v3245 = vld [vmem:[%s2127 + $0xe0] sm:$0xff]
  %v3246 = vld [vmem:[%s2127 + $0xe8] sm:$0xff]
  %v3247 = vld [vmem:[%s2127 + $0xf0] sm:$0xff]
  %v3248 = vld [vmem:[%s2127 + $0xf8] sm:$0xff]
  %v3249 = vld [vmem:[%s2127 + $0x100] sm:$0xff]
  %v3250 = vld [vmem:[%s2127 + $0x108] sm:$0xff]
  %v3251 = vld [vmem:[%s2127 + $0x110] sm:$0xff]
  %v3252 = vld [vmem:[%s2127 + $0x120] sm:$0xff]
  %v3253 = vld [vmem:[%s2127 + $0x128] sm:$0xff]
  %v3254 = vld [vmem:[%s2127 + $0x130] sm:$0xff]
  %v3255 = vld [vmem:[%s2127 + $0x138] sm:$0xff]
  %v3256 = vld [vmem:[%s2127 + $0x140] sm:$0xff]
  %v3257 = vld [vmem:[%s2127 + $0x148] sm:$0xff]
  %v3258 = vld [vmem:[%s2127 + $0x150] sm:$0xff]
  %v3259 = vld [vmem:[%s2127 + $0x158] sm:$0xff]
  %v3260 = vld [vmem:[%s2127 + $0x168] sm:$0xff]
  %v3261 = vld [vmem:[%s2127 + $0x170] sm:$0xff]
  %v3262 = vld [vmem:[%s2127 + $0x178] sm:$0xff]
  %v3263 = vld [vmem:[%s2127 + $0x180] sm:$0xff]
  %v3264 = vld [vmem:[%s2127 + $0x188] sm:$0xff]
  %v3265 = vld [vmem:[%s2127 + $0x190] sm:$0xff]
  %v3266 = vld [vmem:[%s2127 + $0x198] sm:$0xff]
  %v3267 = vld [vmem:[%s2127 + $0x1a0] sm:$0xff]
  %v3268 = vld [vmem:[%s2127 + $0x1b0] sm:$0xff]
  %v3269 = vld [vmem:[%s2127 + $0x1b8] sm:$0xff]
  %v3270 = vld [vmem:[%s2127 + $0x1c0] sm:$0xff]
  %v3271 = vld [vmem:[%s2127 + $0x1c8] sm:$0xff]
  %v3272 = vld [vmem:[%s2127 + $0x1d0] sm:$0xff]
  %v3273 = vld [vmem:[%s2127 + $0x1d8] sm:$0xff]
  %v3274 = vld [vmem:[%s2127 + $0x1e0] sm:$0xff]
  %v3275 = vld [vmem:[%s2127 + $0x1e8] sm:$0xff]
  %v3276 = vld [vmem:[%s2127 + $0x1f8] sm:$0xff]
  %v3277 = vld [vmem:[%s2127 + $0x200] sm:$0xff]
  %v3278 = vld [vmem:[%s2127 + $0x208] sm:$0xff]
  %v3279 = vld [vmem:[%s2127 + $0x210] sm:$0xff]
  %v3280 = vld [vmem:[%s2127 + $0x218] sm:$0xff]
  %v3281 = vld [vmem:[%s2127 + $0x220] sm:$0xff]
  %v3282 = vld [vmem:[%s2127 + $0x228] sm:$0xff]
  %v3283 = vld [vmem:[%s2127 + $0x230] sm:$0xff]
  %v3284 = vpack.c.bf16 %v3220, %v3220
  %v3285 = vpack.c.bf16 %v3221, %v3221
  %v3286 = vpack.c.bf16 %v3222, %v3222
  %v3287 = vpack.c.bf16 %v3223, %v3223
  %v3288 = vpack.c.bf16 %v3224, %v3224
  %v3289 = vpack.c.bf16 %v3225, %v3225
  %v3290 = vpack.c.bf16 %v3226, %v3226
  %v3291 = vpack.c.bf16 %v3227, %v3227
  %v3292 = vpack.c.bf16 %v3228, %v3228
  %v3293 = vpack.c.bf16 %v3229, %v3229
  %v3294 = vpack.c.bf16 %v3230, %v3230
  %v3295 = vpack.c.bf16 %v3231, %v3231
  %v3296 = vpack.c.bf16 %v3232, %v3232
  %v3297 = vpack.c.bf16 %v3233, %v3233
  %v3298 = vpack.c.bf16 %v3234, %v3234
  %v3299 = vpack.c.bf16 %v3235, %v3235
  %v3300 = vpack.c.bf16 %v3236, %v3236
  %v3301 = vpack.c.bf16 %v3237, %v3237
  %v3302 = vpack.c.bf16 %v3238, %v3238
  %v3303 = vpack.c.bf16 %v3239, %v3239
  %v3304 = vpack.c.bf16 %v3240, %v3240
  %v3305 = vpack.c.bf16 %v3241, %v3241
  %v3306 = vpack.c.bf16 %v3242, %v3242
  %v3307 = vpack.c.bf16 %v3243, %v3243
  %v3308 = vpack.c.bf16 %v3244, %v3244
  %v3309 = vpack.c.bf16 %v3245, %v3245
  %v3310 = vpack.c.bf16 %v3246, %v3246
  %v3311 = vpack.c.bf16 %v3247, %v3247
  %v3312 = vpack.c.bf16 %v3248, %v3248
  %v3313 = vpack.c.bf16 %v3249, %v3249
  %v3314 = vpack.c.bf16 %v3250, %v3250
  %v3315 = vpack.c.bf16 %v3251, %v3251
  %v3316 = vpack.c.bf16 %v3252, %v3252
  %v3317 = vpack.c.bf16 %v3253, %v3253
  %v3318 = vpack.c.bf16 %v3254, %v3254
  %v3319 = vpack.c.bf16 %v3255, %v3255
  %v3320 = vpack.c.bf16 %v3256, %v3256
  %v3321 = vpack.c.bf16 %v3257, %v3257
  %v3322 = vpack.c.bf16 %v3258, %v3258
  %v3323 = vpack.c.bf16 %v3259, %v3259
  %v3324 = vpack.c.bf16 %v3260, %v3260
  %v3325 = vpack.c.bf16 %v3261, %v3261
  %v3326 = vpack.c.bf16 %v3262, %v3262
  %v3327 = vpack.c.bf16 %v3263, %v3263
  %v3328 = vpack.c.bf16 %v3264, %v3264
  %v3329 = vpack.c.bf16 %v3265, %v3265
  %v3330 = vpack.c.bf16 %v3266, %v3266
  %v3331 = vpack.c.bf16 %v3267, %v3267
  %v3332 = vpack.c.bf16 %v3268, %v3268
  %v3333 = vpack.c.bf16 %v3269, %v3269
  %v3334 = vpack.c.bf16 %v3270, %v3270
  %v3335 = vpack.c.bf16 %v3271, %v3271
  %v3336 = vpack.c.bf16 %v3272, %v3272
  %v3337 = vpack.c.bf16 %v3273, %v3273
  %v3338 = vpack.c.bf16 %v3274, %v3274
  %v3339 = vpack.c.bf16 %v3275, %v3275
  %v3340 = vpack.c.bf16 %v3276, %v3276
  %v3341 = vpack.c.bf16 %v3277, %v3277
  %v3342 = vpack.c.bf16 %v3278, %v3278
  %v3343 = vpack.c.bf16 %v3279, %v3279
  %v3344 = vpack.c.bf16 %v3280, %v3280
  %v3345 = vpack.c.bf16 %v3281, %v3281
  %v3346 = vpack.c.bf16 %v3282, %v3282
  %v3347 = vpack.c.bf16 %v3283, %v3283
  %3348 = vst [vmem:[#allocation4 + $0x8] sm:$0xf] %v3284
  %3349 = vst [vmem:[#allocation4 + $0x18] sm:$0xf] %v3285
  %3350 = vst [vmem:[#allocation4 + $0x28] sm:$0xf] %v3286
  %3351 = vst [vmem:[#allocation4 + $0x38] sm:$0xf] %v3287
  %3352 = vst [vmem:[#allocation4 + $0x48] sm:$0xf] %v3288
  %3353 = vst [vmem:[#allocation4 + $0x58] sm:$0xf] %v3289
  %3354 = vst [vmem:[#allocation4 + $0x68] sm:$0xf] %v3290
  %3355 = vst [vmem:[#allocation4 + $0x78] sm:$0xf] %v3291
  %3356 = vst [vmem:[#allocation4 + $0x88] sm:$0xf] %v3292
  %3357 = vst [vmem:[#allocation4 + $0x98] sm:$0xf] %v3293
  %3358 = vst [vmem:[#allocation4 + $0xa8] sm:$0xf] %v3294
  %3359 = vst [vmem:[#allocation4 + $0xb8] sm:$0xf] %v3295
  %3360 = vst [vmem:[#allocation4 + $0xc8] sm:$0xf] %v3296
  %3361 = vst [vmem:[#allocation4 + $0xd8] sm:$0xf] %v3297
  %3362 = vst [vmem:[#allocation4 + $0xe8] sm:$0xf] %v3298
  %3363 = vst [vmem:[#allocation4 + $0xf8] sm:$0xf] %v3299
  %3364 = vst [vmem:[#allocation4 + $0x108] sm:$0xf] %v3300
  %3365 = vst [vmem:[#allocation4 + $0x118] sm:$0xf] %v3301
  %3366 = vst [vmem:[#allocation4 + $0x128] sm:$0xf] %v3302
  %3367 = vst [vmem:[#allocation4 + $0x138] sm:$0xf] %v3303
  %3368 = vst [vmem:[#allocation4 + $0x148] sm:$0xf] %v3304
  %3369 = vst [vmem:[#allocation4 + $0x158] sm:$0xf] %v3305
  %3370 = vst [vmem:[#allocation4 + $0x168] sm:$0xf] %v3306
  %3371 = vst [vmem:[#allocation4 + $0x178] sm:$0xf] %v3307
  %3372 = vst [vmem:[#allocation4 + $0x188] sm:$0xf] %v3308
  %3373 = vst [vmem:[#allocation4 + $0x198] sm:$0xf] %v3309
  %3374 = vst [vmem:[#allocation4 + $0x1a8] sm:$0xf] %v3310
  %3375 = vst [vmem:[#allocation4 + $0x1b8] sm:$0xf] %v3311
  %3376 = vst [vmem:[#allocation4 + $0x1c8] sm:$0xf] %v3312
  %3377 = vst [vmem:[#allocation4 + $0x1d8] sm:$0xf] %v3313
  %3378 = vst [vmem:[#allocation4 + $0x1e8] sm:$0xf] %v3314
  %3379 = vst [vmem:[#allocation4 + $0x1f8] sm:$0xf] %v3315
  %3380 = vst [vmem:[#allocation4 + $0x208] sm:$0xf] %v3316
  %3381 = vst [vmem:[#allocation4 + $0x218] sm:$0xf] %v3317
  %3382 = vst [vmem:[#allocation4 + $0x228] sm:$0xf] %v3318
  %3383 = vst [vmem:[#allocation4 + $0x238] sm:$0xf] %v3319
  %3384 = vst [vmem:[#allocation4 + $0x248] sm:$0xf] %v3320
  %3385 = vst [vmem:[#allocation4 + $0x258] sm:$0xf] %v3321
  %3386 = vst [vmem:[#allocation4 + $0x268] sm:$0xf] %v3322
  %3387 = vst [vmem:[#allocation4 + $0x278] sm:$0xf] %v3323
  %3388 = vst [vmem:[#allocation4 + $0x288] sm:$0xf] %v3324
  %3389 = vst [vmem:[#allocation4 + $0x298] sm:$0xf] %v3325
  %3390 = vst [vmem:[#allocation4 + $0x2a8] sm:$0xf] %v3326
  %3391 = vst [vmem:[#allocation4 + $0x2b8] sm:$0xf] %v3327
  %3392 = vst [vmem:[#allocation4 + $0x2c8] sm:$0xf] %v3328
  %3393 = vst [vmem:[#allocation4 + $0x2d8] sm:$0xf] %v3329
  %3394 = vst [vmem:[#allocation4 + $0x2e8] sm:$0xf] %v3330
  %3395 = vst [vmem:[#allocation4 + $0x2f8] sm:$0xf] %v3331
  %3396 = vst [vmem:[#allocation4 + $0x308] sm:$0xf] %v3332
  %3397 = vst [vmem:[#allocation4 + $0x318] sm:$0xf] %v3333
  %3398 = vst [vmem:[#allocation4 + $0x328] sm:$0xf] %v3334
  %3399 = vst [vmem:[#allocation4 + $0x338] sm:$0xf] %v3335
  %3400 = vst [vmem:[#allocation4 + $0x348] sm:$0xf] %v3336
  %3401 = vst [vmem:[#allocation4 + $0x358] sm:$0xf] %v3337
  %3402 = vst [vmem:[#allocation4 + $0x368] sm:$0xf] %v3338
  %3403 = vst [vmem:[#allocation4 + $0x378] sm:$0xf] %v3339
  %3404 = vst [vmem:[#allocation4 + $0x388] sm:$0xf] %v3340
  %3405 = vst [vmem:[#allocation4 + $0x398] sm:$0xf] %v3341
  %3406 = vst [vmem:[#allocation4 + $0x3a8] sm:$0xf] %v3342
  %3407 = vst [vmem:[#allocation4 + $0x3b8] sm:$0xf] %v3343
  %3408 = vst [vmem:[#allocation4 + $0x3c8] sm:$0xf] %v3344
  %3409 = vst [vmem:[#allocation4 + $0x3d8] sm:$0xf] %v3345
  %3410 = vst [vmem:[#allocation4 + $0x3e8] sm:$0xf] %v3346
  %3411 = vst [vmem:[#allocation4 + $0x3f8] sm:$0xf] %v3347
  %v3412 = vld [vmem:[%s1805] sm:$0xff]
  %v3413 = vld [vmem:[%s1805 + $0x8] sm:$0xff]
  %v3414 = vld [vmem:[%s1805 + $0x10] sm:$0xff]
  %v3415 = vld [vmem:[%s1805 + $0x18] sm:$0xff]
  %v3416 = vld [vmem:[%s1805 + $0x20] sm:$0xff]
  %v3417 = vld [vmem:[%s1805 + $0x28] sm:$0xff]
  %v3418 = vld [vmem:[%s1805 + $0x30] sm:$0xff]
  %v3419 = vld [vmem:[%s1805 + $0x38] sm:$0xff]
  %v3420 = vld [vmem:[%s1805 + $0x48] sm:$0xff]
  %v3421 = vld [vmem:[%s1805 + $0x50] sm:$0xff]
  %v3422 = vld [vmem:[%s1805 + $0x58] sm:$0xff]
  %v3423 = vld [vmem:[%s1805 + $0x60] sm:$0xff]
  %v3424 = vld [vmem:[%s1805 + $0x68] sm:$0xff]
  %v3425 = vld [vmem:[%s1805 + $0x70] sm:$0xff]
  %v3426 = vld [vmem:[%s1805 + $0x78] sm:$0xff]
  %v3427 = vld [vmem:[%s1805 + $0x80] sm:$0xff]
  %v3428 = vld [vmem:[%s1805 + $0x90] sm:$0xff]
  %v3429 = vld [vmem:[%s1805 + $0x98] sm:$0xff]
  %v3430 = vld [vmem:[%s1805 + $0xa0] sm:$0xff]
  %v3431 = vld [vmem:[%s1805 + $0xa8] sm:$0xff]
  %v3432 = vld [vmem:[%s1805 + $0xb0] sm:$0xff]
  %v3433 = vld [vmem:[%s1805 + $0xb8] sm:$0xff]
  %v3434 = vld [vmem:[%s1805 + $0xc0] sm:$0xff]
  %v3435 = vld [vmem:[%s1805 + $0xc8] sm:$0xff]
  %v3436 = vld [vmem:[%s1805 + $0xd8] sm:$0xff]
  %v3437 = vld [vmem:[%s1805 + $0xe0] sm:$0xff]
  %v3438 = vld [vmem:[%s1805 + $0xe8] sm:$0xff]
  %v3439 = vld [vmem:[%s1805 + $0xf0] sm:$0xff]
  %v3440 = vld [vmem:[%s1805 + $0xf8] sm:$0xff]
  %v3441 = vld [vmem:[%s1805 + $0x100] sm:$0xff]
  %v3442 = vld [vmem:[%s1805 + $0x108] sm:$0xff]
  %v3443 = vld [vmem:[%s1805 + $0x110] sm:$0xff]
  %v3444 = vld [vmem:[%s1805 + $0x120] sm:$0xff]
  %v3445 = vld [vmem:[%s1805 + $0x128] sm:$0xff]
  %v3446 = vld [vmem:[%s1805 + $0x130] sm:$0xff]
  %v3447 = vld [vmem:[%s1805 + $0x138] sm:$0xff]
  %v3448 = vld [vmem:[%s1805 + $0x140] sm:$0xff]
  %v3449 = vld [vmem:[%s1805 + $0x148] sm:$0xff]
  %v3450 = vld [vmem:[%s1805 + $0x150] sm:$0xff]
  %v3451 = vld [vmem:[%s1805 + $0x158] sm:$0xff]
  %v3452 = vld [vmem:[%s1805 + $0x168] sm:$0xff]
  %v3453 = vld [vmem:[%s1805 + $0x170] sm:$0xff]
  %v3454 = vld [vmem:[%s1805 + $0x178] sm:$0xff]
  %v3455 = vld [vmem:[%s1805 + $0x180] sm:$0xff]
  %v3456 = vld [vmem:[%s1805 + $0x188] sm:$0xff]
  %v3457 = vld [vmem:[%s1805 + $0x190] sm:$0xff]
  %v3458 = vld [vmem:[%s1805 + $0x198] sm:$0xff]
  %v3459 = vld [vmem:[%s1805 + $0x1a0] sm:$0xff]
  %v3460 = vld [vmem:[%s1805 + $0x1b0] sm:$0xff]
  %v3461 = vld [vmem:[%s1805 + $0x1b8] sm:$0xff]
  %v3462 = vld [vmem:[%s1805 + $0x1c0] sm:$0xff]
  %v3463 = vld [vmem:[%s1805 + $0x1c8] sm:$0xff]
  %v3464 = vld [vmem:[%s1805 + $0x1d0] sm:$0xff]
  %v3465 = vld [vmem:[%s1805 + $0x1d8] sm:$0xff]
  %v3466 = vld [vmem:[%s1805 + $0x1e0] sm:$0xff]
  %v3467 = vld [vmem:[%s1805 + $0x1e8] sm:$0xff]
  %v3468 = vld [vmem:[%s1805 + $0x1f8] sm:$0xff]
  %v3469 = vld [vmem:[%s1805 + $0x200] sm:$0xff]
  %v3470 = vld [vmem:[%s1805 + $0x208] sm:$0xff]
  %v3471 = vld [vmem:[%s1805 + $0x210] sm:$0xff]
  %v3472 = vld [vmem:[%s1805 + $0x218] sm:$0xff]
  %v3473 = vld [vmem:[%s1805 + $0x220] sm:$0xff]
  %v3474 = vld [vmem:[%s1805 + $0x228] sm:$0xff]
  %v3475 = vld [vmem:[%s1805 + $0x230] sm:$0xff]
  %v3476 = vpack.c.bf16 %v3412, %v3412
  %v3477 = vpack.c.bf16 %v3413, %v3413
  %v3478 = vpack.c.bf16 %v3414, %v3414
  %v3479 = vpack.c.bf16 %v3415, %v3415
  %v3480 = vpack.c.bf16 %v3416, %v3416
  %v3481 = vpack.c.bf16 %v3417, %v3417
  %v3482 = vpack.c.bf16 %v3418, %v3418
  %v3483 = vpack.c.bf16 %v3419, %v3419
  %v3484 = vpack.c.bf16 %v3420, %v3420
  %v3485 = vpack.c.bf16 %v3421, %v3421
  %v3486 = vpack.c.bf16 %v3422, %v3422
  %v3487 = vpack.c.bf16 %v3423, %v3423
  %v3488 = vpack.c.bf16 %v3424, %v3424
  %v3489 = vpack.c.bf16 %v3425, %v3425
  %v3490 = vpack.c.bf16 %v3426, %v3426
  %v3491 = vpack.c.bf16 %v3427, %v3427
  %v3492 = vpack.c.bf16 %v3428, %v3428
  %v3493 = vpack.c.bf16 %v3429, %v3429
  %v3494 = vpack.c.bf16 %v3430, %v3430
  %v3495 = vpack.c.bf16 %v3431, %v3431
  %v3496 = vpack.c.bf16 %v3432, %v3432
  %v3497 = vpack.c.bf16 %v3433, %v3433
  %v3498 = vpack.c.bf16 %v3434, %v3434
  %v3499 = vpack.c.bf16 %v3435, %v3435
  %v3500 = vpack.c.bf16 %v3436, %v3436
  %v3501 = vpack.c.bf16 %v3437, %v3437
  %v3502 = vpack.c.bf16 %v3438, %v3438
  %v3503 = vpack.c.bf16 %v3439, %v3439
  %v3504 = vpack.c.bf16 %v3440, %v3440
  %v3505 = vpack.c.bf16 %v3441, %v3441
  %v3506 = vpack.c.bf16 %v3442, %v3442
  %v3507 = vpack.c.bf16 %v3443, %v3443
  %v3508 = vpack.c.bf16 %v3444, %v3444
  %v3509 = vpack.c.bf16 %v3445, %v3445
  %v3510 = vpack.c.bf16 %v3446, %v3446
  %v3511 = vpack.c.bf16 %v3447, %v3447
  %v3512 = vpack.c.bf16 %v3448, %v3448
  %v3513 = vpack.c.bf16 %v3449, %v3449
  %v3514 = vpack.c.bf16 %v3450, %v3450
  %v3515 = vpack.c.bf16 %v3451, %v3451
  %v3516 = vpack.c.bf16 %v3452, %v3452
  %v3517 = vpack.c.bf16 %v3453, %v3453
  %v3518 = vpack.c.bf16 %v3454, %v3454
  %v3519 = vpack.c.bf16 %v3455, %v3455
  %v3520 = vpack.c.bf16 %v3456, %v3456
  %v3521 = vpack.c.bf16 %v3457, %v3457
  %v3522 = vpack.c.bf16 %v3458, %v3458
  %v3523 = vpack.c.bf16 %v3459, %v3459
  %v3524 = vpack.c.bf16 %v3460, %v3460
  %v3525 = vpack.c.bf16 %v3461, %v3461
  %v3526 = vpack.c.bf16 %v3462, %v3462
  %v3527 = vpack.c.bf16 %v3463, %v3463
  %v3528 = vpack.c.bf16 %v3464, %v3464
  %v3529 = vpack.c.bf16 %v3465, %v3465
  %v3530 = vpack.c.bf16 %v3466, %v3466
  %v3531 = vpack.c.bf16 %v3467, %v3467
  %v3532 = vpack.c.bf16 %v3468, %v3468
  %v3533 = vpack.c.bf16 %v3469, %v3469
  %v3534 = vpack.c.bf16 %v3470, %v3470
  %v3535 = vpack.c.bf16 %v3471, %v3471
  %v3536 = vpack.c.bf16 %v3472, %v3472
  %v3537 = vpack.c.bf16 %v3473, %v3473
  %v3538 = vpack.c.bf16 %v3474, %v3474
  %v3539 = vpack.c.bf16 %v3475, %v3475
  %3540 = vst [vmem:[#allocation4 + $0xc] sm:$0xf] %v3476
  %3541 = vst [vmem:[#allocation4 + $0x1c] sm:$0xf] %v3477
  %3542 = vst [vmem:[#allocation4 + $0x2c] sm:$0xf] %v3478
  %3543 = vst [vmem:[#allocation4 + $0x3c] sm:$0xf] %v3479
  %3544 = vst [vmem:[#allocation4 + $0x4c] sm:$0xf] %v3480
  %3545 = vst [vmem:[#allocation4 + $0x5c] sm:$0xf] %v3481
  %3546 = vst [vmem:[#allocation4 + $0x6c] sm:$0xf] %v3482
  %3547 = vst [vmem:[#allocation4 + $0x7c] sm:$0xf] %v3483
  %3548 = vst [vmem:[#allocation4 + $0x8c] sm:$0xf] %v3484
  %3549 = vst [vmem:[#allocation4 + $0x9c] sm:$0xf] %v3485
  %3550 = vst [vmem:[#allocation4 + $0xac] sm:$0xf] %v3486
  %3551 = vst [vmem:[#allocation4 + $0xbc] sm:$0xf] %v3487
  %3552 = vst [vmem:[#allocation4 + $0xcc] sm:$0xf] %v3488
  %3553 = vst [vmem:[#allocation4 + $0xdc] sm:$0xf] %v3489
  %3554 = vst [vmem:[#allocation4 + $0xec] sm:$0xf] %v3490
  %3555 = vst [vmem:[#allocation4 + $0xfc] sm:$0xf] %v3491
  %3556 = vst [vmem:[#allocation4 + $0x10c] sm:$0xf] %v3492
  %3557 = vst [vmem:[#allocation4 + $0x11c] sm:$0xf] %v3493
  %3558 = vst [vmem:[#allocation4 + $0x12c] sm:$0xf] %v3494
  %3559 = vst [vmem:[#allocation4 + $0x13c] sm:$0xf] %v3495
  %3560 = vst [vmem:[#allocation4 + $0x14c] sm:$0xf] %v3496
  %3561 = vst [vmem:[#allocation4 + $0x15c] sm:$0xf] %v3497
  %3562 = vst [vmem:[#allocation4 + $0x16c] sm:$0xf] %v3498
  %3563 = vst [vmem:[#allocation4 + $0x17c] sm:$0xf] %v3499
  %3564 = vst [vmem:[#allocation4 + $0x18c] sm:$0xf] %v3500
  %3565 = vst [vmem:[#allocation4 + $0x19c] sm:$0xf] %v3501
  %3566 = vst [vmem:[#allocation4 + $0x1ac] sm:$0xf] %v3502
  %3567 = vst [vmem:[#allocation4 + $0x1bc] sm:$0xf] %v3503
  %3568 = vst [vmem:[#allocation4 + $0x1cc] sm:$0xf] %v3504
  %3569 = vst [vmem:[#allocation4 + $0x1dc] sm:$0xf] %v3505
  %3570 = vst [vmem:[#allocation4 + $0x1ec] sm:$0xf] %v3506
  %3571 = vst [vmem:[#allocation4 + $0x1fc] sm:$0xf] %v3507
  %3572 = vst [vmem:[#allocation4 + $0x20c] sm:$0xf] %v3508
  %3573 = vst [vmem:[#allocation4 + $0x21c] sm:$0xf] %v3509
  %3574 = vst [vmem:[#allocation4 + $0x22c] sm:$0xf] %v3510
  %3575 = vst [vmem:[#allocation4 + $0x23c] sm:$0xf] %v3511
  %3576 = vst [vmem:[#allocation4 + $0x24c] sm:$0xf] %v3512
  %3577 = vst [vmem:[#allocation4 + $0x25c] sm:$0xf] %v3513
  %3578 = vst [vmem:[#allocation4 + $0x26c] sm:$0xf] %v3514
  %3579 = vst [vmem:[#allocation4 + $0x27c] sm:$0xf] %v3515
  %3580 = vst [vmem:[#allocation4 + $0x28c] sm:$0xf] %v3516
  %3581 = vst [vmem:[#allocation4 + $0x29c] sm:$0xf] %v3517
  %3582 = vst [vmem:[#allocation4 + $0x2ac] sm:$0xf] %v3518
  %3583 = vst [vmem:[#allocation4 + $0x2bc] sm:$0xf] %v3519
  %3584 = vst [vmem:[#allocation4 + $0x2cc] sm:$0xf] %v3520
  %3585 = vst [vmem:[#allocation4 + $0x2dc] sm:$0xf] %v3521
  %3586 = vst [vmem:[#allocation4 + $0x2ec] sm:$0xf] %v3522
  %3587 = vst [vmem:[#allocation4 + $0x2fc] sm:$0xf] %v3523
  %3588 = vst [vmem:[#allocation4 + $0x30c] sm:$0xf] %v3524
  %3589 = vst [vmem:[#allocation4 + $0x31c] sm:$0xf] %v3525
  %3590 = vst [vmem:[#allocation4 + $0x32c] sm:$0xf] %v3526
  %3591 = vst [vmem:[#allocation4 + $0x33c] sm:$0xf] %v3527
  %3592 = vst [vmem:[#allocation4 + $0x34c] sm:$0xf] %v3528
  %3593 = vst [vmem:[#allocation4 + $0x35c] sm:$0xf] %v3529
  %3594 = vst [vmem:[#allocation4 + $0x36c] sm:$0xf] %v3530
  %3595 = vst [vmem:[#allocation4 + $0x37c] sm:$0xf] %v3531
  %3596 = vst [vmem:[#allocation4 + $0x38c] sm:$0xf] %v3532
  %3597 = vst [vmem:[#allocation4 + $0x39c] sm:$0xf] %v3533
  %3598 = vst [vmem:[#allocation4 + $0x3ac] sm:$0xf] %v3534
  %3599 = vst [vmem:[#allocation4 + $0x3bc] sm:$0xf] %v3535
  %3600 = vst [vmem:[#allocation4 + $0x3cc] sm:$0xf] %v3536
  %3601 = vst [vmem:[#allocation4 + $0x3dc] sm:$0xf] %v3537
  %3602 = vst [vmem:[#allocation4 + $0x3ec] sm:$0xf] %v3538
  %3603 = vst [vmem:[#allocation4 + $0x3fc] sm:$0xf] %v3539
  %v3604 = vld [vmem:[#allocation4] sm:$0xff]
  %v3605 = vld [vmem:[#allocation4 + $0x8] sm:$0xff]
  %v3606 = vld [vmem:[#allocation4 + $0x10] sm:$0xff]
  %v3607 = vld [vmem:[#allocation4 + $0x18] sm:$0xff]
  %v3608 = vld [vmem:[#allocation4 + $0x20] sm:$0xff]
  %v3609 = vld [vmem:[#allocation4 + $0x28] sm:$0xff]
  %v3610 = vld [vmem:[#allocation4 + $0x30] sm:$0xff]
  %v3611 = vld [vmem:[#allocation4 + $0x38] sm:$0xff]
  %v3612 = vld [vmem:[#allocation4 + $0x40] sm:$0xff]
  %v3613 = vld [vmem:[#allocation4 + $0x48] sm:$0xff]
  %v3614 = vld [vmem:[#allocation4 + $0x50] sm:$0xff]
  %v3615 = vld [vmem:[#allocation4 + $0x58] sm:$0xff]
  %v3616 = vld [vmem:[#allocation4 + $0x60] sm:$0xff]
  %v3617 = vld [vmem:[#allocation4 + $0x68] sm:$0xff]
  %v3618 = vld [vmem:[#allocation4 + $0x70] sm:$0xff]
  %v3619 = vld [vmem:[#allocation4 + $0x78] sm:$0xff]
  %v3620 = vld [vmem:[#allocation4 + $0x80] sm:$0xff]
  %v3621 = vld [vmem:[#allocation4 + $0x88] sm:$0xff]
  %v3622 = vld [vmem:[#allocation4 + $0x90] sm:$0xff]
  %v3623 = vld [vmem:[#allocation4 + $0x98] sm:$0xff]
  %v3624 = vld [vmem:[#allocation4 + $0xa0] sm:$0xff]
  %v3625 = vld [vmem:[#allocation4 + $0xa8] sm:$0xff]
  %v3626 = vld [vmem:[#allocation4 + $0xb0] sm:$0xff]
  %v3627 = vld [vmem:[#allocation4 + $0xb8] sm:$0xff]
  %v3628 = vld [vmem:[#allocation4 + $0xc0] sm:$0xff]
  %v3629 = vld [vmem:[#allocation4 + $0xc8] sm:$0xff]
  %v3630 = vld [vmem:[#allocation4 + $0xd0] sm:$0xff]
  %v3631 = vld [vmem:[#allocation4 + $0xd8] sm:$0xff]
  %v3632 = vld [vmem:[#allocation4 + $0xe0] sm:$0xff]
  %v3633 = vld [vmem:[#allocation4 + $0xe8] sm:$0xff]
  %v3634 = vld [vmem:[#allocation4 + $0xf0] sm:$0xff]
  %v3635 = vld [vmem:[#allocation4 + $0xf8] sm:$0xff]
  %v3636 = vld [vmem:[#allocation4 + $0x100] sm:$0xff]
  %v3637 = vld [vmem:[#allocation4 + $0x108] sm:$0xff]
  %v3638 = vld [vmem:[#allocation4 + $0x110] sm:$0xff]
  %v3639 = vld [vmem:[#allocation4 + $0x118] sm:$0xff]
  %v3640 = vld [vmem:[#allocation4 + $0x120] sm:$0xff]
  %v3641 = vld [vmem:[#allocation4 + $0x128] sm:$0xff]
  %v3642 = vld [vmem:[#allocation4 + $0x130] sm:$0xff]
  %v3643 = vld [vmem:[#allocation4 + $0x138] sm:$0xff]
  %v3644 = vld [vmem:[#allocation4 + $0x140] sm:$0xff]
  %v3645 = vld [vmem:[#allocation4 + $0x148] sm:$0xff]
  %v3646 = vld [vmem:[#allocation4 + $0x150] sm:$0xff]
  %v3647 = vld [vmem:[#allocation4 + $0x158] sm:$0xff]
  %v3648 = vld [vmem:[#allocation4 + $0x160] sm:$0xff]
  %v3649 = vld [vmem:[#allocation4 + $0x168] sm:$0xff]
  %v3650 = vld [vmem:[#allocation4 + $0x170] sm:$0xff]
  %v3651 = vld [vmem:[#allocation4 + $0x178] sm:$0xff]
  %v3652 = vld [vmem:[#allocation4 + $0x180] sm:$0xff]
  %v3653 = vld [vmem:[#allocation4 + $0x188] sm:$0xff]
  %v3654 = vld [vmem:[#allocation4 + $0x190] sm:$0xff]
  %v3655 = vld [vmem:[#allocation4 + $0x198] sm:$0xff]
  %v3656 = vld [vmem:[#allocation4 + $0x1a0] sm:$0xff]
  %v3657 = vld [vmem:[#allocation4 + $0x1a8] sm:$0xff]
  %v3658 = vld [vmem:[#allocation4 + $0x1b0] sm:$0xff]
  %v3659 = vld [vmem:[#allocation4 + $0x1b8] sm:$0xff]
  %v3660 = vld [vmem:[#allocation4 + $0x1c0] sm:$0xff]
  %v3661 = vld [vmem:[#allocation4 + $0x1c8] sm:$0xff]
  %v3662 = vld [vmem:[#allocation4 + $0x1d0] sm:$0xff]
  %v3663 = vld [vmem:[#allocation4 + $0x1d8] sm:$0xff]
  %v3664 = vld [vmem:[#allocation4 + $0x1e0] sm:$0xff]
  %v3665 = vld [vmem:[#allocation4 + $0x1e8] sm:$0xff]
  %v3666 = vld [vmem:[#allocation4 + $0x1f0] sm:$0xff]
  %v3667 = vld [vmem:[#allocation4 + $0x1f8] sm:$0xff]
  %v3668 = vld [vmem:[#allocation4 + $0x200] sm:$0xff]
  %v3669 = vld [vmem:[#allocation4 + $0x208] sm:$0xff]
  %v3670 = vld [vmem:[#allocation4 + $0x210] sm:$0xff]
  %v3671 = vld [vmem:[#allocation4 + $0x218] sm:$0xff]
  %v3672 = vld [vmem:[#allocation4 + $0x220] sm:$0xff]
  %v3673 = vld [vmem:[#allocation4 + $0x228] sm:$0xff]
  %v3674 = vld [vmem:[#allocation4 + $0x230] sm:$0xff]
  %v3675 = vld [vmem:[#allocation4 + $0x238] sm:$0xff]
  %v3676 = vld [vmem:[#allocation4 + $0x240] sm:$0xff]
  %v3677 = vld [vmem:[#allocation4 + $0x248] sm:$0xff]
  %v3678 = vld [vmem:[#allocation4 + $0x250] sm:$0xff]
  %v3679 = vld [vmem:[#allocation4 + $0x258] sm:$0xff]
  %v3680 = vld [vmem:[#allocation4 + $0x260] sm:$0xff]
  %v3681 = vld [vmem:[#allocation4 + $0x268] sm:$0xff]
  %v3682 = vld [vmem:[#allocation4 + $0x270] sm:$0xff]
  %v3683 = vld [vmem:[#allocation4 + $0x278] sm:$0xff]
  %v3684 = vld [vmem:[#allocation4 + $0x280] sm:$0xff]
  %v3685 = vld [vmem:[#allocation4 + $0x288] sm:$0xff]
  %v3686 = vld [vmem:[#allocation4 + $0x290] sm:$0xff]
  %v3687 = vld [vmem:[#allocation4 + $0x298] sm:$0xff]
  %v3688 = vld [vmem:[#allocation4 + $0x2a0] sm:$0xff]
  %v3689 = vld [vmem:[#allocation4 + $0x2a8] sm:$0xff]
  %v3690 = vld [vmem:[#allocation4 + $0x2b0] sm:$0xff]
  %v3691 = vld [vmem:[#allocation4 + $0x2b8] sm:$0xff]
  %v3692 = vld [vmem:[#allocation4 + $0x2c0] sm:$0xff]
  %v3693 = vld [vmem:[#allocation4 + $0x2c8] sm:$0xff]
  %v3694 = vld [vmem:[#allocation4 + $0x2d0] sm:$0xff]
  %v3695 = vld [vmem:[#allocation4 + $0x2d8] sm:$0xff]
  %v3696 = vld [vmem:[#allocation4 + $0x2e0] sm:$0xff]
  %v3697 = vld [vmem:[#allocation4 + $0x2e8] sm:$0xff]
  %v3698 = vld [vmem:[#allocation4 + $0x2f0] sm:$0xff]
  %v3699 = vld [vmem:[#allocation4 + $0x2f8] sm:$0xff]
  %v3700 = vld [vmem:[#allocation4 + $0x300] sm:$0xff]
  %v3701 = vld [vmem:[#allocation4 + $0x308] sm:$0xff]
  %v3702 = vld [vmem:[#allocation4 + $0x310] sm:$0xff]
  %v3703 = vld [vmem:[#allocation4 + $0x318] sm:$0xff]
  %v3704 = vld [vmem:[#allocation4 + $0x320] sm:$0xff]
  %v3705 = vld [vmem:[#allocation4 + $0x328] sm:$0xff]
  %v3706 = vld [vmem:[#allocation4 + $0x330] sm:$0xff]
  %v3707 = vld [vmem:[#allocation4 + $0x338] sm:$0xff]
  %v3708 = vld [vmem:[#allocation4 + $0x340] sm:$0xff]
  %v3709 = vld [vmem:[#allocation4 + $0x348] sm:$0xff]
  %v3710 = vld [vmem:[#allocation4 + $0x350] sm:$0xff]
  %v3711 = vld [vmem:[#allocation4 + $0x358] sm:$0xff]
  %v3712 = vld [vmem:[#allocation4 + $0x360] sm:$0xff]
  %v3713 = vld [vmem:[#allocation4 + $0x368] sm:$0xff]
  %v3714 = vld [vmem:[#allocation4 + $0x370] sm:$0xff]
  %v3715 = vld [vmem:[#allocation4 + $0x378] sm:$0xff]
  %v3716 = vld [vmem:[#allocation4 + $0x380] sm:$0xff]
  %v3717 = vld [vmem:[#allocation4 + $0x388] sm:$0xff]
  %v3718 = vld [vmem:[#allocation4 + $0x390] sm:$0xff]
  %v3719 = vld [vmem:[#allocation4 + $0x398] sm:$0xff]
  %v3720 = vld [vmem:[#allocation4 + $0x3a0] sm:$0xff]
  %v3721 = vld [vmem:[#allocation4 + $0x3a8] sm:$0xff]
  %v3722 = vld [vmem:[#allocation4 + $0x3b0] sm:$0xff]
  %v3723 = vld [vmem:[#allocation4 + $0x3b8] sm:$0xff]
  %v3724 = vld [vmem:[#allocation4 + $0x3c0] sm:$0xff]
  %v3725 = vld [vmem:[#allocation4 + $0x3c8] sm:$0xff]
  %v3726 = vld [vmem:[#allocation4 + $0x3d0] sm:$0xff]
  %v3727 = vld [vmem:[#allocation4 + $0x3d8] sm:$0xff]
  %v3728 = vld [vmem:[#allocation4 + $0x3e0] sm:$0xff]
  %v3729 = vld [vmem:[#allocation4 + $0x3e8] sm:$0xff]
  %v3730 = vld [vmem:[#allocation4 + $0x3f0] sm:$0xff]
  %v3731 = vld [vmem:[#allocation4 + $0x3f8] sm:$0xff]
  %v3732 = vld [vmem:[%s3] sm:$0xf]
  %v3733 = vld [vmem:[%s3 + $0x4] sm:$0xf]
  %v3734 = vld [vmem:[%s3 + $0x8] sm:$0xf]
  %v3735 = vld [vmem:[%s3 + $0xc] sm:$0xf]
  %v3736 = vld [vmem:[%s3 + $0x10] sm:$0xf]
  %v3737 = vld [vmem:[%s3 + $0x14] sm:$0xf]
  %v3738 = vld [vmem:[%s3 + $0x18] sm:$0xf]
  %v3739 = vld [vmem:[%s3 + $0x1c] sm:$0xf]
  %v3740 = vld [vmem:[%s3 + $0x20] sm:$0xf]
  %v3741 = vld [vmem:[%s3 + $0x24] sm:$0xf]
  %v3742 = vld [vmem:[%s3 + $0x28] sm:$0xf]
  %v3743 = vld [vmem:[%s3 + $0x2c] sm:$0xf]
  %v3744 = vld [vmem:[%s3 + $0x30] sm:$0xf]
  %v3745 = vld [vmem:[%s3 + $0x34] sm:$0xf]
  %v3746 = vld [vmem:[%s3 + $0x38] sm:$0xf]
  %v3747 = vld [vmem:[%s3 + $0x3c] sm:$0xf]
  %v3748 = vld [vmem:[%s3 + $0x40] sm:$0xf]
  %v3749 = vld [vmem:[%s3 + $0x44] sm:$0xf]
  %v3750 = vld [vmem:[%s3 + $0x48] sm:$0xf]
  %v3751 = vld [vmem:[%s3 + $0x4c] sm:$0xf]
  %v3752 = vld [vmem:[%s3 + $0x50] sm:$0xf]
  %v3753 = vld [vmem:[%s3 + $0x54] sm:$0xf]
  %v3754 = vld [vmem:[%s3 + $0x58] sm:$0xf]
  %v3755 = vld [vmem:[%s3 + $0x5c] sm:$0xf]
  %v3756 = vld [vmem:[%s3 + $0x60] sm:$0xf]
  %v3757 = vld [vmem:[%s3 + $0x64] sm:$0xf]
  %v3758 = vld [vmem:[%s3 + $0x68] sm:$0xf]
  %v3759 = vld [vmem:[%s3 + $0x6c] sm:$0xf]
  %v3760 = vld [vmem:[%s3 + $0x70] sm:$0xf]
  %v3761 = vld [vmem:[%s3 + $0x74] sm:$0xf]
  %v3762 = vld [vmem:[%s3 + $0x78] sm:$0xf]
  %v3763 = vld [vmem:[%s3 + $0x7c] sm:$0xf]
  %v3764 = vld [vmem:[%s3 + $0x80] sm:$0xf]
  %v3765 = vld [vmem:[%s3 + $0x84] sm:$0xf]
  %v3766 = vld [vmem:[%s3 + $0x88] sm:$0xf]
  %v3767 = vld [vmem:[%s3 + $0x8c] sm:$0xf]
  %v3768 = vld [vmem:[%s3 + $0x90] sm:$0xf]
  %v3769 = vld [vmem:[%s3 + $0x94] sm:$0xf]
  %v3770 = vld [vmem:[%s3 + $0x98] sm:$0xf]
  %v3771 = vld [vmem:[%s3 + $0x9c] sm:$0xf]
  %v3772 = vld [vmem:[%s3 + $0xa0] sm:$0xf]
  %v3773 = vld [vmem:[%s3 + $0xa4] sm:$0xf]
  %v3774 = vld [vmem:[%s3 + $0xa8] sm:$0xf]
  %v3775 = vld [vmem:[%s3 + $0xac] sm:$0xf]
  %v3776 = vld [vmem:[%s3 + $0xb0] sm:$0xf]
  %v3777 = vld [vmem:[%s3 + $0xb4] sm:$0xf]
  %v3778 = vld [vmem:[%s3 + $0xb8] sm:$0xf]
  %v3779 = vld [vmem:[%s3 + $0xbc] sm:$0xf]
  %v3780 = vld [vmem:[%s3 + $0xc0] sm:$0xf]
  %v3781 = vld [vmem:[%s3 + $0xc4] sm:$0xf]
  %v3782 = vld [vmem:[%s3 + $0xc8] sm:$0xf]
  %v3783 = vld [vmem:[%s3 + $0xcc] sm:$0xf]
  %v3784 = vld [vmem:[%s3 + $0xd0] sm:$0xf]
  %v3785 = vld [vmem:[%s3 + $0xd4] sm:$0xf]
  %v3786 = vld [vmem:[%s3 + $0xd8] sm:$0xf]
  %v3787 = vld [vmem:[%s3 + $0xdc] sm:$0xf]
  %v3788 = vld [vmem:[%s3 + $0xe0] sm:$0xf]
  %v3789 = vld [vmem:[%s3 + $0xe4] sm:$0xf]
  %v3790 = vld [vmem:[%s3 + $0xe8] sm:$0xf]
  %v3791 = vld [vmem:[%s3 + $0xec] sm:$0xf]
  %v3792 = vld [vmem:[%s3 + $0xf0] sm:$0xf]
  %v3793 = vld [vmem:[%s3 + $0xf4] sm:$0xf]
  %v3794 = vld [vmem:[%s3 + $0xf8] sm:$0xf]
  %v3795 = vld [vmem:[%s3 + $0xfc] sm:$0xf]
  %v3796 = vld [vmem:[%s4] sm:$0x1]
  %v3798 = vperm.slane %v3796, 0
  %v3928 = vunpack.c.l.b16 %v3604
  %v3929 = vunpack.c.h.b16 %v3604
  %v3930 = vunpack.c.l.b16 %v3605
  %v3931 = vunpack.c.h.b16 %v3605
  %v3932 = vunpack.c.l.b16 %v3606
  %v3933 = vunpack.c.h.b16 %v3606
  %v3934 = vunpack.c.l.b16 %v3607
  %v3935 = vunpack.c.h.b16 %v3607
  %v3936 = vunpack.c.l.b16 %v3608
  %v3937 = vunpack.c.h.b16 %v3608
  %v3938 = vunpack.c.l.b16 %v3609
  %v3939 = vunpack.c.h.b16 %v3609
  %v3940 = vunpack.c.l.b16 %v3610
  %v3941 = vunpack.c.h.b16 %v3610
  %v3942 = vunpack.c.l.b16 %v3611
  %v3943 = vunpack.c.h.b16 %v3611
  %v3944 = vunpack.c.l.b16 %v3612
  %v3945 = vunpack.c.h.b16 %v3612
  %v3946 = vunpack.c.l.b16 %v3613
  %v3947 = vunpack.c.h.b16 %v3613
  %v3948 = vunpack.c.l.b16 %v3614
  %v3949 = vunpack.c.h.b16 %v3614
  %v3950 = vunpack.c.l.b16 %v3615
  %v3951 = vunpack.c.h.b16 %v3615
  %v3952 = vunpack.c.l.b16 %v3616
  %v3953 = vunpack.c.h.b16 %v3616
  %v3954 = vunpack.c.l.b16 %v3617
  %v3955 = vunpack.c.h.b16 %v3617
  %v3956 = vunpack.c.l.b16 %v3618
  %v3957 = vunpack.c.h.b16 %v3618
  %v3958 = vunpack.c.l.b16 %v3619
  %v3959 = vunpack.c.h.b16 %v3619
  %v3960 = vunpack.c.l.b16 %v3620
  %v3961 = vunpack.c.h.b16 %v3620
  %v3962 = vunpack.c.l.b16 %v3621
  %v3963 = vunpack.c.h.b16 %v3621
  %v3964 = vunpack.c.l.b16 %v3622
  %v3965 = vunpack.c.h.b16 %v3622
  %v3966 = vunpack.c.l.b16 %v3623
  %v3967 = vunpack.c.h.b16 %v3623
  %v3968 = vunpack.c.l.b16 %v3624
  %v3969 = vunpack.c.h.b16 %v3624
  %v3970 = vunpack.c.l.b16 %v3625
  %v3971 = vunpack.c.h.b16 %v3625
  %v3972 = vunpack.c.l.b16 %v3626
  %v3973 = vunpack.c.h.b16 %v3626
  %v3974 = vunpack.c.l.b16 %v3627
  %v3975 = vunpack.c.h.b16 %v3627
  %v3976 = vunpack.c.l.b16 %v3628
  %v3977 = vunpack.c.h.b16 %v3628
  %v3978 = vunpack.c.l.b16 %v3629
  %v3979 = vunpack.c.h.b16 %v3629
  %v3980 = vunpack.c.l.b16 %v3630
  %v3981 = vunpack.c.h.b16 %v3630
  %v3982 = vunpack.c.l.b16 %v3631
  %v3983 = vunpack.c.h.b16 %v3631
  %v3984 = vunpack.c.l.b16 %v3632
  %v3985 = vunpack.c.h.b16 %v3632
  %v3986 = vunpack.c.l.b16 %v3633
  %v3987 = vunpack.c.h.b16 %v3633
  %v3988 = vunpack.c.l.b16 %v3634
  %v3989 = vunpack.c.h.b16 %v3634
  %v3990 = vunpack.c.l.b16 %v3635
  %v3991 = vunpack.c.h.b16 %v3635
  %v3992 = vunpack.c.l.b16 %v3636
  %v3993 = vunpack.c.h.b16 %v3636
  %v3994 = vunpack.c.l.b16 %v3637
  %v3995 = vunpack.c.h.b16 %v3637
  %v3996 = vunpack.c.l.b16 %v3638
  %v3997 = vunpack.c.h.b16 %v3638
  %v3998 = vunpack.c.l.b16 %v3639
  %v3999 = vunpack.c.h.b16 %v3639
  %v4000 = vunpack.c.l.b16 %v3640
  %v4001 = vunpack.c.h.b16 %v3640
  %v4002 = vunpack.c.l.b16 %v3641
  %v4003 = vunpack.c.h.b16 %v3641
  %v4004 = vunpack.c.l.b16 %v3642
  %v4005 = vunpack.c.h.b16 %v3642
  %v4006 = vunpack.c.l.b16 %v3643
  %v4007 = vunpack.c.h.b16 %v3643
  %v4008 = vunpack.c.l.b16 %v3644
  %v4009 = vunpack.c.h.b16 %v3644
  %v4010 = vunpack.c.l.b16 %v3645
  %v4011 = vunpack.c.h.b16 %v3645
  %v4012 = vunpack.c.l.b16 %v3646
  %v4013 = vunpack.c.h.b16 %v3646
  %v4014 = vunpack.c.l.b16 %v3647
  %v4015 = vunpack.c.h.b16 %v3647
  %v4016 = vunpack.c.l.b16 %v3648
  %v4017 = vunpack.c.h.b16 %v3648
  %v4018 = vunpack.c.l.b16 %v3649
  %v4019 = vunpack.c.h.b16 %v3649
  %v4020 = vunpack.c.l.b16 %v3650
  %v4021 = vunpack.c.h.b16 %v3650
  %v4022 = vunpack.c.l.b16 %v3651
  %v4023 = vunpack.c.h.b16 %v3651
  %v4024 = vunpack.c.l.b16 %v3652
  %v4025 = vunpack.c.h.b16 %v3652
  %v4026 = vunpack.c.l.b16 %v3653
  %v4027 = vunpack.c.h.b16 %v3653
  %v4028 = vunpack.c.l.b16 %v3654
  %v4029 = vunpack.c.h.b16 %v3654
  %v4030 = vunpack.c.l.b16 %v3655
  %v4031 = vunpack.c.h.b16 %v3655
  %v4032 = vunpack.c.l.b16 %v3656
  %v4033 = vunpack.c.h.b16 %v3656
  %v4034 = vunpack.c.l.b16 %v3657
  %v4035 = vunpack.c.h.b16 %v3657
  %v4036 = vunpack.c.l.b16 %v3658
  %v4037 = vunpack.c.h.b16 %v3658
  %v4038 = vunpack.c.l.b16 %v3659
  %v4039 = vunpack.c.h.b16 %v3659
  %v4040 = vunpack.c.l.b16 %v3660
  %v4041 = vunpack.c.h.b16 %v3660
  %v4042 = vunpack.c.l.b16 %v3661
  %v4043 = vunpack.c.h.b16 %v3661
  %v4044 = vunpack.c.l.b16 %v3662
  %v4045 = vunpack.c.h.b16 %v3662
  %v4046 = vunpack.c.l.b16 %v3663
  %v4047 = vunpack.c.h.b16 %v3663
  %v4048 = vunpack.c.l.b16 %v3664
  %v4049 = vunpack.c.h.b16 %v3664
  %v4050 = vunpack.c.l.b16 %v3665
  %v4051 = vunpack.c.h.b16 %v3665
  %v4052 = vunpack.c.l.b16 %v3666
  %v4053 = vunpack.c.h.b16 %v3666
  %v4054 = vunpack.c.l.b16 %v3667
  %v4055 = vunpack.c.h.b16 %v3667
  %v4056 = vunpack.c.l.b16 %v3668
  %v4057 = vunpack.c.h.b16 %v3668
  %v4058 = vunpack.c.l.b16 %v3669
  %v4059 = vunpack.c.h.b16 %v3669
  %v4060 = vunpack.c.l.b16 %v3670
  %v4061 = vunpack.c.h.b16 %v3670
  %v4062 = vunpack.c.l.b16 %v3671
  %v4063 = vunpack.c.h.b16 %v3671
  %v4064 = vunpack.c.l.b16 %v3672
  %v4065 = vunpack.c.h.b16 %v3672
  %v4066 = vunpack.c.l.b16 %v3673
  %v4067 = vunpack.c.h.b16 %v3673
  %v4068 = vunpack.c.l.b16 %v3674
  %v4069 = vunpack.c.h.b16 %v3674
  %v4070 = vunpack.c.l.b16 %v3675
  %v4071 = vunpack.c.h.b16 %v3675
  %v4072 = vunpack.c.l.b16 %v3676
  %v4073 = vunpack.c.h.b16 %v3676
  %v4074 = vunpack.c.l.b16 %v3677
  %v4075 = vunpack.c.h.b16 %v3677
  %v4076 = vunpack.c.l.b16 %v3678
  %v4077 = vunpack.c.h.b16 %v3678
  %v4078 = vunpack.c.l.b16 %v3679
  %v4079 = vunpack.c.h.b16 %v3679
  %v4080 = vunpack.c.l.b16 %v3680
  %v4081 = vunpack.c.h.b16 %v3680
  %v4082 = vunpack.c.l.b16 %v3681
  %v4083 = vunpack.c.h.b16 %v3681
  %v4084 = vunpack.c.l.b16 %v3682
  %v4085 = vunpack.c.h.b16 %v3682
  %v4086 = vunpack.c.l.b16 %v3683
  %v4087 = vunpack.c.h.b16 %v3683
  %v4088 = vunpack.c.l.b16 %v3684
  %v4089 = vunpack.c.h.b16 %v3684
  %v4090 = vunpack.c.l.b16 %v3685
  %v4091 = vunpack.c.h.b16 %v3685
  %v4092 = vunpack.c.l.b16 %v3686
  %v4093 = vunpack.c.h.b16 %v3686
  %v4094 = vunpack.c.l.b16 %v3687
  %v4095 = vunpack.c.h.b16 %v3687
  %v4096 = vunpack.c.l.b16 %v3688
  %v4097 = vunpack.c.h.b16 %v3688
  %v4098 = vunpack.c.l.b16 %v3689
  %v4099 = vunpack.c.h.b16 %v3689
  %v4100 = vunpack.c.l.b16 %v3690
  %v4101 = vunpack.c.h.b16 %v3690
  %v4102 = vunpack.c.l.b16 %v3691
  %v4103 = vunpack.c.h.b16 %v3691
  %v4104 = vunpack.c.l.b16 %v3692
  %v4105 = vunpack.c.h.b16 %v3692
  %v4106 = vunpack.c.l.b16 %v3693
  %v4107 = vunpack.c.h.b16 %v3693
  %v4108 = vunpack.c.l.b16 %v3694
  %v4109 = vunpack.c.h.b16 %v3694
  %v4110 = vunpack.c.l.b16 %v3695
  %v4111 = vunpack.c.h.b16 %v3695
  %v4112 = vunpack.c.l.b16 %v3696
  %v4113 = vunpack.c.h.b16 %v3696
  %v4114 = vunpack.c.l.b16 %v3697
  %v4115 = vunpack.c.h.b16 %v3697
  %v4116 = vunpack.c.l.b16 %v3698
  %v4117 = vunpack.c.h.b16 %v3698
  %v4118 = vunpack.c.l.b16 %v3699
  %v4119 = vunpack.c.h.b16 %v3699
  %v4120 = vunpack.c.l.b16 %v3700
  %v4121 = vunpack.c.h.b16 %v3700
  %v4122 = vunpack.c.l.b16 %v3701
  %v4123 = vunpack.c.h.b16 %v3701
  %v4124 = vunpack.c.l.b16 %v3702
  %v4125 = vunpack.c.h.b16 %v3702
  %v4126 = vunpack.c.l.b16 %v3703
  %v4127 = vunpack.c.h.b16 %v3703
  %v4128 = vunpack.c.l.b16 %v3704
  %v4129 = vunpack.c.h.b16 %v3704
  %v4130 = vunpack.c.l.b16 %v3705
  %v4131 = vunpack.c.h.b16 %v3705
  %v4132 = vunpack.c.l.b16 %v3706
  %v4133 = vunpack.c.h.b16 %v3706
  %v4134 = vunpack.c.l.b16 %v3707
  %v4135 = vunpack.c.h.b16 %v3707
  %v4136 = vunpack.c.l.b16 %v3708
  %v4137 = vunpack.c.h.b16 %v3708
  %v4138 = vunpack.c.l.b16 %v3709
  %v4139 = vunpack.c.h.b16 %v3709
  %v4140 = vunpack.c.l.b16 %v3710
  %v4141 = vunpack.c.h.b16 %v3710
  %v4142 = vunpack.c.l.b16 %v3711
  %v4143 = vunpack.c.h.b16 %v3711
  %v4144 = vunpack.c.l.b16 %v3712
  %v4145 = vunpack.c.h.b16 %v3712
  %v4146 = vunpack.c.l.b16 %v3713
  %v4147 = vunpack.c.h.b16 %v3713
  %v4148 = vunpack.c.l.b16 %v3714
  %v4149 = vunpack.c.h.b16 %v3714
  %v4150 = vunpack.c.l.b16 %v3715
  %v4151 = vunpack.c.h.b16 %v3715
  %v4152 = vunpack.c.l.b16 %v3716
  %v4153 = vunpack.c.h.b16 %v3716
  %v4154 = vunpack.c.l.b16 %v3717
  %v4155 = vunpack.c.h.b16 %v3717
  %v4156 = vunpack.c.l.b16 %v3718
  %v4157 = vunpack.c.h.b16 %v3718
  %v4158 = vunpack.c.l.b16 %v3719
  %v4159 = vunpack.c.h.b16 %v3719
  %v4160 = vunpack.c.l.b16 %v3720
  %v4161 = vunpack.c.h.b16 %v3720
  %v4162 = vunpack.c.l.b16 %v3721
  %v4163 = vunpack.c.h.b16 %v3721
  %v4164 = vunpack.c.l.b16 %v3722
  %v4165 = vunpack.c.h.b16 %v3722
  %v4166 = vunpack.c.l.b16 %v3723
  %v4167 = vunpack.c.h.b16 %v3723
  %v4168 = vunpack.c.l.b16 %v3724
  %v4169 = vunpack.c.h.b16 %v3724
  %v4170 = vunpack.c.l.b16 %v3725
  %v4171 = vunpack.c.h.b16 %v3725
  %v4172 = vunpack.c.l.b16 %v3726
  %v4173 = vunpack.c.h.b16 %v3726
  %v4174 = vunpack.c.l.b16 %v3727
  %v4175 = vunpack.c.h.b16 %v3727
  %v4176 = vunpack.c.l.b16 %v3728
  %v4177 = vunpack.c.h.b16 %v3728
  %v4178 = vunpack.c.l.b16 %v3729
  %v4179 = vunpack.c.h.b16 %v3729
  %v4180 = vunpack.c.l.b16 %v3730
  %v4181 = vunpack.c.h.b16 %v3730
  %v4182 = vunpack.c.l.b16 %v3731
  %v4183 = vunpack.c.h.b16 %v3731
  %v4184 = vpack.c.b16 %v3932, %v3928
  %v4185 = vpack.c.b16 %v3933, %v3929
  %v4186 = vpack.c.b16 %v3934, %v3930
  %v4187 = vpack.c.b16 %v3935, %v3931
  %v4188 = vpack.c.b16 %v3940, %v3936
  %v4189 = vpack.c.b16 %v3941, %v3937
  %v4190 = vpack.c.b16 %v3942, %v3938
  %v4191 = vpack.c.b16 %v3943, %v3939
  %v4192 = vpack.c.b16 %v3948, %v3944
  %v4193 = vpack.c.b16 %v3949, %v3945
  %v4194 = vpack.c.b16 %v3950, %v3946
  %v4195 = vpack.c.b16 %v3951, %v3947
  %v4196 = vpack.c.b16 %v3956, %v3952
  %v4197 = vpack.c.b16 %v3957, %v3953
  %v4198 = vpack.c.b16 %v3958, %v3954
  %v4199 = vpack.c.b16 %v3959, %v3955
  %v4200 = vpack.c.b16 %v3964, %v3960
  %v4201 = vpack.c.b16 %v3965, %v3961
  %v4202 = vpack.c.b16 %v3966, %v3962
  %v4203 = vpack.c.b16 %v3967, %v3963
  %v4204 = vpack.c.b16 %v3972, %v3968
  %v4205 = vpack.c.b16 %v3973, %v3969
  %v4206 = vpack.c.b16 %v3974, %v3970
  %v4207 = vpack.c.b16 %v3975, %v3971
  %v4208 = vpack.c.b16 %v3980, %v3976
  %v4209 = vpack.c.b16 %v3981, %v3977
  %v4210 = vpack.c.b16 %v3982, %v3978
  %v4211 = vpack.c.b16 %v3983, %v3979
  %v4212 = vpack.c.b16 %v3988, %v3984
  %v4213 = vpack.c.b16 %v3989, %v3985
  %v4214 = vpack.c.b16 %v3990, %v3986
  %v4215 = vpack.c.b16 %v3991, %v3987
  %v4216 = vpack.c.b16 %v3996, %v3992
  %v4217 = vpack.c.b16 %v3997, %v3993
  %v4218 = vpack.c.b16 %v3998, %v3994
  %v4219 = vpack.c.b16 %v3999, %v3995
  %v4220 = vpack.c.b16 %v4004, %v4000
  %v4221 = vpack.c.b16 %v4005, %v4001
  %v4222 = vpack.c.b16 %v4006, %v4002
  %v4223 = vpack.c.b16 %v4007, %v4003
  %v4224 = vpack.c.b16 %v4012, %v4008
  %v4225 = vpack.c.b16 %v4013, %v4009
  %v4226 = vpack.c.b16 %v4014, %v4010
  %v4227 = vpack.c.b16 %v4015, %v4011
  %v4228 = vpack.c.b16 %v4020, %v4016
  %v4229 = vpack.c.b16 %v4021, %v4017
  %v4230 = vpack.c.b16 %v4022, %v4018
  %v4231 = vpack.c.b16 %v4023, %v4019
  %v4232 = vpack.c.b16 %v4028, %v4024
  %v4233 = vpack.c.b16 %v4029, %v4025
  %v4234 = vpack.c.b16 %v4030, %v4026
  %v4235 = vpack.c.b16 %v4031, %v4027
  %v4236 = vpack.c.b16 %v4036, %v4032
  %v4237 = vpack.c.b16 %v4037, %v4033
  %v4238 = vpack.c.b16 %v4038, %v4034
  %v4239 = vpack.c.b16 %v4039, %v4035
  %v4240 = vpack.c.b16 %v4044, %v4040
  %v4241 = vpack.c.b16 %v4045, %v4041
  %v4242 = vpack.c.b16 %v4046, %v4042
  %v4243 = vpack.c.b16 %v4047, %v4043
  %v4244 = vpack.c.b16 %v4052, %v4048
  %v4245 = vpack.c.b16 %v4053, %v4049
  %v4246 = vpack.c.b16 %v4054, %v4050
  %v4247 = vpack.c.b16 %v4055, %v4051
  %v4248 = vpack.c.b16 %v4060, %v4056
  %v4249 = vpack.c.b16 %v4061, %v4057
  %v4250 = vpack.c.b16 %v4062, %v4058
  %v4251 = vpack.c.b16 %v4063, %v4059
  %v4252 = vpack.c.b16 %v4068, %v4064
  %v4253 = vpack.c.b16 %v4069, %v4065
  %v4254 = vpack.c.b16 %v4070, %v4066
  %v4255 = vpack.c.b16 %v4071, %v4067
  %v4256 = vpack.c.b16 %v4076, %v4072
  %v4257 = vpack.c.b16 %v4077, %v4073
  %v4258 = vpack.c.b16 %v4078, %v4074
  %v4259 = vpack.c.b16 %v4079, %v4075
  %v4260 = vpack.c.b16 %v4084, %v4080
  %v4261 = vpack.c.b16 %v4085, %v4081
  %v4262 = vpack.c.b16 %v4086, %v4082
  %v4263 = vpack.c.b16 %v4087, %v4083
  %v4264 = vpack.c.b16 %v4092, %v4088
  %v4265 = vpack.c.b16 %v4093, %v4089
  %v4266 = vpack.c.b16 %v4094, %v4090
  %v4267 = vpack.c.b16 %v4095, %v4091
  %v4268 = vpack.c.b16 %v4100, %v4096
  %v4269 = vpack.c.b16 %v4101, %v4097
  %v4270 = vpack.c.b16 %v4102, %v4098
  %v4271 = vpack.c.b16 %v4103, %v4099
  %v4272 = vpack.c.b16 %v4108, %v4104
  %v4273 = vpack.c.b16 %v4109, %v4105
  %v4274 = vpack.c.b16 %v4110, %v4106
  %v4275 = vpack.c.b16 %v4111, %v4107
  %v4276 = vpack.c.b16 %v4116, %v4112
  %v4277 = vpack.c.b16 %v4117, %v4113
  %v4278 = vpack.c.b16 %v4118, %v4114
  %v4279 = vpack.c.b16 %v4119, %v4115
  %v4280 = vpack.c.b16 %v4124, %v4120
  %v4281 = vpack.c.b16 %v4125, %v4121
  %v4282 = vpack.c.b16 %v4126, %v4122
  %v4283 = vpack.c.b16 %v4127, %v4123
  %v4284 = vpack.c.b16 %v4132, %v4128
  %v4285 = vpack.c.b16 %v4133, %v4129
  %v4286 = vpack.c.b16 %v4134, %v4130
  %v4287 = vpack.c.b16 %v4135, %v4131
  %v4288 = vpack.c.b16 %v4140, %v4136
  %v4289 = vpack.c.b16 %v4141, %v4137
  %v4290 = vpack.c.b16 %v4142, %v4138
  %v4291 = vpack.c.b16 %v4143, %v4139
  %v4292 = vpack.c.b16 %v4148, %v4144
  %v4293 = vpack.c.b16 %v4149, %v4145
  %v4294 = vpack.c.b16 %v4150, %v4146
  %v4295 = vpack.c.b16 %v4151, %v4147
  %v4296 = vpack.c.b16 %v4156, %v4152
  %v4297 = vpack.c.b16 %v4157, %v4153
  %v4298 = vpack.c.b16 %v4158, %v4154
  %v4299 = vpack.c.b16 %v4159, %v4155
  %v4300 = vpack.c.b16 %v4164, %v4160
  %v4301 = vpack.c.b16 %v4165, %v4161
  %v4302 = vpack.c.b16 %v4166, %v4162
  %v4303 = vpack.c.b16 %v4167, %v4163
  %v4304 = vpack.c.b16 %v4172, %v4168
  %v4305 = vpack.c.b16 %v4173, %v4169
  %v4306 = vpack.c.b16 %v4174, %v4170
  %v4307 = vpack.c.b16 %v4175, %v4171
  %v4308 = vpack.c.b16 %v4180, %v4176
  %v4309 = vpack.c.b16 %v4181, %v4177
  %v4310 = vpack.c.b16 %v4182, %v4178
  %v4311 = vpack.c.b16 %v4183, %v4179
  %v4504 = vunpack.c.l.b16 %v3732
  %v4505 = vunpack.c.l.b16 %v3733
  %v4506 = vunpack.c.l.b16 %v3734
  %v4507 = vunpack.c.l.b16 %v3735
  %v4508 = vunpack.c.l.b16 %v3736
  %v4509 = vunpack.c.l.b16 %v3737
  %v4510 = vunpack.c.l.b16 %v3738
  %v4511 = vunpack.c.l.b16 %v3739
  %v4512 = vunpack.c.l.b16 %v3740
  %v4513 = vunpack.c.l.b16 %v3741
  %v4514 = vunpack.c.l.b16 %v3742
  %v4515 = vunpack.c.l.b16 %v3743
  %v4516 = vunpack.c.l.b16 %v3744
  %v4517 = vunpack.c.l.b16 %v3745
  %v4518 = vunpack.c.l.b16 %v3746
  %v4519 = vunpack.c.l.b16 %v3747
  %v4520 = vunpack.c.l.b16 %v3748
  %v4521 = vunpack.c.l.b16 %v3749
  %v4522 = vunpack.c.l.b16 %v3750
  %v4523 = vunpack.c.l.b16 %v3751
  %v4524 = vunpack.c.l.b16 %v3752
  %v4525 = vunpack.c.l.b16 %v3753
  %v4526 = vunpack.c.l.b16 %v3754
  %v4527 = vunpack.c.l.b16 %v3755
  %v4528 = vunpack.c.l.b16 %v3756
  %v4529 = vunpack.c.l.b16 %v3757
  %v4530 = vunpack.c.l.b16 %v3758
  %v4531 = vunpack.c.l.b16 %v3759
  %v4532 = vunpack.c.l.b16 %v3760
  %v4533 = vunpack.c.l.b16 %v3761
  %v4534 = vunpack.c.l.b16 %v3762
  %v4535 = vunpack.c.l.b16 %v3763
  %v4536 = vunpack.c.l.b16 %v3764
  %v4537 = vunpack.c.l.b16 %v3765
  %v4538 = vunpack.c.l.b16 %v3766
  %v4539 = vunpack.c.l.b16 %v3767
  %v4540 = vunpack.c.l.b16 %v3768
  %v4541 = vunpack.c.l.b16 %v3769
  %v4542 = vunpack.c.l.b16 %v3770
  %v4543 = vunpack.c.l.b16 %v3771
  %v4544 = vunpack.c.l.b16 %v3772
  %v4545 = vunpack.c.l.b16 %v3773
  %v4546 = vunpack.c.l.b16 %v3774
  %v4547 = vunpack.c.l.b16 %v3775
  %v4548 = vunpack.c.l.b16 %v3776
  %v4549 = vunpack.c.l.b16 %v3777
  %v4550 = vunpack.c.l.b16 %v3778
  %v4551 = vunpack.c.l.b16 %v3779
  %v4552 = vunpack.c.l.b16 %v3780
  %v4553 = vunpack.c.l.b16 %v3781
  %v4554 = vunpack.c.l.b16 %v3782
  %v4555 = vunpack.c.l.b16 %v3783
  %v4556 = vunpack.c.l.b16 %v3784
  %v4557 = vunpack.c.l.b16 %v3785
  %v4558 = vunpack.c.l.b16 %v3786
  %v4559 = vunpack.c.l.b16 %v3787
  %v4560 = vunpack.c.l.b16 %v3788
  %v4561 = vunpack.c.l.b16 %v3789
  %v4562 = vunpack.c.l.b16 %v3790
  %v4563 = vunpack.c.l.b16 %v3791
  %v4564 = vunpack.c.l.b16 %v3792
  %v4565 = vunpack.c.l.b16 %v3793
  %v4566 = vunpack.c.l.b16 %v3794
  %v4567 = vunpack.c.l.b16 %v3795
  %v4568 = vpack.c.b16 %v4505, %v4504
  %v4569 = vpack.c.b16 %v4507, %v4506
  %v4570 = vpack.c.b16 %v4509, %v4508
  %v4571 = vpack.c.b16 %v4511, %v4510
  %v4572 = vpack.c.b16 %v4513, %v4512
  %v4573 = vpack.c.b16 %v4515, %v4514
  %v4574 = vpack.c.b16 %v4517, %v4516
  %v4575 = vpack.c.b16 %v4519, %v4518
  %v4576 = vpack.c.b16 %v4521, %v4520
  %v4577 = vpack.c.b16 %v4523, %v4522
  %v4578 = vpack.c.b16 %v4525, %v4524
  %v4579 = vpack.c.b16 %v4527, %v4526
  %v4580 = vpack.c.b16 %v4529, %v4528
  %v4581 = vpack.c.b16 %v4531, %v4530
  %v4582 = vpack.c.b16 %v4533, %v4532
  %v4583 = vpack.c.b16 %v4535, %v4534
  %v4584 = vpack.c.b16 %v4537, %v4536
  %v4585 = vpack.c.b16 %v4539, %v4538
  %v4586 = vpack.c.b16 %v4541, %v4540
  %v4587 = vpack.c.b16 %v4543, %v4542
  %v4588 = vpack.c.b16 %v4545, %v4544
  %v4589 = vpack.c.b16 %v4547, %v4546
  %v4590 = vpack.c.b16 %v4549, %v4548
  %v4591 = vpack.c.b16 %v4551, %v4550
  %v4592 = vpack.c.b16 %v4553, %v4552
  %v4593 = vpack.c.b16 %v4555, %v4554
  %v4594 = vpack.c.b16 %v4557, %v4556
  %v4595 = vpack.c.b16 %v4559, %v4558
  %v4596 = vpack.c.b16 %v4561, %v4560
  %v4597 = vpack.c.b16 %v4563, %v4562
  %v4598 = vpack.c.b16 %v4565, %v4564
  %v4599 = vpack.c.b16 %v4567, %v4566
  %4632 = vmatpush.bf16.msra.mxu0 %v4575
  %4633 = vmatpush.bf16.msra.mxu0 %v4574
  %4634 = vmatpush.bf16.msra.mxu0 %v4573
  %4635 = vmatpush.bf16.msra.mxu0 %v4572
  %4636 = vmatpush.bf16.msra.mxu0 %v4571
  %4637 = vmatpush.bf16.msra.mxu0 %v4570
  %4638 = vmatpush.bf16.msra.mxu0 %v4569
  %4639 = vmatpush.bf16.msra.mxu0 %v4568
  %4640 = vmatmul.bf16.gmra.mxu0 %v4184
  %v4641 = vpop.f32.mrf.mxu0
  %v4642 = vadd.f32 %v3798, %v4641
  %v4643 = vpop.f32.mrf.mxu0
  %v4644 = vadd.f32 %v3798, %v4643
  %4645 = vmatmul.bf16.gmra.mxu0 %v4188
  %v4646 = vpop.f32.mrf.mxu0
  %v4647 = vadd.f32 %v3798, %v4646
  %v4648 = vpop.f32.mrf.mxu0
  %v4649 = vadd.f32 %v3798, %v4648
  %4650 = vmatmul.bf16.gmra.mxu0 %v4192
  %v4651 = vpop.f32.mrf.mxu0
  %v4652 = vadd.f32 %v3798, %v4651
  %v4653 = vpop.f32.mrf.mxu0
  %v4654 = vadd.f32 %v3798, %v4653
  %4655 = vmatmul.bf16.gmra.mxu0 %v4196
  %v4656 = vpop.f32.mrf.mxu0
  %v4657 = vadd.f32 %v3798, %v4656
  %v4658 = vpop.f32.mrf.mxu0
  %v4659 = vadd.f32 %v3798, %v4658
  %4660 = vmatmul.bf16.gmra.mxu0 %v4200
  %v4661 = vpop.f32.mrf.mxu0
  %v4662 = vadd.f32 %v3798, %v4661
  %v4663 = vpop.f32.mrf.mxu0
  %v4664 = vadd.f32 %v3798, %v4663
  %4665 = vmatmul.bf16.gmra.mxu0 %v4204
  %v4666 = vpop.f32.mrf.mxu0
  %v4667 = vadd.f32 %v3798, %v4666
  %v4668 = vpop.f32.mrf.mxu0
  %v4669 = vadd.f32 %v3798, %v4668
  %4670 = vmatmul.bf16.gmra.mxu0 %v4208
  %v4671 = vpop.f32.mrf.mxu0
  %v4672 = vadd.f32 %v3798, %v4671
  %v4673 = vpop.f32.mrf.mxu0
  %v4674 = vadd.f32 %v3798, %v4673
  %4675 = vmatmul.bf16.gmra.mxu0 %v4212
  %v4676 = vpop.f32.mrf.mxu0
  %v4677 = vadd.f32 %v3798, %v4676
  %v4678 = vpop.f32.mrf.mxu0
  %v4679 = vadd.f32 %v3798, %v4678
  %4680 = vmatmul.bf16.gmra.mxu0 %v4216
  %v4681 = vpop.f32.mrf.mxu0
  %v4682 = vadd.f32 %v3798, %v4681
  %v4683 = vpop.f32.mrf.mxu0
  %v4684 = vadd.f32 %v3798, %v4683
  %4685 = vmatmul.bf16.gmra.mxu0 %v4220
  %v4686 = vpop.f32.mrf.mxu0
  %v4687 = vadd.f32 %v3798, %v4686
  %v4688 = vpop.f32.mrf.mxu0
  %v4689 = vadd.f32 %v3798, %v4688
  %4690 = vmatmul.bf16.gmra.mxu0 %v4224
  %v4691 = vpop.f32.mrf.mxu0
  %v4692 = vadd.f32 %v3798, %v4691
  %v4693 = vpop.f32.mrf.mxu0
  %v4694 = vadd.f32 %v3798, %v4693
  %4695 = vmatmul.bf16.gmra.mxu0 %v4228
  %v4696 = vpop.f32.mrf.mxu0
  %v4697 = vadd.f32 %v3798, %v4696
  %v4698 = vpop.f32.mrf.mxu0
  %v4699 = vadd.f32 %v3798, %v4698
  %4700 = vmatmul.bf16.gmra.mxu0 %v4232
  %v4701 = vpop.f32.mrf.mxu0
  %v4702 = vadd.f32 %v3798, %v4701
  %v4703 = vpop.f32.mrf.mxu0
  %v4704 = vadd.f32 %v3798, %v4703
  %4705 = vmatmul.bf16.gmra.mxu0 %v4236
  %v4706 = vpop.f32.mrf.mxu0
  %v4707 = vadd.f32 %v3798, %v4706
  %v4708 = vpop.f32.mrf.mxu0
  %v4709 = vadd.f32 %v3798, %v4708
  %4710 = vmatmul.bf16.gmra.mxu0 %v4240
  %v4711 = vpop.f32.mrf.mxu0
  %v4712 = vadd.f32 %v3798, %v4711
  %v4713 = vpop.f32.mrf.mxu0
  %v4714 = vadd.f32 %v3798, %v4713
  %4715 = vmatmul.bf16.gmra.mxu0 %v4244
  %v4716 = vpop.f32.mrf.mxu0
  %v4717 = vadd.f32 %v3798, %v4716
  %v4718 = vpop.f32.mrf.mxu0
  %v4719 = vadd.f32 %v3798, %v4718
  %4720 = vmatmul.bf16.gmra.mxu0 %v4248
  %v4721 = vpop.f32.mrf.mxu0
  %v4722 = vadd.f32 %v3798, %v4721
  %v4723 = vpop.f32.mrf.mxu0
  %v4724 = vadd.f32 %v3798, %v4723
  %4725 = vmatmul.bf16.gmra.mxu0 %v4252
  %v4726 = vpop.f32.mrf.mxu0
  %v4727 = vadd.f32 %v3798, %v4726
  %v4728 = vpop.f32.mrf.mxu0
  %v4729 = vadd.f32 %v3798, %v4728
  %4730 = vmatmul.bf16.gmra.mxu0 %v4256
  %v4731 = vpop.f32.mrf.mxu0
  %v4732 = vadd.f32 %v3798, %v4731
  %v4733 = vpop.f32.mrf.mxu0
  %v4734 = vadd.f32 %v3798, %v4733
  %4735 = vmatmul.bf16.gmra.mxu0 %v4260
  %v4736 = vpop.f32.mrf.mxu0
  %v4737 = vadd.f32 %v3798, %v4736
  %v4738 = vpop.f32.mrf.mxu0
  %v4739 = vadd.f32 %v3798, %v4738
  %4740 = vmatmul.bf16.gmra.mxu0 %v4264
  %v4741 = vpop.f32.mrf.mxu0
  %v4742 = vadd.f32 %v3798, %v4741
  %v4743 = vpop.f32.mrf.mxu0
  %v4744 = vadd.f32 %v3798, %v4743
  %4745 = vmatmul.bf16.gmra.mxu0 %v4268
  %v4746 = vpop.f32.mrf.mxu0
  %v4747 = vadd.f32 %v3798, %v4746
  %v4748 = vpop.f32.mrf.mxu0
  %v4749 = vadd.f32 %v3798, %v4748
  %4750 = vmatmul.bf16.gmra.mxu0 %v4272
  %v4751 = vpop.f32.mrf.mxu0
  %v4752 = vadd.f32 %v3798, %v4751
  %v4753 = vpop.f32.mrf.mxu0
  %v4754 = vadd.f32 %v3798, %v4753
  %4755 = vmatmul.bf16.gmra.mxu0 %v4276
  %v4756 = vpop.f32.mrf.mxu0
  %v4757 = vadd.f32 %v3798, %v4756
  %v4758 = vpop.f32.mrf.mxu0
  %v4759 = vadd.f32 %v3798, %v4758
  %4760 = vmatmul.bf16.gmra.mxu0 %v4280
  %v4761 = vpop.f32.mrf.mxu0
  %v4762 = vadd.f32 %v3798, %v4761
  %v4763 = vpop.f32.mrf.mxu0
  %v4764 = vadd.f32 %v3798, %v4763
  %4765 = vmatmul.bf16.gmra.mxu0 %v4284
  %v4766 = vpop.f32.mrf.mxu0
  %v4767 = vadd.f32 %v3798, %v4766
  %v4768 = vpop.f32.mrf.mxu0
  %v4769 = vadd.f32 %v3798, %v4768
  %4770 = vmatmul.bf16.gmra.mxu0 %v4288
  %v4771 = vpop.f32.mrf.mxu0
  %v4772 = vadd.f32 %v3798, %v4771
  %v4773 = vpop.f32.mrf.mxu0
  %v4774 = vadd.f32 %v3798, %v4773
  %4775 = vmatmul.bf16.gmra.mxu0 %v4292
  %v4776 = vpop.f32.mrf.mxu0
  %v4777 = vadd.f32 %v3798, %v4776
  %v4778 = vpop.f32.mrf.mxu0
  %v4779 = vadd.f32 %v3798, %v4778
  %4780 = vmatmul.bf16.gmra.mxu0 %v4296
  %v4781 = vpop.f32.mrf.mxu0
  %v4782 = vadd.f32 %v3798, %v4781
  %v4783 = vpop.f32.mrf.mxu0
  %v4784 = vadd.f32 %v3798, %v4783
  %4785 = vmatmul.bf16.gmra.mxu0 %v4300
  %v4786 = vpop.f32.mrf.mxu0
  %v4787 = vadd.f32 %v3798, %v4786
  %v4788 = vpop.f32.mrf.mxu0
  %v4789 = vadd.f32 %v3798, %v4788
  %4790 = vmatmul.bf16.gmra.mxu0 %v4304
  %v4791 = vpop.f32.mrf.mxu0
  %v4792 = vadd.f32 %v3798, %v4791
  %v4793 = vpop.f32.mrf.mxu0
  %v4794 = vadd.f32 %v3798, %v4793
  %4795 = vmatmul.bf16.gmra.mxu0 %v4308
  %v4796 = vpop.f32.mrf.mxu0
  %v4797 = vadd.f32 %v3798, %v4796
  %v4798 = vpop.f32.mrf.mxu0
  %v4799 = vadd.f32 %v3798, %v4798
  %4800 = vdwg.mxu0
  %4801 = vmatpush.bf16.msra.mxu0 %v4583
  %4802 = vmatpush.bf16.msra.mxu0 %v4582
  %4803 = vmatpush.bf16.msra.mxu0 %v4581
  %4804 = vmatpush.bf16.msra.mxu0 %v4580
  %4805 = vmatpush.bf16.msra.mxu0 %v4579
  %4806 = vmatpush.bf16.msra.mxu0 %v4578
  %4807 = vmatpush.bf16.msra.mxu0 %v4577
  %4808 = vmatpush.bf16.msra.mxu0 %v4576
  %4809 = vmatmul.bf16.gmra.mxu0 %v4185
  %v4810 = vpop.f32.mrf.mxu0
  %v4811 = vadd.f32 %v4642, %v4810
  %v4812 = vpop.f32.mrf.mxu0
  %v4813 = vadd.f32 %v4644, %v4812
  %4814 = vmatmul.bf16.gmra.mxu0 %v4189
  %v4815 = vpop.f32.mrf.mxu0
  %v4816 = vadd.f32 %v4647, %v4815
  %v4817 = vpop.f32.mrf.mxu0
  %v4818 = vadd.f32 %v4649, %v4817
  %4819 = vmatmul.bf16.gmra.mxu0 %v4193
  %v4820 = vpop.f32.mrf.mxu0
  %v4821 = vadd.f32 %v4652, %v4820
  %v4822 = vpop.f32.mrf.mxu0
  %v4823 = vadd.f32 %v4654, %v4822
  %4824 = vmatmul.bf16.gmra.mxu0 %v4197
  %v4825 = vpop.f32.mrf.mxu0
  %v4826 = vadd.f32 %v4657, %v4825
  %v4827 = vpop.f32.mrf.mxu0
  %v4828 = vadd.f32 %v4659, %v4827
  %4829 = vmatmul.bf16.gmra.mxu0 %v4201
  %v4830 = vpop.f32.mrf.mxu0
  %v4831 = vadd.f32 %v4662, %v4830
  %v4832 = vpop.f32.mrf.mxu0
  %v4833 = vadd.f32 %v4664, %v4832
  %4834 = vmatmul.bf16.gmra.mxu0 %v4205
  %v4835 = vpop.f32.mrf.mxu0
  %v4836 = vadd.f32 %v4667, %v4835
  %v4837 = vpop.f32.mrf.mxu0
  %v4838 = vadd.f32 %v4669, %v4837
  %4839 = vmatmul.bf16.gmra.mxu0 %v4209
  %v4840 = vpop.f32.mrf.mxu0
  %v4841 = vadd.f32 %v4672, %v4840
  %v4842 = vpop.f32.mrf.mxu0
  %v4843 = vadd.f32 %v4674, %v4842
  %4844 = vmatmul.bf16.gmra.mxu0 %v4213
  %v4845 = vpop.f32.mrf.mxu0
  %v4846 = vadd.f32 %v4677, %v4845
  %v4847 = vpop.f32.mrf.mxu0
  %v4848 = vadd.f32 %v4679, %v4847
  %4849 = vmatmul.bf16.gmra.mxu0 %v4217
  %v4850 = vpop.f32.mrf.mxu0
  %v4851 = vadd.f32 %v4682, %v4850
  %v4852 = vpop.f32.mrf.mxu0
  %v4853 = vadd.f32 %v4684, %v4852
  %4854 = vmatmul.bf16.gmra.mxu0 %v4221
  %v4855 = vpop.f32.mrf.mxu0
  %v4856 = vadd.f32 %v4687, %v4855
  %v4857 = vpop.f32.mrf.mxu0
  %v4858 = vadd.f32 %v4689, %v4857
  %4859 = vmatmul.bf16.gmra.mxu0 %v4225
  %v4860 = vpop.f32.mrf.mxu0
  %v4861 = vadd.f32 %v4692, %v4860
  %v4862 = vpop.f32.mrf.mxu0
  %v4863 = vadd.f32 %v4694, %v4862
  %4864 = vmatmul.bf16.gmra.mxu0 %v4229
  %v4865 = vpop.f32.mrf.mxu0
  %v4866 = vadd.f32 %v4697, %v4865
  %v4867 = vpop.f32.mrf.mxu0
  %v4868 = vadd.f32 %v4699, %v4867
  %4869 = vmatmul.bf16.gmra.mxu0 %v4233
  %v4870 = vpop.f32.mrf.mxu0
  %v4871 = vadd.f32 %v4702, %v4870
  %v4872 = vpop.f32.mrf.mxu0
  %v4873 = vadd.f32 %v4704, %v4872
  %4874 = vmatmul.bf16.gmra.mxu0 %v4237
  %v4875 = vpop.f32.mrf.mxu0
  %v4876 = vadd.f32 %v4707, %v4875
  %v4877 = vpop.f32.mrf.mxu0
  %v4878 = vadd.f32 %v4709, %v4877
  %4879 = vmatmul.bf16.gmra.mxu0 %v4241
  %v4880 = vpop.f32.mrf.mxu0
  %v4881 = vadd.f32 %v4712, %v4880
  %v4882 = vpop.f32.mrf.mxu0
  %v4883 = vadd.f32 %v4714, %v4882
  %4884 = vmatmul.bf16.gmra.mxu0 %v4245
  %v4885 = vpop.f32.mrf.mxu0
  %v4886 = vadd.f32 %v4717, %v4885
  %v4887 = vpop.f32.mrf.mxu0
  %v4888 = vadd.f32 %v4719, %v4887
  %4889 = vmatmul.bf16.gmra.mxu0 %v4249
  %v4890 = vpop.f32.mrf.mxu0
  %v4891 = vadd.f32 %v4722, %v4890
  %v4892 = vpop.f32.mrf.mxu0
  %v4893 = vadd.f32 %v4724, %v4892
  %4894 = vmatmul.bf16.gmra.mxu0 %v4253
  %v4895 = vpop.f32.mrf.mxu0
  %v4896 = vadd.f32 %v4727, %v4895
  %v4897 = vpop.f32.mrf.mxu0
  %v4898 = vadd.f32 %v4729, %v4897
  %4899 = vmatmul.bf16.gmra.mxu0 %v4257
  %v4900 = vpop.f32.mrf.mxu0
  %v4901 = vadd.f32 %v4732, %v4900
  %v4902 = vpop.f32.mrf.mxu0
  %v4903 = vadd.f32 %v4734, %v4902
  %4904 = vmatmul.bf16.gmra.mxu0 %v4261
  %v4905 = vpop.f32.mrf.mxu0
  %v4906 = vadd.f32 %v4737, %v4905
  %v4907 = vpop.f32.mrf.mxu0
  %v4908 = vadd.f32 %v4739, %v4907
  %4909 = vmatmul.bf16.gmra.mxu0 %v4265
  %v4910 = vpop.f32.mrf.mxu0
  %v4911 = vadd.f32 %v4742, %v4910
  %v4912 = vpop.f32.mrf.mxu0
  %v4913 = vadd.f32 %v4744, %v4912
  %4914 = vmatmul.bf16.gmra.mxu0 %v4269
  %v4915 = vpop.f32.mrf.mxu0
  %v4916 = vadd.f32 %v4747, %v4915
  %v4917 = vpop.f32.mrf.mxu0
  %v4918 = vadd.f32 %v4749, %v4917
  %4919 = vmatmul.bf16.gmra.mxu0 %v4273
  %v4920 = vpop.f32.mrf.mxu0
  %v4921 = vadd.f32 %v4752, %v4920
  %v4922 = vpop.f32.mrf.mxu0
  %v4923 = vadd.f32 %v4754, %v4922
  %4924 = vmatmul.bf16.gmra.mxu0 %v4277
  %v4925 = vpop.f32.mrf.mxu0
  %v4926 = vadd.f32 %v4757, %v4925
  %v4927 = vpop.f32.mrf.mxu0
  %v4928 = vadd.f32 %v4759, %v4927
  %4929 = vmatmul.bf16.gmra.mxu0 %v4281
  %v4930 = vpop.f32.mrf.mxu0
  %v4931 = vadd.f32 %v4762, %v4930
  %v4932 = vpop.f32.mrf.mxu0
  %v4933 = vadd.f32 %v4764, %v4932
  %4934 = vmatmul.bf16.gmra.mxu0 %v4285
  %v4935 = vpop.f32.mrf.mxu0
  %v4936 = vadd.f32 %v4767, %v4935
  %v4937 = vpop.f32.mrf.mxu0
  %v4938 = vadd.f32 %v4769, %v4937
  %4939 = vmatmul.bf16.gmra.mxu0 %v4289
  %v4940 = vpop.f32.mrf.mxu0
  %v4941 = vadd.f32 %v4772, %v4940
  %v4942 = vpop.f32.mrf.mxu0
  %v4943 = vadd.f32 %v4774, %v4942
  %4944 = vmatmul.bf16.gmra.mxu0 %v4293
  %v4945 = vpop.f32.mrf.mxu0
  %v4946 = vadd.f32 %v4777, %v4945
  %v4947 = vpop.f32.mrf.mxu0
  %v4948 = vadd.f32 %v4779, %v4947
  %4949 = vmatmul.bf16.gmra.mxu0 %v4297
  %v4950 = vpop.f32.mrf.mxu0
  %v4951 = vadd.f32 %v4782, %v4950
  %v4952 = vpop.f32.mrf.mxu0
  %v4953 = vadd.f32 %v4784, %v4952
  %4954 = vmatmul.bf16.gmra.mxu0 %v4301
  %v4955 = vpop.f32.mrf.mxu0
  %v4956 = vadd.f32 %v4787, %v4955
  %v4957 = vpop.f32.mrf.mxu0
  %v4958 = vadd.f32 %v4789, %v4957
  %4959 = vmatmul.bf16.gmra.mxu0 %v4305
  %v4960 = vpop.f32.mrf.mxu0
  %v4961 = vadd.f32 %v4792, %v4960
  %v4962 = vpop.f32.mrf.mxu0
  %v4963 = vadd.f32 %v4794, %v4962
  %4964 = vmatmul.bf16.gmra.mxu0 %v4309
  %v4965 = vpop.f32.mrf.mxu0
  %v4966 = vadd.f32 %v4797, %v4965
  %v4967 = vpop.f32.mrf.mxu0
  %v4968 = vadd.f32 %v4799, %v4967
  %4969 = vdwg.mxu0
  %4970 = vmatpush.bf16.msra.mxu0 %v4591
  %4971 = vmatpush.bf16.msra.mxu0 %v4590
  %4972 = vmatpush.bf16.msra.mxu0 %v4589
  %4973 = vmatpush.bf16.msra.mxu0 %v4588
  %4974 = vmatpush.bf16.msra.mxu0 %v4587
  %4975 = vmatpush.bf16.msra.mxu0 %v4586
  %4976 = vmatpush.bf16.msra.mxu0 %v4585
  %4977 = vmatpush.bf16.msra.mxu0 %v4584
  %4978 = vmatmul.bf16.gmra.mxu0 %v4186
  %v4979 = vpop.f32.mrf.mxu0
  %v4980 = vadd.f32 %v4811, %v4979
  %v4981 = vpop.f32.mrf.mxu0
  %v4982 = vadd.f32 %v4813, %v4981
  %4983 = vmatmul.bf16.gmra.mxu0 %v4190
  %v4984 = vpop.f32.mrf.mxu0
  %v4985 = vadd.f32 %v4816, %v4984
  %v4986 = vpop.f32.mrf.mxu0
  %v4987 = vadd.f32 %v4818, %v4986
  %4988 = vmatmul.bf16.gmra.mxu0 %v4194
  %v4989 = vpop.f32.mrf.mxu0
  %v4990 = vadd.f32 %v4821, %v4989
  %v4991 = vpop.f32.mrf.mxu0
  %v4992 = vadd.f32 %v4823, %v4991
  %4993 = vmatmul.bf16.gmra.mxu0 %v4198
  %v4994 = vpop.f32.mrf.mxu0
  %v4995 = vadd.f32 %v4826, %v4994
  %v4996 = vpop.f32.mrf.mxu0
  %v4997 = vadd.f32 %v4828, %v4996
  %4998 = vmatmul.bf16.gmra.mxu0 %v4202
  %v4999 = vpop.f32.mrf.mxu0
  %v5000 = vadd.f32 %v4831, %v4999
  %v5001 = vpop.f32.mrf.mxu0
  %v5002 = vadd.f32 %v4833, %v5001
  %5003 = vmatmul.bf16.gmra.mxu0 %v4206
  %v5004 = vpop.f32.mrf.mxu0
  %v5005 = vadd.f32 %v4836, %v5004
  %v5006 = vpop.f32.mrf.mxu0
  %v5007 = vadd.f32 %v4838, %v5006
  %5008 = vmatmul.bf16.gmra.mxu0 %v4210
  %v5009 = vpop.f32.mrf.mxu0
  %v5010 = vadd.f32 %v4841, %v5009
  %v5011 = vpop.f32.mrf.mxu0
  %v5012 = vadd.f32 %v4843, %v5011
  %5013 = vmatmul.bf16.gmra.mxu0 %v4214
  %v5014 = vpop.f32.mrf.mxu0
  %v5015 = vadd.f32 %v4846, %v5014
  %v5016 = vpop.f32.mrf.mxu0
  %v5017 = vadd.f32 %v4848, %v5016
  %5018 = vmatmul.bf16.gmra.mxu0 %v4218
  %v5019 = vpop.f32.mrf.mxu0
  %v5020 = vadd.f32 %v4851, %v5019
  %v5021 = vpop.f32.mrf.mxu0
  %v5022 = vadd.f32 %v4853, %v5021
  %5023 = vmatmul.bf16.gmra.mxu0 %v4222
  %v5024 = vpop.f32.mrf.mxu0
  %v5025 = vadd.f32 %v4856, %v5024
  %v5026 = vpop.f32.mrf.mxu0
  %v5027 = vadd.f32 %v4858, %v5026
  %5028 = vmatmul.bf16.gmra.mxu0 %v4226
  %v5029 = vpop.f32.mrf.mxu0
  %v5030 = vadd.f32 %v4861, %v5029
  %v5031 = vpop.f32.mrf.mxu0
  %v5032 = vadd.f32 %v4863, %v5031
  %5033 = vmatmul.bf16.gmra.mxu0 %v4230
  %v5034 = vpop.f32.mrf.mxu0
  %v5035 = vadd.f32 %v4866, %v5034
  %v5036 = vpop.f32.mrf.mxu0
  %v5037 = vadd.f32 %v4868, %v5036
  %5038 = vmatmul.bf16.gmra.mxu0 %v4234
  %v5039 = vpop.f32.mrf.mxu0
  %v5040 = vadd.f32 %v4871, %v5039
  %v5041 = vpop.f32.mrf.mxu0
  %v5042 = vadd.f32 %v4873, %v5041
  %5043 = vmatmul.bf16.gmra.mxu0 %v4238
  %v5044 = vpop.f32.mrf.mxu0
  %v5045 = vadd.f32 %v4876, %v5044
  %v5046 = vpop.f32.mrf.mxu0
  %v5047 = vadd.f32 %v4878, %v5046
  %5048 = vmatmul.bf16.gmra.mxu0 %v4242
  %v5049 = vpop.f32.mrf.mxu0
  %v5050 = vadd.f32 %v4881, %v5049
  %v5051 = vpop.f32.mrf.mxu0
  %v5052 = vadd.f32 %v4883, %v5051
  %5053 = vmatmul.bf16.gmra.mxu0 %v4246
  %v5054 = vpop.f32.mrf.mxu0
  %v5055 = vadd.f32 %v4886, %v5054
  %v5056 = vpop.f32.mrf.mxu0
  %v5057 = vadd.f32 %v4888, %v5056
  %5058 = vmatmul.bf16.gmra.mxu0 %v4250
  %v5059 = vpop.f32.mrf.mxu0
  %v5060 = vadd.f32 %v4891, %v5059
  %v5061 = vpop.f32.mrf.mxu0
  %v5062 = vadd.f32 %v4893, %v5061
  %5063 = vmatmul.bf16.gmra.mxu0 %v4254
  %v5064 = vpop.f32.mrf.mxu0
  %v5065 = vadd.f32 %v4896, %v5064
  %v5066 = vpop.f32.mrf.mxu0
  %v5067 = vadd.f32 %v4898, %v5066
  %5068 = vmatmul.bf16.gmra.mxu0 %v4258
  %v5069 = vpop.f32.mrf.mxu0
  %v5070 = vadd.f32 %v4901, %v5069
  %v5071 = vpop.f32.mrf.mxu0
  %v5072 = vadd.f32 %v4903, %v5071
  %5073 = vmatmul.bf16.gmra.mxu0 %v4262
  %v5074 = vpop.f32.mrf.mxu0
  %v5075 = vadd.f32 %v4906, %v5074
  %v5076 = vpop.f32.mrf.mxu0
  %v5077 = vadd.f32 %v4908, %v5076
  %5078 = vmatmul.bf16.gmra.mxu0 %v4266
  %v5079 = vpop.f32.mrf.mxu0
  %v5080 = vadd.f32 %v4911, %v5079
  %v5081 = vpop.f32.mrf.mxu0
  %v5082 = vadd.f32 %v4913, %v5081
  %5083 = vmatmul.bf16.gmra.mxu0 %v4270
  %v5084 = vpop.f32.mrf.mxu0
  %v5085 = vadd.f32 %v4916, %v5084
  %v5086 = vpop.f32.mrf.mxu0
  %v5087 = vadd.f32 %v4918, %v5086
  %5088 = vmatmul.bf16.gmra.mxu0 %v4274
  %v5089 = vpop.f32.mrf.mxu0
  %v5090 = vadd.f32 %v4921, %v5089
  %v5091 = vpop.f32.mrf.mxu0
  %v5092 = vadd.f32 %v4923, %v5091
  %5093 = vmatmul.bf16.gmra.mxu0 %v4278
  %v5094 = vpop.f32.mrf.mxu0
  %v5095 = vadd.f32 %v4926, %v5094
  %v5096 = vpop.f32.mrf.mxu0
  %v5097 = vadd.f32 %v4928, %v5096
  %5098 = vmatmul.bf16.gmra.mxu0 %v4282
  %v5099 = vpop.f32.mrf.mxu0
  %v5100 = vadd.f32 %v4931, %v5099
  %v5101 = vpop.f32.mrf.mxu0
  %v5102 = vadd.f32 %v4933, %v5101
  %5103 = vmatmul.bf16.gmra.mxu0 %v4286
  %v5104 = vpop.f32.mrf.mxu0
  %v5105 = vadd.f32 %v4936, %v5104
  %v5106 = vpop.f32.mrf.mxu0
  %v5107 = vadd.f32 %v4938, %v5106
  %5108 = vmatmul.bf16.gmra.mxu0 %v4290
  %v5109 = vpop.f32.mrf.mxu0
  %v5110 = vadd.f32 %v4941, %v5109
  %v5111 = vpop.f32.mrf.mxu0
  %v5112 = vadd.f32 %v4943, %v5111
  %5113 = vmatmul.bf16.gmra.mxu0 %v4294
  %v5114 = vpop.f32.mrf.mxu0
  %v5115 = vadd.f32 %v4946, %v5114
  %v5116 = vpop.f32.mrf.mxu0
  %v5117 = vadd.f32 %v4948, %v5116
  %5118 = vmatmul.bf16.gmra.mxu0 %v4298
  %v5119 = vpop.f32.mrf.mxu0
  %v5120 = vadd.f32 %v4951, %v5119
  %v5121 = vpop.f32.mrf.mxu0
  %v5122 = vadd.f32 %v4953, %v5121
  %5123 = vmatmul.bf16.gmra.mxu0 %v4302
  %v5124 = vpop.f32.mrf.mxu0
  %v5125 = vadd.f32 %v4956, %v5124
  %v5126 = vpop.f32.mrf.mxu0
  %v5127 = vadd.f32 %v4958, %v5126
  %5128 = vmatmul.bf16.gmra.mxu0 %v4306
  %v5129 = vpop.f32.mrf.mxu0
  %v5130 = vadd.f32 %v4961, %v5129
  %v5131 = vpop.f32.mrf.mxu0
  %v5132 = vadd.f32 %v4963, %v5131
  %5133 = vmatmul.bf16.gmra.mxu0 %v4310
  %v5134 = vpop.f32.mrf.mxu0
  %v5135 = vadd.f32 %v4966, %v5134
  %v5136 = vpop.f32.mrf.mxu0
  %v5137 = vadd.f32 %v4968, %v5136
  %5138 = vdwg.mxu0
  %5139 = vmatpush.bf16.msra.mxu0 %v4599
  %5140 = vmatpush.bf16.msra.mxu0 %v4598
  %5141 = vmatpush.bf16.msra.mxu0 %v4597
  %5142 = vmatpush.bf16.msra.mxu0 %v4596
  %5143 = vmatpush.bf16.msra.mxu0 %v4595
  %5144 = vmatpush.bf16.msra.mxu0 %v4594
  %5145 = vmatpush.bf16.msra.mxu0 %v4593
  %5146 = vmatpush.bf16.msra.mxu0 %v4592
  %5147 = vmatmul.bf16.gmra.mxu0 %v4187
  %v5148 = vpop.f32.mrf.mxu0
  %v5149 = vadd.f32 %v4980, %v5148
  %v5150 = vpop.f32.mrf.mxu0
  %v5151 = vadd.f32 %v4982, %v5150
  %5152 = vmatmul.bf16.gmra.mxu0 %v4191
  %v5153 = vpop.f32.mrf.mxu0
  %v5154 = vadd.f32 %v4985, %v5153
  %v5155 = vpop.f32.mrf.mxu0
  %v5156 = vadd.f32 %v4987, %v5155
  %5157 = vmatmul.bf16.gmra.mxu0 %v4195
  %v5158 = vpop.f32.mrf.mxu0
  %v5159 = vadd.f32 %v4990, %v5158
  %v5160 = vpop.f32.mrf.mxu0
  %v5161 = vadd.f32 %v4992, %v5160
  %5162 = vmatmul.bf16.gmra.mxu0 %v4199
  %v5163 = vpop.f32.mrf.mxu0
  %v5164 = vadd.f32 %v4995, %v5163
  %v5165 = vpop.f32.mrf.mxu0
  %v5166 = vadd.f32 %v4997, %v5165
  %5167 = vmatmul.bf16.gmra.mxu0 %v4203
  %v5168 = vpop.f32.mrf.mxu0
  %v5169 = vadd.f32 %v5000, %v5168
  %v5170 = vpop.f32.mrf.mxu0
  %v5171 = vadd.f32 %v5002, %v5170
  %5172 = vmatmul.bf16.gmra.mxu0 %v4207
  %v5173 = vpop.f32.mrf.mxu0
  %v5174 = vadd.f32 %v5005, %v5173
  %v5175 = vpop.f32.mrf.mxu0
  %v5176 = vadd.f32 %v5007, %v5175
  %5177 = vmatmul.bf16.gmra.mxu0 %v4211
  %v5178 = vpop.f32.mrf.mxu0
  %v5179 = vadd.f32 %v5010, %v5178
  %v5180 = vpop.f32.mrf.mxu0
  %v5181 = vadd.f32 %v5012, %v5180
  %5182 = vmatmul.bf16.gmra.mxu0 %v4215
  %v5183 = vpop.f32.mrf.mxu0
  %v5184 = vadd.f32 %v5015, %v5183
  %v5185 = vpop.f32.mrf.mxu0
  %v5186 = vadd.f32 %v5017, %v5185
  %5187 = vmatmul.bf16.gmra.mxu0 %v4219
  %v5188 = vpop.f32.mrf.mxu0
  %v5189 = vadd.f32 %v5020, %v5188
  %v5190 = vpop.f32.mrf.mxu0
  %v5191 = vadd.f32 %v5022, %v5190
  %5192 = vmatmul.bf16.gmra.mxu0 %v4223
  %v5193 = vpop.f32.mrf.mxu0
  %v5194 = vadd.f32 %v5025, %v5193
  %v5195 = vpop.f32.mrf.mxu0
  %v5196 = vadd.f32 %v5027, %v5195
  %5197 = vmatmul.bf16.gmra.mxu0 %v4227
  %v5198 = vpop.f32.mrf.mxu0
  %v5199 = vadd.f32 %v5030, %v5198
  %v5200 = vpop.f32.mrf.mxu0
  %v5201 = vadd.f32 %v5032, %v5200
  %5202 = vmatmul.bf16.gmra.mxu0 %v4231
  %v5203 = vpop.f32.mrf.mxu0
  %v5204 = vadd.f32 %v5035, %v5203
  %v5205 = vpop.f32.mrf.mxu0
  %v5206 = vadd.f32 %v5037, %v5205
  %5207 = vmatmul.bf16.gmra.mxu0 %v4235
  %v5208 = vpop.f32.mrf.mxu0
  %v5209 = vadd.f32 %v5040, %v5208
  %v5210 = vpop.f32.mrf.mxu0
  %v5211 = vadd.f32 %v5042, %v5210
  %5212 = vmatmul.bf16.gmra.mxu0 %v4239
  %v5213 = vpop.f32.mrf.mxu0
  %v5214 = vadd.f32 %v5045, %v5213
  %v5215 = vpop.f32.mrf.mxu0
  %v5216 = vadd.f32 %v5047, %v5215
  %5217 = vmatmul.bf16.gmra.mxu0 %v4243
  %v5218 = vpop.f32.mrf.mxu0
  %v5219 = vadd.f32 %v5050, %v5218
  %v5220 = vpop.f32.mrf.mxu0
  %v5221 = vadd.f32 %v5052, %v5220
  %5222 = vmatmul.bf16.gmra.mxu0 %v4247
  %v5223 = vpop.f32.mrf.mxu0
  %v5224 = vadd.f32 %v5055, %v5223
  %v5225 = vpop.f32.mrf.mxu0
  %v5226 = vadd.f32 %v5057, %v5225
  %5227 = vmatmul.bf16.gmra.mxu0 %v4251
  %v5228 = vpop.f32.mrf.mxu0
  %v5229 = vadd.f32 %v5060, %v5228
  %v5230 = vpop.f32.mrf.mxu0
  %v5231 = vadd.f32 %v5062, %v5230
  %5232 = vmatmul.bf16.gmra.mxu0 %v4255
  %v5233 = vpop.f32.mrf.mxu0
  %v5234 = vadd.f32 %v5065, %v5233
  %v5235 = vpop.f32.mrf.mxu0
  %v5236 = vadd.f32 %v5067, %v5235
  %5237 = vmatmul.bf16.gmra.mxu0 %v4259
  %v5238 = vpop.f32.mrf.mxu0
  %v5239 = vadd.f32 %v5070, %v5238
  %v5240 = vpop.f32.mrf.mxu0
  %v5241 = vadd.f32 %v5072, %v5240
  %5242 = vmatmul.bf16.gmra.mxu0 %v4263
  %v5243 = vpop.f32.mrf.mxu0
  %v5244 = vadd.f32 %v5075, %v5243
  %v5245 = vpop.f32.mrf.mxu0
  %v5246 = vadd.f32 %v5077, %v5245
  %5247 = vmatmul.bf16.gmra.mxu0 %v4267
  %v5248 = vpop.f32.mrf.mxu0
  %v5249 = vadd.f32 %v5080, %v5248
  %v5250 = vpop.f32.mrf.mxu0
  %v5251 = vadd.f32 %v5082, %v5250
  %5252 = vmatmul.bf16.gmra.mxu0 %v4271
  %v5253 = vpop.f32.mrf.mxu0
  %v5254 = vadd.f32 %v5085, %v5253
  %v5255 = vpop.f32.mrf.mxu0
  %v5256 = vadd.f32 %v5087, %v5255
  %5257 = vmatmul.bf16.gmra.mxu0 %v4275
  %v5258 = vpop.f32.mrf.mxu0
  %v5259 = vadd.f32 %v5090, %v5258
  %v5260 = vpop.f32.mrf.mxu0
  %v5261 = vadd.f32 %v5092, %v5260
  %5262 = vmatmul.bf16.gmra.mxu0 %v4279
  %v5263 = vpop.f32.mrf.mxu0
  %v5264 = vadd.f32 %v5095, %v5263
  %v5265 = vpop.f32.mrf.mxu0
  %v5266 = vadd.f32 %v5097, %v5265
  %5267 = vmatmul.bf16.gmra.mxu0 %v4283
  %v5268 = vpop.f32.mrf.mxu0
  %v5269 = vadd.f32 %v5100, %v5268
  %v5270 = vpop.f32.mrf.mxu0
  %v5271 = vadd.f32 %v5102, %v5270
  %5272 = vmatmul.bf16.gmra.mxu0 %v4287
  %v5273 = vpop.f32.mrf.mxu0
  %v5274 = vadd.f32 %v5105, %v5273
  %v5275 = vpop.f32.mrf.mxu0
  %v5276 = vadd.f32 %v5107, %v5275
  %5277 = vmatmul.bf16.gmra.mxu0 %v4291
  %v5278 = vpop.f32.mrf.mxu0
  %v5279 = vadd.f32 %v5110, %v5278
  %v5280 = vpop.f32.mrf.mxu0
  %v5281 = vadd.f32 %v5112, %v5280
  %5282 = vmatmul.bf16.gmra.mxu0 %v4295
  %v5283 = vpop.f32.mrf.mxu0
  %v5284 = vadd.f32 %v5115, %v5283
  %v5285 = vpop.f32.mrf.mxu0
  %v5286 = vadd.f32 %v5117, %v5285
  %5287 = vmatmul.bf16.gmra.mxu0 %v4299
  %v5288 = vpop.f32.mrf.mxu0
  %v5289 = vadd.f32 %v5120, %v5288
  %v5290 = vpop.f32.mrf.mxu0
  %v5291 = vadd.f32 %v5122, %v5290
  %5292 = vmatmul.bf16.gmra.mxu0 %v4303
  %v5293 = vpop.f32.mrf.mxu0
  %v5294 = vadd.f32 %v5125, %v5293
  %v5295 = vpop.f32.mrf.mxu0
  %v5296 = vadd.f32 %v5127, %v5295
  %5297 = vmatmul.bf16.gmra.mxu0 %v4307
  %v5298 = vpop.f32.mrf.mxu0
  %v5299 = vadd.f32 %v5130, %v5298
  %v5300 = vpop.f32.mrf.mxu0
  %v5301 = vadd.f32 %v5132, %v5300
  %5302 = vmatmul.bf16.gmra.mxu0 %v4311
  %v5303 = vpop.f32.mrf.mxu0
  %v5304 = vadd.f32 %v5135, %v5303
  %v5305 = vpop.f32.mrf.mxu0
  %v5306 = vadd.f32 %v5137, %v5305
  %5307 = vdwg.mxu0
  %v5308 = vmax.f32 %v5149, 0.0
  %v5309 = vmax.f32 %v5151, 0.0
  %v5310 = vmax.f32 %v5154, 0.0
  %v5311 = vmax.f32 %v5156, 0.0
  %v5312 = vmax.f32 %v5159, 0.0
  %v5313 = vmax.f32 %v5161, 0.0
  %v5314 = vmax.f32 %v5164, 0.0
  %v5315 = vmax.f32 %v5166, 0.0
  %v5316 = vmax.f32 %v5169, 0.0
  %v5317 = vmax.f32 %v5171, 0.0
  %v5318 = vmax.f32 %v5174, 0.0
  %v5319 = vmax.f32 %v5176, 0.0
  %v5320 = vmax.f32 %v5179, 0.0
  %v5321 = vmax.f32 %v5181, 0.0
  %v5322 = vmax.f32 %v5184, 0.0
  %v5323 = vmax.f32 %v5186, 0.0
  %v5324 = vmax.f32 %v5189, 0.0
  %v5325 = vmax.f32 %v5191, 0.0
  %v5326 = vmax.f32 %v5194, 0.0
  %v5327 = vmax.f32 %v5196, 0.0
  %v5328 = vmax.f32 %v5199, 0.0
  %v5329 = vmax.f32 %v5201, 0.0
  %v5330 = vmax.f32 %v5204, 0.0
  %v5331 = vmax.f32 %v5206, 0.0
  %v5332 = vmax.f32 %v5209, 0.0
  %v5333 = vmax.f32 %v5211, 0.0
  %v5334 = vmax.f32 %v5214, 0.0
  %v5335 = vmax.f32 %v5216, 0.0
  %v5336 = vmax.f32 %v5219, 0.0
  %v5337 = vmax.f32 %v5221, 0.0
  %v5338 = vmax.f32 %v5224, 0.0
  %v5339 = vmax.f32 %v5226, 0.0
  %v5340 = vmax.f32 %v5229, 0.0
  %v5341 = vmax.f32 %v5231, 0.0
  %v5342 = vmax.f32 %v5234, 0.0
  %v5343 = vmax.f32 %v5236, 0.0
  %v5344 = vmax.f32 %v5239, 0.0
  %v5345 = vmax.f32 %v5241, 0.0
  %v5346 = vmax.f32 %v5244, 0.0
  %v5347 = vmax.f32 %v5246, 0.0
  %v5348 = vmax.f32 %v5249, 0.0
  %v5349 = vmax.f32 %v5251, 0.0
  %v5350 = vmax.f32 %v5254, 0.0
  %v5351 = vmax.f32 %v5256, 0.0
  %v5352 = vmax.f32 %v5259, 0.0
  %v5353 = vmax.f32 %v5261, 0.0
  %v5354 = vmax.f32 %v5264, 0.0
  %v5355 = vmax.f32 %v5266, 0.0
  %v5356 = vmax.f32 %v5269, 0.0
  %v5357 = vmax.f32 %v5271, 0.0
  %v5358 = vmax.f32 %v5274, 0.0
  %v5359 = vmax.f32 %v5276, 0.0
  %v5360 = vmax.f32 %v5279, 0.0
  %v5361 = vmax.f32 %v5281, 0.0
  %v5362 = vmax.f32 %v5284, 0.0
  %v5363 = vmax.f32 %v5286, 0.0
  %v5364 = vmax.f32 %v5289, 0.0
  %v5365 = vmax.f32 %v5291, 0.0
  %v5366 = vmax.f32 %v5294, 0.0
  %v5367 = vmax.f32 %v5296, 0.0
  %v5368 = vmax.f32 %v5299, 0.0
  %v5369 = vmax.f32 %v5301, 0.0
  %v5370 = vmax.f32 %v5304, 0.0
  %v5371 = vmax.f32 %v5306, 0.0
  %s5372 = scalar_lea.vmem [#allocation3], 96
  %vm5373 = vcmask 523264
  %5374 = vst.msk [vmem:[%s5372] sm:$0xff] %vm5373, %v5317
  %5375 = vst.msk [vmem:[%s5372 + $0x10] sm:$0xff] %vm5373, %v5319
  %5376 = vst.msk [vmem:[%s5372 + $0x20] sm:$0xff] %vm5373, %v5321
  %5377 = vst.msk [vmem:[%s5372 + $0x30] sm:$0xff] %vm5373, %v5323
  %5378 = vst.msk [vmem:[%s5372 + $0x50] sm:$0xff] %vm5373, %v5333
  %5379 = vst.msk [vmem:[%s5372 + $0x60] sm:$0xff] %vm5373, %v5335
  %5380 = vst.msk [vmem:[%s5372 + $0x70] sm:$0xff] %vm5373, %v5337
  %5381 = vst.msk [vmem:[%s5372 + $0x80] sm:$0xff] %vm5373, %v5339
  %5382 = vst.msk [vmem:[%s5372 + $0xa0] sm:$0xff] %vm5373, %v5349
  %5383 = vst.msk [vmem:[%s5372 + $0xb0] sm:$0xff] %vm5373, %v5351
  %5384 = vst.msk [vmem:[%s5372 + $0xc0] sm:$0xff] %vm5373, %v5353
  %5385 = vst.msk [vmem:[%s5372 + $0xd0] sm:$0xff] %vm5373, %v5355
  %5386 = vst.msk [vmem:[%s5372 + $0xf0] sm:$0xff] %vm5373, %v5365
  %5387 = vst.msk [vmem:[%s5372 + $0x100] sm:$0xff] %vm5373, %v5367
  %5388 = vst.msk [vmem:[%s5372 + $0x110] sm:$0xff] %vm5373, %v5369
  %5389 = vst.msk [vmem:[%s5372 + $0x120] sm:$0xff] %vm5373, %v5371
  %5406 = vrot.lane.b32.xlu0 %v5316, 64
  %v5407 = vpop.permute.xlu0 %5406
  %5408 = vrot.lane.b32.xlu0 %v5318, 64
  %v5409 = vpop.permute.xlu0 %5408
  %5410 = vrot.lane.b32.xlu0 %v5320, 64
  %v5411 = vpop.permute.xlu0 %5410
  %5412 = vrot.lane.b32.xlu0 %v5322, 64
  %v5413 = vpop.permute.xlu0 %5412
  %5414 = vrot.lane.b32.xlu0 %v5332, 64
  %v5415 = vpop.permute.xlu0 %5414
  %5416 = vrot.lane.b32.xlu0 %v5334, 64
  %v5417 = vpop.permute.xlu0 %5416
  %5418 = vrot.lane.b32.xlu0 %v5336, 64
  %v5419 = vpop.permute.xlu0 %5418
  %5420 = vrot.lane.b32.xlu0 %v5338, 64
  %v5421 = vpop.permute.xlu0 %5420
  %5422 = vrot.lane.b32.xlu0 %v5348, 64
  %v5423 = vpop.permute.xlu0 %5422
  %5424 = vrot.lane.b32.xlu0 %v5350, 64
  %v5425 = vpop.permute.xlu0 %5424
  %5426 = vrot.lane.b32.xlu0 %v5352, 64
  %v5427 = vpop.permute.xlu0 %5426
  %5428 = vrot.lane.b32.xlu0 %v5354, 64
  %v5429 = vpop.permute.xlu0 %5428
  %5430 = vrot.lane.b32.xlu0 %v5364, 64
  %v5431 = vpop.permute.xlu0 %5430
  %5432 = vrot.lane.b32.xlu0 %v5366, 64
  %v5433 = vpop.permute.xlu0 %5432
  %5434 = vrot.lane.b32.xlu0 %v5368, 64
  %v5435 = vpop.permute.xlu0 %5434
  %5436 = vrot.lane.b32.xlu0 %v5370, 64
  %v5437 = vpop.permute.xlu0 %5436
  %s5454 = scalar_lea.vmem [#allocation3], 80
  %vm5455 = vcmask 1048064
  %5456 = vst.msk [vmem:[%s5454] sm:$0xff] %vm5455, %v5407
  %5457 = vst.msk [vmem:[%s5454 + $0x10] sm:$0xff] %vm5455, %v5409
  %5458 = vst.msk [vmem:[%s5454 + $0x20] sm:$0xff] %vm5455, %v5411
  %5459 = vst.msk [vmem:[%s5454 + $0x30] sm:$0xff] %vm5455, %v5413
  %5460 = vst.msk [vmem:[%s5454 + $0x50] sm:$0xff] %vm5455, %v5415
  %5461 = vst.msk [vmem:[%s5454 + $0x60] sm:$0xff] %vm5455, %v5417
  %5462 = vst.msk [vmem:[%s5454 + $0x70] sm:$0xff] %vm5455, %v5419
  %5463 = vst.msk [vmem:[%s5454 + $0x80] sm:$0xff] %vm5455, %v5421
  %5464 = vst.msk [vmem:[%s5454 + $0xa0] sm:$0xff] %vm5455, %v5423
  %5465 = vst.msk [vmem:[%s5454 + $0xb0] sm:$0xff] %vm5455, %v5425
  %5466 = vst.msk [vmem:[%s5454 + $0xc0] sm:$0xff] %vm5455, %v5427
  %5467 = vst.msk [vmem:[%s5454 + $0xd0] sm:$0xff] %vm5455, %v5429
  %5468 = vst.msk [vmem:[%s5454 + $0xf0] sm:$0xff] %vm5455, %v5431
  %5469 = vst.msk [vmem:[%s5454 + $0x100] sm:$0xff] %vm5455, %v5433
  %5470 = vst.msk [vmem:[%s5454 + $0x110] sm:$0xff] %vm5455, %v5435
  %5471 = vst.msk [vmem:[%s5454 + $0x120] sm:$0xff] %vm5455, %v5437
  %s5472 = scalar_lea.vmem [#allocation3], 16
  %5473 = vst.msk [vmem:[%s5472 + $0x8] sm:$0xff] %vm5373, %v5309
  %5474 = vst.msk [vmem:[%s5472 + $0x18] sm:$0xff] %vm5373, %v5311
  %5475 = vst.msk [vmem:[%s5472 + $0x28] sm:$0xff] %vm5373, %v5313
  %5476 = vst.msk [vmem:[%s5472 + $0x38] sm:$0xff] %vm5373, %v5315
  %5477 = vst.msk [vmem:[%s5472 + $0x58] sm:$0xff] %vm5373, %v5325
  %5478 = vst.msk [vmem:[%s5472 + $0x68] sm:$0xff] %vm5373, %v5327
  %5479 = vst.msk [vmem:[%s5472 + $0x78] sm:$0xff] %vm5373, %v5329
  %5480 = vst.msk [vmem:[%s5472 + $0x88] sm:$0xff] %vm5373, %v5331
  %5481 = vst.msk [vmem:[%s5472 + $0xa8] sm:$0xff] %vm5373, %v5341
  %5482 = vst.msk [vmem:[%s5472 + $0xb8] sm:$0xff] %vm5373, %v5343
  %5483 = vst.msk [vmem:[%s5472 + $0xc8] sm:$0xff] %vm5373, %v5345
  %5484 = vst.msk [vmem:[%s5472 + $0xd8] sm:$0xff] %vm5373, %v5347
  %5485 = vst.msk [vmem:[%s5472 + $0xf8] sm:$0xff] %vm5373, %v5357
  %5486 = vst.msk [vmem:[%s5472 + $0x108] sm:$0xff] %vm5373, %v5359
  %5487 = vst.msk [vmem:[%s5472 + $0x118] sm:$0xff] %vm5373, %v5361
  %5488 = vst.msk [vmem:[%s5472 + $0x128] sm:$0xff] %vm5373, %v5363
  %5505 = vrot.lane.b32.xlu0 %v5308, 64
  %v5506 = vpop.permute.xlu0 %5505
  %5507 = vrot.lane.b32.xlu0 %v5310, 64
  %v5508 = vpop.permute.xlu0 %5507
  %5509 = vrot.lane.b32.xlu0 %v5312, 64
  %v5510 = vpop.permute.xlu0 %5509
  %5511 = vrot.lane.b32.xlu0 %v5314, 64
  %v5512 = vpop.permute.xlu0 %5511
  %5513 = vrot.lane.b32.xlu0 %v5324, 64
  %v5514 = vpop.permute.xlu0 %5513
  %5515 = vrot.lane.b32.xlu0 %v5326, 64
  %v5516 = vpop.permute.xlu0 %5515
  %5517 = vrot.lane.b32.xlu0 %v5328, 64
  %v5518 = vpop.permute.xlu0 %5517
  %5519 = vrot.lane.b32.xlu0 %v5330, 64
  %v5520 = vpop.permute.xlu0 %5519
  %5521 = vrot.lane.b32.xlu0 %v5340, 64
  %v5522 = vpop.permute.xlu0 %5521
  %5523 = vrot.lane.b32.xlu0 %v5342, 64
  %v5524 = vpop.permute.xlu0 %5523
  %5525 = vrot.lane.b32.xlu0 %v5344, 64
  %v5526 = vpop.permute.xlu0 %5525
  %5527 = vrot.lane.b32.xlu0 %v5346, 64
  %v5528 = vpop.permute.xlu0 %5527
  %5529 = vrot.lane.b32.xlu0 %v5356, 64
  %v5530 = vpop.permute.xlu0 %5529
  %5531 = vrot.lane.b32.xlu0 %v5358, 64
  %v5532 = vpop.permute.xlu0 %5531
  %5533 = vrot.lane.b32.xlu0 %v5360, 64
  %v5534 = vpop.permute.xlu0 %5533
  %5535 = vrot.lane.b32.xlu0 %v5362, 64
  %v5536 = vpop.permute.xlu0 %5535
  %5553 = vst.msk [vmem:[#allocation3 + $0x8] sm:$0xff] %vm5455, %v5506
  %5554 = vst.msk [vmem:[#allocation3 + $0x18] sm:$0xff] %vm5455, %v5508
  %5555 = vst.msk [vmem:[#allocation3 + $0x28] sm:$0xff] %vm5455, %v5510
  %5556 = vst.msk [vmem:[#allocation3 + $0x38] sm:$0xff] %vm5455, %v5512
  %5557 = vst.msk [vmem:[#allocation3 + $0x58] sm:$0xff] %vm5455, %v5514
  %5558 = vst.msk [vmem:[#allocation3 + $0x68] sm:$0xff] %vm5455, %v5516
  %5559 = vst.msk [vmem:[#allocation3 + $0x78] sm:$0xff] %vm5455, %v5518
  %5560 = vst.msk [vmem:[#allocation3 + $0x88] sm:$0xff] %vm5455, %v5520
  %5561 = vst.msk [vmem:[#allocation3 + $0xa8] sm:$0xff] %vm5455, %v5522
  %5562 = vst.msk [vmem:[#allocation3 + $0xb8] sm:$0xff] %vm5455, %v5524
  %5563 = vst.msk [vmem:[#allocation3 + $0xc8] sm:$0xff] %vm5455, %v5526
  %5564 = vst.msk [vmem:[#allocation3 + $0xd8] sm:$0xff] %vm5455, %v5528
  %5565 = vst.msk [vmem:[#allocation3 + $0xf8] sm:$0xff] %vm5455, %v5530
  %5566 = vst.msk [vmem:[#allocation3 + $0x108] sm:$0xff] %vm5455, %v5532
  %5567 = vst.msk [vmem:[#allocation3 + $0x118] sm:$0xff] %vm5455, %v5534
  %5568 = vst.msk [vmem:[#allocation3 + $0x128] sm:$0xff] %vm5455, %v5536
  %v5569 = vld [vmem:[#allocation3] sm:$0xff]
  %v5570 = vld [vmem:[#allocation3 + $0x8] sm:$0xff]
  %v5571 = vld [vmem:[#allocation3 + $0x10] sm:$0xff]
  %v5572 = vld [vmem:[#allocation3 + $0x18] sm:$0xff]
  %v5573 = vld [vmem:[#allocation3 + $0x20] sm:$0xff]
  %v5574 = vld [vmem:[#allocation3 + $0x28] sm:$0xff]
  %v5575 = vld [vmem:[#allocation3 + $0x30] sm:$0xff]
  %v5576 = vld [vmem:[#allocation3 + $0x38] sm:$0xff]
  %v5577 = vld [vmem:[#allocation3 + $0x50] sm:$0xff]
  %v5578 = vld [vmem:[#allocation3 + $0x58] sm:$0xff]
  %v5579 = vld [vmem:[#allocation3 + $0x60] sm:$0xff]
  %v5580 = vld [vmem:[#allocation3 + $0x68] sm:$0xff]
  %v5581 = vld [vmem:[#allocation3 + $0x70] sm:$0xff]
  %v5582 = vld [vmem:[#allocation3 + $0x78] sm:$0xff]
  %v5583 = vld [vmem:[#allocation3 + $0x80] sm:$0xff]
  %v5584 = vld [vmem:[#allocation3 + $0x88] sm:$0xff]
  %v5585 = vld [vmem:[#allocation3 + $0xa0] sm:$0xff]
  %v5586 = vld [vmem:[#allocation3 + $0xa8] sm:$0xff]
  %v5587 = vld [vmem:[#allocation3 + $0xb0] sm:$0xff]
  %v5588 = vld [vmem:[#allocation3 + $0xb8] sm:$0xff]
  %v5589 = vld [vmem:[#allocation3 + $0xc0] sm:$0xff]
  %v5590 = vld [vmem:[#allocation3 + $0xc8] sm:$0xff]
  %v5591 = vld [vmem:[#allocation3 + $0xd0] sm:$0xff]
  %v5592 = vld [vmem:[#allocation3 + $0xd8] sm:$0xff]
  %v5593 = vld [vmem:[#allocation3 + $0xf0] sm:$0xff]
  %v5594 = vld [vmem:[#allocation3 + $0xf8] sm:$0xff]
  %v5595 = vld [vmem:[#allocation3 + $0x100] sm:$0xff]
  %v5596 = vld [vmem:[#allocation3 + $0x108] sm:$0xff]
  %v5597 = vld [vmem:[#allocation3 + $0x110] sm:$0xff]
  %v5598 = vld [vmem:[#allocation3 + $0x118] sm:$0xff]
  %v5599 = vld [vmem:[#allocation3 + $0x120] sm:$0xff]
  %v5600 = vld [vmem:[#allocation3 + $0x128] sm:$0xff]
  %v5601 = vpack.c.bf16 %v5570, %v5569
  %v5602 = vpack.c.bf16 %v5572, %v5571
  %v5603 = vpack.c.bf16 %v5574, %v5573
  %v5604 = vpack.c.bf16 %v5576, %v5575
  %v5605 = vpack.c.bf16 %v5578, %v5577
  %v5606 = vpack.c.bf16 %v5580, %v5579
  %v5607 = vpack.c.bf16 %v5582, %v5581
  %v5608 = vpack.c.bf16 %v5584, %v5583
  %v5609 = vpack.c.bf16 %v5586, %v5585
  %v5610 = vpack.c.bf16 %v5588, %v5587
  %v5611 = vpack.c.bf16 %v5590, %v5589
  %v5612 = vpack.c.bf16 %v5592, %v5591
  %v5613 = vpack.c.bf16 %v5594, %v5593
  %v5614 = vpack.c.bf16 %v5596, %v5595
  %v5615 = vpack.c.bf16 %v5598, %v5597
  %v5616 = vpack.c.bf16 %v5600, %v5599
  %5617 = vst [vmem:[#allocation5] sm:$0xff] %v5601
  %5618 = vst [vmem:[#allocation5 + $0x20] sm:$0xff] %v5602
  %5619 = vst [vmem:[#allocation5 + $0x40] sm:$0xff] %v5603
  %5620 = vst [vmem:[#allocation5 + $0x60] sm:$0xff] %v5604
  %5621 = vst [vmem:[#allocation5 + $0x80] sm:$0xff] %v5605
  %5622 = vst [vmem:[#allocation5 + $0xa0] sm:$0xff] %v5606
  %5623 = vst [vmem:[#allocation5 + $0xc0] sm:$0xff] %v5607
  %5624 = vst [vmem:[#allocation5 + $0xe0] sm:$0xff] %v5608
  %5625 = vst [vmem:[#allocation5 + $0x100] sm:$0xff] %v5609
  %5626 = vst [vmem:[#allocation5 + $0x120] sm:$0xff] %v5610
  %5627 = vst [vmem:[#allocation5 + $0x140] sm:$0xff] %v5611
  %5628 = vst [vmem:[#allocation5 + $0x160] sm:$0xff] %v5612
  %5629 = vst [vmem:[#allocation5 + $0x180] sm:$0xff] %v5613
  %5630 = vst [vmem:[#allocation5 + $0x1a0] sm:$0xff] %v5614
  %5631 = vst [vmem:[#allocation5 + $0x1c0] sm:$0xff] %v5615
  %5632 = vst [vmem:[#allocation5 + $0x1e0] sm:$0xff] %v5616
  %v5633 = vld [vmem:[%s5472] sm:$0xff]
  %v5634 = vld [vmem:[%s5472 + $0x8] sm:$0xff]
  %v5635 = vld [vmem:[%s5472 + $0x10] sm:$0xff]
  %v5636 = vld [vmem:[%s5472 + $0x18] sm:$0xff]
  %v5637 = vld [vmem:[%s5472 + $0x20] sm:$0xff]
  %v5638 = vld [vmem:[%s5472 + $0x28] sm:$0xff]
  %v5639 = vld [vmem:[%s5472 + $0x30] sm:$0xff]
  %v5640 = vld [vmem:[%s5472 + $0x38] sm:$0xff]
  %v5641 = vld [vmem:[%s5472 + $0x50] sm:$0xff]
  %v5642 = vld [vmem:[%s5472 + $0x58] sm:$0xff]
  %v5643 = vld [vmem:[%s5472 + $0x60] sm:$0xff]
  %v5644 = vld [vmem:[%s5472 + $0x68] sm:$0xff]
  %v5645 = vld [vmem:[%s5472 + $0x70] sm:$0xff]
  %v5646 = vld [vmem:[%s5472 + $0x78] sm:$0xff]
  %v5647 = vld [vmem:[%s5472 + $0x80] sm:$0xff]
  %v5648 = vld [vmem:[%s5472 + $0x88] sm:$0xff]
  %v5649 = vld [vmem:[%s5472 + $0xa0] sm:$0xff]
  %v5650 = vld [vmem:[%s5472 + $0xa8] sm:$0xff]
  %v5651 = vld [vmem:[%s5472 + $0xb0] sm:$0xff]
  %v5652 = vld [vmem:[%s5472 + $0xb8] sm:$0xff]
  %v5653 = vld [vmem:[%s5472 + $0xc0] sm:$0xff]
  %v5654 = vld [vmem:[%s5472 + $0xc8] sm:$0xff]
  %v5655 = vld [vmem:[%s5472 + $0xd0] sm:$0xff]
  %v5656 = vld [vmem:[%s5472 + $0xd8] sm:$0xff]
  %v5657 = vld [vmem:[%s5472 + $0xf0] sm:$0xff]
  %v5658 = vld [vmem:[%s5472 + $0xf8] sm:$0xff]
  %v5659 = vld [vmem:[%s5472 + $0x100] sm:$0xff]
  %v5660 = vld [vmem:[%s5472 + $0x108] sm:$0xff]
  %v5661 = vld [vmem:[%s5472 + $0x110] sm:$0xff]
  %v5662 = vld [vmem:[%s5472 + $0x118] sm:$0xff]
  %v5663 = vld [vmem:[%s5472 + $0x120] sm:$0xff]
  %v5664 = vld [vmem:[%s5472 + $0x128] sm:$0xff]
  %v5665 = vpack.c.bf16 %v5634, %v5633
  %v5666 = vpack.c.bf16 %v5636, %v5635
  %v5667 = vpack.c.bf16 %v5638, %v5637
  %v5668 = vpack.c.bf16 %v5640, %v5639
  %v5669 = vpack.c.bf16 %v5642, %v5641
  %v5670 = vpack.c.bf16 %v5644, %v5643
  %v5671 = vpack.c.bf16 %v5646, %v5645
  %v5672 = vpack.c.bf16 %v5648, %v5647
  %v5673 = vpack.c.bf16 %v5650, %v5649
  %v5674 = vpack.c.bf16 %v5652, %v5651
  %v5675 = vpack.c.bf16 %v5654, %v5653
  %v5676 = vpack.c.bf16 %v5656, %v5655
  %v5677 = vpack.c.bf16 %v5658, %v5657
  %v5678 = vpack.c.bf16 %v5660, %v5659
  %v5679 = vpack.c.bf16 %v5662, %v5661
  %v5680 = vpack.c.bf16 %v5664, %v5663
  %5681 = vst [vmem:[#allocation5 + $0x8] sm:$0xff] %v5665
  %5682 = vst [vmem:[#allocation5 + $0x28] sm:$0xff] %v5666
  %5683 = vst [vmem:[#allocation5 + $0x48] sm:$0xff] %v5667
  %5684 = vst [vmem:[#allocation5 + $0x68] sm:$0xff] %v5668
  %5685 = vst [vmem:[#allocation5 + $0x88] sm:$0xff] %v5669
  %5686 = vst [vmem:[#allocation5 + $0xa8] sm:$0xff] %v5670
  %5687 = vst [vmem:[#allocation5 + $0xc8] sm:$0xff] %v5671
  %5688 = vst [vmem:[#allocation5 + $0xe8] sm:$0xff] %v5672
  %5689 = vst [vmem:[#allocation5 + $0x108] sm:$0xff] %v5673
  %5690 = vst [vmem:[#allocation5 + $0x128] sm:$0xff] %v5674
  %5691 = vst [vmem:[#allocation5 + $0x148] sm:$0xff] %v5675
  %5692 = vst [vmem:[#allocation5 + $0x168] sm:$0xff] %v5676
  %5693 = vst [vmem:[#allocation5 + $0x188] sm:$0xff] %v5677
  %5694 = vst [vmem:[#allocation5 + $0x1a8] sm:$0xff] %v5678
  %5695 = vst [vmem:[#allocation5 + $0x1c8] sm:$0xff] %v5679
  %5696 = vst [vmem:[#allocation5 + $0x1e8] sm:$0xff] %v5680
  %v5697 = vld [vmem:[%s5454] sm:$0xff]
  %v5698 = vld [vmem:[%s5454 + $0x8] sm:$0xff]
  %v5699 = vld [vmem:[%s5454 + $0x10] sm:$0xff]
  %v5700 = vld [vmem:[%s5454 + $0x18] sm:$0xff]
  %v5701 = vld [vmem:[%s5454 + $0x20] sm:$0xff]
  %v5702 = vld [vmem:[%s5454 + $0x28] sm:$0xff]
  %v5703 = vld [vmem:[%s5454 + $0x30] sm:$0xff]
  %v5704 = vld [vmem:[%s5454 + $0x38] sm:$0xff]
  %v5705 = vld [vmem:[%s5454 + $0x50] sm:$0xff]
  %v5706 = vld [vmem:[%s5454 + $0x58] sm:$0xff]
  %v5707 = vld [vmem:[%s5454 + $0x60] sm:$0xff]
  %v5708 = vld [vmem:[%s5454 + $0x68] sm:$0xff]
  %v5709 = vld [vmem:[%s5454 + $0x70] sm:$0xff]
  %v5710 = vld [vmem:[%s5454 + $0x78] sm:$0xff]
  %v5711 = vld [vmem:[%s5454 + $0x80] sm:$0xff]
  %v5712 = vld [vmem:[%s5454 + $0x88] sm:$0xff]
  %v5713 = vld [vmem:[%s5454 + $0xa0] sm:$0xff]
  %v5714 = vld [vmem:[%s5454 + $0xa8] sm:$0xff]
  %v5715 = vld [vmem:[%s5454 + $0xb0] sm:$0xff]
  %v5716 = vld [vmem:[%s5454 + $0xb8] sm:$0xff]
  %v5717 = vld [vmem:[%s5454 + $0xc0] sm:$0xff]
  %v5718 = vld [vmem:[%s5454 + $0xc8] sm:$0xff]
  %v5719 = vld [vmem:[%s5454 + $0xd0] sm:$0xff]
  %v5720 = vld [vmem:[%s5454 + $0xd8] sm:$0xff]
  %v5721 = vld [vmem:[%s5454 + $0xf0] sm:$0xff]
  %v5722 = vld [vmem:[%s5454 + $0xf8] sm:$0xff]
  %v5723 = vld [vmem:[%s5454 + $0x100] sm:$0xff]
  %v5724 = vld [vmem:[%s5454 + $0x108] sm:$0xff]
  %v5725 = vld [vmem:[%s5454 + $0x110] sm:$0xff]
  %v5726 = vld [vmem:[%s5454 + $0x118] sm:$0xff]
  %v5727 = vld [vmem:[%s5454 + $0x120] sm:$0xff]
  %v5728 = vld [vmem:[%s5454 + $0x128] sm:$0xff]
  %v5729 = vpack.c.bf16 %v5698, %v5697
  %v5730 = vpack.c.bf16 %v5700, %v5699
  %v5731 = vpack.c.bf16 %v5702, %v5701
  %v5732 = vpack.c.bf16 %v5704, %v5703
  %v5733 = vpack.c.bf16 %v5706, %v5705
  %v5734 = vpack.c.bf16 %v5708, %v5707
  %v5735 = vpack.c.bf16 %v5710, %v5709
  %v5736 = vpack.c.bf16 %v5712, %v5711
  %v5737 = vpack.c.bf16 %v5714, %v5713
  %v5738 = vpack.c.bf16 %v5716, %v5715
  %v5739 = vpack.c.bf16 %v5718, %v5717
  %v5740 = vpack.c.bf16 %v5720, %v5719
  %v5741 = vpack.c.bf16 %v5722, %v5721
  %v5742 = vpack.c.bf16 %v5724, %v5723
  %v5743 = vpack.c.bf16 %v5726, %v5725
  %v5744 = vpack.c.bf16 %v5728, %v5727
  %5745 = vst [vmem:[#allocation5 + $0x10] sm:$0xff] %v5729
  %5746 = vst [vmem:[#allocation5 + $0x30] sm:$0xff] %v5730
  %5747 = vst [vmem:[#allocation5 + $0x50] sm:$0xff] %v5731
  %5748 = vst [vmem:[#allocation5 + $0x70] sm:$0xff] %v5732
  %5749 = vst [vmem:[#allocation5 + $0x90] sm:$0xff] %v5733
  %5750 = vst [vmem:[#allocation5 + $0xb0] sm:$0xff] %v5734
  %5751 = vst [vmem:[#allocation5 + $0xd0] sm:$0xff] %v5735
  %5752 = vst [vmem:[#allocation5 + $0xf0] sm:$0xff] %v5736
  %5753 = vst [vmem:[#allocation5 + $0x110] sm:$0xff] %v5737
  %5754 = vst [vmem:[#allocation5 + $0x130] sm:$0xff] %v5738
  %5755 = vst [vmem:[#allocation5 + $0x150] sm:$0xff] %v5739
  %5756 = vst [vmem:[#allocation5 + $0x170] sm:$0xff] %v5740
  %5757 = vst [vmem:[#allocation5 + $0x190] sm:$0xff] %v5741
  %5758 = vst [vmem:[#allocation5 + $0x1b0] sm:$0xff] %v5742
  %5759 = vst [vmem:[#allocation5 + $0x1d0] sm:$0xff] %v5743
  %5760 = vst [vmem:[#allocation5 + $0x1f0] sm:$0xff] %v5744
  %v5761 = vld [vmem:[%s5372] sm:$0xff]
  %v5762 = vld [vmem:[%s5372 + $0x8] sm:$0xff]
  %v5763 = vld [vmem:[%s5372 + $0x10] sm:$0xff]
  %v5764 = vld [vmem:[%s5372 + $0x18] sm:$0xff]
  %v5765 = vld [vmem:[%s5372 + $0x20] sm:$0xff]
  %v5766 = vld [vmem:[%s5372 + $0x28] sm:$0xff]
  %v5767 = vld [vmem:[%s5372 + $0x30] sm:$0xff]
  %v5768 = vld [vmem:[%s5372 + $0x38] sm:$0xff]
  %v5769 = vld [vmem:[%s5372 + $0x50] sm:$0xff]
  %v5770 = vld [vmem:[%s5372 + $0x58] sm:$0xff]
  %v5771 = vld [vmem:[%s5372 + $0x60] sm:$0xff]
  %v5772 = vld [vmem:[%s5372 + $0x68] sm:$0xff]
  %v5773 = vld [vmem:[%s5372 + $0x70] sm:$0xff]
  %v5774 = vld [vmem:[%s5372 + $0x78] sm:$0xff]
  %v5775 = vld [vmem:[%s5372 + $0x80] sm:$0xff]
  %v5776 = vld [vmem:[%s5372 + $0x88] sm:$0xff]
  %v5777 = vld [vmem:[%s5372 + $0xa0] sm:$0xff]
  %v5778 = vld [vmem:[%s5372 + $0xa8] sm:$0xff]
  %v5779 = vld [vmem:[%s5372 + $0xb0] sm:$0xff]
  %v5780 = vld [vmem:[%s5372 + $0xb8] sm:$0xff]
  %v5781 = vld [vmem:[%s5372 + $0xc0] sm:$0xff]
  %v5782 = vld [vmem:[%s5372 + $0xc8] sm:$0xff]
  %v5783 = vld [vmem:[%s5372 + $0xd0] sm:$0xff]
  %v5784 = vld [vmem:[%s5372 + $0xd8] sm:$0xff]
  %v5785 = vld [vmem:[%s5372 + $0xf0] sm:$0xff]
  %v5786 = vld [vmem:[%s5372 + $0xf8] sm:$0xff]
  %v5787 = vld [vmem:[%s5372 + $0x100] sm:$0xff]
  %v5788 = vld [vmem:[%s5372 + $0x108] sm:$0xff]
  %v5789 = vld [vmem:[%s5372 + $0x110] sm:$0xff]
  %v5790 = vld [vmem:[%s5372 + $0x118] sm:$0xff]
  %v5791 = vld [vmem:[%s5372 + $0x120] sm:$0xff]
  %v5792 = vld [vmem:[%s5372 + $0x128] sm:$0xff]
  %v5793 = vpack.c.bf16 %v5762, %v5761
  %v5794 = vpack.c.bf16 %v5764, %v5763
  %v5795 = vpack.c.bf16 %v5766, %v5765
  %v5796 = vpack.c.bf16 %v5768, %v5767
  %v5797 = vpack.c.bf16 %v5770, %v5769
  %v5798 = vpack.c.bf16 %v5772, %v5771
  %v5799 = vpack.c.bf16 %v5774, %v5773
  %v5800 = vpack.c.bf16 %v5776, %v5775
  %v5801 = vpack.c.bf16 %v5778, %v5777
  %v5802 = vpack.c.bf16 %v5780, %v5779
  %v5803 = vpack.c.bf16 %v5782, %v5781
  %v5804 = vpack.c.bf16 %v5784, %v5783
  %v5805 = vpack.c.bf16 %v5786, %v5785
  %v5806 = vpack.c.bf16 %v5788, %v5787
  %v5807 = vpack.c.bf16 %v5790, %v5789
  %v5808 = vpack.c.bf16 %v5792, %v5791
  %5809 = vst [vmem:[#allocation5 + $0x18] sm:$0xff] %v5793
  %5810 = vst [vmem:[#allocation5 + $0x38] sm:$0xff] %v5794
  %5811 = vst [vmem:[#allocation5 + $0x58] sm:$0xff] %v5795
  %5812 = vst [vmem:[#allocation5 + $0x78] sm:$0xff] %v5796
  %5813 = vst [vmem:[#allocation5 + $0x98] sm:$0xff] %v5797
  %5814 = vst [vmem:[#allocation5 + $0xb8] sm:$0xff] %v5798
  %5815 = vst [vmem:[#allocation5 + $0xd8] sm:$0xff] %v5799
  %5816 = vst [vmem:[#allocation5 + $0xf8] sm:$0xff] %v5800
  %5817 = vst [vmem:[#allocation5 + $0x118] sm:$0xff] %v5801
  %5818 = vst [vmem:[#allocation5 + $0x138] sm:$0xff] %v5802
  %5819 = vst [vmem:[#allocation5 + $0x158] sm:$0xff] %v5803
  %5820 = vst [vmem:[#allocation5 + $0x178] sm:$0xff] %v5804
  %5821 = vst [vmem:[#allocation5 + $0x198] sm:$0xff] %v5805
  %5822 = vst [vmem:[#allocation5 + $0x1b8] sm:$0xff] %v5806
  %5823 = vst [vmem:[#allocation5 + $0x1d8] sm:$0xff] %v5807
  %5824 = vst [vmem:[#allocation5 + $0x1f8] sm:$0xff] %v5808
  %v5825 = vld [vmem:[#allocation5] sm:$0xff]
  %v5826 = vld [vmem:[#allocation5 + $0x8] sm:$0xff]
  %v5827 = vld [vmem:[#allocation5 + $0x10] sm:$0xff]
  %v5828 = vld [vmem:[#allocation5 + $0x18] sm:$0xff]
  %v5829 = vld [vmem:[#allocation5 + $0x20] sm:$0xff]
  %v5830 = vld [vmem:[#allocation5 + $0x28] sm:$0xff]
  %v5831 = vld [vmem:[#allocation5 + $0x30] sm:$0xff]
  %v5832 = vld [vmem:[#allocation5 + $0x38] sm:$0xff]
  %v5833 = vld [vmem:[#allocation5 + $0x40] sm:$0xff]
  %v5834 = vld [vmem:[#allocation5 + $0x48] sm:$0xff]
  %v5835 = vld [vmem:[#allocation5 + $0x50] sm:$0xff]
  %v5836 = vld [vmem:[#allocation5 + $0x58] sm:$0xff]
  %v5837 = vld [vmem:[#allocation5 + $0x60] sm:$0xff]
  %v5838 = vld [vmem:[#allocation5 + $0x68] sm:$0xff]
  %v5839 = vld [vmem:[#allocation5 + $0x70] sm:$0xff]
  %v5840 = vld [vmem:[#allocation5 + $0x78] sm:$0xff]
  %v5841 = vld [vmem:[#allocation5 + $0x80] sm:$0xff]
  %v5842 = vld [vmem:[#allocation5 + $0x88] sm:$0xff]
  %v5843 = vld [vmem:[#allocation5 + $0x90] sm:$0xff]
  %v5844 = vld [vmem:[#allocation5 + $0x98] sm:$0xff]
  %v5845 = vld [vmem:[#allocation5 + $0xa0] sm:$0xff]
  %v5846 = vld [vmem:[#allocation5 + $0xa8] sm:$0xff]
  %v5847 = vld [vmem:[#allocation5 + $0xb0] sm:$0xff]
  %v5848 = vld [vmem:[#allocation5 + $0xb8] sm:$0xff]
  %v5849 = vld [vmem:[#allocation5 + $0xc0] sm:$0xff]
  %v5850 = vld [vmem:[#allocation5 + $0xc8] sm:$0xff]
  %v5851 = vld [vmem:[#allocation5 + $0xd0] sm:$0xff]
  %v5852 = vld [vmem:[#allocation5 + $0xd8] sm:$0xff]
  %v5853 = vld [vmem:[#allocation5 + $0xe0] sm:$0xff]
  %v5854 = vld [vmem:[#allocation5 + $0xe8] sm:$0xff]
  %v5855 = vld [vmem:[#allocation5 + $0xf0] sm:$0xff]
  %v5856 = vld [vmem:[#allocation5 + $0xf8] sm:$0xff]
  %v5857 = vld [vmem:[#allocation5 + $0x100] sm:$0xff]
  %v5858 = vld [vmem:[#allocation5 + $0x108] sm:$0xff]
  %v5859 = vld [vmem:[#allocation5 + $0x110] sm:$0xff]
  %v5860 = vld [vmem:[#allocation5 + $0x118] sm:$0xff]
  %v5861 = vld [vmem:[#allocation5 + $0x120] sm:$0xff]
  %v5862 = vld [vmem:[#allocation5 + $0x128] sm:$0xff]
  %v5863 = vld [vmem:[#allocation5 + $0x130] sm:$0xff]
  %v5864 = vld [vmem:[#allocation5 + $0x138] sm:$0xff]
  %v5865 = vld [vmem:[#allocation5 + $0x140] sm:$0xff]
  %v5866 = vld [vmem:[#allocation5 + $0x148] sm:$0xff]
  %v5867 = vld [vmem:[#allocation5 + $0x150] sm:$0xff]
  %v5868 = vld [vmem:[#allocation5 + $0x158] sm:$0xff]
  %v5869 = vld [vmem:[#allocation5 + $0x160] sm:$0xff]
  %v5870 = vld [vmem:[#allocation5 + $0x168] sm:$0xff]
  %v5871 = vld [vmem:[#allocation5 + $0x170] sm:$0xff]
  %v5872 = vld [vmem:[#allocation5 + $0x178] sm:$0xff]
  %v5873 = vld [vmem:[#allocation5 + $0x180] sm:$0xff]
  %v5874 = vld [vmem:[#allocation5 + $0x188] sm:$0xff]
  %v5875 = vld [vmem:[#allocation5 + $0x190] sm:$0xff]
  %v5876 = vld [vmem:[#allocation5 + $0x198] sm:$0xff]
  %v5877 = vld [vmem:[#allocation5 + $0x1a0] sm:$0xff]
  %v5878 = vld [vmem:[#allocation5 + $0x1a8] sm:$0xff]
  %v5879 = vld [vmem:[#allocation5 + $0x1b0] sm:$0xff]
  %v5880 = vld [vmem:[#allocation5 + $0x1b8] sm:$0xff]
  %v5881 = vld [vmem:[#allocation5 + $0x1c0] sm:$0xff]
  %v5882 = vld [vmem:[#allocation5 + $0x1c8] sm:$0xff]
  %v5883 = vld [vmem:[#allocation5 + $0x1d0] sm:$0xff]
  %v5884 = vld [vmem:[#allocation5 + $0x1d8] sm:$0xff]
  %v5885 = vld [vmem:[#allocation5 + $0x1e0] sm:$0xff]
  %v5886 = vld [vmem:[#allocation5 + $0x1e8] sm:$0xff]
  %v5887 = vld [vmem:[#allocation5 + $0x1f0] sm:$0xff]
  %v5888 = vld [vmem:[#allocation5 + $0x1f8] sm:$0xff]
  %v5889 = vld [vmem:[%s5] sm:$0xf]
  %v5890 = vld [vmem:[%s5 + $0x4] sm:$0xf]
  %v5891 = vld [vmem:[%s5 + $0x8] sm:$0xf]
  %v5892 = vld [vmem:[%s5 + $0xc] sm:$0xf]
  %v5893 = vld [vmem:[%s5 + $0x10] sm:$0xf]
  %v5894 = vld [vmem:[%s5 + $0x14] sm:$0xf]
  %v5895 = vld [vmem:[%s5 + $0x18] sm:$0xf]
  %v5896 = vld [vmem:[%s5 + $0x1c] sm:$0xf]
  %v5897 = vld [vmem:[%s5 + $0x20] sm:$0xf]
  %v5898 = vld [vmem:[%s5 + $0x24] sm:$0xf]
  %v5899 = vld [vmem:[%s5 + $0x28] sm:$0xf]
  %v5900 = vld [vmem:[%s5 + $0x2c] sm:$0xf]
  %v5901 = vld [vmem:[%s5 + $0x30] sm:$0xf]
  %v5902 = vld [vmem:[%s5 + $0x34] sm:$0xf]
  %v5903 = vld [vmem:[%s5 + $0x38] sm:$0xf]
  %v5904 = vld [vmem:[%s5 + $0x3c] sm:$0xf]
  %v5905 = vld [vmem:[%s5 + $0x40] sm:$0xf]
  %v5906 = vld [vmem:[%s5 + $0x44] sm:$0xf]
  %v5907 = vld [vmem:[%s5 + $0x48] sm:$0xf]
  %v5908 = vld [vmem:[%s5 + $0x4c] sm:$0xf]
  %v5909 = vld [vmem:[%s5 + $0x50] sm:$0xf]
  %v5910 = vld [vmem:[%s5 + $0x54] sm:$0xf]
  %v5911 = vld [vmem:[%s5 + $0x58] sm:$0xf]
  %v5912 = vld [vmem:[%s5 + $0x5c] sm:$0xf]
  %v5913 = vld [vmem:[%s5 + $0x60] sm:$0xf]
  %v5914 = vld [vmem:[%s5 + $0x64] sm:$0xf]
  %v5915 = vld [vmem:[%s5 + $0x68] sm:$0xf]
  %v5916 = vld [vmem:[%s5 + $0x6c] sm:$0xf]
  %v5917 = vld [vmem:[%s5 + $0x70] sm:$0xf]
  %v5918 = vld [vmem:[%s5 + $0x74] sm:$0xf]
  %v5919 = vld [vmem:[%s5 + $0x78] sm:$0xf]
  %v5920 = vld [vmem:[%s5 + $0x7c] sm:$0xf]
  %v5921 = vld [vmem:[%s5 + $0x80] sm:$0xf]
  %v5922 = vld [vmem:[%s5 + $0x84] sm:$0xf]
  %v5923 = vld [vmem:[%s5 + $0x88] sm:$0xf]
  %v5924 = vld [vmem:[%s5 + $0x8c] sm:$0xf]
  %v5925 = vld [vmem:[%s5 + $0x90] sm:$0xf]
  %v5926 = vld [vmem:[%s5 + $0x94] sm:$0xf]
  %v5927 = vld [vmem:[%s5 + $0x98] sm:$0xf]
  %v5928 = vld [vmem:[%s5 + $0x9c] sm:$0xf]
  %v5929 = vld [vmem:[%s5 + $0xa0] sm:$0xf]
  %v5930 = vld [vmem:[%s5 + $0xa4] sm:$0xf]
  %v5931 = vld [vmem:[%s5 + $0xa8] sm:$0xf]
  %v5932 = vld [vmem:[%s5 + $0xac] sm:$0xf]
  %v5933 = vld [vmem:[%s5 + $0xb0] sm:$0xf]
  %v5934 = vld [vmem:[%s5 + $0xb4] sm:$0xf]
  %v5935 = vld [vmem:[%s5 + $0xb8] sm:$0xf]
  %v5936 = vld [vmem:[%s5 + $0xbc] sm:$0xf]
  %v5937 = vld [vmem:[%s5 + $0xc0] sm:$0xf]
  %v5938 = vld [vmem:[%s5 + $0xc4] sm:$0xf]
  %v5939 = vld [vmem:[%s5 + $0xc8] sm:$0xf]
  %v5940 = vld [vmem:[%s5 + $0xcc] sm:$0xf]
  %v5941 = vld [vmem:[%s5 + $0xd0] sm:$0xf]
  %v5942 = vld [vmem:[%s5 + $0xd4] sm:$0xf]
  %v5943 = vld [vmem:[%s5 + $0xd8] sm:$0xf]
  %v5944 = vld [vmem:[%s5 + $0xdc] sm:$0xf]
  %v5945 = vld [vmem:[%s5 + $0xe0] sm:$0xf]
  %v5946 = vld [vmem:[%s5 + $0xe4] sm:$0xf]
  %v5947 = vld [vmem:[%s5 + $0xe8] sm:$0xf]
  %v5948 = vld [vmem:[%s5 + $0xec] sm:$0xf]
  %v5949 = vld [vmem:[%s5 + $0xf0] sm:$0xf]
  %v5950 = vld [vmem:[%s5 + $0xf4] sm:$0xf]
  %v5951 = vld [vmem:[%s5 + $0xf8] sm:$0xf]
  %v5952 = vld [vmem:[%s5 + $0xfc] sm:$0xf]
  %v5953 = vld [vmem:[%s5 + $0x100] sm:$0xf]
  %v5954 = vld [vmem:[%s5 + $0x104] sm:$0xf]
  %v5955 = vld [vmem:[%s5 + $0x108] sm:$0xf]
  %v5956 = vld [vmem:[%s5 + $0x10c] sm:$0xf]
  %v5957 = vld [vmem:[%s5 + $0x110] sm:$0xf]
  %v5958 = vld [vmem:[%s5 + $0x114] sm:$0xf]
  %v5959 = vld [vmem:[%s5 + $0x118] sm:$0xf]
  %v5960 = vld [vmem:[%s5 + $0x11c] sm:$0xf]
  %v5961 = vld [vmem:[%s5 + $0x120] sm:$0xf]
  %v5962 = vld [vmem:[%s5 + $0x124] sm:$0xf]
  %v5963 = vld [vmem:[%s5 + $0x128] sm:$0xf]
  %v5964 = vld [vmem:[%s5 + $0x12c] sm:$0xf]
  %v5965 = vld [vmem:[%s5 + $0x130] sm:$0xf]
  %v5966 = vld [vmem:[%s5 + $0x134] sm:$0xf]
  %v5967 = vld [vmem:[%s5 + $0x138] sm:$0xf]
  %v5968 = vld [vmem:[%s5 + $0x13c] sm:$0xf]
  %v5969 = vld [vmem:[%s5 + $0x140] sm:$0xf]
  %v5970 = vld [vmem:[%s5 + $0x144] sm:$0xf]
  %v5971 = vld [vmem:[%s5 + $0x148] sm:$0xf]
  %v5972 = vld [vmem:[%s5 + $0x14c] sm:$0xf]
  %v5973 = vld [vmem:[%s5 + $0x150] sm:$0xf]
  %v5974 = vld [vmem:[%s5 + $0x154] sm:$0xf]
  %v5975 = vld [vmem:[%s5 + $0x158] sm:$0xf]
  %v5976 = vld [vmem:[%s5 + $0x15c] sm:$0xf]
  %v5977 = vld [vmem:[%s5 + $0x160] sm:$0xf]
  %v5978 = vld [vmem:[%s5 + $0x164] sm:$0xf]
  %v5979 = vld [vmem:[%s5 + $0x168] sm:$0xf]
  %v5980 = vld [vmem:[%s5 + $0x16c] sm:$0xf]
  %v5981 = vld [vmem:[%s5 + $0x170] sm:$0xf]
  %v5982 = vld [vmem:[%s5 + $0x174] sm:$0xf]
  %v5983 = vld [vmem:[%s5 + $0x178] sm:$0xf]
  %v5984 = vld [vmem:[%s5 + $0x17c] sm:$0xf]
  %v5985 = vld [vmem:[%s5 + $0x180] sm:$0xf]
  %v5986 = vld [vmem:[%s5 + $0x184] sm:$0xf]
  %v5987 = vld [vmem:[%s5 + $0x188] sm:$0xf]
  %v5988 = vld [vmem:[%s5 + $0x18c] sm:$0xf]
  %v5989 = vld [vmem:[%s5 + $0x190] sm:$0xf]
  %v5990 = vld [vmem:[%s5 + $0x194] sm:$0xf]
  %v5991 = vld [vmem:[%s5 + $0x198] sm:$0xf]
  %v5992 = vld [vmem:[%s5 + $0x19c] sm:$0xf]
  %v5993 = vld [vmem:[%s5 + $0x1a0] sm:$0xf]
  %v5994 = vld [vmem:[%s5 + $0x1a4] sm:$0xf]
  %v5995 = vld [vmem:[%s5 + $0x1a8] sm:$0xf]
  %v5996 = vld [vmem:[%s5 + $0x1ac] sm:$0xf]
  %v5997 = vld [vmem:[%s5 + $0x1b0] sm:$0xf]
  %v5998 = vld [vmem:[%s5 + $0x1b4] sm:$0xf]
  %v5999 = vld [vmem:[%s5 + $0x1b8] sm:$0xf]
  %v6000 = vld [vmem:[%s5 + $0x1bc] sm:$0xf]
  %v6001 = vld [vmem:[%s5 + $0x1c0] sm:$0xf]
  %v6002 = vld [vmem:[%s5 + $0x1c4] sm:$0xf]
  %v6003 = vld [vmem:[%s5 + $0x1c8] sm:$0xf]
  %v6004 = vld [vmem:[%s5 + $0x1cc] sm:$0xf]
  %v6005 = vld [vmem:[%s5 + $0x1d0] sm:$0xf]
  %v6006 = vld [vmem:[%s5 + $0x1d4] sm:$0xf]
  %v6007 = vld [vmem:[%s5 + $0x1d8] sm:$0xf]
  %v6008 = vld [vmem:[%s5 + $0x1dc] sm:$0xf]
  %v6009 = vld [vmem:[%s5 + $0x1e0] sm:$0xf]
  %v6010 = vld [vmem:[%s5 + $0x1e4] sm:$0xf]
  %v6011 = vld [vmem:[%s5 + $0x1e8] sm:$0xf]
  %v6012 = vld [vmem:[%s5 + $0x1ec] sm:$0xf]
  %v6013 = vld [vmem:[%s5 + $0x1f0] sm:$0xf]
  %v6014 = vld [vmem:[%s5 + $0x1f4] sm:$0xf]
  %v6015 = vld [vmem:[%s5 + $0x1f8] sm:$0xf]
  %v6016 = vld [vmem:[%s5 + $0x1fc] sm:$0xf]
  %v6017 = vld [vmem:[%s6] sm:$0x1]
  %v6019 = vperm.slane %v6017, 0
  %v6085 = vunpack.c.l.b16 %v5825
  %v6086 = vunpack.c.h.b16 %v5825
  %v6087 = vunpack.c.l.b16 %v5826
  %v6088 = vunpack.c.h.b16 %v5826
  %v6089 = vunpack.c.l.b16 %v5827
  %v6090 = vunpack.c.h.b16 %v5827
  %v6091 = vunpack.c.l.b16 %v5828
  %v6092 = vunpack.c.h.b16 %v5828
  %v6093 = vunpack.c.l.b16 %v5829
  %v6094 = vunpack.c.h.b16 %v5829
  %v6095 = vunpack.c.l.b16 %v5830
  %v6096 = vunpack.c.h.b16 %v5830
  %v6097 = vunpack.c.l.b16 %v5831
  %v6098 = vunpack.c.h.b16 %v5831
  %v6099 = vunpack.c.l.b16 %v5832
  %v6100 = vunpack.c.h.b16 %v5832
  %v6101 = vunpack.c.l.b16 %v5833
  %v6102 = vunpack.c.h.b16 %v5833
  %v6103 = vunpack.c.l.b16 %v5834
  %v6104 = vunpack.c.h.b16 %v5834
  %v6105 = vunpack.c.l.b16 %v5835
  %v6106 = vunpack.c.h.b16 %v5835
  %v6107 = vunpack.c.l.b16 %v5836
  %v6108 = vunpack.c.h.b16 %v5836
  %v6109 = vunpack.c.l.b16 %v5837
  %v6110 = vunpack.c.h.b16 %v5837
  %v6111 = vunpack.c.l.b16 %v5838
  %v6112 = vunpack.c.h.b16 %v5838
  %v6113 = vunpack.c.l.b16 %v5839
  %v6114 = vunpack.c.h.b16 %v5839
  %v6115 = vunpack.c.l.b16 %v5840
  %v6116 = vunpack.c.h.b16 %v5840
  %v6117 = vunpack.c.l.b16 %v5841
  %v6118 = vunpack.c.h.b16 %v5841
  %v6119 = vunpack.c.l.b16 %v5842
  %v6120 = vunpack.c.h.b16 %v5842
  %v6121 = vunpack.c.l.b16 %v5843
  %v6122 = vunpack.c.h.b16 %v5843
  %v6123 = vunpack.c.l.b16 %v5844
  %v6124 = vunpack.c.h.b16 %v5844
  %v6125 = vunpack.c.l.b16 %v5845
  %v6126 = vunpack.c.h.b16 %v5845
  %v6127 = vunpack.c.l.b16 %v5846
  %v6128 = vunpack.c.h.b16 %v5846
  %v6129 = vunpack.c.l.b16 %v5847
  %v6130 = vunpack.c.h.b16 %v5847
  %v6131 = vunpack.c.l.b16 %v5848
  %v6132 = vunpack.c.h.b16 %v5848
  %v6133 = vunpack.c.l.b16 %v5849
  %v6134 = vunpack.c.h.b16 %v5849
  %v6135 = vunpack.c.l.b16 %v5850
  %v6136 = vunpack.c.h.b16 %v5850
  %v6137 = vunpack.c.l.b16 %v5851
  %v6138 = vunpack.c.h.b16 %v5851
  %v6139 = vunpack.c.l.b16 %v5852
  %v6140 = vunpack.c.h.b16 %v5852
  %v6141 = vunpack.c.l.b16 %v5853
  %v6142 = vunpack.c.h.b16 %v5853
  %v6143 = vunpack.c.l.b16 %v5854
  %v6144 = vunpack.c.h.b16 %v5854
  %v6145 = vunpack.c.l.b16 %v5855
  %v6146 = vunpack.c.h.b16 %v5855
  %v6147 = vunpack.c.l.b16 %v5856
  %v6148 = vunpack.c.h.b16 %v5856
  %v6149 = vunpack.c.l.b16 %v5857
  %v6150 = vunpack.c.h.b16 %v5857
  %v6151 = vunpack.c.l.b16 %v5858
  %v6152 = vunpack.c.h.b16 %v5858
  %v6153 = vunpack.c.l.b16 %v5859
  %v6154 = vunpack.c.h.b16 %v5859
  %v6155 = vunpack.c.l.b16 %v5860
  %v6156 = vunpack.c.h.b16 %v5860
  %v6157 = vunpack.c.l.b16 %v5861
  %v6158 = vunpack.c.h.b16 %v5861
  %v6159 = vunpack.c.l.b16 %v5862
  %v6160 = vunpack.c.h.b16 %v5862
  %v6161 = vunpack.c.l.b16 %v5863
  %v6162 = vunpack.c.h.b16 %v5863
  %v6163 = vunpack.c.l.b16 %v5864
  %v6164 = vunpack.c.h.b16 %v5864
  %v6165 = vunpack.c.l.b16 %v5865
  %v6166 = vunpack.c.h.b16 %v5865
  %v6167 = vunpack.c.l.b16 %v5866
  %v6168 = vunpack.c.h.b16 %v5866
  %v6169 = vunpack.c.l.b16 %v5867
  %v6170 = vunpack.c.h.b16 %v5867
  %v6171 = vunpack.c.l.b16 %v5868
  %v6172 = vunpack.c.h.b16 %v5868
  %v6173 = vunpack.c.l.b16 %v5869
  %v6174 = vunpack.c.h.b16 %v5869
  %v6175 = vunpack.c.l.b16 %v5870
  %v6176 = vunpack.c.h.b16 %v5870
  %v6177 = vunpack.c.l.b16 %v5871
  %v6178 = vunpack.c.h.b16 %v5871
  %v6179 = vunpack.c.l.b16 %v5872
  %v6180 = vunpack.c.h.b16 %v5872
  %v6181 = vunpack.c.l.b16 %v5873
  %v6182 = vunpack.c.h.b16 %v5873
  %v6183 = vunpack.c.l.b16 %v5874
  %v6184 = vunpack.c.h.b16 %v5874
  %v6185 = vunpack.c.l.b16 %v5875
  %v6186 = vunpack.c.h.b16 %v5875
  %v6187 = vunpack.c.l.b16 %v5876
  %v6188 = vunpack.c.h.b16 %v5876
  %v6189 = vunpack.c.l.b16 %v5877
  %v6190 = vunpack.c.h.b16 %v5877
  %v6191 = vunpack.c.l.b16 %v5878
  %v6192 = vunpack.c.h.b16 %v5878
  %v6193 = vunpack.c.l.b16 %v5879
  %v6194 = vunpack.c.h.b16 %v5879
  %v6195 = vunpack.c.l.b16 %v5880
  %v6196 = vunpack.c.h.b16 %v5880
  %v6197 = vunpack.c.l.b16 %v5881
  %v6198 = vunpack.c.h.b16 %v5881
  %v6199 = vunpack.c.l.b16 %v5882
  %v6200 = vunpack.c.h.b16 %v5882
  %v6201 = vunpack.c.l.b16 %v5883
  %v6202 = vunpack.c.h.b16 %v5883
  %v6203 = vunpack.c.l.b16 %v5884
  %v6204 = vunpack.c.h.b16 %v5884
  %v6205 = vunpack.c.l.b16 %v5885
  %v6206 = vunpack.c.h.b16 %v5885
  %v6207 = vunpack.c.l.b16 %v5886
  %v6208 = vunpack.c.h.b16 %v5886
  %v6209 = vunpack.c.l.b16 %v5887
  %v6210 = vunpack.c.h.b16 %v5887
  %v6211 = vunpack.c.l.b16 %v5888
  %v6212 = vunpack.c.h.b16 %v5888
  %v6213 = vpack.c.b16 %v6093, %v6085
  %v6214 = vpack.c.b16 %v6094, %v6086
  %v6215 = vpack.c.b16 %v6095, %v6087
  %v6216 = vpack.c.b16 %v6096, %v6088
  %v6217 = vpack.c.b16 %v6097, %v6089
  %v6218 = vpack.c.b16 %v6098, %v6090
  %v6219 = vpack.c.b16 %v6099, %v6091
  %v6220 = vpack.c.b16 %v6100, %v6092
  %v6221 = vpack.c.b16 %v6109, %v6101
  %v6222 = vpack.c.b16 %v6110, %v6102
  %v6223 = vpack.c.b16 %v6111, %v6103
  %v6224 = vpack.c.b16 %v6112, %v6104
  %v6225 = vpack.c.b16 %v6113, %v6105
  %v6226 = vpack.c.b16 %v6114, %v6106
  %v6227 = vpack.c.b16 %v6115, %v6107
  %v6228 = vpack.c.b16 %v6116, %v6108
  %v6229 = vpack.c.b16 %v6125, %v6117
  %v6230 = vpack.c.b16 %v6126, %v6118
  %v6231 = vpack.c.b16 %v6127, %v6119
  %v6232 = vpack.c.b16 %v6128, %v6120
  %v6233 = vpack.c.b16 %v6129, %v6121
  %v6234 = vpack.c.b16 %v6130, %v6122
  %v6235 = vpack.c.b16 %v6131, %v6123
  %v6236 = vpack.c.b16 %v6132, %v6124
  %v6237 = vpack.c.b16 %v6141, %v6133
  %v6238 = vpack.c.b16 %v6142, %v6134
  %v6239 = vpack.c.b16 %v6143, %v6135
  %v6240 = vpack.c.b16 %v6144, %v6136
  %v6241 = vpack.c.b16 %v6145, %v6137
  %v6242 = vpack.c.b16 %v6146, %v6138
  %v6243 = vpack.c.b16 %v6147, %v6139
  %v6244 = vpack.c.b16 %v6148, %v6140
  %v6245 = vpack.c.b16 %v6157, %v6149
  %v6246 = vpack.c.b16 %v6158, %v6150
  %v6247 = vpack.c.b16 %v6159, %v6151
  %v6248 = vpack.c.b16 %v6160, %v6152
  %v6249 = vpack.c.b16 %v6161, %v6153
  %v6250 = vpack.c.b16 %v6162, %v6154
  %v6251 = vpack.c.b16 %v6163, %v6155
  %v6252 = vpack.c.b16 %v6164, %v6156
  %v6253 = vpack.c.b16 %v6173, %v6165
  %v6254 = vpack.c.b16 %v6174, %v6166
  %v6255 = vpack.c.b16 %v6175, %v6167
  %v6256 = vpack.c.b16 %v6176, %v6168
  %v6257 = vpack.c.b16 %v6177, %v6169
  %v6258 = vpack.c.b16 %v6178, %v6170
  %v6259 = vpack.c.b16 %v6179, %v6171
  %v6260 = vpack.c.b16 %v6180, %v6172
  %v6261 = vpack.c.b16 %v6189, %v6181
  %v6262 = vpack.c.b16 %v6190, %v6182
  %v6263 = vpack.c.b16 %v6191, %v6183
  %v6264 = vpack.c.b16 %v6192, %v6184
  %v6265 = vpack.c.b16 %v6193, %v6185
  %v6266 = vpack.c.b16 %v6194, %v6186
  %v6267 = vpack.c.b16 %v6195, %v6187
  %v6268 = vpack.c.b16 %v6196, %v6188
  %v6269 = vpack.c.b16 %v6205, %v6197
  %v6270 = vpack.c.b16 %v6206, %v6198
  %v6271 = vpack.c.b16 %v6207, %v6199
  %v6272 = vpack.c.b16 %v6208, %v6200
  %v6273 = vpack.c.b16 %v6209, %v6201
  %v6274 = vpack.c.b16 %v6210, %v6202
  %v6275 = vpack.c.b16 %v6211, %v6203
  %v6276 = vpack.c.b16 %v6212, %v6204
  %v6469 = vunpack.c.l.b16 %v5889
  %v6470 = vunpack.c.l.b16 %v5890
  %v6471 = vunpack.c.l.b16 %v5891
  %v6472 = vunpack.c.l.b16 %v5892
  %v6473 = vunpack.c.l.b16 %v5893
  %v6474 = vunpack.c.l.b16 %v5894
  %v6475 = vunpack.c.l.b16 %v5895
  %v6476 = vunpack.c.l.b16 %v5896
  %v6477 = vunpack.c.l.b16 %v5897
  %v6478 = vunpack.c.l.b16 %v5898
  %v6479 = vunpack.c.l.b16 %v5899
  %v6480 = vunpack.c.l.b16 %v5900
  %v6481 = vunpack.c.l.b16 %v5901
  %v6482 = vunpack.c.l.b16 %v5902
  %v6483 = vunpack.c.l.b16 %v5903
  %v6484 = vunpack.c.l.b16 %v5904
  %v6485 = vunpack.c.l.b16 %v5905
  %v6486 = vunpack.c.l.b16 %v5906
  %v6487 = vunpack.c.l.b16 %v5907
  %v6488 = vunpack.c.l.b16 %v5908
  %v6489 = vunpack.c.l.b16 %v5909
  %v6490 = vunpack.c.l.b16 %v5910
  %v6491 = vunpack.c.l.b16 %v5911
  %v6492 = vunpack.c.l.b16 %v5912
  %v6493 = vunpack.c.l.b16 %v5913
  %v6494 = vunpack.c.l.b16 %v5914
  %v6495 = vunpack.c.l.b16 %v5915
  %v6496 = vunpack.c.l.b16 %v5916
  %v6497 = vunpack.c.l.b16 %v5917
  %v6498 = vunpack.c.l.b16 %v5918
  %v6499 = vunpack.c.l.b16 %v5919
  %v6500 = vunpack.c.l.b16 %v5920
  %v6501 = vunpack.c.l.b16 %v5921
  %v6502 = vunpack.c.l.b16 %v5922
  %v6503 = vunpack.c.l.b16 %v5923
  %v6504 = vunpack.c.l.b16 %v5924
  %v6505 = vunpack.c.l.b16 %v5925
  %v6506 = vunpack.c.l.b16 %v5926
  %v6507 = vunpack.c.l.b16 %v5927
  %v6508 = vunpack.c.l.b16 %v5928
  %v6509 = vunpack.c.l.b16 %v5929
  %v6510 = vunpack.c.l.b16 %v5930
  %v6511 = vunpack.c.l.b16 %v5931
  %v6512 = vunpack.c.l.b16 %v5932
  %v6513 = vunpack.c.l.b16 %v5933
  %v6514 = vunpack.c.l.b16 %v5934
  %v6515 = vunpack.c.l.b16 %v5935
  %v6516 = vunpack.c.l.b16 %v5936
  %v6517 = vunpack.c.l.b16 %v5937
  %v6518 = vunpack.c.l.b16 %v5938
  %v6519 = vunpack.c.l.b16 %v5939
  %v6520 = vunpack.c.l.b16 %v5940
  %v6521 = vunpack.c.l.b16 %v5941
  %v6522 = vunpack.c.l.b16 %v5942
  %v6523 = vunpack.c.l.b16 %v5943
  %v6524 = vunpack.c.l.b16 %v5944
  %v6525 = vunpack.c.l.b16 %v5945
  %v6526 = vunpack.c.l.b16 %v5946
  %v6527 = vunpack.c.l.b16 %v5947
  %v6528 = vunpack.c.l.b16 %v5948
  %v6529 = vunpack.c.l.b16 %v5949
  %v6530 = vunpack.c.l.b16 %v5950
  %v6531 = vunpack.c.l.b16 %v5951
  %v6532 = vunpack.c.l.b16 %v5952
  %v6533 = vunpack.c.l.b16 %v5953
  %v6534 = vunpack.c.l.b16 %v5954
  %v6535 = vunpack.c.l.b16 %v5955
  %v6536 = vunpack.c.l.b16 %v5956
  %v6537 = vunpack.c.l.b16 %v5957
  %v6538 = vunpack.c.l.b16 %v5958
  %v6539 = vunpack.c.l.b16 %v5959
  %v6540 = vunpack.c.l.b16 %v5960
  %v6541 = vunpack.c.l.b16 %v5961
  %v6542 = vunpack.c.l.b16 %v5962
  %v6543 = vunpack.c.l.b16 %v5963
  %v6544 = vunpack.c.l.b16 %v5964
  %v6545 = vunpack.c.l.b16 %v5965
  %v6546 = vunpack.c.l.b16 %v5966
  %v6547 = vunpack.c.l.b16 %v5967
  %v6548 = vunpack.c.l.b16 %v5968
  %v6549 = vunpack.c.l.b16 %v5969
  %v6550 = vunpack.c.l.b16 %v5970
  %v6551 = vunpack.c.l.b16 %v5971
  %v6552 = vunpack.c.l.b16 %v5972
  %v6553 = vunpack.c.l.b16 %v5973
  %v6554 = vunpack.c.l.b16 %v5974
  %v6555 = vunpack.c.l.b16 %v5975
  %v6556 = vunpack.c.l.b16 %v5976
  %v6557 = vunpack.c.l.b16 %v5977
  %v6558 = vunpack.c.l.b16 %v5978
  %v6559 = vunpack.c.l.b16 %v5979
  %v6560 = vunpack.c.l.b16 %v5980
  %v6561 = vunpack.c.l.b16 %v5981
  %v6562 = vunpack.c.l.b16 %v5982
  %v6563 = vunpack.c.l.b16 %v5983
  %v6564 = vunpack.c.l.b16 %v5984
  %v6565 = vunpack.c.l.b16 %v5985
  %v6566 = vunpack.c.l.b16 %v5986
  %v6567 = vunpack.c.l.b16 %v5987
  %v6568 = vunpack.c.l.b16 %v5988
  %v6569 = vunpack.c.l.b16 %v5989
  %v6570 = vunpack.c.l.b16 %v5990
  %v6571 = vunpack.c.l.b16 %v5991
  %v6572 = vunpack.c.l.b16 %v5992
  %v6573 = vunpack.c.l.b16 %v5993
  %v6574 = vunpack.c.l.b16 %v5994
  %v6575 = vunpack.c.l.b16 %v5995
  %v6576 = vunpack.c.l.b16 %v5996
  %v6577 = vunpack.c.l.b16 %v5997
  %v6578 = vunpack.c.l.b16 %v5998
  %v6579 = vunpack.c.l.b16 %v5999
  %v6580 = vunpack.c.l.b16 %v6000
  %v6581 = vunpack.c.l.b16 %v6001
  %v6582 = vunpack.c.l.b16 %v6002
  %v6583 = vunpack.c.l.b16 %v6003
  %v6584 = vunpack.c.l.b16 %v6004
  %v6585 = vunpack.c.l.b16 %v6005
  %v6586 = vunpack.c.l.b16 %v6006
  %v6587 = vunpack.c.l.b16 %v6007
  %v6588 = vunpack.c.l.b16 %v6008
  %v6589 = vunpack.c.l.b16 %v6009
  %v6590 = vunpack.c.l.b16 %v6010
  %v6591 = vunpack.c.l.b16 %v6011
  %v6592 = vunpack.c.l.b16 %v6012
  %v6593 = vunpack.c.l.b16 %v6013
  %v6594 = vunpack.c.l.b16 %v6014
  %v6595 = vunpack.c.l.b16 %v6015
  %v6596 = vunpack.c.l.b16 %v6016
  %v6597 = vpack.c.b16 %v6470, %v6469
  %v6598 = vpack.c.b16 %v6472, %v6471
  %v6599 = vpack.c.b16 %v6474, %v6473
  %v6600 = vpack.c.b16 %v6476, %v6475
  %v6601 = vpack.c.b16 %v6478, %v6477
  %v6602 = vpack.c.b16 %v6480, %v6479
  %v6603 = vpack.c.b16 %v6482, %v6481
  %v6604 = vpack.c.b16 %v6484, %v6483
  %v6605 = vpack.c.b16 %v6486, %v6485
  %v6606 = vpack.c.b16 %v6488, %v6487
  %v6607 = vpack.c.b16 %v6490, %v6489
  %v6608 = vpack.c.b16 %v6492, %v6491
  %v6609 = vpack.c.b16 %v6494, %v6493
  %v6610 = vpack.c.b16 %v6496, %v6495
  %v6611 = vpack.c.b16 %v6498, %v6497
  %v6612 = vpack.c.b16 %v6500, %v6499
  %v6613 = vpack.c.b16 %v6502, %v6501
  %v6614 = vpack.c.b16 %v6504, %v6503
  %v6615 = vpack.c.b16 %v6506, %v6505
  %v6616 = vpack.c.b16 %v6508, %v6507
  %v6617 = vpack.c.b16 %v6510, %v6509
  %v6618 = vpack.c.b16 %v6512, %v6511
  %v6619 = vpack.c.b16 %v6514, %v6513
  %v6620 = vpack.c.b16 %v6516, %v6515
  %v6621 = vpack.c.b16 %v6518, %v6517
  %v6622 = vpack.c.b16 %v6520, %v6519
  %v6623 = vpack.c.b16 %v6522, %v6521
  %v6624 = vpack.c.b16 %v6524, %v6523
  %v6625 = vpack.c.b16 %v6526, %v6525
  %v6626 = vpack.c.b16 %v6528, %v6527
  %v6627 = vpack.c.b16 %v6530, %v6529
  %v6628 = vpack.c.b16 %v6532, %v6531
  %v6629 = vpack.c.b16 %v6534, %v6533
  %v6630 = vpack.c.b16 %v6536, %v6535
  %v6631 = vpack.c.b16 %v6538, %v6537
  %v6632 = vpack.c.b16 %v6540, %v6539
  %v6633 = vpack.c.b16 %v6542, %v6541
  %v6634 = vpack.c.b16 %v6544, %v6543
  %v6635 = vpack.c.b16 %v6546, %v6545
  %v6636 = vpack.c.b16 %v6548, %v6547
  %v6637 = vpack.c.b16 %v6550, %v6549
  %v6638 = vpack.c.b16 %v6552, %v6551
  %v6639 = vpack.c.b16 %v6554, %v6553
  %v6640 = vpack.c.b16 %v6556, %v6555
  %v6641 = vpack.c.b16 %v6558, %v6557
  %v6642 = vpack.c.b16 %v6560, %v6559
  %v6643 = vpack.c.b16 %v6562, %v6561
  %v6644 = vpack.c.b16 %v6564, %v6563
  %v6645 = vpack.c.b16 %v6566, %v6565
  %v6646 = vpack.c.b16 %v6568, %v6567
  %v6647 = vpack.c.b16 %v6570, %v6569
  %v6648 = vpack.c.b16 %v6572, %v6571
  %v6649 = vpack.c.b16 %v6574, %v6573
  %v6650 = vpack.c.b16 %v6576, %v6575
  %v6651 = vpack.c.b16 %v6578, %v6577
  %v6652 = vpack.c.b16 %v6580, %v6579
  %v6653 = vpack.c.b16 %v6582, %v6581
  %v6654 = vpack.c.b16 %v6584, %v6583
  %v6655 = vpack.c.b16 %v6586, %v6585
  %v6656 = vpack.c.b16 %v6588, %v6587
  %v6657 = vpack.c.b16 %v6590, %v6589
  %v6658 = vpack.c.b16 %v6592, %v6591
  %v6659 = vpack.c.b16 %v6594, %v6593
  %v6660 = vpack.c.b16 %v6596, %v6595
  %6725 = vmatpush.bf16.msra.mxu0 %v6604
  %6726 = vmatpush.bf16.msra.mxu0 %v6603
  %6727 = vmatpush.bf16.msra.mxu0 %v6602
  %6728 = vmatpush.bf16.msra.mxu0 %v6601
  %6729 = vmatpush.bf16.msra.mxu0 %v6600
  %6730 = vmatpush.bf16.msra.mxu0 %v6599
  %6731 = vmatpush.bf16.msra.mxu0 %v6598
  %6732 = vmatpush.bf16.msra.mxu0 %v6597
  %6733 = vmatmul.bf16.gmra.mxu0 %v6213
  %v6734 = vpop.f32.mrf.mxu0
  %v6735 = vadd.f32 %v6019, %v6734
  %v6736 = vpop.f32.mrf.mxu0
  %v6737 = vadd.f32 %v6019, %v6736
  %6738 = vmatmul.bf16.gmra.mxu0 %v6221
  %v6739 = vpop.f32.mrf.mxu0
  %v6740 = vadd.f32 %v6019, %v6739
  %v6741 = vpop.f32.mrf.mxu0
  %v6742 = vadd.f32 %v6019, %v6741
  %6743 = vmatmul.bf16.gmra.mxu0 %v6229
  %v6744 = vpop.f32.mrf.mxu0
  %v6745 = vadd.f32 %v6019, %v6744
  %v6746 = vpop.f32.mrf.mxu0
  %v6747 = vadd.f32 %v6019, %v6746
  %6748 = vmatmul.bf16.gmra.mxu0 %v6237
  %v6749 = vpop.f32.mrf.mxu0
  %v6750 = vadd.f32 %v6019, %v6749
  %v6751 = vpop.f32.mrf.mxu0
  %v6752 = vadd.f32 %v6019, %v6751
  %6753 = vmatmul.bf16.gmra.mxu0 %v6245
  %v6754 = vpop.f32.mrf.mxu0
  %v6755 = vadd.f32 %v6019, %v6754
  %v6756 = vpop.f32.mrf.mxu0
  %v6757 = vadd.f32 %v6019, %v6756
  %6758 = vmatmul.bf16.gmra.mxu0 %v6253
  %v6759 = vpop.f32.mrf.mxu0
  %v6760 = vadd.f32 %v6019, %v6759
  %v6761 = vpop.f32.mrf.mxu0
  %v6762 = vadd.f32 %v6019, %v6761
  %6763 = vmatmul.bf16.gmra.mxu0 %v6261
  %v6764 = vpop.f32.mrf.mxu0
  %v6765 = vadd.f32 %v6019, %v6764
  %v6766 = vpop.f32.mrf.mxu0
  %v6767 = vadd.f32 %v6019, %v6766
  %6768 = vmatmul.bf16.gmra.mxu0 %v6269
  %v6769 = vpop.f32.mrf.mxu0
  %v6770 = vadd.f32 %v6019, %v6769
  %v6771 = vpop.f32.mrf.mxu0
  %v6772 = vadd.f32 %v6019, %v6771
  %6773 = vdwg.mxu0
  %6774 = vmatpush.bf16.msra.mxu0 %v6612
  %6775 = vmatpush.bf16.msra.mxu0 %v6611
  %6776 = vmatpush.bf16.msra.mxu0 %v6610
  %6777 = vmatpush.bf16.msra.mxu0 %v6609
  %6778 = vmatpush.bf16.msra.mxu0 %v6608
  %6779 = vmatpush.bf16.msra.mxu0 %v6607
  %6780 = vmatpush.bf16.msra.mxu0 %v6606
  %6781 = vmatpush.bf16.msra.mxu0 %v6605
  %6782 = vmatmul.bf16.gmra.mxu0 %v6214
  %v6783 = vpop.f32.mrf.mxu0
  %v6784 = vadd.f32 %v6735, %v6783
  %v6785 = vpop.f32.mrf.mxu0
  %v6786 = vadd.f32 %v6737, %v6785
  %6787 = vmatmul.bf16.gmra.mxu0 %v6222
  %v6788 = vpop.f32.mrf.mxu0
  %v6789 = vadd.f32 %v6740, %v6788
  %v6790 = vpop.f32.mrf.mxu0
  %v6791 = vadd.f32 %v6742, %v6790
  %6792 = vmatmul.bf16.gmra.mxu0 %v6230
  %v6793 = vpop.f32.mrf.mxu0
  %v6794 = vadd.f32 %v6745, %v6793
  %v6795 = vpop.f32.mrf.mxu0
  %v6796 = vadd.f32 %v6747, %v6795
  %6797 = vmatmul.bf16.gmra.mxu0 %v6238
  %v6798 = vpop.f32.mrf.mxu0
  %v6799 = vadd.f32 %v6750, %v6798
  %v6800 = vpop.f32.mrf.mxu0
  %v6801 = vadd.f32 %v6752, %v6800
  %6802 = vmatmul.bf16.gmra.mxu0 %v6246
  %v6803 = vpop.f32.mrf.mxu0
  %v6804 = vadd.f32 %v6755, %v6803
  %v6805 = vpop.f32.mrf.mxu0
  %v6806 = vadd.f32 %v6757, %v6805
  %6807 = vmatmul.bf16.gmra.mxu0 %v6254
  %v6808 = vpop.f32.mrf.mxu0
  %v6809 = vadd.f32 %v6760, %v6808
  %v6810 = vpop.f32.mrf.mxu0
  %v6811 = vadd.f32 %v6762, %v6810
  %6812 = vmatmul.bf16.gmra.mxu0 %v6262
  %v6813 = vpop.f32.mrf.mxu0
  %v6814 = vadd.f32 %v6765, %v6813
  %v6815 = vpop.f32.mrf.mxu0
  %v6816 = vadd.f32 %v6767, %v6815
  %6817 = vmatmul.bf16.gmra.mxu0 %v6270
  %v6818 = vpop.f32.mrf.mxu0
  %v6819 = vadd.f32 %v6770, %v6818
  %v6820 = vpop.f32.mrf.mxu0
  %v6821 = vadd.f32 %v6772, %v6820
  %6822 = vdwg.mxu0
  %6823 = vmatpush.bf16.msra.mxu0 %v6620
  %6824 = vmatpush.bf16.msra.mxu0 %v6619
  %6825 = vmatpush.bf16.msra.mxu0 %v6618
  %6826 = vmatpush.bf16.msra.mxu0 %v6617
  %6827 = vmatpush.bf16.msra.mxu0 %v6616
  %6828 = vmatpush.bf16.msra.mxu0 %v6615
  %6829 = vmatpush.bf16.msra.mxu0 %v6614
  %6830 = vmatpush.bf16.msra.mxu0 %v6613
  %6831 = vmatmul.bf16.gmra.mxu0 %v6215
  %v6832 = vpop.f32.mrf.mxu0
  %v6833 = vadd.f32 %v6784, %v6832
  %v6834 = vpop.f32.mrf.mxu0
  %v6835 = vadd.f32 %v6786, %v6834
  %6836 = vmatmul.bf16.gmra.mxu0 %v6223
  %v6837 = vpop.f32.mrf.mxu0
  %v6838 = vadd.f32 %v6789, %v6837
  %v6839 = vpop.f32.mrf.mxu0
  %v6840 = vadd.f32 %v6791, %v6839
  %6841 = vmatmul.bf16.gmra.mxu0 %v6231
  %v6842 = vpop.f32.mrf.mxu0
  %v6843 = vadd.f32 %v6794, %v6842
  %v6844 = vpop.f32.mrf.mxu0
  %v6845 = vadd.f32 %v6796, %v6844
  %6846 = vmatmul.bf16.gmra.mxu0 %v6239
  %v6847 = vpop.f32.mrf.mxu0
  %v6848 = vadd.f32 %v6799, %v6847
  %v6849 = vpop.f32.mrf.mxu0
  %v6850 = vadd.f32 %v6801, %v6849
  %6851 = vmatmul.bf16.gmra.mxu0 %v6247
  %v6852 = vpop.f32.mrf.mxu0
  %v6853 = vadd.f32 %v6804, %v6852
  %v6854 = vpop.f32.mrf.mxu0
  %v6855 = vadd.f32 %v6806, %v6854
  %6856 = vmatmul.bf16.gmra.mxu0 %v6255
  %v6857 = vpop.f32.mrf.mxu0
  %v6858 = vadd.f32 %v6809, %v6857
  %v6859 = vpop.f32.mrf.mxu0
  %v6860 = vadd.f32 %v6811, %v6859
  %6861 = vmatmul.bf16.gmra.mxu0 %v6263
  %v6862 = vpop.f32.mrf.mxu0
  %v6863 = vadd.f32 %v6814, %v6862
  %v6864 = vpop.f32.mrf.mxu0
  %v6865 = vadd.f32 %v6816, %v6864
  %6866 = vmatmul.bf16.gmra.mxu0 %v6271
  %v6867 = vpop.f32.mrf.mxu0
  %v6868 = vadd.f32 %v6819, %v6867
  %v6869 = vpop.f32.mrf.mxu0
  %v6870 = vadd.f32 %v6821, %v6869
  %6871 = vdwg.mxu0
  %6872 = vmatpush.bf16.msra.mxu0 %v6628
  %6873 = vmatpush.bf16.msra.mxu0 %v6627
  %6874 = vmatpush.bf16.msra.mxu0 %v6626
  %6875 = vmatpush.bf16.msra.mxu0 %v6625
  %6876 = vmatpush.bf16.msra.mxu0 %v6624
  %6877 = vmatpush.bf16.msra.mxu0 %v6623
  %6878 = vmatpush.bf16.msra.mxu0 %v6622
  %6879 = vmatpush.bf16.msra.mxu0 %v6621
  %6880 = vmatmul.bf16.gmra.mxu0 %v6216
  %v6881 = vpop.f32.mrf.mxu0
  %v6882 = vadd.f32 %v6833, %v6881
  %v6883 = vpop.f32.mrf.mxu0
  %v6884 = vadd.f32 %v6835, %v6883
  %6885 = vmatmul.bf16.gmra.mxu0 %v6224
  %v6886 = vpop.f32.mrf.mxu0
  %v6887 = vadd.f32 %v6838, %v6886
  %v6888 = vpop.f32.mrf.mxu0
  %v6889 = vadd.f32 %v6840, %v6888
  %6890 = vmatmul.bf16.gmra.mxu0 %v6232
  %v6891 = vpop.f32.mrf.mxu0
  %v6892 = vadd.f32 %v6843, %v6891
  %v6893 = vpop.f32.mrf.mxu0
  %v6894 = vadd.f32 %v6845, %v6893
  %6895 = vmatmul.bf16.gmra.mxu0 %v6240
  %v6896 = vpop.f32.mrf.mxu0
  %v6897 = vadd.f32 %v6848, %v6896
  %v6898 = vpop.f32.mrf.mxu0
  %v6899 = vadd.f32 %v6850, %v6898
  %6900 = vmatmul.bf16.gmra.mxu0 %v6248
  %v6901 = vpop.f32.mrf.mxu0
  %v6902 = vadd.f32 %v6853, %v6901
  %v6903 = vpop.f32.mrf.mxu0
  %v6904 = vadd.f32 %v6855, %v6903
  %6905 = vmatmul.bf16.gmra.mxu0 %v6256
  %v6906 = vpop.f32.mrf.mxu0
  %v6907 = vadd.f32 %v6858, %v6906
  %v6908 = vpop.f32.mrf.mxu0
  %v6909 = vadd.f32 %v6860, %v6908
  %6910 = vmatmul.bf16.gmra.mxu0 %v6264
  %v6911 = vpop.f32.mrf.mxu0
  %v6912 = vadd.f32 %v6863, %v6911
  %v6913 = vpop.f32.mrf.mxu0
  %v6914 = vadd.f32 %v6865, %v6913
  %6915 = vmatmul.bf16.gmra.mxu0 %v6272
  %v6916 = vpop.f32.mrf.mxu0
  %v6917 = vadd.f32 %v6868, %v6916
  %v6918 = vpop.f32.mrf.mxu0
  %v6919 = vadd.f32 %v6870, %v6918
  %6920 = vdwg.mxu0
  %6921 = vmatpush.bf16.msra.mxu0 %v6636
  %6922 = vmatpush.bf16.msra.mxu0 %v6635
  %6923 = vmatpush.bf16.msra.mxu0 %v6634
  %6924 = vmatpush.bf16.msra.mxu0 %v6633
  %6925 = vmatpush.bf16.msra.mxu0 %v6632
  %6926 = vmatpush.bf16.msra.mxu0 %v6631
  %6927 = vmatpush.bf16.msra.mxu0 %v6630
  %6928 = vmatpush.bf16.msra.mxu0 %v6629
  %6929 = vmatmul.bf16.gmra.mxu0 %v6217
  %v6930 = vpop.f32.mrf.mxu0
  %v6931 = vadd.f32 %v6882, %v6930
  %v6932 = vpop.f32.mrf.mxu0
  %v6933 = vadd.f32 %v6884, %v6932
  %6934 = vmatmul.bf16.gmra.mxu0 %v6225
  %v6935 = vpop.f32.mrf.mxu0
  %v6936 = vadd.f32 %v6887, %v6935
  %v6937 = vpop.f32.mrf.mxu0
  %v6938 = vadd.f32 %v6889, %v6937
  %6939 = vmatmul.bf16.gmra.mxu0 %v6233
  %v6940 = vpop.f32.mrf.mxu0
  %v6941 = vadd.f32 %v6892, %v6940
  %v6942 = vpop.f32.mrf.mxu0
  %v6943 = vadd.f32 %v6894, %v6942
  %6944 = vmatmul.bf16.gmra.mxu0 %v6241
  %v6945 = vpop.f32.mrf.mxu0
  %v6946 = vadd.f32 %v6897, %v6945
  %v6947 = vpop.f32.mrf.mxu0
  %v6948 = vadd.f32 %v6899, %v6947
  %6949 = vmatmul.bf16.gmra.mxu0 %v6249
  %v6950 = vpop.f32.mrf.mxu0
  %v6951 = vadd.f32 %v6902, %v6950
  %v6952 = vpop.f32.mrf.mxu0
  %v6953 = vadd.f32 %v6904, %v6952
  %6954 = vmatmul.bf16.gmra.mxu0 %v6257
  %v6955 = vpop.f32.mrf.mxu0
  %v6956 = vadd.f32 %v6907, %v6955
  %v6957 = vpop.f32.mrf.mxu0
  %v6958 = vadd.f32 %v6909, %v6957
  %6959 = vmatmul.bf16.gmra.mxu0 %v6265
  %v6960 = vpop.f32.mrf.mxu0
  %v6961 = vadd.f32 %v6912, %v6960
  %v6962 = vpop.f32.mrf.mxu0
  %v6963 = vadd.f32 %v6914, %v6962
  %6964 = vmatmul.bf16.gmra.mxu0 %v6273
  %v6965 = vpop.f32.mrf.mxu0
  %v6966 = vadd.f32 %v6917, %v6965
  %v6967 = vpop.f32.mrf.mxu0
  %v6968 = vadd.f32 %v6919, %v6967
  %6969 = vdwg.mxu0
  %6970 = vmatpush.bf16.msra.mxu0 %v6644
  %6971 = vmatpush.bf16.msra.mxu0 %v6643
  %6972 = vmatpush.bf16.msra.mxu0 %v6642
  %6973 = vmatpush.bf16.msra.mxu0 %v6641
  %6974 = vmatpush.bf16.msra.mxu0 %v6640
  %6975 = vmatpush.bf16.msra.mxu0 %v6639
  %6976 = vmatpush.bf16.msra.mxu0 %v6638
  %6977 = vmatpush.bf16.msra.mxu0 %v6637
  %6978 = vmatmul.bf16.gmra.mxu0 %v6218
  %v6979 = vpop.f32.mrf.mxu0
  %v6980 = vadd.f32 %v6931, %v6979
  %v6981 = vpop.f32.mrf.mxu0
  %v6982 = vadd.f32 %v6933, %v6981
  %6983 = vmatmul.bf16.gmra.mxu0 %v6226
  %v6984 = vpop.f32.mrf.mxu0
  %v6985 = vadd.f32 %v6936, %v6984
  %v6986 = vpop.f32.mrf.mxu0
  %v6987 = vadd.f32 %v6938, %v6986
  %6988 = vmatmul.bf16.gmra.mxu0 %v6234
  %v6989 = vpop.f32.mrf.mxu0
  %v6990 = vadd.f32 %v6941, %v6989
  %v6991 = vpop.f32.mrf.mxu0
  %v6992 = vadd.f32 %v6943, %v6991
  %6993 = vmatmul.bf16.gmra.mxu0 %v6242
  %v6994 = vpop.f32.mrf.mxu0
  %v6995 = vadd.f32 %v6946, %v6994
  %v6996 = vpop.f32.mrf.mxu0
  %v6997 = vadd.f32 %v6948, %v6996
  %6998 = vmatmul.bf16.gmra.mxu0 %v6250
  %v6999 = vpop.f32.mrf.mxu0
  %v7000 = vadd.f32 %v6951, %v6999
  %v7001 = vpop.f32.mrf.mxu0
  %v7002 = vadd.f32 %v6953, %v7001
  %7003 = vmatmul.bf16.gmra.mxu0 %v6258
  %v7004 = vpop.f32.mrf.mxu0
  %v7005 = vadd.f32 %v6956, %v7004
  %v7006 = vpop.f32.mrf.mxu0
  %v7007 = vadd.f32 %v6958, %v7006
  %7008 = vmatmul.bf16.gmra.mxu0 %v6266
  %v7009 = vpop.f32.mrf.mxu0
  %v7010 = vadd.f32 %v6961, %v7009
  %v7011 = vpop.f32.mrf.mxu0
  %v7012 = vadd.f32 %v6963, %v7011
  %7013 = vmatmul.bf16.gmra.mxu0 %v6274
  %v7014 = vpop.f32.mrf.mxu0
  %v7015 = vadd.f32 %v6966, %v7014
  %v7016 = vpop.f32.mrf.mxu0
  %v7017 = vadd.f32 %v6968, %v7016
  %7018 = vdwg.mxu0
  %7019 = vmatpush.bf16.msra.mxu0 %v6652
  %7020 = vmatpush.bf16.msra.mxu0 %v6651
  %7021 = vmatpush.bf16.msra.mxu0 %v6650
  %7022 = vmatpush.bf16.msra.mxu0 %v6649
  %7023 = vmatpush.bf16.msra.mxu0 %v6648
  %7024 = vmatpush.bf16.msra.mxu0 %v6647
  %7025 = vmatpush.bf16.msra.mxu0 %v6646
  %7026 = vmatpush.bf16.msra.mxu0 %v6645
  %7027 = vmatmul.bf16.gmra.mxu0 %v6219
  %v7028 = vpop.f32.mrf.mxu0
  %v7029 = vadd.f32 %v6980, %v7028
  %v7030 = vpop.f32.mrf.mxu0
  %v7031 = vadd.f32 %v6982, %v7030
  %7032 = vmatmul.bf16.gmra.mxu0 %v6227
  %v7033 = vpop.f32.mrf.mxu0
  %v7034 = vadd.f32 %v6985, %v7033
  %v7035 = vpop.f32.mrf.mxu0
  %v7036 = vadd.f32 %v6987, %v7035
  %7037 = vmatmul.bf16.gmra.mxu0 %v6235
  %v7038 = vpop.f32.mrf.mxu0
  %v7039 = vadd.f32 %v6990, %v7038
  %v7040 = vpop.f32.mrf.mxu0
  %v7041 = vadd.f32 %v6992, %v7040
  %7042 = vmatmul.bf16.gmra.mxu0 %v6243
  %v7043 = vpop.f32.mrf.mxu0
  %v7044 = vadd.f32 %v6995, %v7043
  %v7045 = vpop.f32.mrf.mxu0
  %v7046 = vadd.f32 %v6997, %v7045
  %7047 = vmatmul.bf16.gmra.mxu0 %v6251
  %v7048 = vpop.f32.mrf.mxu0
  %v7049 = vadd.f32 %v7000, %v7048
  %v7050 = vpop.f32.mrf.mxu0
  %v7051 = vadd.f32 %v7002, %v7050
  %7052 = vmatmul.bf16.gmra.mxu0 %v6259
  %v7053 = vpop.f32.mrf.mxu0
  %v7054 = vadd.f32 %v7005, %v7053
  %v7055 = vpop.f32.mrf.mxu0
  %v7056 = vadd.f32 %v7007, %v7055
  %7057 = vmatmul.bf16.gmra.mxu0 %v6267
  %v7058 = vpop.f32.mrf.mxu0
  %v7059 = vadd.f32 %v7010, %v7058
  %v7060 = vpop.f32.mrf.mxu0
  %v7061 = vadd.f32 %v7012, %v7060
  %7062 = vmatmul.bf16.gmra.mxu0 %v6275
  %v7063 = vpop.f32.mrf.mxu0
  %v7064 = vadd.f32 %v7015, %v7063
  %v7065 = vpop.f32.mrf.mxu0
  %v7066 = vadd.f32 %v7017, %v7065
  %7067 = vdwg.mxu0
  %7068 = vmatpush.bf16.msra.mxu0 %v6660
  %7069 = vmatpush.bf16.msra.mxu0 %v6659
  %7070 = vmatpush.bf16.msra.mxu0 %v6658
  %7071 = vmatpush.bf16.msra.mxu0 %v6657
  %7072 = vmatpush.bf16.msra.mxu0 %v6656
  %7073 = vmatpush.bf16.msra.mxu0 %v6655
  %7074 = vmatpush.bf16.msra.mxu0 %v6654
  %7075 = vmatpush.bf16.msra.mxu0 %v6653
  %7076 = vmatmul.bf16.gmra.mxu0 %v6220
  %v7077 = vpop.f32.mrf.mxu0
  %v7078 = vadd.f32 %v7029, %v7077
  %v7079 = vpop.f32.mrf.mxu0
  %v7080 = vadd.f32 %v7031, %v7079
  %7081 = vmatmul.bf16.gmra.mxu0 %v6228
  %v7082 = vpop.f32.mrf.mxu0
  %v7083 = vadd.f32 %v7034, %v7082
  %v7084 = vpop.f32.mrf.mxu0
  %v7085 = vadd.f32 %v7036, %v7084
  %7086 = vmatmul.bf16.gmra.mxu0 %v6236
  %v7087 = vpop.f32.mrf.mxu0
  %v7088 = vadd.f32 %v7039, %v7087
  %v7089 = vpop.f32.mrf.mxu0
  %v7090 = vadd.f32 %v7041, %v7089
  %7091 = vmatmul.bf16.gmra.mxu0 %v6244
  %v7092 = vpop.f32.mrf.mxu0
  %v7093 = vadd.f32 %v7044, %v7092
  %v7094 = vpop.f32.mrf.mxu0
  %v7095 = vadd.f32 %v7046, %v7094
  %7096 = vmatmul.bf16.gmra.mxu0 %v6252
  %v7097 = vpop.f32.mrf.mxu0
  %v7098 = vadd.f32 %v7049, %v7097
  %v7099 = vpop.f32.mrf.mxu0
  %v7100 = vadd.f32 %v7051, %v7099
  %7101 = vmatmul.bf16.gmra.mxu0 %v6260
  %v7102 = vpop.f32.mrf.mxu0
  %v7103 = vadd.f32 %v7054, %v7102
  %v7104 = vpop.f32.mrf.mxu0
  %v7105 = vadd.f32 %v7056, %v7104
  %7106 = vmatmul.bf16.gmra.mxu0 %v6268
  %v7107 = vpop.f32.mrf.mxu0
  %v7108 = vadd.f32 %v7059, %v7107
  %v7109 = vpop.f32.mrf.mxu0
  %v7110 = vadd.f32 %v7061, %v7109
  %7111 = vmatmul.bf16.gmra.mxu0 %v6276
  %v7112 = vpop.f32.mrf.mxu0
  %v7113 = vadd.f32 %v7064, %v7112
  %v7114 = vpop.f32.mrf.mxu0
  %v7115 = vadd.f32 %v7066, %v7114
  %7116 = vdwg.mxu0
  %v7117 = vmax.f32 %v7078, 0.0
  %v7118 = vmax.f32 %v7080, 0.0
  %v7119 = vmax.f32 %v7083, 0.0
  %v7120 = vmax.f32 %v7085, 0.0
  %v7121 = vmax.f32 %v7088, 0.0
  %v7122 = vmax.f32 %v7090, 0.0
  %v7123 = vmax.f32 %v7093, 0.0
  %v7124 = vmax.f32 %v7095, 0.0
  %v7125 = vmax.f32 %v7098, 0.0
  %v7126 = vmax.f32 %v7100, 0.0
  %v7127 = vmax.f32 %v7103, 0.0
  %v7128 = vmax.f32 %v7105, 0.0
  %v7129 = vmax.f32 %v7108, 0.0
  %v7130 = vmax.f32 %v7110, 0.0
  %v7131 = vmax.f32 %v7113, 0.0
  %v7132 = vmax.f32 %v7115, 0.0
  %7133 = vst.msk [vmem:[#allocation6] sm:$0xff] %vm5373, %v7117
  %7135 = vrot.lane.b32.xlu0 %v7118, 64
  %v7136 = vpop.permute.xlu0 %7135
  %7138 = vst.msk [vmem:[#allocation6] sm:$0xff] %vm5455, %v7136
  %7139 = vst.msk [vmem:[#allocation6 + $0x8] sm:$0xff] %vm5373, %v7119
  %7141 = vrot.lane.b32.xlu0 %v7120, 64
  %v7142 = vpop.permute.xlu0 %7141
  %7144 = vst.msk [vmem:[#allocation6 + $0x8] sm:$0xff] %vm5455, %v7142
  %7145 = vst.msk [vmem:[#allocation6 + $0x10] sm:$0xff] %vm5373, %v7121
  %7147 = vrot.lane.b32.xlu0 %v7122, 64
  %v7148 = vpop.permute.xlu0 %7147
  %7150 = vst.msk [vmem:[#allocation6 + $0x10] sm:$0xff] %vm5455, %v7148
  %7151 = vst.msk [vmem:[#allocation6 + $0x18] sm:$0xff] %vm5373, %v7123
  %7153 = vrot.lane.b32.xlu0 %v7124, 64
  %v7154 = vpop.permute.xlu0 %7153
  %7156 = vst.msk [vmem:[#allocation6 + $0x18] sm:$0xff] %vm5455, %v7154
  %7157 = vst.msk [vmem:[#allocation6 + $0x20] sm:$0xff] %vm5373, %v7125
  %7159 = vrot.lane.b32.xlu0 %v7126, 64
  %v7160 = vpop.permute.xlu0 %7159
  %7162 = vst.msk [vmem:[#allocation6 + $0x20] sm:$0xff] %vm5455, %v7160
  %7163 = vst.msk [vmem:[#allocation6 + $0x28] sm:$0xff] %vm5373, %v7127
  %7165 = vrot.lane.b32.xlu0 %v7128, 64
  %v7166 = vpop.permute.xlu0 %7165
  %7168 = vst.msk [vmem:[#allocation6 + $0x28] sm:$0xff] %vm5455, %v7166
  %7169 = vst.msk [vmem:[#allocation6 + $0x30] sm:$0xff] %vm5373, %v7129
  %7171 = vrot.lane.b32.xlu0 %v7130, 64
  %v7172 = vpop.permute.xlu0 %7171
  %7174 = vst.msk [vmem:[#allocation6 + $0x30] sm:$0xff] %vm5455, %v7172
  %7175 = vst.msk [vmem:[#allocation6 + $0x38] sm:$0xff] %vm5373, %v7131
  %7177 = vrot.lane.b32.xlu0 %v7132, 64
  %v7178 = vpop.permute.xlu0 %7177
  %7180 = vst.msk [vmem:[#allocation6 + $0x38] sm:$0xff] %vm5455, %v7178
  %v7181 = vld [vmem:[#allocation6] sm:$0xff]
  %v7182 = vld [vmem:[#allocation6 + $0x8] sm:$0xff]
  %v7183 = vld [vmem:[#allocation6 + $0x10] sm:$0xff]
  %v7184 = vld [vmem:[#allocation6 + $0x18] sm:$0xff]
  %v7185 = vld [vmem:[#allocation6 + $0x20] sm:$0xff]
  %v7186 = vld [vmem:[#allocation6 + $0x28] sm:$0xff]
  %v7187 = vld [vmem:[#allocation6 + $0x30] sm:$0xff]
  %v7188 = vld [vmem:[#allocation6 + $0x38] sm:$0xff]
  %v7189 = vpack.c.bf16 %v7181, %v7181
  %v7190 = vpack.c.bf16 %v7182, %v7182
  %v7191 = vpack.c.bf16 %v7183, %v7183
  %v7192 = vpack.c.bf16 %v7184, %v7184
  %v7193 = vpack.c.bf16 %v7185, %v7185
  %v7194 = vpack.c.bf16 %v7186, %v7186
  %v7195 = vpack.c.bf16 %v7187, %v7187
  %v7196 = vpack.c.bf16 %v7188, %v7188
  %v7197 = vld [vmem:[%s7] sm:$0xff]
  %v7198 = vld [vmem:[%s7 + $0x8] sm:$0xff]
  %v7199 = vld [vmem:[%s7 + $0x10] sm:$0xff]
  %v7200 = vld [vmem:[%s7 + $0x18] sm:$0xff]
  %v7201 = vld [vmem:[%s7 + $0x20] sm:$0xff]
  %v7202 = vld [vmem:[%s7 + $0x28] sm:$0xff]
  %v7203 = vld [vmem:[%s7 + $0x30] sm:$0xff]
  %v7204 = vld [vmem:[%s7 + $0x38] sm:$0xff]
  %v7205 = vld [vmem:[%s7 + $0x40] sm:$0xff]
  %v7206 = vld [vmem:[%s7 + $0x48] sm:$0xff]
  %v7207 = vld [vmem:[%s7 + $0x50] sm:$0xff]
  %v7208 = vld [vmem:[%s7 + $0x58] sm:$0xff]
  %v7209 = vld [vmem:[%s7 + $0x60] sm:$0xff]
  %v7210 = vld [vmem:[%s7 + $0x68] sm:$0xff]
  %v7211 = vld [vmem:[%s7 + $0x70] sm:$0xff]
  %v7212 = vld [vmem:[%s7 + $0x78] sm:$0xff]
  %v7213 = vld [vmem:[%s7 + $0x80] sm:$0xff]
  %v7214 = vld [vmem:[%s7 + $0x88] sm:$0xff]
  %v7215 = vld [vmem:[%s7 + $0x90] sm:$0xff]
  %v7216 = vld [vmem:[%s7 + $0x98] sm:$0xff]
  %v7217 = vld [vmem:[%s7 + $0xa0] sm:$0xff]
  %v7218 = vld [vmem:[%s7 + $0xa8] sm:$0xff]
  %v7219 = vld [vmem:[%s7 + $0xb0] sm:$0xff]
  %v7220 = vld [vmem:[%s7 + $0xb8] sm:$0xff]
  %v7221 = vld [vmem:[%s7 + $0xc0] sm:$0xff]
  %v7222 = vld [vmem:[%s7 + $0xc8] sm:$0xff]
  %v7223 = vld [vmem:[%s7 + $0xd0] sm:$0xff]
  %v7224 = vld [vmem:[%s7 + $0xd8] sm:$0xff]
  %v7225 = vld [vmem:[%s7 + $0xe0] sm:$0xff]
  %v7226 = vld [vmem:[%s7 + $0xe8] sm:$0xff]
  %v7227 = vld [vmem:[%s7 + $0xf0] sm:$0xff]
  %v7228 = vld [vmem:[%s7 + $0xf8] sm:$0xff]
  %v7229 = vld [vmem:[%s7 + $0x100] sm:$0xff]
  %v7230 = vld [vmem:[%s7 + $0x108] sm:$0xff]
  %v7231 = vld [vmem:[%s7 + $0x110] sm:$0xff]
  %v7232 = vld [vmem:[%s7 + $0x118] sm:$0xff]
  %v7233 = vld [vmem:[%s7 + $0x120] sm:$0xff]
  %v7234 = vld [vmem:[%s7 + $0x128] sm:$0xff]
  %v7235 = vld [vmem:[%s7 + $0x130] sm:$0xff]
  %v7236 = vld [vmem:[%s7 + $0x138] sm:$0xff]
  %v7237 = vld [vmem:[%s7 + $0x140] sm:$0xff]
  %v7238 = vld [vmem:[%s7 + $0x148] sm:$0xff]
  %v7239 = vld [vmem:[%s7 + $0x150] sm:$0xff]
  %v7240 = vld [vmem:[%s7 + $0x158] sm:$0xff]
  %v7241 = vld [vmem:[%s7 + $0x160] sm:$0xff]
  %v7242 = vld [vmem:[%s7 + $0x168] sm:$0xff]
  %v7243 = vld [vmem:[%s7 + $0x170] sm:$0xff]
  %v7244 = vld [vmem:[%s7 + $0x178] sm:$0xff]
  %v7245 = vld [vmem:[%s7 + $0x180] sm:$0xff]
  %v7246 = vld [vmem:[%s7 + $0x188] sm:$0xff]
  %v7247 = vld [vmem:[%s7 + $0x190] sm:$0xff]
  %v7248 = vld [vmem:[%s7 + $0x198] sm:$0xff]
  %v7249 = vld [vmem:[%s7 + $0x1a0] sm:$0xff]
  %v7250 = vld [vmem:[%s7 + $0x1a8] sm:$0xff]
  %v7251 = vld [vmem:[%s7 + $0x1b0] sm:$0xff]
  %v7252 = vld [vmem:[%s7 + $0x1b8] sm:$0xff]
  %v7253 = vld [vmem:[%s7 + $0x1c0] sm:$0xff]
  %v7254 = vld [vmem:[%s7 + $0x1c8] sm:$0xff]
  %v7255 = vld [vmem:[%s7 + $0x1d0] sm:$0xff]
  %v7256 = vld [vmem:[%s7 + $0x1d8] sm:$0xff]
  %v7257 = vld [vmem:[%s7 + $0x1e0] sm:$0xff]
  %v7258 = vld [vmem:[%s7 + $0x1e8] sm:$0xff]
  %v7259 = vld [vmem:[%s7 + $0x1f0] sm:$0xff]
  %v7260 = vld [vmem:[%s7 + $0x1f8] sm:$0xff]
  %v7261 = vld [vmem:[%s7 + $0x200] sm:$0xff]
  %v7262 = vld [vmem:[%s7 + $0x208] sm:$0xff]
  %v7263 = vld [vmem:[%s7 + $0x210] sm:$0xff]
  %v7264 = vld [vmem:[%s7 + $0x218] sm:$0xff]
  %v7265 = vld [vmem:[%s7 + $0x220] sm:$0xff]
  %v7266 = vld [vmem:[%s7 + $0x228] sm:$0xff]
  %v7267 = vld [vmem:[%s7 + $0x230] sm:$0xff]
  %v7268 = vld [vmem:[%s7 + $0x238] sm:$0xff]
  %v7269 = vld [vmem:[%s7 + $0x240] sm:$0xff]
  %v7270 = vld [vmem:[%s7 + $0x248] sm:$0xff]
  %v7271 = vld [vmem:[%s7 + $0x250] sm:$0xff]
  %v7272 = vld [vmem:[%s7 + $0x258] sm:$0xff]
  %v7273 = vld [vmem:[%s7 + $0x260] sm:$0xff]
  %v7274 = vld [vmem:[%s7 + $0x268] sm:$0xff]
  %v7275 = vld [vmem:[%s7 + $0x270] sm:$0xff]
  %v7276 = vld [vmem:[%s7 + $0x278] sm:$0xff]
  %v7277 = vld [vmem:[%s7 + $0x280] sm:$0xff]
  %v7278 = vld [vmem:[%s7 + $0x288] sm:$0xff]
  %v7279 = vld [vmem:[%s7 + $0x290] sm:$0xff]
  %v7280 = vld [vmem:[%s7 + $0x298] sm:$0xff]
  %v7281 = vld [vmem:[%s7 + $0x2a0] sm:$0xff]
  %v7282 = vld [vmem:[%s7 + $0x2a8] sm:$0xff]
  %v7283 = vld [vmem:[%s7 + $0x2b0] sm:$0xff]
  %v7284 = vld [vmem:[%s7 + $0x2b8] sm:$0xff]
  %v7285 = vld [vmem:[%s7 + $0x2c0] sm:$0xff]
  %v7286 = vld [vmem:[%s7 + $0x2c8] sm:$0xff]
  %v7287 = vld [vmem:[%s7 + $0x2d0] sm:$0xff]
  %v7288 = vld [vmem:[%s7 + $0x2d8] sm:$0xff]
  %v7289 = vld [vmem:[%s7 + $0x2e0] sm:$0xff]
  %v7290 = vld [vmem:[%s7 + $0x2e8] sm:$0xff]
  %v7291 = vld [vmem:[%s7 + $0x2f0] sm:$0xff]
  %v7292 = vld [vmem:[%s7 + $0x2f8] sm:$0xff]
  %v7293 = vld [vmem:[%s7 + $0x300] sm:$0xff]
  %v7294 = vld [vmem:[%s7 + $0x308] sm:$0xff]
  %v7295 = vld [vmem:[%s7 + $0x310] sm:$0xff]
  %v7296 = vld [vmem:[%s7 + $0x318] sm:$0xff]
  %v7297 = vld [vmem:[%s7 + $0x320] sm:$0xff]
  %v7298 = vld [vmem:[%s7 + $0x328] sm:$0xff]
  %v7299 = vld [vmem:[%s7 + $0x330] sm:$0xff]
  %v7300 = vld [vmem:[%s7 + $0x338] sm:$0xff]
  %v7301 = vld [vmem:[%s7 + $0x340] sm:$0xff]
  %v7302 = vld [vmem:[%s7 + $0x348] sm:$0xff]
  %v7303 = vld [vmem:[%s7 + $0x350] sm:$0xff]
  %v7304 = vld [vmem:[%s7 + $0x358] sm:$0xff]
  %v7305 = vld [vmem:[%s7 + $0x360] sm:$0xff]
  %v7306 = vld [vmem:[%s7 + $0x368] sm:$0xff]
  %v7307 = vld [vmem:[%s7 + $0x370] sm:$0xff]
  %v7308 = vld [vmem:[%s7 + $0x378] sm:$0xff]
  %v7309 = vld [vmem:[%s7 + $0x380] sm:$0xff]
  %v7310 = vld [vmem:[%s7 + $0x388] sm:$0xff]
  %v7311 = vld [vmem:[%s7 + $0x390] sm:$0xff]
  %v7312 = vld [vmem:[%s7 + $0x398] sm:$0xff]
  %v7313 = vld [vmem:[%s7 + $0x3a0] sm:$0xff]
  %v7314 = vld [vmem:[%s7 + $0x3a8] sm:$0xff]
  %v7315 = vld [vmem:[%s7 + $0x3b0] sm:$0xff]
  %v7316 = vld [vmem:[%s7 + $0x3b8] sm:$0xff]
  %v7317 = vld [vmem:[%s7 + $0x3c0] sm:$0xff]
  %v7318 = vld [vmem:[%s7 + $0x3c8] sm:$0xff]
  %v7319 = vld [vmem:[%s7 + $0x3d0] sm:$0xff]
  %v7320 = vld [vmem:[%s7 + $0x3d8] sm:$0xff]
  %v7321 = vld [vmem:[%s7 + $0x3e0] sm:$0xff]
  %v7322 = vld [vmem:[%s7 + $0x3e8] sm:$0xff]
  %v7323 = vld [vmem:[%s7 + $0x3f0] sm:$0xff]
  %v7324 = vld [vmem:[%s7 + $0x3f8] sm:$0xff]
  %v7325 = vld [vmem:[%s8] sm:$0x3]
  %v7327 = vperm.slane %v7325, 0
  %v7328 = vperm.slane %v7325, 1
  %v7459 = vunpack.c.l.b16 %v7197
  %v7460 = vunpack.c.h.b16 %v7197
  %v7461 = vunpack.c.l.b16 %v7198
  %v7462 = vunpack.c.h.b16 %v7198
  %v7463 = vunpack.c.l.b16 %v7199
  %v7464 = vunpack.c.h.b16 %v7199
  %v7465 = vunpack.c.l.b16 %v7200
  %v7466 = vunpack.c.h.b16 %v7200
  %v7467 = vunpack.c.l.b16 %v7201
  %v7468 = vunpack.c.h.b16 %v7201
  %v7469 = vunpack.c.l.b16 %v7202
  %v7470 = vunpack.c.h.b16 %v7202
  %v7471 = vunpack.c.l.b16 %v7203
  %v7472 = vunpack.c.h.b16 %v7203
  %v7473 = vunpack.c.l.b16 %v7204
  %v7474 = vunpack.c.h.b16 %v7204
  %v7475 = vunpack.c.l.b16 %v7205
  %v7476 = vunpack.c.h.b16 %v7205
  %v7477 = vunpack.c.l.b16 %v7206
  %v7478 = vunpack.c.h.b16 %v7206
  %v7479 = vunpack.c.l.b16 %v7207
  %v7480 = vunpack.c.h.b16 %v7207
  %v7481 = vunpack.c.l.b16 %v7208
  %v7482 = vunpack.c.h.b16 %v7208
  %v7483 = vunpack.c.l.b16 %v7209
  %v7484 = vunpack.c.h.b16 %v7209
  %v7485 = vunpack.c.l.b16 %v7210
  %v7486 = vunpack.c.h.b16 %v7210
  %v7487 = vunpack.c.l.b16 %v7211
  %v7488 = vunpack.c.h.b16 %v7211
  %v7489 = vunpack.c.l.b16 %v7212
  %v7490 = vunpack.c.h.b16 %v7212
  %v7491 = vunpack.c.l.b16 %v7213
  %v7492 = vunpack.c.h.b16 %v7213
  %v7493 = vunpack.c.l.b16 %v7214
  %v7494 = vunpack.c.h.b16 %v7214
  %v7495 = vunpack.c.l.b16 %v7215
  %v7496 = vunpack.c.h.b16 %v7215
  %v7497 = vunpack.c.l.b16 %v7216
  %v7498 = vunpack.c.h.b16 %v7216
  %v7499 = vunpack.c.l.b16 %v7217
  %v7500 = vunpack.c.h.b16 %v7217
  %v7501 = vunpack.c.l.b16 %v7218
  %v7502 = vunpack.c.h.b16 %v7218
  %v7503 = vunpack.c.l.b16 %v7219
  %v7504 = vunpack.c.h.b16 %v7219
  %v7505 = vunpack.c.l.b16 %v7220
  %v7506 = vunpack.c.h.b16 %v7220
  %v7507 = vunpack.c.l.b16 %v7221
  %v7508 = vunpack.c.h.b16 %v7221
  %v7509 = vunpack.c.l.b16 %v7222
  %v7510 = vunpack.c.h.b16 %v7222
  %v7511 = vunpack.c.l.b16 %v7223
  %v7512 = vunpack.c.h.b16 %v7223
  %v7513 = vunpack.c.l.b16 %v7224
  %v7514 = vunpack.c.h.b16 %v7224
  %v7515 = vunpack.c.l.b16 %v7225
  %v7516 = vunpack.c.h.b16 %v7225
  %v7517 = vunpack.c.l.b16 %v7226
  %v7518 = vunpack.c.h.b16 %v7226
  %v7519 = vunpack.c.l.b16 %v7227
  %v7520 = vunpack.c.h.b16 %v7227
  %v7521 = vunpack.c.l.b16 %v7228
  %v7522 = vunpack.c.h.b16 %v7228
  %v7523 = vunpack.c.l.b16 %v7229
  %v7524 = vunpack.c.h.b16 %v7229
  %v7525 = vunpack.c.l.b16 %v7230
  %v7526 = vunpack.c.h.b16 %v7230
  %v7527 = vunpack.c.l.b16 %v7231
  %v7528 = vunpack.c.h.b16 %v7231
  %v7529 = vunpack.c.l.b16 %v7232
  %v7530 = vunpack.c.h.b16 %v7232
  %v7531 = vunpack.c.l.b16 %v7233
  %v7532 = vunpack.c.h.b16 %v7233
  %v7533 = vunpack.c.l.b16 %v7234
  %v7534 = vunpack.c.h.b16 %v7234
  %v7535 = vunpack.c.l.b16 %v7235
  %v7536 = vunpack.c.h.b16 %v7235
  %v7537 = vunpack.c.l.b16 %v7236
  %v7538 = vunpack.c.h.b16 %v7236
  %v7539 = vunpack.c.l.b16 %v7237
  %v7540 = vunpack.c.h.b16 %v7237
  %v7541 = vunpack.c.l.b16 %v7238
  %v7542 = vunpack.c.h.b16 %v7238
  %v7543 = vunpack.c.l.b16 %v7239
  %v7544 = vunpack.c.h.b16 %v7239
  %v7545 = vunpack.c.l.b16 %v7240
  %v7546 = vunpack.c.h.b16 %v7240
  %v7547 = vunpack.c.l.b16 %v7241
  %v7548 = vunpack.c.h.b16 %v7241
  %v7549 = vunpack.c.l.b16 %v7242
  %v7550 = vunpack.c.h.b16 %v7242
  %v7551 = vunpack.c.l.b16 %v7243
  %v7552 = vunpack.c.h.b16 %v7243
  %v7553 = vunpack.c.l.b16 %v7244
  %v7554 = vunpack.c.h.b16 %v7244
  %v7555 = vunpack.c.l.b16 %v7245
  %v7556 = vunpack.c.h.b16 %v7245
  %v7557 = vunpack.c.l.b16 %v7246
  %v7558 = vunpack.c.h.b16 %v7246
  %v7559 = vunpack.c.l.b16 %v7247
  %v7560 = vunpack.c.h.b16 %v7247
  %v7561 = vunpack.c.l.b16 %v7248
  %v7562 = vunpack.c.h.b16 %v7248
  %v7563 = vunpack.c.l.b16 %v7249
  %v7564 = vunpack.c.h.b16 %v7249
  %v7565 = vunpack.c.l.b16 %v7250
  %v7566 = vunpack.c.h.b16 %v7250
  %v7567 = vunpack.c.l.b16 %v7251
  %v7568 = vunpack.c.h.b16 %v7251
  %v7569 = vunpack.c.l.b16 %v7252
  %v7570 = vunpack.c.h.b16 %v7252
  %v7571 = vunpack.c.l.b16 %v7253
  %v7572 = vunpack.c.h.b16 %v7253
  %v7573 = vunpack.c.l.b16 %v7254
  %v7574 = vunpack.c.h.b16 %v7254
  %v7575 = vunpack.c.l.b16 %v7255
  %v7576 = vunpack.c.h.b16 %v7255
  %v7577 = vunpack.c.l.b16 %v7256
  %v7578 = vunpack.c.h.b16 %v7256
  %v7579 = vunpack.c.l.b16 %v7257
  %v7580 = vunpack.c.h.b16 %v7257
  %v7581 = vunpack.c.l.b16 %v7258
  %v7582 = vunpack.c.h.b16 %v7258
  %v7583 = vunpack.c.l.b16 %v7259
  %v7584 = vunpack.c.h.b16 %v7259
  %v7585 = vunpack.c.l.b16 %v7260
  %v7586 = vunpack.c.h.b16 %v7260
  %v7587 = vunpack.c.l.b16 %v7261
  %v7588 = vunpack.c.h.b16 %v7261
  %v7589 = vunpack.c.l.b16 %v7262
  %v7590 = vunpack.c.h.b16 %v7262
  %v7591 = vunpack.c.l.b16 %v7263
  %v7592 = vunpack.c.h.b16 %v7263
  %v7593 = vunpack.c.l.b16 %v7264
  %v7594 = vunpack.c.h.b16 %v7264
  %v7595 = vunpack.c.l.b16 %v7265
  %v7596 = vunpack.c.h.b16 %v7265
  %v7597 = vunpack.c.l.b16 %v7266
  %v7598 = vunpack.c.h.b16 %v7266
  %v7599 = vunpack.c.l.b16 %v7267
  %v7600 = vunpack.c.h.b16 %v7267
  %v7601 = vunpack.c.l.b16 %v7268
  %v7602 = vunpack.c.h.b16 %v7268
  %v7603 = vunpack.c.l.b16 %v7269
  %v7604 = vunpack.c.h.b16 %v7269
  %v7605 = vunpack.c.l.b16 %v7270
  %v7606 = vunpack.c.h.b16 %v7270
  %v7607 = vunpack.c.l.b16 %v7271
  %v7608 = vunpack.c.h.b16 %v7271
  %v7609 = vunpack.c.l.b16 %v7272
  %v7610 = vunpack.c.h.b16 %v7272
  %v7611 = vunpack.c.l.b16 %v7273
  %v7612 = vunpack.c.h.b16 %v7273
  %v7613 = vunpack.c.l.b16 %v7274
  %v7614 = vunpack.c.h.b16 %v7274
  %v7615 = vunpack.c.l.b16 %v7275
  %v7616 = vunpack.c.h.b16 %v7275
  %v7617 = vunpack.c.l.b16 %v7276
  %v7618 = vunpack.c.h.b16 %v7276
  %v7619 = vunpack.c.l.b16 %v7277
  %v7620 = vunpack.c.h.b16 %v7277
  %v7621 = vunpack.c.l.b16 %v7278
  %v7622 = vunpack.c.h.b16 %v7278
  %v7623 = vunpack.c.l.b16 %v7279
  %v7624 = vunpack.c.h.b16 %v7279
  %v7625 = vunpack.c.l.b16 %v7280
  %v7626 = vunpack.c.h.b16 %v7280
  %v7627 = vunpack.c.l.b16 %v7281
  %v7628 = vunpack.c.h.b16 %v7281
  %v7629 = vunpack.c.l.b16 %v7282
  %v7630 = vunpack.c.h.b16 %v7282
  %v7631 = vunpack.c.l.b16 %v7283
  %v7632 = vunpack.c.h.b16 %v7283
  %v7633 = vunpack.c.l.b16 %v7284
  %v7634 = vunpack.c.h.b16 %v7284
  %v7635 = vunpack.c.l.b16 %v7285
  %v7636 = vunpack.c.h.b16 %v7285
  %v7637 = vunpack.c.l.b16 %v7286
  %v7638 = vunpack.c.h.b16 %v7286
  %v7639 = vunpack.c.l.b16 %v7287
  %v7640 = vunpack.c.h.b16 %v7287
  %v7641 = vunpack.c.l.b16 %v7288
  %v7642 = vunpack.c.h.b16 %v7288
  %v7643 = vunpack.c.l.b16 %v7289
  %v7644 = vunpack.c.h.b16 %v7289
  %v7645 = vunpack.c.l.b16 %v7290
  %v7646 = vunpack.c.h.b16 %v7290
  %v7647 = vunpack.c.l.b16 %v7291
  %v7648 = vunpack.c.h.b16 %v7291
  %v7649 = vunpack.c.l.b16 %v7292
  %v7650 = vunpack.c.h.b16 %v7292
  %v7651 = vunpack.c.l.b16 %v7293
  %v7652 = vunpack.c.h.b16 %v7293
  %v7653 = vunpack.c.l.b16 %v7294
  %v7654 = vunpack.c.h.b16 %v7294
  %v7655 = vunpack.c.l.b16 %v7295
  %v7656 = vunpack.c.h.b16 %v7295
  %v7657 = vunpack.c.l.b16 %v7296
  %v7658 = vunpack.c.h.b16 %v7296
  %v7659 = vunpack.c.l.b16 %v7297
  %v7660 = vunpack.c.h.b16 %v7297
  %v7661 = vunpack.c.l.b16 %v7298
  %v7662 = vunpack.c.h.b16 %v7298
  %v7663 = vunpack.c.l.b16 %v7299
  %v7664 = vunpack.c.h.b16 %v7299
  %v7665 = vunpack.c.l.b16 %v7300
  %v7666 = vunpack.c.h.b16 %v7300
  %v7667 = vunpack.c.l.b16 %v7301
  %v7668 = vunpack.c.h.b16 %v7301
  %v7669 = vunpack.c.l.b16 %v7302
  %v7670 = vunpack.c.h.b16 %v7302
  %v7671 = vunpack.c.l.b16 %v7303
  %v7672 = vunpack.c.h.b16 %v7303
  %v7673 = vunpack.c.l.b16 %v7304
  %v7674 = vunpack.c.h.b16 %v7304
  %v7675 = vunpack.c.l.b16 %v7305
  %v7676 = vunpack.c.h.b16 %v7305
  %v7677 = vunpack.c.l.b16 %v7306
  %v7678 = vunpack.c.h.b16 %v7306
  %v7679 = vunpack.c.l.b16 %v7307
  %v7680 = vunpack.c.h.b16 %v7307
  %v7681 = vunpack.c.l.b16 %v7308
  %v7682 = vunpack.c.h.b16 %v7308
  %v7683 = vunpack.c.l.b16 %v7309
  %v7684 = vunpack.c.h.b16 %v7309
  %v7685 = vunpack.c.l.b16 %v7310
  %v7686 = vunpack.c.h.b16 %v7310
  %v7687 = vunpack.c.l.b16 %v7311
  %v7688 = vunpack.c.h.b16 %v7311
  %v7689 = vunpack.c.l.b16 %v7312
  %v7690 = vunpack.c.h.b16 %v7312
  %v7691 = vunpack.c.l.b16 %v7313
  %v7692 = vunpack.c.h.b16 %v7313
  %v7693 = vunpack.c.l.b16 %v7314
  %v7694 = vunpack.c.h.b16 %v7314
  %v7695 = vunpack.c.l.b16 %v7315
  %v7696 = vunpack.c.h.b16 %v7315
  %v7697 = vunpack.c.l.b16 %v7316
  %v7698 = vunpack.c.h.b16 %v7316
  %v7699 = vunpack.c.l.b16 %v7317
  %v7700 = vunpack.c.h.b16 %v7317
  %v7701 = vunpack.c.l.b16 %v7318
  %v7702 = vunpack.c.h.b16 %v7318
  %v7703 = vunpack.c.l.b16 %v7319
  %v7704 = vunpack.c.h.b16 %v7319
  %v7705 = vunpack.c.l.b16 %v7320
  %v7706 = vunpack.c.h.b16 %v7320
  %v7707 = vunpack.c.l.b16 %v7321
  %v7708 = vunpack.c.h.b16 %v7321
  %v7709 = vunpack.c.l.b16 %v7322
  %v7710 = vunpack.c.h.b16 %v7322
  %v7711 = vunpack.c.l.b16 %v7323
  %v7712 = vunpack.c.h.b16 %v7323
  %v7713 = vunpack.c.l.b16 %v7324
  %v7714 = vunpack.c.h.b16 %v7324
  %v7715 = vpack.c.b16 %v7461, %v7459
  %v7716 = vpack.c.b16 %v7462, %v7460
  %v7717 = vpack.c.b16 %v7465, %v7463
  %v7718 = vpack.c.b16 %v7466, %v7464
  %v7719 = vpack.c.b16 %v7469, %v7467
  %v7720 = vpack.c.b16 %v7470, %v7468
  %v7721 = vpack.c.b16 %v7473, %v7471
  %v7722 = vpack.c.b16 %v7474, %v7472
  %v7723 = vpack.c.b16 %v7477, %v7475
  %v7724 = vpack.c.b16 %v7478, %v7476
  %v7725 = vpack.c.b16 %v7481, %v7479
  %v7726 = vpack.c.b16 %v7482, %v7480
  %v7727 = vpack.c.b16 %v7485, %v7483
  %v7728 = vpack.c.b16 %v7486, %v7484
  %v7729 = vpack.c.b16 %v7489, %v7487
  %v7730 = vpack.c.b16 %v7490, %v7488
  %v7731 = vpack.c.b16 %v7493, %v7491
  %v7732 = vpack.c.b16 %v7494, %v7492
  %v7733 = vpack.c.b16 %v7497, %v7495
  %v7734 = vpack.c.b16 %v7498, %v7496
  %v7735 = vpack.c.b16 %v7501, %v7499
  %v7736 = vpack.c.b16 %v7502, %v7500
  %v7737 = vpack.c.b16 %v7505, %v7503
  %v7738 = vpack.c.b16 %v7506, %v7504
  %v7739 = vpack.c.b16 %v7509, %v7507
  %v7740 = vpack.c.b16 %v7510, %v7508
  %v7741 = vpack.c.b16 %v7513, %v7511
  %v7742 = vpack.c.b16 %v7514, %v7512
  %v7743 = vpack.c.b16 %v7517, %v7515
  %v7744 = vpack.c.b16 %v7518, %v7516
  %v7745 = vpack.c.b16 %v7521, %v7519
  %v7746 = vpack.c.b16 %v7522, %v7520
  %v7747 = vpack.c.b16 %v7525, %v7523
  %v7748 = vpack.c.b16 %v7526, %v7524
  %v7749 = vpack.c.b16 %v7529, %v7527
  %v7750 = vpack.c.b16 %v7530, %v7528
  %v7751 = vpack.c.b16 %v7533, %v7531
  %v7752 = vpack.c.b16 %v7534, %v7532
  %v7753 = vpack.c.b16 %v7537, %v7535
  %v7754 = vpack.c.b16 %v7538, %v7536
  %v7755 = vpack.c.b16 %v7541, %v7539
  %v7756 = vpack.c.b16 %v7542, %v7540
  %v7757 = vpack.c.b16 %v7545, %v7543
  %v7758 = vpack.c.b16 %v7546, %v7544
  %v7759 = vpack.c.b16 %v7549, %v7547
  %v7760 = vpack.c.b16 %v7550, %v7548
  %v7761 = vpack.c.b16 %v7553, %v7551
  %v7762 = vpack.c.b16 %v7554, %v7552
  %v7763 = vpack.c.b16 %v7557, %v7555
  %v7764 = vpack.c.b16 %v7558, %v7556
  %v7765 = vpack.c.b16 %v7561, %v7559
  %v7766 = vpack.c.b16 %v7562, %v7560
  %v7767 = vpack.c.b16 %v7565, %v7563
  %v7768 = vpack.c.b16 %v7566, %v7564
  %v7769 = vpack.c.b16 %v7569, %v7567
  %v7770 = vpack.c.b16 %v7570, %v7568
  %v7771 = vpack.c.b16 %v7573, %v7571
  %v7772 = vpack.c.b16 %v7574, %v7572
  %v7773 = vpack.c.b16 %v7577, %v7575
  %v7774 = vpack.c.b16 %v7578, %v7576
  %v7775 = vpack.c.b16 %v7581, %v7579
  %v7776 = vpack.c.b16 %v7582, %v7580
  %v7777 = vpack.c.b16 %v7585, %v7583
  %v7778 = vpack.c.b16 %v7586, %v7584
  %v7779 = vpack.c.b16 %v7589, %v7587
  %v7780 = vpack.c.b16 %v7590, %v7588
  %v7781 = vpack.c.b16 %v7593, %v7591
  %v7782 = vpack.c.b16 %v7594, %v7592
  %v7783 = vpack.c.b16 %v7597, %v7595
  %v7784 = vpack.c.b16 %v7598, %v7596
  %v7785 = vpack.c.b16 %v7601, %v7599
  %v7786 = vpack.c.b16 %v7602, %v7600
  %v7787 = vpack.c.b16 %v7605, %v7603
  %v7788 = vpack.c.b16 %v7606, %v7604
  %v7789 = vpack.c.b16 %v7609, %v7607
  %v7790 = vpack.c.b16 %v7610, %v7608
  %v7791 = vpack.c.b16 %v7613, %v7611
  %v7792 = vpack.c.b16 %v7614, %v7612
  %v7793 = vpack.c.b16 %v7617, %v7615
  %v7794 = vpack.c.b16 %v7618, %v7616
  %v7795 = vpack.c.b16 %v7621, %v7619
  %v7796 = vpack.c.b16 %v7622, %v7620
  %v7797 = vpack.c.b16 %v7625, %v7623
  %v7798 = vpack.c.b16 %v7626, %v7624
  %v7799 = vpack.c.b16 %v7629, %v7627
  %v7800 = vpack.c.b16 %v7630, %v7628
  %v7801 = vpack.c.b16 %v7633, %v7631
  %v7802 = vpack.c.b16 %v7634, %v7632
  %v7803 = vpack.c.b16 %v7637, %v7635
  %v7804 = vpack.c.b16 %v7638, %v7636
  %v7805 = vpack.c.b16 %v7641, %v7639
  %v7806 = vpack.c.b16 %v7642, %v7640
  %v7807 = vpack.c.b16 %v7645, %v7643
  %v7808 = vpack.c.b16 %v7646, %v7644
  %v7809 = vpack.c.b16 %v7649, %v7647
  %v7810 = vpack.c.b16 %v7650, %v7648
  %v7811 = vpack.c.b16 %v7653, %v7651
  %v7812 = vpack.c.b16 %v7654, %v7652
  %v7813 = vpack.c.b16 %v7657, %v7655
  %v7814 = vpack.c.b16 %v7658, %v7656
  %v7815 = vpack.c.b16 %v7661, %v7659
  %v7816 = vpack.c.b16 %v7662, %v7660
  %v7817 = vpack.c.b16 %v7665, %v7663
  %v7818 = vpack.c.b16 %v7666, %v7664
  %v7819 = vpack.c.b16 %v7669, %v7667
  %v7820 = vpack.c.b16 %v7670, %v7668
  %v7821 = vpack.c.b16 %v7673, %v7671
  %v7822 = vpack.c.b16 %v7674, %v7672
  %v7823 = vpack.c.b16 %v7677, %v7675
  %v7824 = vpack.c.b16 %v7678, %v7676
  %v7825 = vpack.c.b16 %v7681, %v7679
  %v7826 = vpack.c.b16 %v7682, %v7680
  %v7827 = vpack.c.b16 %v7685, %v7683
  %v7828 = vpack.c.b16 %v7686, %v7684
  %v7829 = vpack.c.b16 %v7689, %v7687
  %v7830 = vpack.c.b16 %v7690, %v7688
  %v7831 = vpack.c.b16 %v7693, %v7691
  %v7832 = vpack.c.b16 %v7694, %v7692
  %v7833 = vpack.c.b16 %v7697, %v7695
  %v7834 = vpack.c.b16 %v7698, %v7696
  %v7835 = vpack.c.b16 %v7701, %v7699
  %v7836 = vpack.c.b16 %v7702, %v7700
  %v7837 = vpack.c.b16 %v7705, %v7703
  %v7838 = vpack.c.b16 %v7706, %v7704
  %v7839 = vpack.c.b16 %v7709, %v7707
  %v7840 = vpack.c.b16 %v7710, %v7708
  %v7841 = vpack.c.b16 %v7713, %v7711
  %v7842 = vpack.c.b16 %v7714, %v7712
  %7971 = vmatpush.bf16.msra.mxu0 %v7729
  %7972 = vmatpush.bf16.msra.mxu0 %v7727
  %7973 = vmatpush.bf16.msra.mxu0 %v7725
  %7974 = vmatpush.bf16.msra.mxu0 %v7723
  %7975 = vmatpush.bf16.msra.mxu0 %v7721
  %7976 = vmatpush.bf16.msra.mxu0 %v7719
  %7977 = vmatpush.bf16.msra.mxu0 %v7717
  %7978 = vmatpush.bf16.msra.mxu0 %v7715
  %7979 = vmatmul.bf16.gmra.mxu0 %v7189
  %v7980 = vpop.f32.mrf.mxu0
  %v7981 = vadd.f32 %v7327, %v7980
  %v7982 = vpop.f32.mrf.mxu0
  %7983 = vdwg.mxu0
  %7984 = vmatpush.bf16.msra.mxu0 %v7745
  %7985 = vmatpush.bf16.msra.mxu0 %v7743
  %7986 = vmatpush.bf16.msra.mxu0 %v7741
  %7987 = vmatpush.bf16.msra.mxu0 %v7739
  %7988 = vmatpush.bf16.msra.mxu0 %v7737
  %7989 = vmatpush.bf16.msra.mxu0 %v7735
  %7990 = vmatpush.bf16.msra.mxu0 %v7733
  %7991 = vmatpush.bf16.msra.mxu0 %v7731
  %7992 = vmatmul.bf16.gmra.mxu0 %v7190
  %v7993 = vpop.f32.mrf.mxu0
  %v7994 = vadd.f32 %v7981, %v7993
  %v7995 = vpop.f32.mrf.mxu0
  %7996 = vdwg.mxu0
  %7997 = vmatpush.bf16.msra.mxu0 %v7761
  %7998 = vmatpush.bf16.msra.mxu0 %v7759
  %7999 = vmatpush.bf16.msra.mxu0 %v7757
  %8000 = vmatpush.bf16.msra.mxu0 %v7755
  %8001 = vmatpush.bf16.msra.mxu0 %v7753
  %8002 = vmatpush.bf16.msra.mxu0 %v7751
  %8003 = vmatpush.bf16.msra.mxu0 %v7749
  %8004 = vmatpush.bf16.msra.mxu0 %v7747
  %8005 = vmatmul.bf16.gmra.mxu0 %v7191
  %v8006 = vpop.f32.mrf.mxu0
  %v8007 = vadd.f32 %v7994, %v8006
  %v8008 = vpop.f32.mrf.mxu0
  %8009 = vdwg.mxu0
  %8010 = vmatpush.bf16.msra.mxu0 %v7777
  %8011 = vmatpush.bf16.msra.mxu0 %v7775
  %8012 = vmatpush.bf16.msra.mxu0 %v7773
  %8013 = vmatpush.bf16.msra.mxu0 %v7771
  %8014 = vmatpush.bf16.msra.mxu0 %v7769
  %8015 = vmatpush.bf16.msra.mxu0 %v7767
  %8016 = vmatpush.bf16.msra.mxu0 %v7765
  %8017 = vmatpush.bf16.msra.mxu0 %v7763
  %8018 = vmatmul.bf16.gmra.mxu0 %v7192
  %v8019 = vpop.f32.mrf.mxu0
  %v8020 = vadd.f32 %v8007, %v8019
  %v8021 = vpop.f32.mrf.mxu0
  %8022 = vdwg.mxu0
  %8023 = vmatpush.bf16.msra.mxu0 %v7793
  %8024 = vmatpush.bf16.msra.mxu0 %v7791
  %8025 = vmatpush.bf16.msra.mxu0 %v7789
  %8026 = vmatpush.bf16.msra.mxu0 %v7787
  %8027 = vmatpush.bf16.msra.mxu0 %v7785
  %8028 = vmatpush.bf16.msra.mxu0 %v7783
  %8029 = vmatpush.bf16.msra.mxu0 %v7781
  %8030 = vmatpush.bf16.msra.mxu0 %v7779
  %8031 = vmatmul.bf16.gmra.mxu0 %v7193
  %v8032 = vpop.f32.mrf.mxu0
  %v8033 = vadd.f32 %v8020, %v8032
  %v8034 = vpop.f32.mrf.mxu0
  %8035 = vdwg.mxu0
  %8036 = vmatpush.bf16.msra.mxu0 %v7809
  %8037 = vmatpush.bf16.msra.mxu0 %v7807
  %8038 = vmatpush.bf16.msra.mxu0 %v7805
  %8039 = vmatpush.bf16.msra.mxu0 %v7803
  %8040 = vmatpush.bf16.msra.mxu0 %v7801
  %8041 = vmatpush.bf16.msra.mxu0 %v7799
  %8042 = vmatpush.bf16.msra.mxu0 %v7797
  %8043 = vmatpush.bf16.msra.mxu0 %v7795
  %8044 = vmatmul.bf16.gmra.mxu0 %v7194
  %v8045 = vpop.f32.mrf.mxu0
  %v8046 = vadd.f32 %v8033, %v8045
  %v8047 = vpop.f32.mrf.mxu0
  %8048 = vdwg.mxu0
  %8049 = vmatpush.bf16.msra.mxu0 %v7825
  %8050 = vmatpush.bf16.msra.mxu0 %v7823
  %8051 = vmatpush.bf16.msra.mxu0 %v7821
  %8052 = vmatpush.bf16.msra.mxu0 %v7819
  %8053 = vmatpush.bf16.msra.mxu0 %v7817
  %8054 = vmatpush.bf16.msra.mxu0 %v7815
  %8055 = vmatpush.bf16.msra.mxu0 %v7813
  %8056 = vmatpush.bf16.msra.mxu0 %v7811
  %8057 = vmatmul.bf16.gmra.mxu0 %v7195
  %v8058 = vpop.f32.mrf.mxu0
  %v8059 = vadd.f32 %v8046, %v8058
  %v8060 = vpop.f32.mrf.mxu0
  %8061 = vdwg.mxu0
  %8062 = vmatpush.bf16.msra.mxu0 %v7841
  %8063 = vmatpush.bf16.msra.mxu0 %v7839
  %8064 = vmatpush.bf16.msra.mxu0 %v7837
  %8065 = vmatpush.bf16.msra.mxu0 %v7835
  %8066 = vmatpush.bf16.msra.mxu0 %v7833
  %8067 = vmatpush.bf16.msra.mxu0 %v7831
  %8068 = vmatpush.bf16.msra.mxu0 %v7829
  %8069 = vmatpush.bf16.msra.mxu0 %v7827
  %8070 = vmatmul.bf16.gmra.mxu0 %v7196
  %v8071 = vpop.f32.mrf.mxu0
  %v8072 = vadd.f32 %v8059, %v8071
  %v8073 = vpop.f32.mrf.mxu0
  %8074 = vdwg.mxu0
  %8075 = vmatpush.bf16.msra.mxu0 %v7730
  %8076 = vmatpush.bf16.msra.mxu0 %v7728
  %8077 = vmatpush.bf16.msra.mxu0 %v7726
  %8078 = vmatpush.bf16.msra.mxu0 %v7724
  %8079 = vmatpush.bf16.msra.mxu0 %v7722
  %8080 = vmatpush.bf16.msra.mxu0 %v7720
  %8081 = vmatpush.bf16.msra.mxu0 %v7718
  %8082 = vmatpush.bf16.msra.mxu0 %v7716
  %8083 = vmatmul.bf16.gmra.mxu0 %v7189
  %v8084 = vpop.f32.mrf.mxu0
  %v8085 = vadd.f32 %v7328, %v8084
  %v8086 = vpop.f32.mrf.mxu0
  %8087 = vdwg.mxu0
  %8088 = vmatpush.bf16.msra.mxu0 %v7746
  %8089 = vmatpush.bf16.msra.mxu0 %v7744
  %8090 = vmatpush.bf16.msra.mxu0 %v7742
  %8091 = vmatpush.bf16.msra.mxu0 %v7740
  %8092 = vmatpush.bf16.msra.mxu0 %v7738
  %8093 = vmatpush.bf16.msra.mxu0 %v7736
  %8094 = vmatpush.bf16.msra.mxu0 %v7734
  %8095 = vmatpush.bf16.msra.mxu0 %v7732
  %8096 = vmatmul.bf16.gmra.mxu0 %v7190
  %v8097 = vpop.f32.mrf.mxu0
  %v8098 = vadd.f32 %v8085, %v8097
  %v8099 = vpop.f32.mrf.mxu0
  %8100 = vdwg.mxu0
  %8101 = vmatpush.bf16.msra.mxu0 %v7762
  %8102 = vmatpush.bf16.msra.mxu0 %v7760
  %8103 = vmatpush.bf16.msra.mxu0 %v7758
  %8104 = vmatpush.bf16.msra.mxu0 %v7756
  %8105 = vmatpush.bf16.msra.mxu0 %v7754
  %8106 = vmatpush.bf16.msra.mxu0 %v7752
  %8107 = vmatpush.bf16.msra.mxu0 %v7750
  %8108 = vmatpush.bf16.msra.mxu0 %v7748
  %8109 = vmatmul.bf16.gmra.mxu0 %v7191
  %v8110 = vpop.f32.mrf.mxu0
  %v8111 = vadd.f32 %v8098, %v8110
  %v8112 = vpop.f32.mrf.mxu0
  %8113 = vdwg.mxu0
  %8114 = vmatpush.bf16.msra.mxu0 %v7778
  %8115 = vmatpush.bf16.msra.mxu0 %v7776
  %8116 = vmatpush.bf16.msra.mxu0 %v7774
  %8117 = vmatpush.bf16.msra.mxu0 %v7772
  %8118 = vmatpush.bf16.msra.mxu0 %v7770
  %8119 = vmatpush.bf16.msra.mxu0 %v7768
  %8120 = vmatpush.bf16.msra.mxu0 %v7766
  %8121 = vmatpush.bf16.msra.mxu0 %v7764
  %8122 = vmatmul.bf16.gmra.mxu0 %v7192
  %v8123 = vpop.f32.mrf.mxu0
  %v8124 = vadd.f32 %v8111, %v8123
  %v8125 = vpop.f32.mrf.mxu0
  %8126 = vdwg.mxu0
  %8127 = vmatpush.bf16.msra.mxu0 %v7794
  %8128 = vmatpush.bf16.msra.mxu0 %v7792
  %8129 = vmatpush.bf16.msra.mxu0 %v7790
  %8130 = vmatpush.bf16.msra.mxu0 %v7788
  %8131 = vmatpush.bf16.msra.mxu0 %v7786
  %8132 = vmatpush.bf16.msra.mxu0 %v7784
  %8133 = vmatpush.bf16.msra.mxu0 %v7782
  %8134 = vmatpush.bf16.msra.mxu0 %v7780
  %8135 = vmatmul.bf16.gmra.mxu0 %v7193
  %v8136 = vpop.f32.mrf.mxu0
  %v8137 = vadd.f32 %v8124, %v8136
  %v8138 = vpop.f32.mrf.mxu0
  %8139 = vdwg.mxu0
  %8140 = vmatpush.bf16.msra.mxu0 %v7810
  %8141 = vmatpush.bf16.msra.mxu0 %v7808
  %8142 = vmatpush.bf16.msra.mxu0 %v7806
  %8143 = vmatpush.bf16.msra.mxu0 %v7804
  %8144 = vmatpush.bf16.msra.mxu0 %v7802
  %8145 = vmatpush.bf16.msra.mxu0 %v7800
  %8146 = vmatpush.bf16.msra.mxu0 %v7798
  %8147 = vmatpush.bf16.msra.mxu0 %v7796
  %8148 = vmatmul.bf16.gmra.mxu0 %v7194
  %v8149 = vpop.f32.mrf.mxu0
  %v8150 = vadd.f32 %v8137, %v8149
  %v8151 = vpop.f32.mrf.mxu0
  %8152 = vdwg.mxu0
  %8153 = vmatpush.bf16.msra.mxu0 %v7826
  %8154 = vmatpush.bf16.msra.mxu0 %v7824
  %8155 = vmatpush.bf16.msra.mxu0 %v7822
  %8156 = vmatpush.bf16.msra.mxu0 %v7820
  %8157 = vmatpush.bf16.msra.mxu0 %v7818
  %8158 = vmatpush.bf16.msra.mxu0 %v7816
  %8159 = vmatpush.bf16.msra.mxu0 %v7814
  %8160 = vmatpush.bf16.msra.mxu0 %v7812
  %8161 = vmatmul.bf16.gmra.mxu0 %v7195
  %v8162 = vpop.f32.mrf.mxu0
  %v8163 = vadd.f32 %v8150, %v8162
  %v8164 = vpop.f32.mrf.mxu0
  %8165 = vdwg.mxu0
  %8166 = vmatpush.bf16.msra.mxu0 %v7842
  %8167 = vmatpush.bf16.msra.mxu0 %v7840
  %8168 = vmatpush.bf16.msra.mxu0 %v7838
  %8169 = vmatpush.bf16.msra.mxu0 %v7836
  %8170 = vmatpush.bf16.msra.mxu0 %v7834
  %8171 = vmatpush.bf16.msra.mxu0 %v7832
  %8172 = vmatpush.bf16.msra.mxu0 %v7830
  %8173 = vmatpush.bf16.msra.mxu0 %v7828
  %8174 = vmatmul.bf16.gmra.mxu0 %v7196
  %v8175 = vpop.f32.mrf.mxu0
  %v8176 = vadd.f32 %v8163, %v8175
  %v8177 = vpop.f32.mrf.mxu0
  %8178 = vdwg.mxu0
  %v8179 = vmax.f32 %v8072, 0.0
  %v8180 = vmax.f32 %v8176, 0.0
  %v8181 = vpack.c.bf16 %v8179, %v8179
  %v8182 = vpack.c.bf16 %v8180, %v8180
  %v8183 = vld [vmem:[%s9] sm:$0xf]
  %v8184 = vld [vmem:[%s9 + $0x4] sm:$0xf]
  %v8185 = vld [vmem:[%s9 + $0x8] sm:$0xf]
  %v8186 = vld [vmem:[%s9 + $0xc] sm:$0xf]
  %v8187 = vld [vmem:[%s9 + $0x10] sm:$0xf]
  %v8188 = vld [vmem:[%s9 + $0x14] sm:$0xf]
  %v8189 = vld [vmem:[%s9 + $0x18] sm:$0xf]
  %v8190 = vld [vmem:[%s9 + $0x1c] sm:$0xf]
  %v8191 = vld [vmem:[%s9 + $0x20] sm:$0xf]
  %v8192 = vld [vmem:[%s9 + $0x24] sm:$0xf]
  %v8193 = vld [vmem:[%s9 + $0x28] sm:$0xf]
  %v8194 = vld [vmem:[%s9 + $0x2c] sm:$0xf]
  %v8195 = vld [vmem:[%s9 + $0x30] sm:$0xf]
  %v8196 = vld [vmem:[%s9 + $0x34] sm:$0xf]
  %v8197 = vld [vmem:[%s9 + $0x38] sm:$0xf]
  %v8198 = vld [vmem:[%s9 + $0x3c] sm:$0xf]
  %v8199 = vld [vmem:[%s9 + $0x40] sm:$0xf]
  %v8200 = vld [vmem:[%s9 + $0x44] sm:$0xf]
  %v8201 = vld [vmem:[%s9 + $0x48] sm:$0xf]
  %v8202 = vld [vmem:[%s9 + $0x4c] sm:$0xf]
  %v8203 = vld [vmem:[%s9 + $0x50] sm:$0xf]
  %v8204 = vld [vmem:[%s9 + $0x54] sm:$0xf]
  %v8205 = vld [vmem:[%s9 + $0x58] sm:$0xf]
  %v8206 = vld [vmem:[%s9 + $0x5c] sm:$0xf]
  %v8207 = vld [vmem:[%s9 + $0x60] sm:$0xf]
  %v8208 = vld [vmem:[%s9 + $0x64] sm:$0xf]
  %v8209 = vld [vmem:[%s9 + $0x68] sm:$0xf]
  %v8210 = vld [vmem:[%s9 + $0x6c] sm:$0xf]
  %v8211 = vld [vmem:[%s9 + $0x70] sm:$0xf]
  %v8212 = vld [vmem:[%s9 + $0x74] sm:$0xf]
  %v8213 = vld [vmem:[%s9 + $0x78] sm:$0xf]
  %v8214 = vld [vmem:[%s9 + $0x7c] sm:$0xf]
  %v8215 = vld [vmem:[%s10] sm:$0x1]
  %v8217 = vperm.slane %v8215, 0
  %v8251 = vunpack.c.l.b16 %v8183
  %v8252 = vunpack.c.l.b16 %v8184
  %v8253 = vunpack.c.l.b16 %v8185
  %v8254 = vunpack.c.l.b16 %v8186
  %v8255 = vunpack.c.l.b16 %v8187
  %v8256 = vunpack.c.l.b16 %v8188
  %v8257 = vunpack.c.l.b16 %v8189
  %v8258 = vunpack.c.l.b16 %v8190
  %v8259 = vunpack.c.l.b16 %v8191
  %v8260 = vunpack.c.l.b16 %v8192
  %v8261 = vunpack.c.l.b16 %v8193
  %v8262 = vunpack.c.l.b16 %v8194
  %v8263 = vunpack.c.l.b16 %v8195
  %v8264 = vunpack.c.l.b16 %v8196
  %v8265 = vunpack.c.l.b16 %v8197
  %v8266 = vunpack.c.l.b16 %v8198
  %v8267 = vunpack.c.l.b16 %v8199
  %v8268 = vunpack.c.l.b16 %v8200
  %v8269 = vunpack.c.l.b16 %v8201
  %v8270 = vunpack.c.l.b16 %v8202
  %v8271 = vunpack.c.l.b16 %v8203
  %v8272 = vunpack.c.l.b16 %v8204
  %v8273 = vunpack.c.l.b16 %v8205
  %v8274 = vunpack.c.l.b16 %v8206
  %v8275 = vunpack.c.l.b16 %v8207
  %v8276 = vunpack.c.l.b16 %v8208
  %v8277 = vunpack.c.l.b16 %v8209
  %v8278 = vunpack.c.l.b16 %v8210
  %v8279 = vunpack.c.l.b16 %v8211
  %v8280 = vunpack.c.l.b16 %v8212
  %v8281 = vunpack.c.l.b16 %v8213
  %v8282 = vunpack.c.l.b16 %v8214
  %v8283 = vpack.c.b16 %v8252, %v8251
  %v8284 = vpack.c.b16 %v8254, %v8253
  %v8285 = vpack.c.b16 %v8256, %v8255
  %v8286 = vpack.c.b16 %v8258, %v8257
  %v8287 = vpack.c.b16 %v8260, %v8259
  %v8288 = vpack.c.b16 %v8262, %v8261
  %v8289 = vpack.c.b16 %v8264, %v8263
  %v8290 = vpack.c.b16 %v8266, %v8265
  %v8291 = vpack.c.b16 %v8268, %v8267
  %v8292 = vpack.c.b16 %v8270, %v8269
  %v8293 = vpack.c.b16 %v8272, %v8271
  %v8294 = vpack.c.b16 %v8274, %v8273
  %v8295 = vpack.c.b16 %v8276, %v8275
  %v8296 = vpack.c.b16 %v8278, %v8277
  %v8297 = vpack.c.b16 %v8280, %v8279
  %v8298 = vpack.c.b16 %v8282, %v8281
  %8315 = vmatpush.bf16.msra.mxu0 %v8290
  %8316 = vmatpush.bf16.msra.mxu0 %v8289
  %8317 = vmatpush.bf16.msra.mxu0 %v8288
  %8318 = vmatpush.bf16.msra.mxu0 %v8287
  %8319 = vmatpush.bf16.msra.mxu0 %v8286
  %8320 = vmatpush.bf16.msra.mxu0 %v8285
  %8321 = vmatpush.bf16.msra.mxu0 %v8284
  %8322 = vmatpush.bf16.msra.mxu0 %v8283
  %8323 = vmatmul.bf16.gmra.mxu0 %v8181
  %v8324 = vpop.f32.mrf.mxu0
  %v8325 = vadd.f32 %v8217, %v8324
  %v8326 = vpop.f32.mrf.mxu0
  %8327 = vdwg.mxu0
  %8328 = vmatpush.bf16.msra.mxu0 %v8298
  %8329 = vmatpush.bf16.msra.mxu0 %v8297
  %8330 = vmatpush.bf16.msra.mxu0 %v8296
  %8331 = vmatpush.bf16.msra.mxu0 %v8295
  %8332 = vmatpush.bf16.msra.mxu0 %v8294
  %8333 = vmatpush.bf16.msra.mxu0 %v8293
  %8334 = vmatpush.bf16.msra.mxu0 %v8292
  %8335 = vmatpush.bf16.msra.mxu0 %v8291
  %8336 = vmatmul.bf16.gmra.mxu0 %v8182
  %v8337 = vpop.f32.mrf.mxu0
  %v8338 = vadd.f32 %v8325, %v8337
  %v8339 = vpop.f32.mrf.mxu0
  %8340 = vdwg.mxu0
  %8341 = vst [vmem:[%s11] sm:$0xff] %v8338
  // Predicated region
  $region46: #{mlp_forward.1} parent=0 // pred_check
    _
  $region47: #{mlp_forward.1} parent=0 // pred_check_branch
    %8343 = sbr.rel (0) target = $region49
  $region48: #{mlp_forward.1} parent=0 // pred_region
    _
  $region49: #{mlp_forward.1} parent=0 // pred_fallthru
    _
  // Predicated region
  $region50: #{mlp_forward.1} parent=0 // pred_check
    _
  $region51: #{mlp_forward.1} parent=0 // pred_check_branch
    %8345 = sbr.rel (0) target = $region53
  $region52: #{mlp_forward.1} parent=0 // pred_region
    _
  $region53: #{mlp_forward.1} parent=0 // pred_fallthru
    _

</llo_original>
